<compile_context>
chip_gen: v7x
topology: tpu7x:2x2x1
jax: 0.10.0
libtpu: 0.0.40
codegen_flags: <defaults>
</compile_context>

<pallas_src>
import functools

import jax
import jax.numpy as jnp
from jax.experimental import pallas as pl
from jax.experimental.pallas import tpu as pltpu

jax.config.update("jax_default_matmul_precision", "highest")

F32 = jnp.float32


# ----------------------------------------------------------------------------
# Fused DialogueRNNCell kernel
# ----------------------------------------------------------------------------

def _fs(shape):
    nd = len(shape)
    return pl.BlockSpec(shape, lambda *_: (0,) * nd)


def _cell_kernel(dims,
                 ut_ref, ua_ref, qmask_ref, ght_ref, gha_ref, hmask_ref,
                 q0t_ref, q0a_ref, e0t_ref, e0a_ref,
                 wd_ref, bd_ref,
                 wig_ref, big_ref, whg_ref, bhg_ref,
                 wip_ref, bip_ref, whp_ref, bhp_ref,
                 wie_ref, bie_ref, whe_ref, bhe_ref,
                 watt_ref, wsa_ref, bsa_ref, wd12_ref, bd12_ref,
                 g_out_ref, q_out_ref, e_out_ref, alpha_out_ref):
    D_m, D_g, D_p, D_e = dims
    B, party = qmask_ref.shape
    T = ght_ref.shape[0]

    def mm(x, w_ref, b_ref=None):
        y = jnp.dot(x, w_ref[...], preferred_element_type=F32)
        if b_ref is not None:
            y = y + b_ref[...]
        return y

    def gru_finish(gi, h_cat, wh_ref, bh_ref, H):
        # gi / gh layout: [r_t, r_a, z_t, z_a, n_t, n_a]; h_cat layout: [h_t | h_a]
        gh = jnp.dot(h_cat, wh_ref[...], preferred_element_type=F32) + bh_ref[...]
        r = jax.nn.sigmoid(gi[:, :2 * H] + gh[:, :2 * H])
        z = jax.nn.sigmoid(gi[:, 2 * H:4 * H] + gh[:, 2 * H:4 * H])
        n = jnp.tanh(gi[:, 4 * H:] + r * gh[:, 4 * H:])
        return (1.0 - z) * n + z * h_cat

    qmask = qmask_ref[...]

    # --- fused dense_t / dense_a (block-diagonal weight) ---
    u_cat = jnp.concatenate([ut_ref[...], ua_ref[...]], axis=1)
    U = mm(u_cat, wd_ref, bd_ref)                                  # (B, 2*D_m) = [Ut | Ua]
    Ut = U[:, :D_m]
    Ua = U[:, D_m:]

    # --- speaker selection one-hot (argmax, first-max semantics) ---
    party_iota = jax.lax.broadcasted_iota(jnp.int32, (B, party), 1).astype(F32)
    is_max = qmask == jnp.max(qmask, axis=1, keepdims=True)
    first_idx = jnp.min(jnp.where(is_max, party_iota, float(party)), axis=1, keepdims=True)
    sel = jnp.where(party_iota == first_idx, 1.0, 0.0)             # (B, party)

    q0t = q0t_ref[...]                                             # (B, party*D_p)
    q0a = q0a_ref[...]
    q0_sel_t = jnp.zeros((B, D_p), F32)
    q0_sel_a = jnp.zeros((B, D_p), F32)
    for p in range(party):
        sp = sel[:, p:p + 1]
        q0_sel_t = q0_sel_t + sp * q0t[:, p * D_p:(p + 1) * D_p]
        q0_sel_a = q0_sel_a + sp * q0a[:, p * D_p:(p + 1) * D_p]

    # --- previous global state = last valid history entry (zeros if history empty) ---
    hmask = hmask_ref[...]                                         # (T, 1)
    hist_len = jnp.sum(hmask)                                      # scalar
    t_iota = jax.lax.broadcasted_iota(jnp.int32, (T, 1), 0).astype(F32)
    last_onehot = jnp.where(t_iota == hist_len - 1.0, 1.0, 0.0)    # (T, 1)
    ght = ght_ref[...]                                             # (T, B, D_g)
    gha = gha_ref[...]
    g_prev_t = jnp.sum(last_onehot[:, :, None] * ght, axis=0)      # (B, D_g)
    g_prev_a = jnp.sum(last_onehot[:, :, None] * gha, axis=0)

    # --- fused global GRU pair (g_cell_t / g_cell_a) ---
    x_g = jnp.concatenate([Ut, q0_sel_t, Ua, q0_sel_a], axis=1)    # (B, 2*(D_m+D_p))
    gi_g = mm(x_g, wig_ref, big_ref)                               # (B, 6*D_g)
    h_g = jnp.concatenate([g_prev_t, g_prev_a], axis=1)
    g_cat = gru_finish(gi_g, h_g, whg_ref, bhg_ref, D_g)           # (B, 2*D_g) = [g_t | g_a]

    # --- four SimpleAttentions over the padded history (masked, exact) ---
    watt = watt_ref[...]                                           # (4, D_g)
    hvalid = hmask > 0.0                                           # (T, 1)

    def simple_att(M3, k):
        w_row = watt[k:k + 1, :]                                   # (1, D_g)
        s = jnp.sum(M3 * w_row[None, :, :], axis=-1)               # (T, B)
        s = jnp.where(hvalid, s, -1e30)
        s = s - jnp.max(s, axis=0, keepdims=True)
        e = jnp.exp(s)
        alpha = e / jnp.sum(e, axis=0, keepdims=True)              # softmax over history (dim 0)
        pool = jnp.sum(alpha[:, :, None] * M3, axis=0)             # (B, D_g)
        return pool, alpha

    c_tt, a_tt = simple_att(ght, 0)
    c_at, a_at = simple_att(ght, 1)
    c_ta, a_ta = simple_att(gha, 2)
    c_aa, a_aa = simple_att(gha, 3)
    alpha_out_ref[...] = (a_tt + a_ta + a_at + a_aa) * hmask       # (T, B), zero in padding

    # --- fused SelfAttention(general2) x2 + dense1/dense2 ---
    x_sa = jnp.concatenate([c_tt, c_ta, c_aa, c_at], axis=1)       # (B, 4*D_g)
    scale = mm(x_sa, wsa_ref, bsa_ref)                             # (B, 4)
    scale = scale - jnp.max(scale, axis=0, keepdims=True)
    esc = jnp.exp(scale)
    alpha_sa = esc / jnp.sum(esc, axis=0, keepdims=True)           # softmax over batch (faithful)
    pool = jnp.concatenate([(1.0 + alpha_sa[:, 0:1]) * c_tt,
                            (1.0 + alpha_sa[:, 1:2]) * c_ta,
                            (1.0 + alpha_sa[:, 2:3]) * c_aa,
                            (1.0 + alpha_sa[:, 3:4]) * c_at], axis=1)   # (B, 4*D_g)
    c_both = mm(pool, wd12_ref, bd12_ref)                          # (B, 2*D_g) = [c_t | c_a]
    hflag = jnp.where(hist_len > 0.0, 1.0, 0.0)                    # empty history -> c = 0
    c_t = c_both[:, :D_g] * hflag
    c_a = c_both[:, D_g:] * hflag

    # --- fused party GRU pair (p_cell_t / p_cell_a); input gates shared across parties ---
    x_p = jnp.concatenate([Ut, c_t, Ua, c_a], axis=1)              # (B, 2*(D_m+D_g))
    gi_p = mm(x_p, wip_ref, bip_ref)                               # (B, 6*D_p)
    q_sel_t = jnp.zeros((B, D_p), F32)
    q_sel_a = jnp.zeros((B, D_p), F32)
    q_cols = []
    for p in range(party):                                          # party=2, static unroll
        q0t_p = q0t[:, p * D_p:(p + 1) * D_p]
        q0a_p = q0a[:, p * D_p:(p + 1) * D_p]
        h_p = jnp.concatenate([q0t_p, q0a_p], axis=1)              # (B, 2*D_p)
        qs_p = gru_finish(gi_p, h_p, whp_ref, bhp_ref, D_p)        # (B, 2*D_p)
        qmp = qmask[:, p:p + 1]
        q_t_p = q0t_p * (1.0 - qmp) + qs_p[:, :D_p] * qmp          # listener_state=False
        q_a_p = q0a_p * (1.0 - qmp) + qs_p[:, D_p:] * qmp
        sp = sel[:, p:p + 1]
        q_sel_t = q_sel_t + sp * q_t_p
        q_sel_a = q_sel_a + sp * q_a_p
        q_cols.append(q_t_p)
        q_cols.append(q_a_p)
    q_out_ref[...] = jnp.concatenate(q_cols, axis=1)               # (B, party*2*D_p), lane-dense

    # --- fused emotion GRU pair (e_cell_t / e_cell_a) ---
    x_e = jnp.concatenate([q_sel_t, q_sel_a], axis=1)
    gi_e = mm(x_e, wie_ref, bie_ref)
    h_e = jnp.concatenate([e0t_ref[...], e0a_ref[...]], axis=1)
    e_cat = gru_finish(gi_e, h_e, whe_ref, bhe_ref, D_e)           # (B, 2*D_e) = [e_t | e_a]

    g_out_ref[...] = g_cat
    e_out_ref[...] = e_cat


PACKED_ORDER = ("wd", "bd", "wig", "big", "whg", "bhg", "wip", "bip", "whp", "bhp",
                "wie", "bie", "whe", "bhe", "watt", "wsa", "bsa", "wd12", "bd12")


def dialogue_rnn_cell(packed, dims, Ut, Ua, qmask, g_hist_t, g_hist_a,
                      q0_t, q0_a, e0_t, e0_a, max_hist):
    """One fused Pallas call for DialogueRNNCell.forward (inference)."""
    D_m, D_g, D_p, D_e = dims
    B, party = qmask.shape
    t = g_hist_t.shape[0]
    assert t <= max_hist
    if t == 0:
        ght = jnp.zeros((max_hist, B, D_g), F32)
        gha = jnp.zeros((max_hist, B, D_g), F32)
    else:
        pad = ((0, max_hist - t), (0, 0), (0, 0))
        ght = jnp.pad(g_hist_t.astype(F32), pad)
        gha = jnp.pad(g_hist_a.astype(F32), pad)
    hmask = (jnp.arange(max_hist) < t).astype(F32)[:, None]        # (max_hist, 1)

    data = [Ut.astype(F32), Ua.astype(F32), qmask.astype(F32), ght, gha, hmask,
            q0_t.reshape(B, party * D_p).astype(F32),
            q0_a.reshape(B, party * D_p).astype(F32),
            e0_t.astype(F32), e0_a.astype(F32)]
    weights = [packed[k] for k in PACKED_ORDER]
    inputs = data + weights

    out_shape = (jax.ShapeDtypeStruct((B, 2 * D_g), F32),
                 jax.ShapeDtypeStruct((B, party * 2 * D_p), F32),
                 jax.ShapeDtypeStruct((B, 2 * D_e), F32),
                 jax.ShapeDtypeStruct((max_hist, B), F32))

    g_cat, q_cat, e_cat, alpha_tb = pl.pallas_call(
        functools.partial(_cell_kernel, dims),
        grid=(1,),
        in_specs=[_fs(a.shape) for a in inputs],
        out_specs=tuple(_fs(s.shape) for s in out_shape),
        out_shape=out_shape,
        compiler_params=pltpu.CompilerParams(dimension_semantics=("arbitrary",)),
    )(*inputs)

    g_t, g_a = g_cat[:, :D_g], g_cat[:, D_g:]
    q_cat = q_cat.reshape(B, party, 2 * D_p)
    q_t, q_a = q_cat[..., :D_p], q_cat[..., D_p:]
    e_t, e_a = e_cat[:, :D_e], e_cat[:, D_e:]
    alpha = None if t == 0 else jnp.transpose(alpha_tb, (1, 0))[:, None, :t]
    return g_t, q_t, e_t, g_a, q_a, e_a, alpha


# ----------------------------------------------------------------------------
# Weight packing (glue, done once)
# ----------------------------------------------------------------------------

def _blkdiag(a, b):
    ra, ca = a.shape
    rb, cb = b.shape
    top = jnp.concatenate([a, jnp.zeros((ra, cb), F32)], axis=1)
    bot = jnp.concatenate([jnp.zeros((rb, ca), F32), b], axis=1)
    return jnp.concatenate([top, bot], axis=0)


def _pack_gru_pair(pt, pa):
    wi = jnp.concatenate([_blkdiag(pt["wir"], pa["wir"]),
                          _blkdiag(pt["wiz"], pa["wiz"]),
                          _blkdiag(pt["win"], pa["win"])], axis=1)
    wh = jnp.concatenate([_blkdiag(pt["whr"], pa["whr"]),
                          _blkdiag(pt["whz"], pa["whz"]),
                          _blkdiag(pt["whn"], pa["whn"])], axis=1)
    bi = jnp.concatenate([pt["bir"], pa["bir"], pt["biz"], pa["biz"],
                          pt["bin"], pa["bin"]], axis=1)
    bh = jnp.concatenate([pt["bhr"], pa["bhr"], pt["bhz"], pa["bhz"],
                          pt["bhn"], pa["bhn"]], axis=1)
    return wi, bi, wh, bh


def pack_params(raw, dims):
    D_m, D_g, D_p, D_e = dims
    packed = {}
    packed["wd"] = _blkdiag(raw["dense_t_w"], raw["dense_a_w"])
    packed["bd"] = jnp.concatenate([raw["dense_t_b"], raw["dense_a_b"]], axis=1)
    (packed["wig"], packed["big"],
     packed["whg"], packed["bhg"]) = _pack_gru_pair(raw["g_cell_t"], raw["g_cell_a"])
    (packed["wip"], packed["bip"],
     packed["whp"], packed["bhp"]) = _pack_gru_pair(raw["p_cell_t"], raw["p_cell_a"])
    (packed["wie"], packed["bie"],
     packed["whe"], packed["bhe"]) = _pack_gru_pair(raw["e_cell_t"], raw["e_cell_a"])
    packed["watt"] = jnp.concatenate([raw["att1_w"], raw["att2_w"],
                                      raw["att3_w"], raw["att4_w"]], axis=0)       # (4, D_g)
    z = jnp.zeros((D_g, 1), F32)
    w1, w2 = raw["sa1_w"], raw["sa2_w"]
    packed["wsa"] = jnp.concatenate([
        jnp.concatenate([w1, z, z, z], axis=1),
        jnp.concatenate([z, w1, z, z], axis=1),
        jnp.concatenate([z, z, w2, z], axis=1),
        jnp.concatenate([z, z, z, w2], axis=1)], axis=0)                            # (4*D_g, 4)
    packed["bsa"] = jnp.concatenate([raw["sa1_b"], raw["sa1_b"],
                                     raw["sa2_b"], raw["sa2_b"]], axis=1)           # (1, 4)
    packed["wd12"] = _blkdiag(raw["dense1_w"], raw["dense2_w"])
    packed["bd12"] = jnp.concatenate([raw["dense1_b"], raw["dense2_b"]], axis=1)
    return packed


# ----------------------------------------------------------------------------
# Pure-JAX reference (mirrors the PyTorch forward) + parameter init
# ----------------------------------------------------------------------------

def _gru_ref(x, h, p):
    r = jax.nn.sigmoid(x @ p["wir"] + p["bir"] + h @ p["whr"] + p["bhr"])
    z = jax.nn.sigmoid(x @ p["wiz"] + p["biz"] + h @ p["whz"] + p["bhz"])
    n = jnp.tanh(x @ p["win"] + p["bin"] + r * (h @ p["whn"] + p["bhn"]))
    return (1.0 - z) * n + z * h


def _simple_att_ref(M, w):                      # M (t,B,D), w (1,D)
    scale = jnp.sum(M * w[None, :, :], axis=-1, keepdims=True)     # (t,B,1)
    alpha = jax.nn.softmax(scale, axis=0)
    pool = jnp.sum(alpha * M, axis=0)                              # (B,D)
    return pool, jnp.transpose(alpha, (1, 2, 0))                   # (B,1,t)


def _self_att2_ref(M, w, b):                    # M (B,2,D)
    scale = M @ w + b                                              # (B,2,1)
    alpha = jax.nn.softmax(scale, axis=0)                          # softmax over batch
    parts = [(1.0 + alpha[:, i, :]) * M[:, i, :] for i in range(M.shape[1])]
    return jnp.concatenate(parts, axis=-1)                         # (B, 2D)


def reference_cell(raw, dims, Ut_in, Ua_in, qmask, g_hist_t, g_hist_a,
                   q0_t, q0_a, e0_t, e0_a):
    D_m, D_g, D_p, D_e = dims
    B, party = qmask.shape
    t = g_hist_t.shape[0]
    rows = jnp.arange(B)
    Ut = Ut_in @ raw["dense_t_w"] + raw["dense_t_b"]
    Ua = Ua_in @ raw["dense_a_w"] + raw["dense_a_b"]
    qm_idx = jnp.argmax(qmask, axis=1)
    q0_sel_t = q0_t[rows, qm_idx]
    q0_sel_a = q0_a[rows, qm_idx]
    g_prev_t = g_hist_t[-1] if t > 0 else jnp.zeros((B, D_g), F32)
    g_prev_a = g_hist_a[-1] if t > 0 else jnp.zeros((B, D_g), F32)
    g_t = _gru_ref(jnp.concatenate([Ut, q0_sel_t], 1), g_prev_t, raw["g_cell_t"])
    g_a = _gru_ref(jnp.concatenate([Ua, q0_sel_a], 1), g_prev_a, raw["g_cell_a"])
    if t == 0:
        c_t = jnp.zeros((B, D_g), F32)
        c_a = jnp.zeros((B, D_g), F32)
        alpha = None
    else:
        c_tt, a_tt = _simple_att_ref(g_hist_t, raw["att1_w"])
        c_at, a_at = _simple_att_ref(g_hist_t, raw["att2_w"])
        c_ta, a_ta = _simple_att_ref(g_hist_a, raw["att3_w"])
        c_aa, a_aa = _simple_att_ref(g_hist_a, raw["att4_w"])
        alpha = a_tt + a_ta + a_at + a_aa
        c_tta = jnp.stack([c_tt, c_ta], axis=1)
        c_aat = jnp.stack([c_aa, c_at], axis=1)
        c_t = _self_att2_ref(c_tta, raw["sa1_w"], raw["sa1_b"]) @ raw["dense1_w"] + raw["dense1_b"]
        c_a = _self_att2_ref(c_aat, raw["sa2_w"], raw["sa2_b"]) @ raw["dense2_w"] + raw["dense2_b"]

    def rnn_half(U, c_, q0, e0, pcell, ecell):
        U_c = jnp.concatenate([U, c_], axis=1)
        Din = U_c.shape[1]
        U_c_exp = jnp.broadcast_to(U_c[:, None, :], (B, party, Din)).reshape(B * party, Din)
        qs = _gru_ref(U_c_exp, q0.reshape(B * party, D_p), pcell).reshape(B, party, D_p)
        q_ = q0 * (1.0 - qmask[:, :, None]) + qs * qmask[:, :, None]
        q_sel = q_[rows, qm_idx]
        e_ = _gru_ref(q_sel, e0, ecell)
        return q_, e_

    q_t, e_t = rnn_half(Ut, c_t, q0_t, e0_t, raw["p_cell_t"], raw["e_cell_t"])
    q_a, e_a = rnn_half(Ua, c_a, q0_a, e0_a, raw["p_cell_a"], raw["e_cell_a"])
    return g_t, q_t, e_t, g_a, q_a, e_a, alpha


def init_raw_params(key, dims):
    D_m, D_g, D_p, D_e = dims
    keys = iter(jax.random.split(key, 160))

    def nrm(shape, scale=0.1):
        return (scale * jax.random.normal(next(keys), shape)).astype(F32)

    def gru_p(i, h):
        return {"wir": nrm((i, h)), "wiz": nrm((i, h)), "win": nrm((i, h)),
                "whr": nrm((h, h)), "whz": nrm((h, h)), "whn": nrm((h, h)),
                "bir": nrm((1, h)), "biz": nrm((1, h)), "bin": nrm((1, h)),
                "bhr": nrm((1, h)), "bhz": nrm((1, h)), "bhn": nrm((1, h))}

    return {
        "dense_t_w": nrm((D_m, D_m)), "dense_t_b": nrm((1, D_m)),
        "dense_a_w": nrm((D_m, D_m)), "dense_a_b": nrm((1, D_m)),
        "g_cell_t": gru_p(D_m + D_p, D_g), "g_cell_a": gru_p(D_m + D_p, D_g),
        "p_cell_t": gru_p(D_m + D_g, D_p), "p_cell_a": gru_p(D_m + D_g, D_p),
        "e_cell_t": gru_p(D_p, D_e), "e_cell_a": gru_p(D_p, D_e),
        "att1_w": nrm((1, D_g)), "att2_w": nrm((1, D_g)),
        "att3_w": nrm((1, D_g)), "att4_w": nrm((1, D_g)),
        "sa1_w": nrm((D_g, 1)), "sa1_b": nrm((1, 1)),
        "sa2_w": nrm((D_g, 1)), "sa2_b": nrm((1, 1)),
        "dense1_w": nrm((2 * D_g, D_g)), "dense1_b": nrm((1, D_g)),
        "dense2_w": nrm((2 * D_g, D_g)), "dense2_b": nrm((1, D_g)),
    }
    # TODO(synk): unused submodules of the original cell (dense_u, self_attention,
    # the fifth SimpleAttention, l_cell) never appear in forward() and are omitted.


# ----------------------------------------------------------------------------
# Main
# ----------------------------------------------------------------------------

if __name__ == "__main__":
    D_m = D_g = D_p = D_e = 32          # D_m_T = D_m_A = D_m
    dims = (D_m, D_g, D_p, D_e)
    B, party, T_MAX, hist_len = 2, 2, 8, 3

    key = jax.random.PRNGKey(0)
    kp, k1, k2, k3, k4, k5, k6, k7, k8 = jax.random.split(key, 9)
    raw = init_raw_params(kp, dims)
    packed = pack_params(raw, dims)

    Ut = jax.random.normal(k1, (B, D_m), F32)
    Ua = jax.random.normal(k2, (B, D_m), F32)
    qmask = jax.nn.one_hot(jax.random.randint(k3, (B,), 0, party), party, dtype=F32)
    g_hist_t = 0.1 * jax.random.normal(k4, (hist_len, B, D_g), F32)
    g_hist_a = 0.1 * jax.random.normal(k5, (hist_len, B, D_g), F32)
    q0_t = 0.1 * jax.random.normal(k6, (B, party, D_p), F32)
    q0_a = 0.1 * jax.random.normal(k7, (B, party, D_p), F32)
    e0_t = 0.1 * jax.random.normal(k8, (B, D_e), F32)
    e0_a = jnp.zeros((B, D_e), F32)

    names = ("g_t", "q_t", "e_t", "g_a", "q_a", "e_a", "alpha")

    # non-empty history path
    outs = dialogue_rnn_cell(packed, dims, Ut, Ua, qmask, g_hist_t, g_hist_a,
                             q0_t, q0_a, e0_t, e0_a, max_hist=T_MAX)
    jax.block_until_ready(outs[0])
    refs = reference_cell(raw, dims, Ut, Ua, qmask, g_hist_t, g_hist_a,
                          q0_t, q0_a, e0_t, e0_a)
    for name, o, r in zip(names, outs, refs):
        if r is None:
            assert o is None, name
            continue
        assert o.shape == r.shape, (name, o.shape, r.shape)
        assert float(jnp.max(jnp.abs(o - r))) < 5e-3, (name, float(jnp.max(jnp.abs(o - r))))

    # empty-history path (c_t = c_a = 0, alpha = None); same compiled kernel, data-only change
    empty = jnp.zeros((0, B, D_g), F32)
    outs0 = dialogue_rnn_cell(packed, dims, Ut, Ua, qmask, empty, empty,
                              q0_t, q0_a, e0_t, e0_a, max_hist=T_MAX)
    jax.block_until_ready(outs0[0])
    refs0 = reference_cell(raw, dims, Ut, Ua, qmask, empty, empty,
                           q0_t, q0_a, e0_t, e0_a)
    for name, o, r in zip(names, outs0, refs0):
        if r is None:
            assert o is None, name
            continue
        assert float(jnp.max(jnp.abs(o - r))) < 5e-3, name

    print("KERNEL_OK")
</pallas_src>

<mosaic_0001>
module attributes {stable_mosaic.version = 11 : i64} {
  func.func @_cell_kernel(%arg0: i32, %arg1: memref<2x32xf32, #tpu.memory_space<vmem>>, %arg2: memref<2x32xf32, #tpu.memory_space<vmem>>, %arg3: memref<2x2xf32, #tpu.memory_space<vmem>>, %arg4: memref<8x2x32xf32, #tpu.memory_space<vmem>>, %arg5: memref<8x2x32xf32, #tpu.memory_space<vmem>>, %arg6: memref<8x1xf32, #tpu.memory_space<vmem>>, %arg7: memref<2x64xf32, #tpu.memory_space<vmem>>, %arg8: memref<2x64xf32, #tpu.memory_space<vmem>>, %arg9: memref<2x32xf32, #tpu.memory_space<vmem>>, %arg10: memref<2x32xf32, #tpu.memory_space<vmem>>, %arg11: memref<64x64xf32, #tpu.memory_space<vmem>>, %arg12: memref<1x64xf32, #tpu.memory_space<vmem>>, %arg13: memref<128x192xf32, #tpu.memory_space<vmem>>, %arg14: memref<1x192xf32, #tpu.memory_space<vmem>>, %arg15: memref<64x192xf32, #tpu.memory_space<vmem>>, %arg16: memref<1x192xf32, #tpu.memory_space<vmem>>, %arg17: memref<128x192xf32, #tpu.memory_space<vmem>>, %arg18: memref<1x192xf32, #tpu.memory_space<vmem>>, %arg19: memref<64x192xf32, #tpu.memory_space<vmem>>, %arg20: memref<1x192xf32, #tpu.memory_space<vmem>>, %arg21: memref<64x192xf32, #tpu.memory_space<vmem>>, %arg22: memref<1x192xf32, #tpu.memory_space<vmem>>, %arg23: memref<64x192xf32, #tpu.memory_space<vmem>>, %arg24: memref<1x192xf32, #tpu.memory_space<vmem>>, %arg25: memref<4x32xf32, #tpu.memory_space<vmem>>, %arg26: memref<128x4xf32, #tpu.memory_space<vmem>>, %arg27: memref<1x4xf32, #tpu.memory_space<vmem>>, %arg28: memref<128x64xf32, #tpu.memory_space<vmem>>, %arg29: memref<1x64xf32, #tpu.memory_space<vmem>>, %arg30: memref<2x64xf32, #tpu.memory_space<vmem>>, %arg31: memref<2x128xf32, #tpu.memory_space<vmem>>, %arg32: memref<2x64xf32, #tpu.memory_space<vmem>>, %arg33: memref<8x2xf32, #tpu.memory_space<vmem>>) attributes {dimension_semantics = [#tpu.dimension_semantics<arbitrary>], iteration_bounds = array<i64: 1>, scalar_prefetch = 0 : i64, scratch_operands = 0 : i64, tpu.core_type = #tpu.core_type<tc>, window_params = [{pipeline_mode = #tpu.pipeline_mode<synchronous>, transform_indices = @transform_0, window_bounds = array<i64: 2, 32>}, {pipeline_mode = #tpu.pipeline_mode<synchronous>, transform_indices = @transform_1, window_bounds = array<i64: 2, 32>}, {pipeline_mode = #tpu.pipeline_mode<synchronous>, transform_indices = @transform_2, window_bounds = array<i64: 2, 2>}, {pipeline_mode = #tpu.pipeline_mode<synchronous>, transform_indices = @transform_3, window_bounds = array<i64: 8, 2, 32>}, {pipeline_mode = #tpu.pipeline_mode<synchronous>, transform_indices = @transform_4, window_bounds = array<i64: 8, 2, 32>}, {pipeline_mode = #tpu.pipeline_mode<synchronous>, transform_indices = @transform_5, window_bounds = array<i64: 8, 1>}, {pipeline_mode = #tpu.pipeline_mode<synchronous>, transform_indices = @transform_6, window_bounds = array<i64: 2, 64>}, {pipeline_mode = #tpu.pipeline_mode<synchronous>, transform_indices = @transform_7, window_bounds = array<i64: 2, 64>}, {pipeline_mode = #tpu.pipeline_mode<synchronous>, transform_indices = @transform_8, window_bounds = array<i64: 2, 32>}, {pipeline_mode = #tpu.pipeline_mode<synchronous>, transform_indices = @transform_9, window_bounds = array<i64: 2, 32>}, {pipeline_mode = #tpu.pipeline_mode<synchronous>, transform_indices = @transform_10, window_bounds = array<i64: 64, 64>}, {pipeline_mode = #tpu.pipeline_mode<synchronous>, transform_indices = @transform_11, window_bounds = array<i64: 1, 64>}, {pipeline_mode = #tpu.pipeline_mode<synchronous>, transform_indices = @transform_12, window_bounds = array<i64: 128, 192>}, {pipeline_mode = #tpu.pipeline_mode<synchronous>, transform_indices = @transform_13, window_bounds = array<i64: 1, 192>}, {pipeline_mode = #tpu.pipeline_mode<synchronous>, transform_indices = @transform_14, window_bounds = array<i64: 64, 192>}, {pipeline_mode = #tpu.pipeline_mode<synchronous>, transform_indices = @transform_15, window_bounds = array<i64: 1, 192>}, {pipeline_mode = #tpu.pipeline_mode<synchronous>, transform_indices = @transform_16, window_bounds = array<i64: 128, 192>}, {pipeline_mode = #tpu.pipeline_mode<synchronous>, transform_indices = @transform_17, window_bounds = array<i64: 1, 192>}, {pipeline_mode = #tpu.pipeline_mode<synchronous>, transform_indices = @transform_18, window_bounds = array<i64: 64, 192>}, {pipeline_mode = #tpu.pipeline_mode<synchronous>, transform_indices = @transform_19, window_bounds = array<i64: 1, 192>}, {pipeline_mode = #tpu.pipeline_mode<synchronous>, transform_indices = @transform_20, window_bounds = array<i64: 64, 192>}, {pipeline_mode = #tpu.pipeline_mode<synchronous>, transform_indices = @transform_21, window_bounds = array<i64: 1, 192>}, {pipeline_mode = #tpu.pipeline_mode<synchronous>, transform_indices = @transform_22, window_bounds = array<i64: 64, 192>}, {pipeline_mode = #tpu.pipeline_mode<synchronous>, transform_indices = @transform_23, window_bounds = array<i64: 1, 192>}, {pipeline_mode = #tpu.pipeline_mode<synchronous>, transform_indices = @transform_24, window_bounds = array<i64: 4, 32>}, {pipeline_mode = #tpu.pipeline_mode<synchronous>, transform_indices = @transform_25, window_bounds = array<i64: 128, 4>}, {pipeline_mode = #tpu.pipeline_mode<synchronous>, transform_indices = @transform_26, window_bounds = array<i64: 1, 4>}, {pipeline_mode = #tpu.pipeline_mode<synchronous>, transform_indices = @transform_27, window_bounds = array<i64: 128, 64>}, {pipeline_mode = #tpu.pipeline_mode<synchronous>, transform_indices = @transform_28, window_bounds = array<i64: 1, 64>}, {pipeline_mode = #tpu.pipeline_mode<synchronous>, transform_indices = @transform_29, window_bounds = array<i64: 2, 64>}, {pipeline_mode = #tpu.pipeline_mode<synchronous>, transform_indices = @transform_30, window_bounds = array<i64: 2, 128>}, {pipeline_mode = #tpu.pipeline_mode<synchronous>, transform_indices = @transform_31, window_bounds = array<i64: 2, 64>}, {pipeline_mode = #tpu.pipeline_mode<synchronous>, transform_indices = @transform_32, window_bounds = array<i64: 8, 2>}]} {
    %c0 = arith.constant 0 : index
    %c0_0 = arith.constant 0 : index
    %0 = vector.load %arg3[%c0, %c0_0] : memref<2x2xf32, #tpu.memory_space<vmem>>, vector<2x2xf32>
    %c0_1 = arith.constant 0 : index
    %c0_2 = arith.constant 0 : index
    %1 = vector.load %arg1[%c0_1, %c0_2] : memref<2x32xf32, #tpu.memory_space<vmem>>, vector<2x32xf32>
    %c0_3 = arith.constant 0 : index
    %c0_4 = arith.constant 0 : index
    %2 = vector.load %arg2[%c0_3, %c0_4] : memref<2x32xf32, #tpu.memory_space<vmem>>, vector<2x32xf32>
    %3 = tpu.concatenate %1, %2 in 1 : vector<2x32xf32>, vector<2x32xf32> -> vector<2x64xf32>
    %c0_5 = arith.constant 0 : index
    %c0_6 = arith.constant 0 : index
    %4 = vector.load %arg11[%c0_5, %c0_6] : memref<64x64xf32, #tpu.memory_space<vmem>>, vector<64x64xf32>
    %cst = arith.constant dense<0.000000e+00> : vector<2x64xf32>
    %5 = tpu.matmul %3, %4, %cst {dimension_numbers = #tpu.dot_dimension_numbers<[1], [0], [0], [1], [0, 0, 1, 1], [], []>, precision = #tpu.contract_precision<fp32>} : vector<2x64xf32>, vector<64x64xf32>, vector<2x64xf32> -> vector<2x64xf32>
    %c0_7 = arith.constant 0 : index
    %c0_8 = arith.constant 0 : index
    %6 = vector.load %arg12[%c0_7, %c0_8] : memref<1x64xf32, #tpu.memory_space<vmem>>, vector<1x64xf32>
    %7 = vector.broadcast %6 : vector<1x64xf32> to vector<2x64xf32>
    %8 = arith.addf %5, %7 : vector<2x64xf32>
    %9 = vector.extract_strided_slice %8 {offsets = [0, 0], sizes = [2, 32], strides = [1, 1]} : vector<2x64xf32> to vector<2x32xf32>
    %10 = vector.extract_strided_slice %8 {offsets = [0, 32], sizes = [2, 32], strides = [1, 1]} : vector<2x64xf32> to vector<2x32xf32>
    %11 = tpu.iota {dimensions = array<i32: 1>} : vector<2x2xi32>
    %12 = arith.sitofp %11 : vector<2x2xi32> to vector<2x2xf32>
    %cst_9 = arith.constant dense<0xFF800000> : vector<2xf32>
    %13 = vector.multi_reduction <maximumf>, %0, %cst_9 [1] : vector<2x2xf32> to vector<2xf32>
    %14 = vector.shape_cast %13 : vector<2xf32> to vector<2x1xf32>
    %15 = vector.broadcast %14 : vector<2x1xf32> to vector<2x2xf32>
    %16 = arith.cmpf oeq, %0, %15 : vector<2x2xf32>
    %cst_10 = arith.constant 2.000000e+00 : f32
    %17 = vector.broadcast %cst_10 : f32 to vector<2x2xf32>
    %18 = arith.select %16, %12, %17 : vector<2x2xi1>, vector<2x2xf32>
    %cst_11 = arith.constant dense<0x7F800000> : vector<2xf32>
    %19 = vector.multi_reduction <minimumf>, %18, %cst_11 [1] : vector<2x2xf32> to vector<2xf32>
    %20 = vector.shape_cast %19 : vector<2xf32> to vector<2x1xf32>
    %21 = vector.broadcast %20 : vector<2x1xf32> to vector<2x2xf32>
    %22 = arith.cmpf oeq, %12, %21 : vector<2x2xf32>
    %cst_12 = arith.constant 1.000000e+00 : f32
    %cst_13 = arith.constant 0.000000e+00 : f32
    %23 = vector.broadcast %cst_12 : f32 to vector<2x2xf32>
    %24 = vector.broadcast %cst_13 : f32 to vector<2x2xf32>
    %25 = arith.select %22, %23, %24 : vector<2x2xi1>, vector<2x2xf32>
    %c0_14 = arith.constant 0 : index
    %c0_15 = arith.constant 0 : index
    %26 = vector.load %arg7[%c0_14, %c0_15] : memref<2x64xf32, #tpu.memory_space<vmem>>, vector<2x64xf32>
    %c0_16 = arith.constant 0 : index
    %c0_17 = arith.constant 0 : index
    %27 = vector.load %arg8[%c0_16, %c0_17] : memref<2x64xf32, #tpu.memory_space<vmem>>, vector<2x64xf32>
    %cst_18 = arith.constant 0.000000e+00 : f32
    %28 = vector.broadcast %cst_18 : f32 to vector<2x32xf32>
    %cst_19 = arith.constant 0.000000e+00 : f32
    %29 = vector.broadcast %cst_19 : f32 to vector<2x32xf32>
    %30 = vector.extract_strided_slice %25 {offsets = [0, 0], sizes = [2, 1], strides = [1, 1]} : vector<2x2xf32> to vector<2x1xf32>
    %31 = vector.extract_strided_slice %26 {offsets = [0, 0], sizes = [2, 32], strides = [1, 1]} : vector<2x64xf32> to vector<2x32xf32>
    %32 = vector.broadcast %30 : vector<2x1xf32> to vector<2x32xf32>
    %33 = arith.mulf %32, %31 : vector<2x32xf32>
    %34 = arith.addf %28, %33 : vector<2x32xf32>
    %35 = vector.extract_strided_slice %27 {offsets = [0, 0], sizes = [2, 32], strides = [1, 1]} : vector<2x64xf32> to vector<2x32xf32>
    %36 = vector.broadcast %30 : vector<2x1xf32> to vector<2x32xf32>
    %37 = arith.mulf %36, %35 : vector<2x32xf32>
    %38 = arith.addf %29, %37 : vector<2x32xf32>
    %39 = vector.extract_strided_slice %25 {offsets = [0, 1], sizes = [2, 1], strides = [1, 1]} : vector<2x2xf32> to vector<2x1xf32>
    %40 = vector.extract_strided_slice %26 {offsets = [0, 32], sizes = [2, 32], strides = [1, 1]} : vector<2x64xf32> to vector<2x32xf32>
    %41 = vector.broadcast %39 : vector<2x1xf32> to vector<2x32xf32>
    %42 = arith.mulf %41, %40 : vector<2x32xf32>
    %43 = arith.addf %34, %42 : vector<2x32xf32>
    %44 = vector.extract_strided_slice %27 {offsets = [0, 32], sizes = [2, 32], strides = [1, 1]} : vector<2x64xf32> to vector<2x32xf32>
    %45 = vector.broadcast %39 : vector<2x1xf32> to vector<2x32xf32>
    %46 = arith.mulf %45, %44 : vector<2x32xf32>
    %47 = arith.addf %38, %46 : vector<2x32xf32>
    %c0_20 = arith.constant 0 : index
    %c0_21 = arith.constant 0 : index
    %48 = vector.load %arg6[%c0_20, %c0_21] : memref<8x1xf32, #tpu.memory_space<vmem>>, vector<8x1xf32>
    %49 = vector.shape_cast %48 : vector<8x1xf32> to vector<1x8x1xf32>
    %cst_22 = arith.constant dense<0.000000e+00> : vector<1xf32>
    %50 = vector.multi_reduction <add>, %49, %cst_22 [1, 2] : vector<1x8x1xf32> to vector<1xf32>
    %51 = vector.shape_cast %50 : vector<1xf32> to vector<1x1x1xf32>
    %52 = vector.extract %51[0, 0, 0] : f32 from vector<1x1x1xf32>
    %53 = tpu.iota {dimensions = array<i32: 0>} : vector<8x1xi32>
    %54 = arith.sitofp %53 : vector<8x1xi32> to vector<8x1xf32>
    %cst_23 = arith.constant 1.000000e+00 : f32
    %55 = arith.subf %52, %cst_23 : f32
    %56 = vector.broadcast %55 : f32 to vector<8x1xf32>
    %57 = arith.cmpf oeq, %54, %56 : vector<8x1xf32>
    %cst_24 = arith.constant 1.000000e+00 : f32
    %cst_25 = arith.constant 0.000000e+00 : f32
    %58 = vector.broadcast %cst_24 : f32 to vector<8x1xf32>
    %59 = vector.broadcast %cst_25 : f32 to vector<8x1xf32>
    %60 = arith.select %57, %58, %59 : vector<8x1xi1>, vector<8x1xf32>
    %c0_26 = arith.constant 0 : index
    %c0_27 = arith.constant 0 : index
    %c0_28 = arith.constant 0 : index
    %61 = vector.load %arg4[%c0_26, %c0_27, %c0_28] : memref<8x2x32xf32, #tpu.memory_space<vmem>>, vector<8x2x32xf32>
    %c0_29 = arith.constant 0 : index
    %c0_30 = arith.constant 0 : index
    %c0_31 = arith.constant 0 : index
    %62 = vector.load %arg5[%c0_29, %c0_30, %c0_31] : memref<8x2x32xf32, #tpu.memory_space<vmem>>, vector<8x2x32xf32>
    %63 = vector.shape_cast %60 : vector<8x1xf32> to vector<8x1x1xf32>
    %64 = vector.broadcast %63 : vector<8x1x1xf32> to vector<8x2x32xf32>
    %65 = arith.mulf %64, %61 : vector<8x2x32xf32>
    %cst_32 = arith.constant dense<0.000000e+00> : vector<2x32xf32>
    %66 = vector.multi_reduction <add>, %65, %cst_32 [0] : vector<8x2x32xf32> to vector<2x32xf32>
    %67 = vector.shape_cast %60 : vector<8x1xf32> to vector<8x1x1xf32>
    %68 = vector.broadcast %67 : vector<8x1x1xf32> to vector<8x2x32xf32>
    %69 = arith.mulf %68, %62 : vector<8x2x32xf32>
    %cst_33 = arith.constant dense<0.000000e+00> : vector<2x32xf32>
    %70 = vector.multi_reduction <add>, %69, %cst_33 [0] : vector<8x2x32xf32> to vector<2x32xf32>
    %71 = tpu.concatenate %9, %43, %10, %47 in 1 : vector<2x32xf32>, vector<2x32xf32>, vector<2x32xf32>, vector<2x32xf32> -> vector<2x128xf32>
    %c0_34 = arith.constant 0 : index
    %c0_35 = arith.constant 0 : index
    %72 = vector.load %arg13[%c0_34, %c0_35] : memref<128x192xf32, #tpu.memory_space<vmem>>, vector<128x192xf32>
    %cst_36 = arith.constant dense<0.000000e+00> : vector<2x192xf32>
    %73 = tpu.matmul %71, %72, %cst_36 {dimension_numbers = #tpu.dot_dimension_numbers<[1], [0], [0], [1], [0, 0, 1, 1], [], []>, precision = #tpu.contract_precision<fp32>} : vector<2x128xf32>, vector<128x192xf32>, vector<2x192xf32> -> vector<2x192xf32>
    %c0_37 = arith.constant 0 : index
    %c0_38 = arith.constant 0 : index
    %74 = vector.load %arg14[%c0_37, %c0_38] : memref<1x192xf32, #tpu.memory_space<vmem>>, vector<1x192xf32>
    %75 = vector.broadcast %74 : vector<1x192xf32> to vector<2x192xf32>
    %76 = arith.addf %73, %75 : vector<2x192xf32>
    %77 = tpu.concatenate %66, %70 in 1 : vector<2x32xf32>, vector<2x32xf32> -> vector<2x64xf32>
    %c0_39 = arith.constant 0 : index
    %c0_40 = arith.constant 0 : index
    %78 = vector.load %arg15[%c0_39, %c0_40] : memref<64x192xf32, #tpu.memory_space<vmem>>, vector<64x192xf32>
    %cst_41 = arith.constant dense<0.000000e+00> : vector<2x192xf32>
    %79 = tpu.matmul %77, %78, %cst_41 {dimension_numbers = #tpu.dot_dimension_numbers<[1], [0], [0], [1], [0, 0, 1, 1], [], []>, precision = #tpu.contract_precision<fp32>} : vector<2x64xf32>, vector<64x192xf32>, vector<2x192xf32> -> vector<2x192xf32>
    %c0_42 = arith.constant 0 : index
    %c0_43 = arith.constant 0 : index
    %80 = vector.load %arg16[%c0_42, %c0_43] : memref<1x192xf32, #tpu.memory_space<vmem>>, vector<1x192xf32>
    %81 = vector.broadcast %80 : vector<1x192xf32> to vector<2x192xf32>
    %82 = arith.addf %79, %81 : vector<2x192xf32>
    %83 = vector.extract_strided_slice %76 {offsets = [0, 0], sizes = [2, 64], strides = [1, 1]} : vector<2x192xf32> to vector<2x64xf32>
    %84 = vector.extract_strided_slice %82 {offsets = [0, 0], sizes = [2, 64], strides = [1, 1]} : vector<2x192xf32> to vector<2x64xf32>
    %85 = arith.addf %83, %84 : vector<2x64xf32>
    %86 = arith.negf %85 : vector<2x64xf32>
    %87 = math.exp %86 : vector<2x64xf32>
    %cst_44 = arith.constant 1.000000e+00 : f32
    %88 = vector.broadcast %cst_44 : f32 to vector<2x64xf32>
    %89 = arith.addf %88, %87 : vector<2x64xf32>
    %90 = arith.divf %88, %89 : vector<2x64xf32>
    %91 = vector.extract_strided_slice %76 {offsets = [0, 64], sizes = [2, 64], strides = [1, 1]} : vector<2x192xf32> to vector<2x64xf32>
    %92 = vector.extract_strided_slice %82 {offsets = [0, 64], sizes = [2, 64], strides = [1, 1]} : vector<2x192xf32> to vector<2x64xf32>
    %93 = arith.addf %91, %92 : vector<2x64xf32>
    %94 = arith.negf %93 : vector<2x64xf32>
    %95 = math.exp %94 : vector<2x64xf32>
    %cst_45 = arith.constant 1.000000e+00 : f32
    %96 = vector.broadcast %cst_45 : f32 to vector<2x64xf32>
    %97 = arith.addf %96, %95 : vector<2x64xf32>
    %98 = arith.divf %96, %97 : vector<2x64xf32>
    %99 = vector.extract_strided_slice %76 {offsets = [0, 128], sizes = [2, 64], strides = [1, 1]} : vector<2x192xf32> to vector<2x64xf32>
    %100 = vector.extract_strided_slice %82 {offsets = [0, 128], sizes = [2, 64], strides = [1, 1]} : vector<2x192xf32> to vector<2x64xf32>
    %101 = arith.mulf %90, %100 : vector<2x64xf32>
    %102 = arith.addf %99, %101 : vector<2x64xf32>
    %103 = math.tanh %102 : vector<2x64xf32>
    %cst_46 = arith.constant 1.000000e+00 : f32
    %104 = vector.broadcast %cst_46 : f32 to vector<2x64xf32>
    %105 = arith.subf %104, %98 : vector<2x64xf32>
    %106 = arith.mulf %105, %103 : vector<2x64xf32>
    %107 = arith.mulf %98, %77 : vector<2x64xf32>
    %108 = arith.addf %106, %107 : vector<2x64xf32>
    %c0_47 = arith.constant 0 : index
    %c0_48 = arith.constant 0 : index
    %109 = vector.load %arg25[%c0_47, %c0_48] : memref<4x32xf32, #tpu.memory_space<vmem>>, vector<4x32xf32>
    %cst_49 = arith.constant 0.000000e+00 : f32
    %110 = vector.broadcast %cst_49 : f32 to vector<8x1xf32>
    %111 = arith.cmpf ogt, %48, %110 : vector<8x1xf32>
    %112 = vector.extract_strided_slice %109 {offsets = [0, 0], sizes = [1, 32], strides = [1, 1]} : vector<4x32xf32> to vector<1x32xf32>
    %113 = vector.shape_cast %112 : vector<1x32xf32> to vector<1x1x32xf32>
    %114 = vector.broadcast %113 : vector<1x1x32xf32> to vector<8x2x32xf32>
    %115 = arith.mulf %61, %114 : vector<8x2x32xf32>
    %cst_50 = arith.constant dense<0.000000e+00> : vector<8x2xf32>
    %116 = vector.multi_reduction <add>, %115, %cst_50 [2] : vector<8x2x32xf32> to vector<8x2xf32>
    %cst_51 = arith.constant -1.000000e+30 : f32
    %117 = vector.shape_cast %111 : vector<8x1xi1> to vector<8x1xi1>
    %118 = vector.broadcast %117 : vector<8x1xi1> to vector<8x2xi1>
    %119 = vector.broadcast %cst_51 : f32 to vector<8x2xf32>
    %120 = arith.select %118, %116, %119 : vector<8x2xi1>, vector<8x2xf32>
    %cst_52 = arith.constant dense<0xFF800000> : vector<2xf32>
    %121 = vector.multi_reduction <maximumf>, %120, %cst_52 [0] : vector<8x2xf32> to vector<2xf32>
    %122 = vector.shape_cast %121 : vector<2xf32> to vector<1x2xf32>
    %123 = vector.broadcast %122 : vector<1x2xf32> to vector<8x2xf32>
    %124 = arith.subf %120, %123 : vector<8x2xf32>
    %125 = math.exp %124 : vector<8x2xf32>
    %cst_53 = arith.constant dense<0.000000e+00> : vector<2xf32>
    %126 = vector.multi_reduction <add>, %125, %cst_53 [0] : vector<8x2xf32> to vector<2xf32>
    %127 = vector.shape_cast %126 : vector<2xf32> to vector<1x2xf32>
    %128 = vector.broadcast %127 : vector<1x2xf32> to vector<8x2xf32>
    %129 = arith.divf %125, %128 : vector<8x2xf32>
    %130 = vector.shape_cast %129 : vector<8x2xf32> to vector<8x2x1xf32>
    %131 = vector.broadcast %130 : vector<8x2x1xf32> to vector<8x2x32xf32>
    %132 = arith.mulf %131, %61 : vector<8x2x32xf32>
    %cst_54 = arith.constant dense<0.000000e+00> : vector<2x32xf32>
    %133 = vector.multi_reduction <add>, %132, %cst_54 [0] : vector<8x2x32xf32> to vector<2x32xf32>
    %134 = vector.extract_strided_slice %109 {offsets = [1, 0], sizes = [1, 32], strides = [1, 1]} : vector<4x32xf32> to vector<1x32xf32>
    %135 = vector.shape_cast %134 : vector<1x32xf32> to vector<1x1x32xf32>
    %136 = vector.broadcast %135 : vector<1x1x32xf32> to vector<8x2x32xf32>
    %137 = arith.mulf %61, %136 : vector<8x2x32xf32>
    %cst_55 = arith.constant dense<0.000000e+00> : vector<8x2xf32>
    %138 = vector.multi_reduction <add>, %137, %cst_55 [2] : vector<8x2x32xf32> to vector<8x2xf32>
    %cst_56 = arith.constant -1.000000e+30 : f32
    %139 = vector.shape_cast %111 : vector<8x1xi1> to vector<8x1xi1>
    %140 = vector.broadcast %139 : vector<8x1xi1> to vector<8x2xi1>
    %141 = vector.broadcast %cst_56 : f32 to vector<8x2xf32>
    %142 = arith.select %140, %138, %141 : vector<8x2xi1>, vector<8x2xf32>
    %cst_57 = arith.constant dense<0xFF800000> : vector<2xf32>
    %143 = vector.multi_reduction <maximumf>, %142, %cst_57 [0] : vector<8x2xf32> to vector<2xf32>
    %144 = vector.shape_cast %143 : vector<2xf32> to vector<1x2xf32>
    %145 = vector.broadcast %144 : vector<1x2xf32> to vector<8x2xf32>
    %146 = arith.subf %142, %145 : vector<8x2xf32>
    %147 = math.exp %146 : vector<8x2xf32>
    %cst_58 = arith.constant dense<0.000000e+00> : vector<2xf32>
    %148 = vector.multi_reduction <add>, %147, %cst_58 [0] : vector<8x2xf32> to vector<2xf32>
    %149 = vector.shape_cast %148 : vector<2xf32> to vector<1x2xf32>
    %150 = vector.broadcast %149 : vector<1x2xf32> to vector<8x2xf32>
    %151 = arith.divf %147, %150 : vector<8x2xf32>
    %152 = vector.shape_cast %151 : vector<8x2xf32> to vector<8x2x1xf32>
    %153 = vector.broadcast %152 : vector<8x2x1xf32> to vector<8x2x32xf32>
    %154 = arith.mulf %153, %61 : vector<8x2x32xf32>
    %cst_59 = arith.constant dense<0.000000e+00> : vector<2x32xf32>
    %155 = vector.multi_reduction <add>, %154, %cst_59 [0] : vector<8x2x32xf32> to vector<2x32xf32>
    %156 = vector.extract_strided_slice %109 {offsets = [2, 0], sizes = [1, 32], strides = [1, 1]} : vector<4x32xf32> to vector<1x32xf32>
    %157 = vector.shape_cast %156 : vector<1x32xf32> to vector<1x1x32xf32>
    %158 = vector.broadcast %157 : vector<1x1x32xf32> to vector<8x2x32xf32>
    %159 = arith.mulf %62, %158 : vector<8x2x32xf32>
    %cst_60 = arith.constant dense<0.000000e+00> : vector<8x2xf32>
    %160 = vector.multi_reduction <add>, %159, %cst_60 [2] : vector<8x2x32xf32> to vector<8x2xf32>
    %cst_61 = arith.constant -1.000000e+30 : f32
    %161 = vector.shape_cast %111 : vector<8x1xi1> to vector<8x1xi1>
    %162 = vector.broadcast %161 : vector<8x1xi1> to vector<8x2xi1>
    %163 = vector.broadcast %cst_61 : f32 to vector<8x2xf32>
    %164 = arith.select %162, %160, %163 : vector<8x2xi1>, vector<8x2xf32>
    %cst_62 = arith.constant dense<0xFF800000> : vector<2xf32>
    %165 = vector.multi_reduction <maximumf>, %164, %cst_62 [0] : vector<8x2xf32> to vector<2xf32>
    %166 = vector.shape_cast %165 : vector<2xf32> to vector<1x2xf32>
    %167 = vector.broadcast %166 : vector<1x2xf32> to vector<8x2xf32>
    %168 = arith.subf %164, %167 : vector<8x2xf32>
    %169 = math.exp %168 : vector<8x2xf32>
    %cst_63 = arith.constant dense<0.000000e+00> : vector<2xf32>
    %170 = vector.multi_reduction <add>, %169, %cst_63 [0] : vector<8x2xf32> to vector<2xf32>
    %171 = vector.shape_cast %170 : vector<2xf32> to vector<1x2xf32>
    %172 = vector.broadcast %171 : vector<1x2xf32> to vector<8x2xf32>
    %173 = arith.divf %169, %172 : vector<8x2xf32>
    %174 = vector.shape_cast %173 : vector<8x2xf32> to vector<8x2x1xf32>
    %175 = vector.broadcast %174 : vector<8x2x1xf32> to vector<8x2x32xf32>
    %176 = arith.mulf %175, %62 : vector<8x2x32xf32>
    %cst_64 = arith.constant dense<0.000000e+00> : vector<2x32xf32>
    %177 = vector.multi_reduction <add>, %176, %cst_64 [0] : vector<8x2x32xf32> to vector<2x32xf32>
    %178 = vector.extract_strided_slice %109 {offsets = [3, 0], sizes = [1, 32], strides = [1, 1]} : vector<4x32xf32> to vector<1x32xf32>
    %179 = vector.shape_cast %178 : vector<1x32xf32> to vector<1x1x32xf32>
    %180 = vector.broadcast %179 : vector<1x1x32xf32> to vector<8x2x32xf32>
    %181 = arith.mulf %62, %180 : vector<8x2x32xf32>
    %cst_65 = arith.constant dense<0.000000e+00> : vector<8x2xf32>
    %182 = vector.multi_reduction <add>, %181, %cst_65 [2] : vector<8x2x32xf32> to vector<8x2xf32>
    %cst_66 = arith.constant -1.000000e+30 : f32
    %183 = vector.shape_cast %111 : vector<8x1xi1> to vector<8x1xi1>
    %184 = vector.broadcast %183 : vector<8x1xi1> to vector<8x2xi1>
    %185 = vector.broadcast %cst_66 : f32 to vector<8x2xf32>
    %186 = arith.select %184, %182, %185 : vector<8x2xi1>, vector<8x2xf32>
    %cst_67 = arith.constant dense<0xFF800000> : vector<2xf32>
    %187 = vector.multi_reduction <maximumf>, %186, %cst_67 [0] : vector<8x2xf32> to vector<2xf32>
    %188 = vector.shape_cast %187 : vector<2xf32> to vector<1x2xf32>
    %189 = vector.broadcast %188 : vector<1x2xf32> to vector<8x2xf32>
    %190 = arith.subf %186, %189 : vector<8x2xf32>
    %191 = math.exp %190 : vector<8x2xf32>
    %cst_68 = arith.constant dense<0.000000e+00> : vector<2xf32>
    %192 = vector.multi_reduction <add>, %191, %cst_68 [0] : vector<8x2xf32> to vector<2xf32>
    %193 = vector.shape_cast %192 : vector<2xf32> to vector<1x2xf32>
    %194 = vector.broadcast %193 : vector<1x2xf32> to vector<8x2xf32>
    %195 = arith.divf %191, %194 : vector<8x2xf32>
    %196 = vector.shape_cast %195 : vector<8x2xf32> to vector<8x2x1xf32>
    %197 = vector.broadcast %196 : vector<8x2x1xf32> to vector<8x2x32xf32>
    %198 = arith.mulf %197, %62 : vector<8x2x32xf32>
    %cst_69 = arith.constant dense<0.000000e+00> : vector<2x32xf32>
    %199 = vector.multi_reduction <add>, %198, %cst_69 [0] : vector<8x2x32xf32> to vector<2x32xf32>
    %200 = arith.addf %129, %173 : vector<8x2xf32>
    %201 = arith.addf %200, %151 : vector<8x2xf32>
    %202 = arith.addf %201, %195 : vector<8x2xf32>
    %203 = vector.broadcast %48 : vector<8x1xf32> to vector<8x2xf32>
    %204 = arith.mulf %202, %203 : vector<8x2xf32>
    %c0_70 = arith.constant 0 : index
    %c0_71 = arith.constant 0 : index
    %205 = vector.load %arg33[%c0_70, %c0_71] : memref<8x2xf32, #tpu.memory_space<vmem>>, vector<8x2xf32>
    tpu.vector_store %arg33[%c0_70, %c0_71], %204 {strides = array<i32>} : memref<8x2xf32, #tpu.memory_space<vmem>>, vector<8x2xf32>,
    %206 = tpu.concatenate %133, %177, %199, %155 in 1 : vector<2x32xf32>, vector<2x32xf32>, vector<2x32xf32>, vector<2x32xf32> -> vector<2x128xf32>
    %c0_72 = arith.constant 0 : index
    %c0_73 = arith.constant 0 : index
    %207 = vector.load %arg26[%c0_72, %c0_73] : memref<128x4xf32, #tpu.memory_space<vmem>>, vector<128x4xf32>
    %cst_74 = arith.constant dense<0.000000e+00> : vector<2x4xf32>
    %208 = tpu.matmul %206, %207, %cst_74 {dimension_numbers = #tpu.dot_dimension_numbers<[1], [0], [0], [1], [0, 0, 1, 1], [], []>, precision = #tpu.contract_precision<fp32>} : vector<2x128xf32>, vector<128x4xf32>, vector<2x4xf32> -> vector<2x4xf32>
    %c0_75 = arith.constant 0 : index
    %c0_76 = arith.constant 0 : index
    %209 = vector.load %arg27[%c0_75, %c0_76] : memref<1x4xf32, #tpu.memory_space<vmem>>, vector<1x4xf32>
    %210 = vector.broadcast %209 : vector<1x4xf32> to vector<2x4xf32>
    %211 = arith.addf %208, %210 : vector<2x4xf32>
    %cst_77 = arith.constant dense<0xFF800000> : vector<4xf32>
    %212 = vector.multi_reduction <maximumf>, %211, %cst_77 [0] : vector<2x4xf32> to vector<4xf32>
    %213 = vector.shape_cast %212 : vector<4xf32> to vector<1x4xf32>
    %214 = vector.broadcast %213 : vector<1x4xf32> to vector<2x4xf32>
    %215 = arith.subf %211, %214 : vector<2x4xf32>
    %216 = math.exp %215 : vector<2x4xf32>
    %cst_78 = arith.constant dense<0.000000e+00> : vector<4xf32>
    %217 = vector.multi_reduction <add>, %216, %cst_78 [0] : vector<2x4xf32> to vector<4xf32>
    %218 = vector.shape_cast %217 : vector<4xf32> to vector<1x4xf32>
    %219 = vector.broadcast %218 : vector<1x4xf32> to vector<2x4xf32>
    %220 = arith.divf %216, %219 : vector<2x4xf32>
    %221 = vector.extract_strided_slice %220 {offsets = [0, 0], sizes = [2, 1], strides = [1, 1]} : vector<2x4xf32> to vector<2x1xf32>
    %cst_79 = arith.constant 1.000000e+00 : f32
    %222 = vector.broadcast %cst_79 : f32 to vector<2x1xf32>
    %223 = arith.addf %222, %221 : vector<2x1xf32>
    %224 = vector.broadcast %223 : vector<2x1xf32> to vector<2x32xf32>
    %225 = arith.mulf %224, %133 : vector<2x32xf32>
    %226 = vector.extract_strided_slice %220 {offsets = [0, 1], sizes = [2, 1], strides = [1, 1]} : vector<2x4xf32> to vector<2x1xf32>
    %cst_80 = arith.constant 1.000000e+00 : f32
    %227 = vector.broadcast %cst_80 : f32 to vector<2x1xf32>
    %228 = arith.addf %227, %226 : vector<2x1xf32>
    %229 = vector.broadcast %228 : vector<2x1xf32> to vector<2x32xf32>
    %230 = arith.mulf %229, %177 : vector<2x32xf32>
    %231 = vector.extract_strided_slice %220 {offsets = [0, 2], sizes = [2, 1], strides = [1, 1]} : vector<2x4xf32> to vector<2x1xf32>
    %cst_81 = arith.constant 1.000000e+00 : f32
    %232 = vector.broadcast %cst_81 : f32 to vector<2x1xf32>
    %233 = arith.addf %232, %231 : vector<2x1xf32>
    %234 = vector.broadcast %233 : vector<2x1xf32> to vector<2x32xf32>
    %235 = arith.mulf %234, %199 : vector<2x32xf32>
    %236 = vector.extract_strided_slice %220 {offsets = [0, 3], sizes = [2, 1], strides = [1, 1]} : vector<2x4xf32> to vector<2x1xf32>
    %cst_82 = arith.constant 1.000000e+00 : f32
    %237 = vector.broadcast %cst_82 : f32 to vector<2x1xf32>
    %238 = arith.addf %237, %236 : vector<2x1xf32>
    %239 = vector.broadcast %238 : vector<2x1xf32> to vector<2x32xf32>
    %240 = arith.mulf %239, %155 : vector<2x32xf32>
    %241 = tpu.concatenate %225, %230, %235, %240 in 1 : vector<2x32xf32>, vector<2x32xf32>, vector<2x32xf32>, vector<2x32xf32> -> vector<2x128xf32>
    %c0_83 = arith.constant 0 : index
    %c0_84 = arith.constant 0 : index
    %242 = vector.load %arg28[%c0_83, %c0_84] : memref<128x64xf32, #tpu.memory_space<vmem>>, vector<128x64xf32>
    %cst_85 = arith.constant dense<0.000000e+00> : vector<2x64xf32>
    %243 = tpu.matmul %241, %242, %cst_85 {dimension_numbers = #tpu.dot_dimension_numbers<[1], [0], [0], [1], [0, 0, 1, 1], [], []>, precision = #tpu.contract_precision<fp32>} : vector<2x128xf32>, vector<128x64xf32>, vector<2x64xf32> -> vector<2x64xf32>
    %c0_86 = arith.constant 0 : index
    %c0_87 = arith.constant 0 : index
    %244 = vector.load %arg29[%c0_86, %c0_87] : memref<1x64xf32, #tpu.memory_space<vmem>>, vector<1x64xf32>
    %245 = vector.broadcast %244 : vector<1x64xf32> to vector<2x64xf32>
    %246 = arith.addf %243, %245 : vector<2x64xf32>
    %cst_88 = arith.constant 0.000000e+00 : f32
    %247 = arith.cmpf ogt, %52, %cst_88 : f32
    %cst_89 = arith.constant 1.000000e+00 : f32
    %cst_90 = arith.constant 0.000000e+00 : f32
    %248 = arith.select %247, %cst_89, %cst_90 : f32
    %249 = vector.extract_strided_slice %246 {offsets = [0, 0], sizes = [2, 32], strides = [1, 1]} : vector<2x64xf32> to vector<2x32xf32>
    %250 = vector.broadcast %248 : f32 to vector<2x32xf32>
    %251 = arith.mulf %249, %250 : vector<2x32xf32>
    %252 = vector.extract_strided_slice %246 {offsets = [0, 32], sizes = [2, 32], strides = [1, 1]} : vector<2x64xf32> to vector<2x32xf32>
    %253 = vector.broadcast %248 : f32 to vector<2x32xf32>
    %254 = arith.mulf %252, %253 : vector<2x32xf32>
    %255 = tpu.concatenate %9, %251, %10, %254 in 1 : vector<2x32xf32>, vector<2x32xf32>, vector<2x32xf32>, vector<2x32xf32> -> vector<2x128xf32>
    %c0_91 = arith.constant 0 : index
    %c0_92 = arith.constant 0 : index
    %256 = vector.load %arg17[%c0_91, %c0_92] : memref<128x192xf32, #tpu.memory_space<vmem>>, vector<128x192xf32>
    %cst_93 = arith.constant dense<0.000000e+00> : vector<2x192xf32>
    %257 = tpu.matmul %255, %256, %cst_93 {dimension_numbers = #tpu.dot_dimension_numbers<[1], [0], [0], [1], [0, 0, 1, 1], [], []>, precision = #tpu.contract_precision<fp32>} : vector<2x128xf32>, vector<128x192xf32>, vector<2x192xf32> -> vector<2x192xf32>
    %c0_94 = arith.constant 0 : index
    %c0_95 = arith.constant 0 : index
    %258 = vector.load %arg18[%c0_94, %c0_95] : memref<1x192xf32, #tpu.memory_space<vmem>>, vector<1x192xf32>
    %259 = vector.broadcast %258 : vector<1x192xf32> to vector<2x192xf32>
    %260 = arith.addf %257, %259 : vector<2x192xf32>
    %cst_96 = arith.constant 0.000000e+00 : f32
    %261 = vector.broadcast %cst_96 : f32 to vector<2x32xf32>
    %cst_97 = arith.constant 0.000000e+00 : f32
    %262 = vector.broadcast %cst_97 : f32 to vector<2x32xf32>
    %263 = vector.extract_strided_slice %26 {offsets = [0, 0], sizes = [2, 32], strides = [1, 1]} : vector<2x64xf32> to vector<2x32xf32>
    %264 = vector.extract_strided_slice %27 {offsets = [0, 0], sizes = [2, 32], strides = [1, 1]} : vector<2x64xf32> to vector<2x32xf32>
    %265 = tpu.concatenate %263, %264 in 1 : vector<2x32xf32>, vector<2x32xf32> -> vector<2x64xf32>
    %c0_98 = arith.constant 0 : index
    %c0_99 = arith.constant 0 : index
    %266 = vector.load %arg19[%c0_98, %c0_99] : memref<64x192xf32, #tpu.memory_space<vmem>>, vector<64x192xf32>
    %cst_100 = arith.constant dense<0.000000e+00> : vector<2x192xf32>
    %267 = tpu.matmul %265, %266, %cst_100 {dimension_numbers = #tpu.dot_dimension_numbers<[1], [0], [0], [1], [0, 0, 1, 1], [], []>, precision = #tpu.contract_precision<fp32>} : vector<2x64xf32>, vector<64x192xf32>, vector<2x192xf32> -> vector<2x192xf32>
    %c0_101 = arith.constant 0 : index
    %c0_102 = arith.constant 0 : index
    %268 = vector.load %arg20[%c0_101, %c0_102] : memref<1x192xf32, #tpu.memory_space<vmem>>, vector<1x192xf32>
    %269 = vector.broadcast %268 : vector<1x192xf32> to vector<2x192xf32>
    %270 = arith.addf %267, %269 : vector<2x192xf32>
    %271 = vector.extract_strided_slice %260 {offsets = [0, 0], sizes = [2, 64], strides = [1, 1]} : vector<2x192xf32> to vector<2x64xf32>
    %272 = vector.extract_strided_slice %270 {offsets = [0, 0], sizes = [2, 64], strides = [1, 1]} : vector<2x192xf32> to vector<2x64xf32>
    %273 = arith.addf %271, %272 : vector<2x64xf32>
    %274 = arith.negf %273 : vector<2x64xf32>
    %275 = math.exp %274 : vector<2x64xf32>
    %cst_103 = arith.constant 1.000000e+00 : f32
    %276 = vector.broadcast %cst_103 : f32 to vector<2x64xf32>
    %277 = arith.addf %276, %275 : vector<2x64xf32>
    %278 = arith.divf %276, %277 : vector<2x64xf32>
    %279 = vector.extract_strided_slice %260 {offsets = [0, 64], sizes = [2, 64], strides = [1, 1]} : vector<2x192xf32> to vector<2x64xf32>
    %280 = vector.extract_strided_slice %270 {offsets = [0, 64], sizes = [2, 64], strides = [1, 1]} : vector<2x192xf32> to vector<2x64xf32>
    %281 = arith.addf %279, %280 : vector<2x64xf32>
    %282 = arith.negf %281 : vector<2x64xf32>
    %283 = math.exp %282 : vector<2x64xf32>
    %cst_104 = arith.constant 1.000000e+00 : f32
    %284 = vector.broadcast %cst_104 : f32 to vector<2x64xf32>
    %285 = arith.addf %284, %283 : vector<2x64xf32>
    %286 = arith.divf %284, %285 : vector<2x64xf32>
    %287 = vector.extract_strided_slice %260 {offsets = [0, 128], sizes = [2, 64], strides = [1, 1]} : vector<2x192xf32> to vector<2x64xf32>
    %288 = vector.extract_strided_slice %270 {offsets = [0, 128], sizes = [2, 64], strides = [1, 1]} : vector<2x192xf32> to vector<2x64xf32>
    %289 = arith.mulf %278, %288 : vector<2x64xf32>
    %290 = arith.addf %287, %289 : vector<2x64xf32>
    %291 = math.tanh %290 : vector<2x64xf32>
    %cst_105 = arith.constant 1.000000e+00 : f32
    %292 = vector.broadcast %cst_105 : f32 to vector<2x64xf32>
    %293 = arith.subf %292, %286 : vector<2x64xf32>
    %294 = arith.mulf %293, %291 : vector<2x64xf32>
    %295 = arith.mulf %286, %265 : vector<2x64xf32>
    %296 = arith.addf %294, %295 : vector<2x64xf32>
    %297 = vector.extract_strided_slice %0 {offsets = [0, 0], sizes = [2, 1], strides = [1, 1]} : vector<2x2xf32> to vector<2x1xf32>
    %cst_106 = arith.constant 1.000000e+00 : f32
    %298 = vector.broadcast %cst_106 : f32 to vector<2x1xf32>
    %299 = arith.subf %298, %297 : vector<2x1xf32>
    %300 = vector.broadcast %299 : vector<2x1xf32> to vector<2x32xf32>
    %301 = arith.mulf %263, %300 : vector<2x32xf32>
    %302 = vector.extract_strided_slice %296 {offsets = [0, 0], sizes = [2, 32], strides = [1, 1]} : vector<2x64xf32> to vector<2x32xf32>
    %303 = vector.broadcast %297 : vector<2x1xf32> to vector<2x32xf32>
    %304 = arith.mulf %302, %303 : vector<2x32xf32>
    %305 = arith.addf %301, %304 : vector<2x32xf32>
    %cst_107 = arith.constant 1.000000e+00 : f32
    %306 = vector.broadcast %cst_107 : f32 to vector<2x1xf32>
    %307 = arith.subf %306, %297 : vector<2x1xf32>
    %308 = vector.broadcast %307 : vector<2x1xf32> to vector<2x32xf32>
    %309 = arith.mulf %264, %308 : vector<2x32xf32>
    %310 = vector.extract_strided_slice %296 {offsets = [0, 32], sizes = [2, 32], strides = [1, 1]} : vector<2x64xf32> to vector<2x32xf32>
    %311 = vector.broadcast %297 : vector<2x1xf32> to vector<2x32xf32>
    %312 = arith.mulf %310, %311 : vector<2x32xf32>
    %313 = arith.addf %309, %312 : vector<2x32xf32>
    %314 = vector.extract_strided_slice %25 {offsets = [0, 0], sizes = [2, 1], strides = [1, 1]} : vector<2x2xf32> to vector<2x1xf32>
    %315 = vector.broadcast %314 : vector<2x1xf32> to vector<2x32xf32>
    %316 = arith.mulf %315, %305 : vector<2x32xf32>
    %317 = arith.addf %261, %316 : vector<2x32xf32>
    %318 = vector.broadcast %314 : vector<2x1xf32> to vector<2x32xf32>
    %319 = arith.mulf %318, %313 : vector<2x32xf32>
    %320 = arith.addf %262, %319 : vector<2x32xf32>
    %321 = vector.extract_strided_slice %26 {offsets = [0, 32], sizes = [2, 32], strides = [1, 1]} : vector<2x64xf32> to vector<2x32xf32>
    %322 = vector.extract_strided_slice %27 {offsets = [0, 32], sizes = [2, 32], strides = [1, 1]} : vector<2x64xf32> to vector<2x32xf32>
    %323 = tpu.concatenate %321, %322 in 1 : vector<2x32xf32>, vector<2x32xf32> -> vector<2x64xf32>
    %c0_108 = arith.constant 0 : index
    %c0_109 = arith.constant 0 : index
    %324 = vector.load %arg19[%c0_108, %c0_109] : memref<64x192xf32, #tpu.memory_space<vmem>>, vector<64x192xf32>
    %cst_110 = arith.constant dense<0.000000e+00> : vector<2x192xf32>
    %325 = tpu.matmul %323, %324, %cst_110 {dimension_numbers = #tpu.dot_dimension_numbers<[1], [0], [0], [1], [0, 0, 1, 1], [], []>, precision = #tpu.contract_precision<fp32>} : vector<2x64xf32>, vector<64x192xf32>, vector<2x192xf32> -> vector<2x192xf32>
    %c0_111 = arith.constant 0 : index
    %c0_112 = arith.constant 0 : index
    %326 = vector.load %arg20[%c0_111, %c0_112] : memref<1x192xf32, #tpu.memory_space<vmem>>, vector<1x192xf32>
    %327 = vector.broadcast %326 : vector<1x192xf32> to vector<2x192xf32>
    %328 = arith.addf %325, %327 : vector<2x192xf32>
    %329 = vector.extract_strided_slice %260 {offsets = [0, 0], sizes = [2, 64], strides = [1, 1]} : vector<2x192xf32> to vector<2x64xf32>
    %330 = vector.extract_strided_slice %328 {offsets = [0, 0], sizes = [2, 64], strides = [1, 1]} : vector<2x192xf32> to vector<2x64xf32>
    %331 = arith.addf %329, %330 : vector<2x64xf32>
    %332 = arith.negf %331 : vector<2x64xf32>
    %333 = math.exp %332 : vector<2x64xf32>
    %cst_113 = arith.constant 1.000000e+00 : f32
    %334 = vector.broadcast %cst_113 : f32 to vector<2x64xf32>
    %335 = arith.addf %334, %333 : vector<2x64xf32>
    %336 = arith.divf %334, %335 : vector<2x64xf32>
    %337 = vector.extract_strided_slice %260 {offsets = [0, 64], sizes = [2, 64], strides = [1, 1]} : vector<2x192xf32> to vector<2x64xf32>
    %338 = vector.extract_strided_slice %328 {offsets = [0, 64], sizes = [2, 64], strides = [1, 1]} : vector<2x192xf32> to vector<2x64xf32>
    %339 = arith.addf %337, %338 : vector<2x64xf32>
    %340 = arith.negf %339 : vector<2x64xf32>
    %341 = math.exp %340 : vector<2x64xf32>
    %cst_114 = arith.constant 1.000000e+00 : f32
    %342 = vector.broadcast %cst_114 : f32 to vector<2x64xf32>
    %343 = arith.addf %342, %341 : vector<2x64xf32>
    %344 = arith.divf %342, %343 : vector<2x64xf32>
    %345 = vector.extract_strided_slice %260 {offsets = [0, 128], sizes = [2, 64], strides = [1, 1]} : vector<2x192xf32> to vector<2x64xf32>
    %346 = vector.extract_strided_slice %328 {offsets = [0, 128], sizes = [2, 64], strides = [1, 1]} : vector<2x192xf32> to vector<2x64xf32>
    %347 = arith.mulf %336, %346 : vector<2x64xf32>
    %348 = arith.addf %345, %347 : vector<2x64xf32>
    %349 = math.tanh %348 : vector<2x64xf32>
    %cst_115 = arith.constant 1.000000e+00 : f32
    %350 = vector.broadcast %cst_115 : f32 to vector<2x64xf32>
    %351 = arith.subf %350, %344 : vector<2x64xf32>
    %352 = arith.mulf %351, %349 : vector<2x64xf32>
    %353 = arith.mulf %344, %323 : vector<2x64xf32>
    %354 = arith.addf %352, %353 : vector<2x64xf32>
    %355 = vector.extract_strided_slice %0 {offsets = [0, 1], sizes = [2, 1], strides = [1, 1]} : vector<2x2xf32> to vector<2x1xf32>
    %cst_116 = arith.constant 1.000000e+00 : f32
    %356 = vector.broadcast %cst_116 : f32 to vector<2x1xf32>
    %357 = arith.subf %356, %355 : vector<2x1xf32>
    %358 = vector.broadcast %357 : vector<2x1xf32> to vector<2x32xf32>
    %359 = arith.mulf %321, %358 : vector<2x32xf32>
    %360 = vector.extract_strided_slice %354 {offsets = [0, 0], sizes = [2, 32], strides = [1, 1]} : vector<2x64xf32> to vector<2x32xf32>
    %361 = vector.broadcast %355 : vector<2x1xf32> to vector<2x32xf32>
    %362 = arith.mulf %360, %361 : vector<2x32xf32>
    %363 = arith.addf %359, %362 : vector<2x32xf32>
    %cst_117 = arith.constant 1.000000e+00 : f32
    %364 = vector.broadcast %cst_117 : f32 to vector<2x1xf32>
    %365 = arith.subf %364, %355 : vector<2x1xf32>
    %366 = vector.broadcast %365 : vector<2x1xf32> to vector<2x32xf32>
    %367 = arith.mulf %322, %366 : vector<2x32xf32>
    %368 = vector.extract_strided_slice %354 {offsets = [0, 32], sizes = [2, 32], strides = [1, 1]} : vector<2x64xf32> to vector<2x32xf32>
    %369 = vector.broadcast %355 : vector<2x1xf32> to vector<2x32xf32>
    %370 = arith.mulf %368, %369 : vector<2x32xf32>
    %371 = arith.addf %367, %370 : vector<2x32xf32>
    %372 = vector.extract_strided_slice %25 {offsets = [0, 1], sizes = [2, 1], strides = [1, 1]} : vector<2x2xf32> to vector<2x1xf32>
    %373 = vector.broadcast %372 : vector<2x1xf32> to vector<2x32xf32>
    %374 = arith.mulf %373, %363 : vector<2x32xf32>
    %375 = arith.addf %317, %374 : vector<2x32xf32>
    %376 = vector.broadcast %372 : vector<2x1xf32> to vector<2x32xf32>
    %377 = arith.mulf %376, %371 : vector<2x32xf32>
    %378 = arith.addf %320, %377 : vector<2x32xf32>
    %379 = tpu.concatenate %305, %313, %363, %371 in 1 : vector<2x32xf32>, vector<2x32xf32>, vector<2x32xf32>, vector<2x32xf32> -> vector<2x128xf32>
    %c0_118 = arith.constant 0 : index
    %c0_119 = arith.constant 0 : index
    %380 = vector.load %arg31[%c0_118, %c0_119] : memref<2x128xf32, #tpu.memory_space<vmem>>, vector<2x128xf32>
    tpu.vector_store %arg31[%c0_118, %c0_119], %379 {strides = array<i32>} : memref<2x128xf32, #tpu.memory_space<vmem>>, vector<2x128xf32>,
    %381 = tpu.concatenate %375, %378 in 1 : vector<2x32xf32>, vector<2x32xf32> -> vector<2x64xf32>
    %c0_120 = arith.constant 0 : index
    %c0_121 = arith.constant 0 : index
    %382 = vector.load %arg21[%c0_120, %c0_121] : memref<64x192xf32, #tpu.memory_space<vmem>>, vector<64x192xf32>
    %cst_122 = arith.constant dense<0.000000e+00> : vector<2x192xf32>
    %383 = tpu.matmul %381, %382, %cst_122 {dimension_numbers = #tpu.dot_dimension_numbers<[1], [0], [0], [1], [0, 0, 1, 1], [], []>, precision = #tpu.contract_precision<fp32>} : vector<2x64xf32>, vector<64x192xf32>, vector<2x192xf32> -> vector<2x192xf32>
    %c0_123 = arith.constant 0 : index
    %c0_124 = arith.constant 0 : index
    %384 = vector.load %arg22[%c0_123, %c0_124] : memref<1x192xf32, #tpu.memory_space<vmem>>, vector<1x192xf32>
    %385 = vector.broadcast %384 : vector<1x192xf32> to vector<2x192xf32>
    %386 = arith.addf %383, %385 : vector<2x192xf32>
    %c0_125 = arith.constant 0 : index
    %c0_126 = arith.constant 0 : index
    %387 = vector.load %arg9[%c0_125, %c0_126] : memref<2x32xf32, #tpu.memory_space<vmem>>, vector<2x32xf32>
    %c0_127 = arith.constant 0 : index
    %c0_128 = arith.constant 0 : index
    %388 = vector.load %arg10[%c0_127, %c0_128] : memref<2x32xf32, #tpu.memory_space<vmem>>, vector<2x32xf32>
    %389 = tpu.concatenate %387, %388 in 1 : vector<2x32xf32>, vector<2x32xf32> -> vector<2x64xf32>
    %c0_129 = arith.constant 0 : index
    %c0_130 = arith.constant 0 : index
    %390 = vector.load %arg23[%c0_129, %c0_130] : memref<64x192xf32, #tpu.memory_space<vmem>>, vector<64x192xf32>
    %cst_131 = arith.constant dense<0.000000e+00> : vector<2x192xf32>
    %391 = tpu.matmul %389, %390, %cst_131 {dimension_numbers = #tpu.dot_dimension_numbers<[1], [0], [0], [1], [0, 0, 1, 1], [], []>, precision = #tpu.contract_precision<fp32>} : vector<2x64xf32>, vector<64x192xf32>, vector<2x192xf32> -> vector<2x192xf32>
    %c0_132 = arith.constant 0 : index
    %c0_133 = arith.constant 0 : index
    %392 = vector.load %arg24[%c0_132, %c0_133] : memref<1x192xf32, #tpu.memory_space<vmem>>, vector<1x192xf32>
    %393 = vector.broadcast %392 : vector<1x192xf32> to vector<2x192xf32>
    %394 = arith.addf %391, %393 : vector<2x192xf32>
    %395 = vector.extract_strided_slice %386 {offsets = [0, 0], sizes = [2, 64], strides = [1, 1]} : vector<2x192xf32> to vector<2x64xf32>
    %396 = vector.extract_strided_slice %394 {offsets = [0, 0], sizes = [2, 64], strides = [1, 1]} : vector<2x192xf32> to vector<2x64xf32>
    %397 = arith.addf %395, %396 : vector<2x64xf32>
    %398 = arith.negf %397 : vector<2x64xf32>
    %399 = math.exp %398 : vector<2x64xf32>
    %cst_134 = arith.constant 1.000000e+00 : f32
    %400 = vector.broadcast %cst_134 : f32 to vector<2x64xf32>
    %401 = arith.addf %400, %399 : vector<2x64xf32>
    %402 = arith.divf %400, %401 : vector<2x64xf32>
    %403 = vector.extract_strided_slice %386 {offsets = [0, 64], sizes = [2, 64], strides = [1, 1]} : vector<2x192xf32> to vector<2x64xf32>
    %404 = vector.extract_strided_slice %394 {offsets = [0, 64], sizes = [2, 64], strides = [1, 1]} : vector<2x192xf32> to vector<2x64xf32>
    %405 = arith.addf %403, %404 : vector<2x64xf32>
    %406 = arith.negf %405 : vector<2x64xf32>
    %407 = math.exp %406 : vector<2x64xf32>
    %cst_135 = arith.constant 1.000000e+00 : f32
    %408 = vector.broadcast %cst_135 : f32 to vector<2x64xf32>
    %409 = arith.addf %408, %407 : vector<2x64xf32>
    %410 = arith.divf %408, %409 : vector<2x64xf32>
    %411 = vector.extract_strided_slice %386 {offsets = [0, 128], sizes = [2, 64], strides = [1, 1]} : vector<2x192xf32> to vector<2x64xf32>
    %412 = vector.extract_strided_slice %394 {offsets = [0, 128], sizes = [2, 64], strides = [1, 1]} : vector<2x192xf32> to vector<2x64xf32>
    %413 = arith.mulf %402, %412 : vector<2x64xf32>
    %414 = arith.addf %411, %413 : vector<2x64xf32>
    %415 = math.tanh %414 : vector<2x64xf32>
    %cst_136 = arith.constant 1.000000e+00 : f32
    %416 = vector.broadcast %cst_136 : f32 to vector<2x64xf32>
    %417 = arith.subf %416, %410 : vector<2x64xf32>
    %418 = arith.mulf %417, %415 : vector<2x64xf32>
    %419 = arith.mulf %410, %389 : vector<2x64xf32>
    %420 = arith.addf %418, %419 : vector<2x64xf32>
    %c0_137 = arith.constant 0 : index
    %c0_138 = arith.constant 0 : index
    %421 = vector.load %arg30[%c0_137, %c0_138] : memref<2x64xf32, #tpu.memory_space<vmem>>, vector<2x64xf32>
    tpu.vector_store %arg30[%c0_137, %c0_138], %108 {strides = array<i32>} : memref<2x64xf32, #tpu.memory_space<vmem>>, vector<2x64xf32>,
    %c0_139 = arith.constant 0 : index
    %c0_140 = arith.constant 0 : index
    %422 = vector.load %arg32[%c0_139, %c0_140] : memref<2x64xf32, #tpu.memory_space<vmem>>, vector<2x64xf32>
    tpu.vector_store %arg32[%c0_139, %c0_140], %420 {strides = array<i32>} : memref<2x64xf32, #tpu.memory_space<vmem>>, vector<2x64xf32>,
    return
  }
  func.func @transform_0(%arg0: i32) -> (i32, i32) {
    %c0_i32 = arith.constant 0 : i32
    %c0_i32_0 = arith.constant 0 : i32
    %c0_i32_1 = arith.constant 0 : i32
    return %c0_i32, %c0_i32_0 : i32, i32
  }
  func.func @transform_1(%arg0: i32) -> (i32, i32) {
    %c0_i32 = arith.constant 0 : i32
    %c0_i32_0 = arith.constant 0 : i32
    %c0_i32_1 = arith.constant 0 : i32
    return %c0_i32, %c0_i32_0 : i32, i32
  }
  func.func @transform_2(%arg0: i32) -> (i32, i32) {
    %c0_i32 = arith.constant 0 : i32
    %c0_i32_0 = arith.constant 0 : i32
    %c0_i32_1 = arith.constant 0 : i32
    return %c0_i32, %c0_i32_0 : i32, i32
  }
  func.func @transform_3(%arg0: i32) -> (i32, i32, i32) {
    %c0_i32 = arith.constant 0 : i32
    %c0_i32_0 = arith.constant 0 : i32
    %c0_i32_1 = arith.constant 0 : i32
    %c0_i32_2 = arith.constant 0 : i32
    return %c0_i32, %c0_i32_0, %c0_i32_1 : i32, i32, i32
  }
  func.func @transform_4(%arg0: i32) -> (i32, i32, i32) {
    %c0_i32 = arith.constant 0 : i32
    %c0_i32_0 = arith.constant 0 : i32
    %c0_i32_1 = arith.constant 0 : i32
    %c0_i32_2 = arith.constant 0 : i32
    return %c0_i32, %c0_i32_0, %c0_i32_1 : i32, i32, i32
  }
  func.func @transform_5(%arg0: i32) -> (i32, i32) {
    %c0_i32 = arith.constant 0 : i32
    %c0_i32_0 = arith.constant 0 : i32
    %c0_i32_1 = arith.constant 0 : i32
    return %c0_i32, %c0_i32_0 : i32, i32
  }
  func.func @transform_6(%arg0: i32) -> (i32, i32) {
    %c0_i32 = arith.constant 0 : i32
    %c0_i32_0 = arith.constant 0 : i32
    %c0_i32_1 = arith.constant 0 : i32
    return %c0_i32, %c0_i32_0 : i32, i32
  }
  func.func @transform_7(%arg0: i32) -> (i32, i32) {
    %c0_i32 = arith.constant 0 : i32
    %c0_i32_0 = arith.constant 0 : i32
    %c0_i32_1 = arith.constant 0 : i32
    return %c0_i32, %c0_i32_0 : i32, i32
  }
  func.func @transform_8(%arg0: i32) -> (i32, i32) {
    %c0_i32 = arith.constant 0 : i32
    %c0_i32_0 = arith.constant 0 : i32
    %c0_i32_1 = arith.constant 0 : i32
    return %c0_i32, %c0_i32_0 : i32, i32
  }
  func.func @transform_9(%arg0: i32) -> (i32, i32) {
    %c0_i32 = arith.constant 0 : i32
    %c0_i32_0 = arith.constant 0 : i32
    %c0_i32_1 = arith.constant 0 : i32
    return %c0_i32, %c0_i32_0 : i32, i32
  }
  func.func @transform_10(%arg0: i32) -> (i32, i32) {
    %c0_i32 = arith.constant 0 : i32
    %c0_i32_0 = arith.constant 0 : i32
    %c0_i32_1 = arith.constant 0 : i32
    return %c0_i32, %c0_i32_0 : i32, i32
  }
  func.func @transform_11(%arg0: i32) -> (i32, i32) {
    %c0_i32 = arith.constant 0 : i32
    %c0_i32_0 = arith.constant 0 : i32
    %c0_i32_1 = arith.constant 0 : i32
    return %c0_i32, %c0_i32_0 : i32, i32
  }
  func.func @transform_12(%arg0: i32) -> (i32, i32) {
    %c0_i32 = arith.constant 0 : i32
    %c0_i32_0 = arith.constant 0 : i32
    %c0_i32_1 = arith.constant 0 : i32
    return %c0_i32, %c0_i32_0 : i32, i32
  }
  func.func @transform_13(%arg0: i32) -> (i32, i32) {
    %c0_i32 = arith.constant 0 : i32
    %c0_i32_0 = arith.constant 0 : i32
    %c0_i32_1 = arith.constant 0 : i32
    return %c0_i32, %c0_i32_0 : i32, i32
  }
  func.func @transform_14(%arg0: i32) -> (i32, i32) {
    %c0_i32 = arith.constant 0 : i32
    %c0_i32_0 = arith.constant 0 : i32
    %c0_i32_1 = arith.constant 0 : i32
    return %c0_i32, %c0_i32_0 : i32, i32
  }
  func.func @transform_15(%arg0: i32) -> (i32, i32) {
    %c0_i32 = arith.constant 0 : i32
    %c0_i32_0 = arith.constant 0 : i32
    %c0_i32_1 = arith.constant 0 : i32
    return %c0_i32, %c0_i32_0 : i32, i32
  }
  func.func @transform_16(%arg0: i32) -> (i32, i32) {
    %c0_i32 = arith.constant 0 : i32
    %c0_i32_0 = arith.constant 0 : i32
    %c0_i32_1 = arith.constant 0 : i32
    return %c0_i32, %c0_i32_0 : i32, i32
  }
  func.func @transform_17(%arg0: i32) -> (i32, i32) {
    %c0_i32 = arith.constant 0 : i32
    %c0_i32_0 = arith.constant 0 : i32
    %c0_i32_1 = arith.constant 0 : i32
    return %c0_i32, %c0_i32_0 : i32, i32
  }
  func.func @transform_18(%arg0: i32) -> (i32, i32) {
    %c0_i32 = arith.constant 0 : i32
    %c0_i32_0 = arith.constant 0 : i32
    %c0_i32_1 = arith.constant 0 : i32
    return %c0_i32, %c0_i32_0 : i32, i32
  }
  func.func @transform_19(%arg0: i32) -> (i32, i32) {
    %c0_i32 = arith.constant 0 : i32
    %c0_i32_0 = arith.constant 0 : i32
    %c0_i32_1 = arith.constant 0 : i32
    return %c0_i32, %c0_i32_0 : i32, i32
  }
  func.func @transform_20(%arg0: i32) -> (i32, i32) {
    %c0_i32 = arith.constant 0 : i32
    %c0_i32_0 = arith.constant 0 : i32
    %c0_i32_1 = arith.constant 0 : i32
    return %c0_i32, %c0_i32_0 : i32, i32
  }
  func.func @transform_21(%arg0: i32) -> (i32, i32) {
    %c0_i32 = arith.constant 0 : i32
    %c0_i32_0 = arith.constant 0 : i32
    %c0_i32_1 = arith.constant 0 : i32
    return %c0_i32, %c0_i32_0 : i32, i32
  }
  func.func @transform_22(%arg0: i32) -> (i32, i32) {
    %c0_i32 = arith.constant 0 : i32
    %c0_i32_0 = arith.constant 0 : i32
    %c0_i32_1 = arith.constant 0 : i32
    return %c0_i32, %c0_i32_0 : i32, i32
  }
  func.func @transform_23(%arg0: i32) -> (i32, i32) {
    %c0_i32 = arith.constant 0 : i32
    %c0_i32_0 = arith.constant 0 : i32
    %c0_i32_1 = arith.constant 0 : i32
    return %c0_i32, %c0_i32_0 : i32, i32
  }
  func.func @transform_24(%arg0: i32) -> (i32, i32) {
    %c0_i32 = arith.constant 0 : i32
    %c0_i32_0 = arith.constant 0 : i32
    %c0_i32_1 = arith.constant 0 : i32
    return %c0_i32, %c0_i32_0 : i32, i32
  }
  func.func @transform_25(%arg0: i32) -> (i32, i32) {
    %c0_i32 = arith.constant 0 : i32
    %c0_i32_0 = arith.constant 0 : i32
    %c0_i32_1 = arith.constant 0 : i32
    return %c0_i32, %c0_i32_0 : i32, i32
  }
  func.func @transform_26(%arg0: i32) -> (i32, i32) {
    %c0_i32 = arith.constant 0 : i32
    %c0_i32_0 = arith.constant 0 : i32
    %c0_i32_1 = arith.constant 0 : i32
    return %c0_i32, %c0_i32_0 : i32, i32
  }
  func.func @transform_27(%arg0: i32) -> (i32, i32) {
    %c0_i32 = arith.constant 0 : i32
    %c0_i32_0 = arith.constant 0 : i32
    %c0_i32_1 = arith.constant 0 : i32
    return %c0_i32, %c0_i32_0 : i32, i32
  }
  func.func @transform_28(%arg0: i32) -> (i32, i32) {
    %c0_i32 = arith.constant 0 : i32
    %c0_i32_0 = arith.constant 0 : i32
    %c0_i32_1 = arith.constant 0 : i32
    return %c0_i32, %c0_i32_0 : i32, i32
  }
  func.func @transform_29(%arg0: i32) -> (i32, i32) {
    %c0_i32 = arith.constant 0 : i32
    %c0_i32_0 = arith.constant 0 : i32
    %c0_i32_1 = arith.constant 0 : i32
    return %c0_i32, %c0_i32_0 : i32, i32
  }
  func.func @transform_30(%arg0: i32) -> (i32, i32) {
    %c0_i32 = arith.constant 0 : i32
    %c0_i32_0 = arith.constant 0 : i32
    %c0_i32_1 = arith.constant 0 : i32
    return %c0_i32, %c0_i32_0 : i32, i32
  }
  func.func @transform_31(%arg0: i32) -> (i32, i32) {
    %c0_i32 = arith.constant 0 : i32
    %c0_i32_0 = arith.constant 0 : i32
    %c0_i32_1 = arith.constant 0 : i32
    return %c0_i32, %c0_i32_0 : i32, i32
  }
  func.func @transform_32(%arg0: i32) -> (i32, i32) {
    %c0_i32 = arith.constant 0 : i32
    %c0_i32_0 = arith.constant 0 : i32
    %c0_i32_1 = arith.constant 0 : i32
    return %c0_i32, %c0_i32_0 : i32, i32
  }
}

</mosaic_0001>

<llo_original>
// kernel: tpu_custom_call.1
$region0: #{tpu_custom_call.1}
  #allocation0 [shape = 'u32[]', space=smem, size = 0x4, offset = 0x4, fixed_abs, tag = 'smem constant byte address 0x4 - core index']
  #allocation1 [shape = 'u32[144,128]{1,0:T(1,128)}', space=vmem, size = 0x12000, scoped, tag = 'internal scratch']
  %s0 = inlined_call_operand.smem [shape: u32[33], index: -1, kind: input, shape index: {}]
  %s1 = sld [smem:[%s0]]
  %s2 = scalar_lea.smem %s0, 1
  %s3 = sld [smem:[%s2]]
  %s4 = scalar_lea.smem %s0, 2
  %s5 = sld [smem:[%s4]]
  %s6 = scalar_lea.smem %s0, 3
  %s7 = sld [smem:[%s6]]
  %s8 = scalar_lea.smem %s0, 4
  %s9 = sld [smem:[%s8]]
  %s10 = scalar_lea.smem %s0, 5
  %s11 = sld [smem:[%s10]]
  %s12 = scalar_lea.smem %s0, 6
  %s13 = sld [smem:[%s12]]
  %s14 = scalar_lea.smem %s0, 7
  %s15 = sld [smem:[%s14]]
  %s16 = scalar_lea.smem %s0, 8
  %s17 = sld [smem:[%s16]]
  %s18 = scalar_lea.smem %s0, 9
  %s19 = sld [smem:[%s18]]
  %s20 = scalar_lea.smem %s0, 10
  %s21 = sld [smem:[%s20]]
  %s22 = scalar_lea.smem %s0, 11
  %s23 = sld [smem:[%s22]]
  %s24 = scalar_lea.smem %s0, 12
  %s25 = sld [smem:[%s24]]
  %s26 = scalar_lea.smem %s0, 13
  %s27 = sld [smem:[%s26]]
  %s28 = scalar_lea.smem %s0, 14
  %s29 = sld [smem:[%s28]]
  %s30 = scalar_lea.smem %s0, 15
  %s31 = sld [smem:[%s30]]
  %s32 = scalar_lea.smem %s0, 16
  %s33 = sld [smem:[%s32]]
  %s34 = scalar_lea.smem %s0, 17
  %s35 = sld [smem:[%s34]]
  %s36 = scalar_lea.smem %s0, 18
  %s37 = sld [smem:[%s36]]
  %s38 = scalar_lea.smem %s0, 19
  %s39 = sld [smem:[%s38]]
  %s40 = scalar_lea.smem %s0, 20
  %s41 = sld [smem:[%s40]]
  %s42 = scalar_lea.smem %s0, 21
  %s43 = sld [smem:[%s42]]
  %s44 = scalar_lea.smem %s0, 22
  %s45 = sld [smem:[%s44]]
  %s46 = scalar_lea.smem %s0, 23
  %s47 = sld [smem:[%s46]]
  %s48 = scalar_lea.smem %s0, 24
  %s49 = sld [smem:[%s48]]
  %s50 = scalar_lea.smem %s0, 25
  %s51 = sld [smem:[%s50]]
  %s52 = scalar_lea.smem %s0, 26
  %s53 = sld [smem:[%s52]]
  %s54 = scalar_lea.smem %s0, 27
  %s55 = sld [smem:[%s54]]
  %s56 = scalar_lea.smem %s0, 28
  %s57 = sld [smem:[%s56]]
  %s58 = scalar_lea.smem %s0, 29
  %s59 = sld [smem:[%s58]]
  %s60 = scalar_lea.smem %s0, 30
  %s61 = sld [smem:[%s60]]
  %s62 = scalar_lea.smem %s0, 31
  %s63 = sld [smem:[%s62]]
  %s64 = scalar_lea.smem %s0, 32
  %s65 = sld [smem:[%s64]]
  %66 = xla_tuple %s59, %s61, %s63, %s65
  %s67 = sld [smem:[#allocation0]]
  $region150: #{tpu_custom_call.1} parent=0
    _
  %s69 = ssub.s32 1, %s67
  %s70 = scalar_select 0, %s69, %s67
  $region1: #{tpu_custom_call.1} parent=0
    #allocation2 [shape = 'u8[1024]{0}', space=vmem, size = 0x400, scoped, tag = 'output window, operand 0, single buffered']
    #allocation3 [shape = 's32[1]{0}', space=sflag, size = 0x4, scoped, tag = 'scoped memory for tpu_custom_call.1']
    #allocation4 [shape = 'u8[1024]{0}', space=vmem, size = 0x400, scoped, tag = 'output window, operand 1, single buffered']
    #allocation5 [shape = 's32[1]{0}', space=sflag, size = 0x4, scoped, tag = 'scoped memory for tpu_custom_call.1']
    #allocation6 [shape = 'u8[1024]{0}', space=vmem, size = 0x400, scoped, tag = 'output window, operand 2, single buffered']
    %71 = vsyncpa [#allocation3], 0
    %72 = vsyncpa [#allocation5], 0
    // Predicated region
    $region2: #{tpu_custom_call.1} parent=1 // pred_check
      _
    $region3: #{tpu_custom_call.1} parent=1 // pred_check_branch
      %74 = sbr.rel (0) target = $region5
    $region4: #{tpu_custom_call.1} parent=1 // pred_region
      _
    $region5: #{tpu_custom_call.1} parent=1 // pred_fallthru
      _
    // Predicated region
    $region6: #{tpu_custom_call.1} parent=1 // pred_check
      _
    $region7: #{tpu_custom_call.1} parent=1 // pred_check_branch
      %76 = sbr.rel (0) target = $region9
    $region8: #{tpu_custom_call.1} parent=1 // pred_region
      _
    $region9: #{tpu_custom_call.1} parent=1 // pred_fallthru
      _
    // Predicated region
    $region10: #{tpu_custom_call.1} parent=1 // pred_check
      _
    $region11: #{tpu_custom_call.1} parent=1 // pred_check_branch
      %78 = sbr.rel (0) target = $region13
    $region12: #{tpu_custom_call.1} parent=1 // pred_region
      _
    $region13: #{tpu_custom_call.1} parent=1 // pred_fallthru
      _
    // Predicated region
    $region14: #{tpu_custom_call.1} parent=1 // pred_check
      _
    $region15: #{tpu_custom_call.1} parent=1 // pred_check_branch
      %80 = sbr.rel (0) target = $region17
    $region16: #{tpu_custom_call.1} parent=1 // pred_region
      _
    $region17: #{tpu_custom_call.1} parent=1 // pred_fallthru
      _
    // Predicated region
    $region18: #{tpu_custom_call.1} parent=1 // pred_check
      _
    $region19: #{tpu_custom_call.1} parent=1 // pred_check_branch
      %82 = sbr.rel (0) target = $region21
    $region20: #{tpu_custom_call.1} parent=1 // pred_region
      _
    $region21: #{tpu_custom_call.1} parent=1 // pred_fallthru
      _
    // Predicated region
    $region22: #{tpu_custom_call.1} parent=1 // pred_check
      _
    $region23: #{tpu_custom_call.1} parent=1 // pred_check_branch
      %84 = sbr.rel (0) target = $region25
    $region24: #{tpu_custom_call.1} parent=1 // pred_region
      _
    $region25: #{tpu_custom_call.1} parent=1 // pred_fallthru
      _
    // Predicated region
    $region26: #{tpu_custom_call.1} parent=1 // pred_check
      _
    $region27: #{tpu_custom_call.1} parent=1 // pred_check_branch
      %86 = sbr.rel (0) target = $region29
    $region28: #{tpu_custom_call.1} parent=1 // pred_region
      _
    $region29: #{tpu_custom_call.1} parent=1 // pred_fallthru
      _
    // Predicated region
    $region30: #{tpu_custom_call.1} parent=1 // pred_check
      _
    $region31: #{tpu_custom_call.1} parent=1 // pred_check_branch
      %88 = sbr.rel (0) target = $region33
    $region32: #{tpu_custom_call.1} parent=1 // pred_region
      _
    $region33: #{tpu_custom_call.1} parent=1 // pred_fallthru
      _
    // Predicated region
    $region34: #{tpu_custom_call.1} parent=1 // pred_check
      _
    $region35: #{tpu_custom_call.1} parent=1 // pred_check_branch
      %90 = sbr.rel (0) target = $region37
    $region36: #{tpu_custom_call.1} parent=1 // pred_region
      _
    $region37: #{tpu_custom_call.1} parent=1 // pred_fallthru
      _
    // Predicated region
    $region38: #{tpu_custom_call.1} parent=1 // pred_check
      _
    $region39: #{tpu_custom_call.1} parent=1 // pred_check_branch
      %92 = sbr.rel (0) target = $region41
    $region40: #{tpu_custom_call.1} parent=1 // pred_region
      _
    $region41: #{tpu_custom_call.1} parent=1 // pred_fallthru
      _
    // Predicated region
    $region42: #{tpu_custom_call.1} parent=1 // pred_check
      _
    $region43: #{tpu_custom_call.1} parent=1 // pred_check_branch
      %94 = sbr.rel (0) target = $region45
    $region44: #{tpu_custom_call.1} parent=1 // pred_region
      _
    $region45: #{tpu_custom_call.1} parent=1 // pred_fallthru
      _
    // Predicated region
    $region46: #{tpu_custom_call.1} parent=1 // pred_check
      _
    $region47: #{tpu_custom_call.1} parent=1 // pred_check_branch
      %96 = sbr.rel (0) target = $region49
    $region48: #{tpu_custom_call.1} parent=1 // pred_region
      _
    $region49: #{tpu_custom_call.1} parent=1 // pred_fallthru
      _
    // Predicated region
    $region50: #{tpu_custom_call.1} parent=1 // pred_check
      _
    $region51: #{tpu_custom_call.1} parent=1 // pred_check_branch
      %98 = sbr.rel (0) target = $region53
    $region52: #{tpu_custom_call.1} parent=1 // pred_region
      _
    $region53: #{tpu_custom_call.1} parent=1 // pred_fallthru
      _
    // Predicated region
    $region54: #{tpu_custom_call.1} parent=1 // pred_check
      _
    $region55: #{tpu_custom_call.1} parent=1 // pred_check_branch
      %100 = sbr.rel (0) target = $region57
    $region56: #{tpu_custom_call.1} parent=1 // pred_region
      _
    $region57: #{tpu_custom_call.1} parent=1 // pred_fallthru
      _
    // Predicated region
    $region58: #{tpu_custom_call.1} parent=1 // pred_check
      _
    $region59: #{tpu_custom_call.1} parent=1 // pred_check_branch
      %102 = sbr.rel (0) target = $region61
    $region60: #{tpu_custom_call.1} parent=1 // pred_region
      _
    $region61: #{tpu_custom_call.1} parent=1 // pred_fallthru
      _
    // Predicated region
    $region62: #{tpu_custom_call.1} parent=1 // pred_check
      _
    $region63: #{tpu_custom_call.1} parent=1 // pred_check_branch
      %104 = sbr.rel (0) target = $region65
    $region64: #{tpu_custom_call.1} parent=1 // pred_region
      _
    $region65: #{tpu_custom_call.1} parent=1 // pred_fallthru
      _
    // Predicated region
    $region66: #{tpu_custom_call.1} parent=1 // pred_check
      _
    $region67: #{tpu_custom_call.1} parent=1 // pred_check_branch
      %106 = sbr.rel (0) target = $region69
    $region68: #{tpu_custom_call.1} parent=1 // pred_region
      _
    $region69: #{tpu_custom_call.1} parent=1 // pred_fallthru
      _
    // Predicated region
    $region70: #{tpu_custom_call.1} parent=1 // pred_check
      _
    $region71: #{tpu_custom_call.1} parent=1 // pred_check_branch
      %108 = sbr.rel (0) target = $region73
    $region72: #{tpu_custom_call.1} parent=1 // pred_region
      _
    $region73: #{tpu_custom_call.1} parent=1 // pred_fallthru
      _
    // Predicated region
    $region74: #{tpu_custom_call.1} parent=1 // pred_check
      _
    $region75: #{tpu_custom_call.1} parent=1 // pred_check_branch
      %110 = sbr.rel (0) target = $region77
    $region76: #{tpu_custom_call.1} parent=1 // pred_region
      _
    $region77: #{tpu_custom_call.1} parent=1 // pred_fallthru
      _
    // Predicated region
    $region78: #{tpu_custom_call.1} parent=1 // pred_check
      _
    $region79: #{tpu_custom_call.1} parent=1 // pred_check_branch
      %112 = sbr.rel (0) target = $region81
    $region80: #{tpu_custom_call.1} parent=1 // pred_region
      _
    $region81: #{tpu_custom_call.1} parent=1 // pred_fallthru
      _
    // Predicated region
    $region82: #{tpu_custom_call.1} parent=1 // pred_check
      _
    $region83: #{tpu_custom_call.1} parent=1 // pred_check_branch
      %114 = sbr.rel (0) target = $region85
    $region84: #{tpu_custom_call.1} parent=1 // pred_region
      _
    $region85: #{tpu_custom_call.1} parent=1 // pred_fallthru
      _
    // Predicated region
    $region86: #{tpu_custom_call.1} parent=1 // pred_check
      _
    $region87: #{tpu_custom_call.1} parent=1 // pred_check_branch
      %116 = sbr.rel (0) target = $region89
    $region88: #{tpu_custom_call.1} parent=1 // pred_region
      _
    $region89: #{tpu_custom_call.1} parent=1 // pred_fallthru
      _
    // Predicated region
    $region90: #{tpu_custom_call.1} parent=1 // pred_check
      _
    $region91: #{tpu_custom_call.1} parent=1 // pred_check_branch
      %118 = sbr.rel (0) target = $region93
    $region92: #{tpu_custom_call.1} parent=1 // pred_region
      _
    $region93: #{tpu_custom_call.1} parent=1 // pred_fallthru
      _
    // Predicated region
    $region94: #{tpu_custom_call.1} parent=1 // pred_check
      _
    $region95: #{tpu_custom_call.1} parent=1 // pred_check_branch
      %120 = sbr.rel (0) target = $region97
    $region96: #{tpu_custom_call.1} parent=1 // pred_region
      _
    $region97: #{tpu_custom_call.1} parent=1 // pred_fallthru
      _
    // Predicated region
    $region98: #{tpu_custom_call.1} parent=1 // pred_check
      _
    $region99: #{tpu_custom_call.1} parent=1 // pred_check_branch
      %122 = sbr.rel (0) target = $region101
    $region100: #{tpu_custom_call.1} parent=1 // pred_region
      _
    $region101: #{tpu_custom_call.1} parent=1 // pred_fallthru
      _
    // Predicated region
    $region102: #{tpu_custom_call.1} parent=1 // pred_check
      _
    $region103: #{tpu_custom_call.1} parent=1 // pred_check_branch
      %124 = sbr.rel (0) target = $region105
    $region104: #{tpu_custom_call.1} parent=1 // pred_region
      _
    $region105: #{tpu_custom_call.1} parent=1 // pred_fallthru
      _
    // Predicated region
    $region106: #{tpu_custom_call.1} parent=1 // pred_check
      _
    $region107: #{tpu_custom_call.1} parent=1 // pred_check_branch
      %126 = sbr.rel (0) target = $region109
    $region108: #{tpu_custom_call.1} parent=1 // pred_region
      _
    $region109: #{tpu_custom_call.1} parent=1 // pred_fallthru
      _
    // Predicated region
    $region110: #{tpu_custom_call.1} parent=1 // pred_check
      _
    $region111: #{tpu_custom_call.1} parent=1 // pred_check_branch
      %128 = sbr.rel (0) target = $region113
    $region112: #{tpu_custom_call.1} parent=1 // pred_region
      _
    $region113: #{tpu_custom_call.1} parent=1 // pred_fallthru
      _
    // Predicated region
    $region114: #{tpu_custom_call.1} parent=1 // pred_check
      _
    $region115: #{tpu_custom_call.1} parent=1 // pred_check_branch
      %130 = sbr.rel (0) target = $region117
    $region116: #{tpu_custom_call.1} parent=1 // pred_region
      _
    $region117: #{tpu_custom_call.1} parent=1 // pred_fallthru
      _
    %v131 = vld [vmem:[%s5] sm:$0x3]
    %v132 = vld [vmem:[%s1] sm:$0x3]
    %v133 = vld [vmem:[%s3] sm:$0x3]
    %135 = vrot.lane.b32.xlu0 %v133, 32
    %v136 = vpop.permute.xlu0 %135
    %vm138 = vcmask 261120
    %v139 = vsel %vm138, %v132, %v136
    %v140 = vld [vmem:[%s21] sm:$0xff]
    %v141 = vld [vmem:[%s21 + $0x8] sm:$0xff]
    %v142 = vld [vmem:[%s21 + $0x10] sm:$0xff]
    %v143 = vld [vmem:[%s21 + $0x18] sm:$0xff]
    %v144 = vld [vmem:[%s21 + $0x20] sm:$0xff]
    %v145 = vld [vmem:[%s21 + $0x28] sm:$0xff]
    %v146 = vld [vmem:[%s21 + $0x30] sm:$0xff]
    %v147 = vld [vmem:[%s21 + $0x38] sm:$0xff]
    %v148 = vld [vmem:[%s23] sm:$0x1]
    %v150 = vlaneseq
    %v151 = vshrl.u32 %v150, 7
    %v152 = vsub.s32 0, %v151
    %v153 = vrot.slane %v148, %v152
    %vm155 = vcmask 523264
    %v157 = vsel %vm155, %v139, 0
    %159 = vmatprep.subr.mxu0 0.0
    %v160 = vand.u32 %v140, 4294901760
    %161 = vmatpush1.msra.mxu0 %v160
    %162 = vmatprep.subr.mxu0 0.0
    %v163 = vand.u32 %v141, 4294901760
    %164 = vmatpush1.msra.mxu0 %v163
    %165 = vmatprep.subr.mxu0 0.0
    %v166 = vand.u32 %v142, 4294901760
    %167 = vmatpush1.msra.mxu0 %v166
    %168 = vmatprep.subr.mxu0 0.0
    %v169 = vand.u32 %v143, 4294901760
    %170 = vmatpush1.msra.mxu0 %v169
    %171 = vmatprep.subr.mxu0 0.0
    %v172 = vand.u32 %v144, 4294901760
    %173 = vmatpush1.msra.mxu0 %v172
    %174 = vmatprep.subr.mxu0 0.0
    %v175 = vand.u32 %v145, 4294901760
    %176 = vmatpush1.msra.mxu0 %v175
    %177 = vmatprep.subr.mxu0 0.0
    %v178 = vand.u32 %v146, 4294901760
    %179 = vmatpush1.msra.mxu0 %v178
    %180 = vmatprep.subr.mxu0 0.0
    %v181 = vand.u32 %v147, 4294901760
    %182 = vmatpush1.msra.mxu0 %v181
    %183 = vmatprep.subr.mxu0 0.0
    %184 = vmatpush1.msra.mxu0 0.0
    %185 = vmatprep.subr.mxu0 0.0
    %186 = vmatpush1.msra.mxu0 0.0
    %187 = vmatprep.subr.mxu0 0.0
    %188 = vmatpush1.msra.mxu0 0.0
    %189 = vmatprep.subr.mxu0 0.0
    %190 = vmatpush1.msra.mxu0 0.0
    %191 = vmatprep.subr.mxu0 0.0
    %192 = vmatpush1.msra.mxu0 0.0
    %193 = vmatprep.subr.mxu0 0.0
    %194 = vmatpush1.msra.mxu0 0.0
    %195 = vmatprep.subr.mxu0 0.0
    %196 = vmatpush1.msra.mxu0 0.0
    %197 = vmatprep.subr.mxu0 0.0
    %198 = vmatpush1.msra.mxu0 0.0
    %199 = vmatprep.subr.mxu0 0.0
    %200 = vmatpush1.msra.mxu0 0.0
    %201 = vmatprep.subr.mxu0 0.0
    %202 = vmatpush1.msra.mxu0 0.0
    %203 = vmatprep.subr.mxu0 0.0
    %204 = vmatpush1.msra.mxu0 0.0
    %205 = vmatprep.subr.mxu0 0.0
    %206 = vmatpush1.msra.mxu0 0.0
    %207 = vmatprep.subr.mxu0 0.0
    %208 = vmatpush1.msra.mxu0 0.0
    %209 = vmatprep.subr.mxu0 0.0
    %210 = vmatpush1.msra.mxu0 0.0
    %211 = vmatprep.subr.mxu0 0.0
    %212 = vmatpush1.msra.mxu0 0.0
    %213 = vmatprep.subr.mxu0 0.0
    %214 = vmatpush1.msra.mxu0 0.0
    %215 = vmatprep.subr.mxu0 0.0
    %216 = vmatpush1.msra.mxu0 0.0
    %217 = vmatprep.subr.mxu0 0.0
    %218 = vmatpush1.msra.mxu0 0.0
    %219 = vmatprep.subr.mxu0 0.0
    %220 = vmatpush1.msra.mxu0 0.0
    %221 = vmatprep.subr.mxu0 0.0
    %222 = vmatpush1.msra.mxu0 0.0
    %223 = vmatprep.subr.mxu0 0.0
    %224 = vmatpush1.msra.mxu0 0.0
    %225 = vmatprep.subr.mxu0 0.0
    %226 = vmatpush1.msra.mxu0 0.0
    %227 = vmatprep.subr.mxu0 0.0
    %228 = vmatpush1.msra.mxu0 0.0
    %229 = vmatprep.subr.mxu0 0.0
    %230 = vmatpush1.msra.mxu0 0.0
    %231 = vmatprep.mubr.f32.mxu0 0.0
    %v232 = vand.u32 %v157, 4294901760
    %v233 = vsub.f32 %v157, %v232
    %v234 = vand.u32 %v233, 4294901760
    %v235 = vsub.f32 %v233, %v234
    %v236 = vand.u32 %v235, 4294901760
    %237 = vmatmul.mubr.f32.gmra.mrb[0].mxu0 %v236
    %v238 = vpop.f32.mrb[0].mxu0
    %v239 = vadd.f32 %v153, %v238
    %v240 = vpop.f32.mrb[0].mxu0
    %241 = vdwg.mxu0
    %242 = vmatprep.subr.mxu0 0.0
    %v243 = vand.u32 %v140, 4294901760
    %v244 = vsub.f32 %v140, %v243
    %v245 = vand.u32 %v244, 4294901760
    %v246 = vsub.f32 %v244, %v245
    %v247 = vand.u32 %v246, 4294901760
    %248 = vmatpush1.msra.mxu0 %v247
    %249 = vmatprep.subr.mxu0 0.0
    %v250 = vand.u32 %v141, 4294901760
    %v251 = vsub.f32 %v141, %v250
    %v252 = vand.u32 %v251, 4294901760
    %v253 = vsub.f32 %v251, %v252
    %v254 = vand.u32 %v253, 4294901760
    %255 = vmatpush1.msra.mxu0 %v254
    %256 = vmatprep.subr.mxu0 0.0
    %v257 = vand.u32 %v142, 4294901760
    %v258 = vsub.f32 %v142, %v257
    %v259 = vand.u32 %v258, 4294901760
    %v260 = vsub.f32 %v258, %v259
    %v261 = vand.u32 %v260, 4294901760
    %262 = vmatpush1.msra.mxu0 %v261
    %263 = vmatprep.subr.mxu0 0.0
    %v264 = vand.u32 %v143, 4294901760
    %v265 = vsub.f32 %v143, %v264
    %v266 = vand.u32 %v265, 4294901760
    %v267 = vsub.f32 %v265, %v266
    %v268 = vand.u32 %v267, 4294901760
    %269 = vmatpush1.msra.mxu0 %v268
    %270 = vmatprep.subr.mxu0 0.0
    %v271 = vand.u32 %v144, 4294901760
    %v272 = vsub.f32 %v144, %v271
    %v273 = vand.u32 %v272, 4294901760
    %v274 = vsub.f32 %v272, %v273
    %v275 = vand.u32 %v274, 4294901760
    %276 = vmatpush1.msra.mxu0 %v275
    %277 = vmatprep.subr.mxu0 0.0
    %v278 = vand.u32 %v145, 4294901760
    %v279 = vsub.f32 %v145, %v278
    %v280 = vand.u32 %v279, 4294901760
    %v281 = vsub.f32 %v279, %v280
    %v282 = vand.u32 %v281, 4294901760
    %283 = vmatpush1.msra.mxu0 %v282
    %284 = vmatprep.subr.mxu0 0.0
    %v285 = vand.u32 %v146, 4294901760
    %v286 = vsub.f32 %v146, %v285
    %v287 = vand.u32 %v286, 4294901760
    %v288 = vsub.f32 %v286, %v287
    %v289 = vand.u32 %v288, 4294901760
    %290 = vmatpush1.msra.mxu0 %v289
    %291 = vmatprep.subr.mxu0 0.0
    %v292 = vand.u32 %v147, 4294901760
    %v293 = vsub.f32 %v147, %v292
    %v294 = vand.u32 %v293, 4294901760
    %v295 = vsub.f32 %v293, %v294
    %v296 = vand.u32 %v295, 4294901760
    %297 = vmatpush1.msra.mxu0 %v296
    %298 = vmatprep.subr.mxu0 0.0
    %299 = vmatpush1.msra.mxu0 0.0
    %300 = vmatprep.subr.mxu0 0.0
    %301 = vmatpush1.msra.mxu0 0.0
    %302 = vmatprep.subr.mxu0 0.0
    %303 = vmatpush1.msra.mxu0 0.0
    %304 = vmatprep.subr.mxu0 0.0
    %305 = vmatpush1.msra.mxu0 0.0
    %306 = vmatprep.subr.mxu0 0.0
    %307 = vmatpush1.msra.mxu0 0.0
    %308 = vmatprep.subr.mxu0 0.0
    %309 = vmatpush1.msra.mxu0 0.0
    %310 = vmatprep.subr.mxu0 0.0
    %311 = vmatpush1.msra.mxu0 0.0
    %312 = vmatprep.subr.mxu0 0.0
    %313 = vmatpush1.msra.mxu0 0.0
    %314 = vmatprep.subr.mxu0 0.0
    %315 = vmatpush1.msra.mxu0 0.0
    %316 = vmatprep.subr.mxu0 0.0
    %317 = vmatpush1.msra.mxu0 0.0
    %318 = vmatprep.subr.mxu0 0.0
    %319 = vmatpush1.msra.mxu0 0.0
    %320 = vmatprep.subr.mxu0 0.0
    %321 = vmatpush1.msra.mxu0 0.0
    %322 = vmatprep.subr.mxu0 0.0
    %323 = vmatpush1.msra.mxu0 0.0
    %324 = vmatprep.subr.mxu0 0.0
    %325 = vmatpush1.msra.mxu0 0.0
    %326 = vmatprep.subr.mxu0 0.0
    %327 = vmatpush1.msra.mxu0 0.0
    %328 = vmatprep.subr.mxu0 0.0
    %329 = vmatpush1.msra.mxu0 0.0
    %330 = vmatprep.subr.mxu0 0.0
    %331 = vmatpush1.msra.mxu0 0.0
    %332 = vmatprep.subr.mxu0 0.0
    %333 = vmatpush1.msra.mxu0 0.0
    %334 = vmatprep.subr.mxu0 0.0
    %335 = vmatpush1.msra.mxu0 0.0
    %336 = vmatprep.subr.mxu0 0.0
    %337 = vmatpush1.msra.mxu0 0.0
    %338 = vmatprep.subr.mxu0 0.0
    %339 = vmatpush1.msra.mxu0 0.0
    %340 = vmatprep.subr.mxu0 0.0
    %341 = vmatpush1.msra.mxu0 0.0
    %342 = vmatprep.subr.mxu0 0.0
    %343 = vmatpush1.msra.mxu0 0.0
    %344 = vmatprep.subr.mxu0 0.0
    %345 = vmatpush1.msra.mxu0 0.0
    %346 = vmatprep.mubr.f32.mxu0 0.0
    %v347 = vand.u32 %v157, 4294901760
    %348 = vmatmul.mubr.f32.gmra.mrb[0].mxu0 %v347
    %v349 = vpop.f32.mrb[0].mxu0
    %v350 = vadd.f32 %v239, %v349
    %v351 = vpop.f32.mrb[0].mxu0
    %352 = vdwg.mxu0
    %353 = vmatprep.subr.mxu0 0.0
    %v354 = vand.u32 %v140, 4294901760
    %v355 = vsub.f32 %v140, %v354
    %356 = vmatpush1.msra.mxu0 %v355
    %357 = vmatprep.subr.mxu0 0.0
    %v358 = vand.u32 %v141, 4294901760
    %v359 = vsub.f32 %v141, %v358
    %360 = vmatpush1.msra.mxu0 %v359
    %361 = vmatprep.subr.mxu0 0.0
    %v362 = vand.u32 %v142, 4294901760
    %v363 = vsub.f32 %v142, %v362
    %364 = vmatpush1.msra.mxu0 %v363
    %365 = vmatprep.subr.mxu0 0.0
    %v366 = vand.u32 %v143, 4294901760
    %v367 = vsub.f32 %v143, %v366
    %368 = vmatpush1.msra.mxu0 %v367
    %369 = vmatprep.subr.mxu0 0.0
    %v370 = vand.u32 %v144, 4294901760
    %v371 = vsub.f32 %v144, %v370
    %372 = vmatpush1.msra.mxu0 %v371
    %373 = vmatprep.subr.mxu0 0.0
    %v374 = vand.u32 %v145, 4294901760
    %v375 = vsub.f32 %v145, %v374
    %376 = vmatpush1.msra.mxu0 %v375
    %377 = vmatprep.subr.mxu0 0.0
    %v378 = vand.u32 %v146, 4294901760
    %v379 = vsub.f32 %v146, %v378
    %380 = vmatpush1.msra.mxu0 %v379
    %381 = vmatprep.subr.mxu0 0.0
    %v382 = vand.u32 %v147, 4294901760
    %v383 = vsub.f32 %v147, %v382
    %384 = vmatpush1.msra.mxu0 %v383
    %385 = vmatprep.subr.mxu0 0.0
    %386 = vmatpush1.msra.mxu0 0.0
    %387 = vmatprep.subr.mxu0 0.0
    %388 = vmatpush1.msra.mxu0 0.0
    %389 = vmatprep.subr.mxu0 0.0
    %390 = vmatpush1.msra.mxu0 0.0
    %391 = vmatprep.subr.mxu0 0.0
    %392 = vmatpush1.msra.mxu0 0.0
    %393 = vmatprep.subr.mxu0 0.0
    %394 = vmatpush1.msra.mxu0 0.0
    %395 = vmatprep.subr.mxu0 0.0
    %396 = vmatpush1.msra.mxu0 0.0
    %397 = vmatprep.subr.mxu0 0.0
    %398 = vmatpush1.msra.mxu0 0.0
    %399 = vmatprep.subr.mxu0 0.0
    %400 = vmatpush1.msra.mxu0 0.0
    %401 = vmatprep.subr.mxu0 0.0
    %402 = vmatpush1.msra.mxu0 0.0
    %403 = vmatprep.subr.mxu0 0.0
    %404 = vmatpush1.msra.mxu0 0.0
    %405 = vmatprep.subr.mxu0 0.0
    %406 = vmatpush1.msra.mxu0 0.0
    %407 = vmatprep.subr.mxu0 0.0
    %408 = vmatpush1.msra.mxu0 0.0
    %409 = vmatprep.subr.mxu0 0.0
    %410 = vmatpush1.msra.mxu0 0.0
    %411 = vmatprep.subr.mxu0 0.0
    %412 = vmatpush1.msra.mxu0 0.0
    %413 = vmatprep.subr.mxu0 0.0
    %414 = vmatpush1.msra.mxu0 0.0
    %415 = vmatprep.subr.mxu0 0.0
    %416 = vmatpush1.msra.mxu0 0.0
    %417 = vmatprep.subr.mxu0 0.0
    %418 = vmatpush1.msra.mxu0 0.0
    %419 = vmatprep.subr.mxu0 0.0
    %420 = vmatpush1.msra.mxu0 0.0
    %421 = vmatprep.subr.mxu0 0.0
    %422 = vmatpush1.msra.mxu0 0.0
    %423 = vmatprep.subr.mxu0 0.0
    %424 = vmatpush1.msra.mxu0 0.0
    %425 = vmatprep.subr.mxu0 0.0
    %426 = vmatpush1.msra.mxu0 0.0
    %427 = vmatprep.subr.mxu0 0.0
    %428 = vmatpush1.msra.mxu0 0.0
    %429 = vmatprep.subr.mxu0 0.0
    %430 = vmatpush1.msra.mxu0 0.0
    %431 = vmatprep.subr.mxu0 0.0
    %432 = vmatpush1.msra.mxu0 0.0
    %433 = vmatprep.mubr.f32.mxu0 0.0
    %v434 = vand.u32 %v157, 4294901760
    %v435 = vsub.f32 %v157, %v434
    %436 = vmatmul.mubr.f32.gmra.mrb[0].mxu0 %v435
    %v437 = vpop.f32.mrb[0].mxu0
    %v438 = vadd.f32 %v350, %v437
    %v439 = vpop.f32.mrb[0].mxu0
    %440 = vdwg.mxu0
    %441 = vmatprep.subr.mxu0 0.0
    %v442 = vand.u32 %v140, 4294901760
    %443 = vmatpush1.msra.mxu0 %v442
    %444 = vmatprep.subr.mxu0 0.0
    %v445 = vand.u32 %v141, 4294901760
    %446 = vmatpush1.msra.mxu0 %v445
    %447 = vmatprep.subr.mxu0 0.0
    %v448 = vand.u32 %v142, 4294901760
    %449 = vmatpush1.msra.mxu0 %v448
    %450 = vmatprep.subr.mxu0 0.0
    %v451 = vand.u32 %v143, 4294901760
    %452 = vmatpush1.msra.mxu0 %v451
    %453 = vmatprep.subr.mxu0 0.0
    %v454 = vand.u32 %v144, 4294901760
    %455 = vmatpush1.msra.mxu0 %v454
    %456 = vmatprep.subr.mxu0 0.0
    %v457 = vand.u32 %v145, 4294901760
    %458 = vmatpush1.msra.mxu0 %v457
    %459 = vmatprep.subr.mxu0 0.0
    %v460 = vand.u32 %v146, 4294901760
    %461 = vmatpush1.msra.mxu0 %v460
    %462 = vmatprep.subr.mxu0 0.0
    %v463 = vand.u32 %v147, 4294901760
    %464 = vmatpush1.msra.mxu0 %v463
    %465 = vmatprep.subr.mxu0 0.0
    %466 = vmatpush1.msra.mxu0 0.0
    %467 = vmatprep.subr.mxu0 0.0
    %468 = vmatpush1.msra.mxu0 0.0
    %469 = vmatprep.subr.mxu0 0.0
    %470 = vmatpush1.msra.mxu0 0.0
    %471 = vmatprep.subr.mxu0 0.0
    %472 = vmatpush1.msra.mxu0 0.0
    %473 = vmatprep.subr.mxu0 0.0
    %474 = vmatpush1.msra.mxu0 0.0
    %475 = vmatprep.subr.mxu0 0.0
    %476 = vmatpush1.msra.mxu0 0.0
    %477 = vmatprep.subr.mxu0 0.0
    %478 = vmatpush1.msra.mxu0 0.0
    %479 = vmatprep.subr.mxu0 0.0
    %480 = vmatpush1.msra.mxu0 0.0
    %481 = vmatprep.subr.mxu0 0.0
    %482 = vmatpush1.msra.mxu0 0.0
    %483 = vmatprep.subr.mxu0 0.0
    %484 = vmatpush1.msra.mxu0 0.0
    %485 = vmatprep.subr.mxu0 0.0
    %486 = vmatpush1.msra.mxu0 0.0
    %487 = vmatprep.subr.mxu0 0.0
    %488 = vmatpush1.msra.mxu0 0.0
    %489 = vmatprep.subr.mxu0 0.0
    %490 = vmatpush1.msra.mxu0 0.0
    %491 = vmatprep.subr.mxu0 0.0
    %492 = vmatpush1.msra.mxu0 0.0
    %493 = vmatprep.subr.mxu0 0.0
    %494 = vmatpush1.msra.mxu0 0.0
    %495 = vmatprep.subr.mxu0 0.0
    %496 = vmatpush1.msra.mxu0 0.0
    %497 = vmatprep.subr.mxu0 0.0
    %498 = vmatpush1.msra.mxu0 0.0
    %499 = vmatprep.subr.mxu0 0.0
    %500 = vmatpush1.msra.mxu0 0.0
    %501 = vmatprep.subr.mxu0 0.0
    %502 = vmatpush1.msra.mxu0 0.0
    %503 = vmatprep.subr.mxu0 0.0
    %504 = vmatpush1.msra.mxu0 0.0
    %505 = vmatprep.subr.mxu0 0.0
    %506 = vmatpush1.msra.mxu0 0.0
    %507 = vmatprep.subr.mxu0 0.0
    %508 = vmatpush1.msra.mxu0 0.0
    %509 = vmatprep.subr.mxu0 0.0
    %510 = vmatpush1.msra.mxu0 0.0
    %511 = vmatprep.subr.mxu0 0.0
    %512 = vmatpush1.msra.mxu0 0.0
    %513 = vmatprep.mubr.f32.mxu0 0.0
    %v514 = vand.u32 %v157, 4294901760
    %v515 = vsub.f32 %v157, %v514
    %v516 = vand.u32 %v515, 4294901760
    %517 = vmatmul.mubr.f32.gmra.mrb[0].mxu0 %v516
    %v518 = vpop.f32.mrb[0].mxu0
    %v519 = vadd.f32 %v438, %v518
    %v520 = vpop.f32.mrb[0].mxu0
    %521 = vdwg.mxu0
    %522 = vmatprep.subr.mxu0 0.0
    %v523 = vand.u32 %v140, 4294901760
    %v524 = vsub.f32 %v140, %v523
    %v525 = vand.u32 %v524, 4294901760
    %526 = vmatpush1.msra.mxu0 %v525
    %527 = vmatprep.subr.mxu0 0.0
    %v528 = vand.u32 %v141, 4294901760
    %v529 = vsub.f32 %v141, %v528
    %v530 = vand.u32 %v529, 4294901760
    %531 = vmatpush1.msra.mxu0 %v530
    %532 = vmatprep.subr.mxu0 0.0
    %v533 = vand.u32 %v142, 4294901760
    %v534 = vsub.f32 %v142, %v533
    %v535 = vand.u32 %v534, 4294901760
    %536 = vmatpush1.msra.mxu0 %v535
    %537 = vmatprep.subr.mxu0 0.0
    %v538 = vand.u32 %v143, 4294901760
    %v539 = vsub.f32 %v143, %v538
    %v540 = vand.u32 %v539, 4294901760
    %541 = vmatpush1.msra.mxu0 %v540
    %542 = vmatprep.subr.mxu0 0.0
    %v543 = vand.u32 %v144, 4294901760
    %v544 = vsub.f32 %v144, %v543
    %v545 = vand.u32 %v544, 4294901760
    %546 = vmatpush1.msra.mxu0 %v545
    %547 = vmatprep.subr.mxu0 0.0
    %v548 = vand.u32 %v145, 4294901760
    %v549 = vsub.f32 %v145, %v548
    %v550 = vand.u32 %v549, 4294901760
    %551 = vmatpush1.msra.mxu0 %v550
    %552 = vmatprep.subr.mxu0 0.0
    %v553 = vand.u32 %v146, 4294901760
    %v554 = vsub.f32 %v146, %v553
    %v555 = vand.u32 %v554, 4294901760
    %556 = vmatpush1.msra.mxu0 %v555
    %557 = vmatprep.subr.mxu0 0.0
    %v558 = vand.u32 %v147, 4294901760
    %v559 = vsub.f32 %v147, %v558
    %v560 = vand.u32 %v559, 4294901760
    %561 = vmatpush1.msra.mxu0 %v560
    %562 = vmatprep.subr.mxu0 0.0
    %563 = vmatpush1.msra.mxu0 0.0
    %564 = vmatprep.subr.mxu0 0.0
    %565 = vmatpush1.msra.mxu0 0.0
    %566 = vmatprep.subr.mxu0 0.0
    %567 = vmatpush1.msra.mxu0 0.0
    %568 = vmatprep.subr.mxu0 0.0
    %569 = vmatpush1.msra.mxu0 0.0
    %570 = vmatprep.subr.mxu0 0.0
    %571 = vmatpush1.msra.mxu0 0.0
    %572 = vmatprep.subr.mxu0 0.0
    %573 = vmatpush1.msra.mxu0 0.0
    %574 = vmatprep.subr.mxu0 0.0
    %575 = vmatpush1.msra.mxu0 0.0
    %576 = vmatprep.subr.mxu0 0.0
    %577 = vmatpush1.msra.mxu0 0.0
    %578 = vmatprep.subr.mxu0 0.0
    %579 = vmatpush1.msra.mxu0 0.0
    %580 = vmatprep.subr.mxu0 0.0
    %581 = vmatpush1.msra.mxu0 0.0
    %582 = vmatprep.subr.mxu0 0.0
    %583 = vmatpush1.msra.mxu0 0.0
    %584 = vmatprep.subr.mxu0 0.0
    %585 = vmatpush1.msra.mxu0 0.0
    %586 = vmatprep.subr.mxu0 0.0
    %587 = vmatpush1.msra.mxu0 0.0
    %588 = vmatprep.subr.mxu0 0.0
    %589 = vmatpush1.msra.mxu0 0.0
    %590 = vmatprep.subr.mxu0 0.0
    %591 = vmatpush1.msra.mxu0 0.0
    %592 = vmatprep.subr.mxu0 0.0
    %593 = vmatpush1.msra.mxu0 0.0
    %594 = vmatprep.subr.mxu0 0.0
    %595 = vmatpush1.msra.mxu0 0.0
    %596 = vmatprep.subr.mxu0 0.0
    %597 = vmatpush1.msra.mxu0 0.0
    %598 = vmatprep.subr.mxu0 0.0
    %599 = vmatpush1.msra.mxu0 0.0
    %600 = vmatprep.subr.mxu0 0.0
    %601 = vmatpush1.msra.mxu0 0.0
    %602 = vmatprep.subr.mxu0 0.0
    %603 = vmatpush1.msra.mxu0 0.0
    %604 = vmatprep.subr.mxu0 0.0
    %605 = vmatpush1.msra.mxu0 0.0
    %606 = vmatprep.subr.mxu0 0.0
    %607 = vmatpush1.msra.mxu0 0.0
    %608 = vmatprep.subr.mxu0 0.0
    %609 = vmatpush1.msra.mxu0 0.0
    %610 = vmatprep.mubr.f32.mxu0 0.0
    %v611 = vand.u32 %v157, 4294901760
    %612 = vmatmul.mubr.f32.gmra.mrb[0].mxu0 %v611
    %v613 = vpop.f32.mrb[0].mxu0
    %v614 = vadd.f32 %v519, %v613
    %v615 = vpop.f32.mrb[0].mxu0
    %616 = vdwg.mxu0
    %617 = vmatprep.subr.mxu0 0.0
    %v618 = vand.u32 %v140, 4294901760
    %619 = vmatpush1.msra.mxu0 %v618
    %620 = vmatprep.subr.mxu0 0.0
    %v621 = vand.u32 %v141, 4294901760
    %622 = vmatpush1.msra.mxu0 %v621
    %623 = vmatprep.subr.mxu0 0.0
    %v624 = vand.u32 %v142, 4294901760
    %625 = vmatpush1.msra.mxu0 %v624
    %626 = vmatprep.subr.mxu0 0.0
    %v627 = vand.u32 %v143, 4294901760
    %628 = vmatpush1.msra.mxu0 %v627
    %629 = vmatprep.subr.mxu0 0.0
    %v630 = vand.u32 %v144, 4294901760
    %631 = vmatpush1.msra.mxu0 %v630
    %632 = vmatprep.subr.mxu0 0.0
    %v633 = vand.u32 %v145, 4294901760
    %634 = vmatpush1.msra.mxu0 %v633
    %635 = vmatprep.subr.mxu0 0.0
    %v636 = vand.u32 %v146, 4294901760
    %637 = vmatpush1.msra.mxu0 %v636
    %638 = vmatprep.subr.mxu0 0.0
    %v639 = vand.u32 %v147, 4294901760
    %640 = vmatpush1.msra.mxu0 %v639
    %641 = vmatprep.subr.mxu0 0.0
    %642 = vmatpush1.msra.mxu0 0.0
    %643 = vmatprep.subr.mxu0 0.0
    %644 = vmatpush1.msra.mxu0 0.0
    %645 = vmatprep.subr.mxu0 0.0
    %646 = vmatpush1.msra.mxu0 0.0
    %647 = vmatprep.subr.mxu0 0.0
    %648 = vmatpush1.msra.mxu0 0.0
    %649 = vmatprep.subr.mxu0 0.0
    %650 = vmatpush1.msra.mxu0 0.0
    %651 = vmatprep.subr.mxu0 0.0
    %652 = vmatpush1.msra.mxu0 0.0
    %653 = vmatprep.subr.mxu0 0.0
    %654 = vmatpush1.msra.mxu0 0.0
    %655 = vmatprep.subr.mxu0 0.0
    %656 = vmatpush1.msra.mxu0 0.0
    %657 = vmatprep.subr.mxu0 0.0
    %658 = vmatpush1.msra.mxu0 0.0
    %659 = vmatprep.subr.mxu0 0.0
    %660 = vmatpush1.msra.mxu0 0.0
    %661 = vmatprep.subr.mxu0 0.0
    %662 = vmatpush1.msra.mxu0 0.0
    %663 = vmatprep.subr.mxu0 0.0
    %664 = vmatpush1.msra.mxu0 0.0
    %665 = vmatprep.subr.mxu0 0.0
    %666 = vmatpush1.msra.mxu0 0.0
    %667 = vmatprep.subr.mxu0 0.0
    %668 = vmatpush1.msra.mxu0 0.0
    %669 = vmatprep.subr.mxu0 0.0
    %670 = vmatpush1.msra.mxu0 0.0
    %671 = vmatprep.subr.mxu0 0.0
    %672 = vmatpush1.msra.mxu0 0.0
    %673 = vmatprep.subr.mxu0 0.0
    %674 = vmatpush1.msra.mxu0 0.0
    %675 = vmatprep.subr.mxu0 0.0
    %676 = vmatpush1.msra.mxu0 0.0
    %677 = vmatprep.subr.mxu0 0.0
    %678 = vmatpush1.msra.mxu0 0.0
    %679 = vmatprep.subr.mxu0 0.0
    %680 = vmatpush1.msra.mxu0 0.0
    %681 = vmatprep.subr.mxu0 0.0
    %682 = vmatpush1.msra.mxu0 0.0
    %683 = vmatprep.subr.mxu0 0.0
    %684 = vmatpush1.msra.mxu0 0.0
    %685 = vmatprep.subr.mxu0 0.0
    %686 = vmatpush1.msra.mxu0 0.0
    %687 = vmatprep.subr.mxu0 0.0
    %688 = vmatpush1.msra.mxu0 0.0
    %689 = vmatprep.mubr.f32.mxu0 0.0
    %v690 = vand.u32 %v157, 4294901760
    %691 = vmatmul.mubr.f32.gmra.mrb[0].mxu0 %v690
    %v692 = vpop.f32.mrb[0].mxu0
    %v693 = vadd.f32 %v614, %v692
    %v694 = vpop.f32.mrb[0].mxu0
    %695 = vdwg.mxu0
    %v696 = vlaneseq
    %v697 = vand.u32 %v696, 127
    %v698 = vcvt.s32.f32 %v697
    %vm699 = vcmask 9216
    %v700 = vsel %vm699, %v131, -inf
    %701 = vmax.xlane.f32.xlu0 %v700
    %v702 = vpop.xlane.xlu0 %701
    %vm703 = vcmp.eq.f32.partialorder %v131, %v702
    %v704 = vsel %vm703, %v698, 2.0
    %v705 = vsel %vm699, %v704, inf
    %706 = vmin.xlane.f32.xlu0 %v705
    %v707 = vpop.xlane.xlu0 %706
    %vm708 = vcmp.eq.f32.partialorder %v698, %v707
    %v709 = vsel %vm708, 1.0, 0.0
    %v710 = vld [vmem:[%s13] sm:$0x3]
    %v711 = vld [vmem:[%s15] sm:$0x3]
    %713 = vset.pattern.permute.xlu0 0
    %714 = vperm.xlu0 %713, %v709
    %v715 = vpop.permute.xlu0 %714
    %v717 = vmul.f32 %v715, %v710
    %v718 = vadd.f32 %v717, 0.0
    %v719 = vmul.f32 %v715, %v711
    %v720 = vadd.f32 %v719, 0.0
    %721 = vset.pattern.permute.xlu0 1
    %722 = vperm.xlu0 %721, %v709
    %v723 = vpop.permute.xlu0 %722
    %v725 = vmul.f32 %v723, %v710
    %727 = vrot.lane.b32.xlu0 %v725, 96
    %v728 = vpop.permute.xlu0 %727
    %v730 = vadd.f32 %v718, %v728
    %v731 = vmul.f32 %v723, %v711
    %733 = vrot.lane.b32.xlu0 %v731, 96
    %v734 = vpop.permute.xlu0 %733
    %v736 = vadd.f32 %v720, %v734
    %v737 = vld [vmem:[%s11] sm:$0xff]
    %vm738 = vcmask 7168
    %v739 = vsel %vm738, %v737, 0.0
    %740 = vadd.xlane.f32.xlu0 %v739
    %v741 = vpop.xlane.xlu0 %740
    %v742 = vrot.slane %v741, 4
    %v743 = vadd.f32 %v741, %v742
    %v744 = vrot.slane %v743, 2
    %v745 = vadd.f32 %v743, %v744
    %v746 = vrot.slane %v745, 1
    %v747 = vadd.f32 %v745, %v746
    %s748 = vtos %v747
    %v749 = vlaneseq
    %v750 = vshrl.u32 %v749, 7
    %v751 = vcvt.s32.f32 %v750
    %s752 = ssub.f32 %s748, 1.0
    %v753 = vstv %s752
    %vm754 = vcmp.eq.f32.partialorder %v751, %v753
    %v755 = vsel %vm754, 1.0, 0.0
    %v756 = vld [vmem:[%s7] sm:$0x3]
    %v757 = vld [vmem:[%s7 + $0x2] sm:$0x3]
    %v758 = vld [vmem:[%s7 + $0x4] sm:$0x3]
    %v759 = vld [vmem:[%s7 + $0x6] sm:$0x3]
    %v760 = vld [vmem:[%s7 + $0x8] sm:$0x3]
    %v761 = vld [vmem:[%s7 + $0xa] sm:$0x3]
    %v762 = vld [vmem:[%s7 + $0xc] sm:$0x3]
    %v763 = vld [vmem:[%s7 + $0xe] sm:$0x3]
    %v764 = vld [vmem:[%s9] sm:$0x3]
    %v765 = vld [vmem:[%s9 + $0x2] sm:$0x3]
    %v766 = vld [vmem:[%s9 + $0x4] sm:$0x3]
    %v767 = vld [vmem:[%s9 + $0x6] sm:$0x3]
    %v768 = vld [vmem:[%s9 + $0x8] sm:$0x3]
    %v769 = vld [vmem:[%s9 + $0xa] sm:$0x3]
    %v770 = vld [vmem:[%s9 + $0xc] sm:$0x3]
    %v771 = vld [vmem:[%s9 + $0xe] sm:$0x3]
    %v773 = vlaneseq
    %v774 = vshrl.u32 %v773, 7
    %v775 = vsub.s32 0, %v774
    %v776 = vrot.slane %v755, %v775
    %v777 = vlaneseq
    %v778 = vshrl.u32 %v777, 7
    %v779 = vsub.s32 1, %v778
    %v780 = vrot.slane %v755, %v779
    %v781 = vlaneseq
    %v782 = vshrl.u32 %v781, 7
    %v783 = vsub.s32 2, %v782
    %v784 = vrot.slane %v755, %v783
    %v785 = vlaneseq
    %v786 = vshrl.u32 %v785, 7
    %v787 = vsub.s32 3, %v786
    %v788 = vrot.slane %v755, %v787
    %v789 = vlaneseq
    %v790 = vshrl.u32 %v789, 7
    %v791 = vsub.s32 4, %v790
    %v792 = vrot.slane %v755, %v791
    %v793 = vlaneseq
    %v794 = vshrl.u32 %v793, 7
    %v795 = vsub.s32 5, %v794
    %v796 = vrot.slane %v755, %v795
    %v797 = vlaneseq
    %v798 = vshrl.u32 %v797, 7
    %v799 = vsub.s32 6, %v798
    %v800 = vrot.slane %v755, %v799
    %v801 = vlaneseq
    %v802 = vshrl.u32 %v801, 7
    %v803 = vsub.s32 7, %v802
    %v804 = vrot.slane %v755, %v803
    %v813 = vmul.f32 %v776, %v756
    %v814 = vmul.f32 %v780, %v757
    %v815 = vmul.f32 %v784, %v758
    %v816 = vmul.f32 %v788, %v759
    %v817 = vmul.f32 %v792, %v760
    %v818 = vmul.f32 %v796, %v761
    %v819 = vmul.f32 %v800, %v762
    %v820 = vmul.f32 %v804, %v763
    %vm821 = vcmask 254976
    %v822 = vsel %vm821, %v813, 0.0
    %v823 = vsel %vm821, %v814, 0.0
    %v824 = vadd.f32 %v822, %v823
    %v825 = vsel %vm821, %v815, 0.0
    %v826 = vadd.f32 %v824, %v825
    %v827 = vsel %vm821, %v816, 0.0
    %v828 = vadd.f32 %v826, %v827
    %v829 = vsel %vm821, %v817, 0.0
    %v830 = vadd.f32 %v828, %v829
    %v831 = vsel %vm821, %v818, 0.0
    %v832 = vadd.f32 %v830, %v831
    %v833 = vsel %vm821, %v819, 0.0
    %v834 = vadd.f32 %v832, %v833
    %v835 = vsel %vm821, %v820, 0.0
    %v836 = vadd.f32 %v834, %v835
    %v837 = vmul.f32 %v776, %v764
    %v838 = vmul.f32 %v780, %v765
    %v839 = vmul.f32 %v784, %v766
    %v840 = vmul.f32 %v788, %v767
    %v841 = vmul.f32 %v792, %v768
    %v842 = vmul.f32 %v796, %v769
    %v843 = vmul.f32 %v800, %v770
    %v844 = vmul.f32 %v804, %v771
    %v845 = vsel %vm821, %v837, 0.0
    %v846 = vsel %vm821, %v838, 0.0
    %v847 = vadd.f32 %v845, %v846
    %v848 = vsel %vm821, %v839, 0.0
    %v849 = vadd.f32 %v847, %v848
    %v850 = vsel %vm821, %v840, 0.0
    %v851 = vadd.f32 %v849, %v850
    %v852 = vsel %vm821, %v841, 0.0
    %v853 = vadd.f32 %v851, %v852
    %v854 = vsel %vm821, %v842, 0.0
    %v855 = vadd.f32 %v853, %v854
    %v856 = vsel %vm821, %v843, 0.0
    %v857 = vadd.f32 %v855, %v856
    %v858 = vsel %vm821, %v844, 0.0
    %v859 = vadd.f32 %v857, %v858
    %861 = vrot.lane.b32.xlu0 %v730, 32
    %v862 = vpop.permute.xlu0 %861
    %865 = vrot.lane.b32.xlu0 %v693, 32
    %v866 = vpop.permute.xlu0 %865
    %869 = vrot.lane.b32.xlu0 %v736, 96
    %v870 = vpop.permute.xlu0 %869
    %v872 = vsel %vm138, %v693, %v862
    %v873 = vsel %vm155, %v872, %v866
    %vm874 = vcmask 785408
    %v875 = vsel %vm874, %v873, %v870
    %v876 = vld [vmem:[%s25] sm:$0xff]
    %v877 = vld [vmem:[%s25 + $0x8] sm:$0xff]
    %v878 = vld [vmem:[%s25 + $0x10] sm:$0xff]
    %v879 = vld [vmem:[%s25 + $0x18] sm:$0xff]
    %v880 = vld [vmem:[%s25 + $0x20] sm:$0xff]
    %v881 = vld [vmem:[%s25 + $0x28] sm:$0xff]
    %v882 = vld [vmem:[%s25 + $0x30] sm:$0xff]
    %v883 = vld [vmem:[%s25 + $0x38] sm:$0xff]
    %v884 = vld [vmem:[%s25 + $0x40] sm:$0xff]
    %v885 = vld [vmem:[%s25 + $0x48] sm:$0xff]
    %v886 = vld [vmem:[%s25 + $0x50] sm:$0xff]
    %v887 = vld [vmem:[%s25 + $0x58] sm:$0xff]
    %v888 = vld [vmem:[%s25 + $0x60] sm:$0xff]
    %v889 = vld [vmem:[%s25 + $0x68] sm:$0xff]
    %v890 = vld [vmem:[%s25 + $0x70] sm:$0xff]
    %v891 = vld [vmem:[%s25 + $0x78] sm:$0xff]
    %v892 = vld [vmem:[%s25 + $0x80] sm:$0xff]
    %v893 = vld [vmem:[%s25 + $0x88] sm:$0xff]
    %v894 = vld [vmem:[%s25 + $0x90] sm:$0xff]
    %v895 = vld [vmem:[%s25 + $0x98] sm:$0xff]
    %v896 = vld [vmem:[%s25 + $0xa0] sm:$0xff]
    %v897 = vld [vmem:[%s25 + $0xa8] sm:$0xff]
    %v898 = vld [vmem:[%s25 + $0xb0] sm:$0xff]
    %v899 = vld [vmem:[%s25 + $0xb8] sm:$0xff]
    %v900 = vld [vmem:[%s25 + $0xc0] sm:$0xff]
    %v901 = vld [vmem:[%s25 + $0xc8] sm:$0xff]
    %v902 = vld [vmem:[%s25 + $0xd0] sm:$0xff]
    %v903 = vld [vmem:[%s25 + $0xd8] sm:$0xff]
    %v904 = vld [vmem:[%s25 + $0xe0] sm:$0xff]
    %v905 = vld [vmem:[%s25 + $0xe8] sm:$0xff]
    %v906 = vld [vmem:[%s25 + $0xf0] sm:$0xff]
    %v907 = vld [vmem:[%s25 + $0xf8] sm:$0xff]
    %v908 = vld [vmem:[%s27] sm:$0x3]
    %v910 = vlaneseq
    %v911 = vshrl.u32 %v910, 7
    %v912 = vsub.s32 0, %v911
    %v913 = vrot.slane %v908, %v912
    %v914 = vlaneseq
    %v915 = vshrl.u32 %v914, 7
    %v916 = vsub.s32 1, %v915
    %v917 = vrot.slane %v908, %v916
    %v920 = vand.u32 %v877, 4294901760
    %921 = vmatprep.subr.mxu0 %v920
    %v922 = vand.u32 %v876, 4294901760
    %923 = vmatpush1.msra.mxu0 %v922
    %v924 = vand.u32 %v879, 4294901760
    %925 = vmatprep.subr.mxu0 %v924
    %v926 = vand.u32 %v878, 4294901760
    %927 = vmatpush1.msra.mxu0 %v926
    %v928 = vand.u32 %v881, 4294901760
    %929 = vmatprep.subr.mxu0 %v928
    %v930 = vand.u32 %v880, 4294901760
    %931 = vmatpush1.msra.mxu0 %v930
    %v932 = vand.u32 %v883, 4294901760
    %933 = vmatprep.subr.mxu0 %v932
    %v934 = vand.u32 %v882, 4294901760
    %935 = vmatpush1.msra.mxu0 %v934
    %v936 = vand.u32 %v885, 4294901760
    %937 = vmatprep.subr.mxu0 %v936
    %v938 = vand.u32 %v884, 4294901760
    %939 = vmatpush1.msra.mxu0 %v938
    %v940 = vand.u32 %v887, 4294901760
    %941 = vmatprep.subr.mxu0 %v940
    %v942 = vand.u32 %v886, 4294901760
    %943 = vmatpush1.msra.mxu0 %v942
    %v944 = vand.u32 %v889, 4294901760
    %945 = vmatprep.subr.mxu0 %v944
    %v946 = vand.u32 %v888, 4294901760
    %947 = vmatpush1.msra.mxu0 %v946
    %v948 = vand.u32 %v891, 4294901760
    %949 = vmatprep.subr.mxu0 %v948
    %v950 = vand.u32 %v890, 4294901760
    %951 = vmatpush1.msra.mxu0 %v950
    %v952 = vand.u32 %v893, 4294901760
    %953 = vmatprep.subr.mxu0 %v952
    %v954 = vand.u32 %v892, 4294901760
    %955 = vmatpush1.msra.mxu0 %v954
    %v956 = vand.u32 %v895, 4294901760
    %957 = vmatprep.subr.mxu0 %v956
    %v958 = vand.u32 %v894, 4294901760
    %959 = vmatpush1.msra.mxu0 %v958
    %v960 = vand.u32 %v897, 4294901760
    %961 = vmatprep.subr.mxu0 %v960
    %v962 = vand.u32 %v896, 4294901760
    %963 = vmatpush1.msra.mxu0 %v962
    %v964 = vand.u32 %v899, 4294901760
    %965 = vmatprep.subr.mxu0 %v964
    %v966 = vand.u32 %v898, 4294901760
    %967 = vmatpush1.msra.mxu0 %v966
    %v968 = vand.u32 %v901, 4294901760
    %969 = vmatprep.subr.mxu0 %v968
    %v970 = vand.u32 %v900, 4294901760
    %971 = vmatpush1.msra.mxu0 %v970
    %v972 = vand.u32 %v903, 4294901760
    %973 = vmatprep.subr.mxu0 %v972
    %v974 = vand.u32 %v902, 4294901760
    %975 = vmatpush1.msra.mxu0 %v974
    %v976 = vand.u32 %v905, 4294901760
    %977 = vmatprep.subr.mxu0 %v976
    %v978 = vand.u32 %v904, 4294901760
    %979 = vmatpush1.msra.mxu0 %v978
    %v980 = vand.u32 %v907, 4294901760
    %981 = vmatprep.subr.mxu0 %v980
    %v982 = vand.u32 %v906, 4294901760
    %983 = vmatpush1.msra.mxu0 %v982
    %984 = vmatprep.subr.mxu0 0.0
    %985 = vmatpush1.msra.mxu0 0.0
    %986 = vmatprep.subr.mxu0 0.0
    %987 = vmatpush1.msra.mxu0 0.0
    %988 = vmatprep.subr.mxu0 0.0
    %989 = vmatpush1.msra.mxu0 0.0
    %990 = vmatprep.subr.mxu0 0.0
    %991 = vmatpush1.msra.mxu0 0.0
    %992 = vmatprep.subr.mxu0 0.0
    %993 = vmatpush1.msra.mxu0 0.0
    %994 = vmatprep.subr.mxu0 0.0
    %995 = vmatpush1.msra.mxu0 0.0
    %996 = vmatprep.subr.mxu0 0.0
    %997 = vmatpush1.msra.mxu0 0.0
    %998 = vmatprep.subr.mxu0 0.0
    %999 = vmatpush1.msra.mxu0 0.0
    %1000 = vmatprep.subr.mxu0 0.0
    %1001 = vmatpush1.msra.mxu0 0.0
    %1002 = vmatprep.subr.mxu0 0.0
    %1003 = vmatpush1.msra.mxu0 0.0
    %1004 = vmatprep.subr.mxu0 0.0
    %1005 = vmatpush1.msra.mxu0 0.0
    %1006 = vmatprep.subr.mxu0 0.0
    %1007 = vmatpush1.msra.mxu0 0.0
    %1008 = vmatprep.subr.mxu0 0.0
    %1009 = vmatpush1.msra.mxu0 0.0
    %1010 = vmatprep.subr.mxu0 0.0
    %1011 = vmatpush1.msra.mxu0 0.0
    %1012 = vmatprep.subr.mxu0 0.0
    %1013 = vmatpush1.msra.mxu0 0.0
    %1014 = vmatprep.subr.mxu0 0.0
    %1015 = vmatpush1.msra.mxu0 0.0
    %1016 = vmatprep.mubr.f32.mxu0 0.0
    %v1017 = vand.u32 %v875, 4294901760
    %v1018 = vsub.f32 %v875, %v1017
    %v1019 = vand.u32 %v1018, 4294901760
    %v1020 = vsub.f32 %v1018, %v1019
    %v1021 = vand.u32 %v1020, 4294901760
    %1022 = vmatmul.mubr.f32.gmra.mrb[0].mxu0 %v1021
    %v1023 = vpop.f32.mrb[0].mxu0
    %v1024 = vadd.f32 %v913, %v1023
    %v1025 = vpop.f32.mrb[0].mxu0
    %v1026 = vadd.f32 %v917, %v1025
    %1027 = vdwg.mxu0
    %v1028 = vand.u32 %v877, 4294901760
    %v1029 = vsub.f32 %v877, %v1028
    %v1030 = vand.u32 %v1029, 4294901760
    %v1031 = vsub.f32 %v1029, %v1030
    %v1032 = vand.u32 %v1031, 4294901760
    %1033 = vmatprep.subr.mxu0 %v1032
    %v1034 = vand.u32 %v876, 4294901760
    %v1035 = vsub.f32 %v876, %v1034
    %v1036 = vand.u32 %v1035, 4294901760
    %v1037 = vsub.f32 %v1035, %v1036
    %v1038 = vand.u32 %v1037, 4294901760
    %1039 = vmatpush1.msra.mxu0 %v1038
    %v1040 = vand.u32 %v879, 4294901760
    %v1041 = vsub.f32 %v879, %v1040
    %v1042 = vand.u32 %v1041, 4294901760
    %v1043 = vsub.f32 %v1041, %v1042
    %v1044 = vand.u32 %v1043, 4294901760
    %1045 = vmatprep.subr.mxu0 %v1044
    %v1046 = vand.u32 %v878, 4294901760
    %v1047 = vsub.f32 %v878, %v1046
    %v1048 = vand.u32 %v1047, 4294901760
    %v1049 = vsub.f32 %v1047, %v1048
    %v1050 = vand.u32 %v1049, 4294901760
    %1051 = vmatpush1.msra.mxu0 %v1050
    %v1052 = vand.u32 %v881, 4294901760
    %v1053 = vsub.f32 %v881, %v1052
    %v1054 = vand.u32 %v1053, 4294901760
    %v1055 = vsub.f32 %v1053, %v1054
    %v1056 = vand.u32 %v1055, 4294901760
    %1057 = vmatprep.subr.mxu0 %v1056
    %v1058 = vand.u32 %v880, 4294901760
    %v1059 = vsub.f32 %v880, %v1058
    %v1060 = vand.u32 %v1059, 4294901760
    %v1061 = vsub.f32 %v1059, %v1060
    %v1062 = vand.u32 %v1061, 4294901760
    %1063 = vmatpush1.msra.mxu0 %v1062
    %v1064 = vand.u32 %v883, 4294901760
    %v1065 = vsub.f32 %v883, %v1064
    %v1066 = vand.u32 %v1065, 4294901760
    %v1067 = vsub.f32 %v1065, %v1066
    %v1068 = vand.u32 %v1067, 4294901760
    %1069 = vmatprep.subr.mxu0 %v1068
    %v1070 = vand.u32 %v882, 4294901760
    %v1071 = vsub.f32 %v882, %v1070
    %v1072 = vand.u32 %v1071, 4294901760
    %v1073 = vsub.f32 %v1071, %v1072
    %v1074 = vand.u32 %v1073, 4294901760
    %1075 = vmatpush1.msra.mxu0 %v1074
    %v1076 = vand.u32 %v885, 4294901760
    %v1077 = vsub.f32 %v885, %v1076
    %v1078 = vand.u32 %v1077, 4294901760
    %v1079 = vsub.f32 %v1077, %v1078
    %v1080 = vand.u32 %v1079, 4294901760
    %1081 = vmatprep.subr.mxu0 %v1080
    %v1082 = vand.u32 %v884, 4294901760
    %v1083 = vsub.f32 %v884, %v1082
    %v1084 = vand.u32 %v1083, 4294901760
    %v1085 = vsub.f32 %v1083, %v1084
    %v1086 = vand.u32 %v1085, 4294901760
    %1087 = vmatpush1.msra.mxu0 %v1086
    %v1088 = vand.u32 %v887, 4294901760
    %v1089 = vsub.f32 %v887, %v1088
    %v1090 = vand.u32 %v1089, 4294901760
    %v1091 = vsub.f32 %v1089, %v1090
    %v1092 = vand.u32 %v1091, 4294901760
    %1093 = vmatprep.subr.mxu0 %v1092
    %v1094 = vand.u32 %v886, 4294901760
    %v1095 = vsub.f32 %v886, %v1094
    %v1096 = vand.u32 %v1095, 4294901760
    %v1097 = vsub.f32 %v1095, %v1096
    %v1098 = vand.u32 %v1097, 4294901760
    %1099 = vmatpush1.msra.mxu0 %v1098
    %v1100 = vand.u32 %v889, 4294901760
    %v1101 = vsub.f32 %v889, %v1100
    %v1102 = vand.u32 %v1101, 4294901760
    %v1103 = vsub.f32 %v1101, %v1102
    %v1104 = vand.u32 %v1103, 4294901760
    %1105 = vmatprep.subr.mxu0 %v1104
    %v1106 = vand.u32 %v888, 4294901760
    %v1107 = vsub.f32 %v888, %v1106
    %v1108 = vand.u32 %v1107, 4294901760
    %v1109 = vsub.f32 %v1107, %v1108
    %v1110 = vand.u32 %v1109, 4294901760
    %1111 = vmatpush1.msra.mxu0 %v1110
    %v1112 = vand.u32 %v891, 4294901760
    %v1113 = vsub.f32 %v891, %v1112
    %v1114 = vand.u32 %v1113, 4294901760
    %v1115 = vsub.f32 %v1113, %v1114
    %v1116 = vand.u32 %v1115, 4294901760
    %1117 = vmatprep.subr.mxu0 %v1116
    %v1118 = vand.u32 %v890, 4294901760
    %v1119 = vsub.f32 %v890, %v1118
    %v1120 = vand.u32 %v1119, 4294901760
    %v1121 = vsub.f32 %v1119, %v1120
    %v1122 = vand.u32 %v1121, 4294901760
    %1123 = vmatpush1.msra.mxu0 %v1122
    %v1124 = vand.u32 %v893, 4294901760
    %v1125 = vsub.f32 %v893, %v1124
    %v1126 = vand.u32 %v1125, 4294901760
    %v1127 = vsub.f32 %v1125, %v1126
    %v1128 = vand.u32 %v1127, 4294901760
    %1129 = vmatprep.subr.mxu0 %v1128
    %v1130 = vand.u32 %v892, 4294901760
    %v1131 = vsub.f32 %v892, %v1130
    %v1132 = vand.u32 %v1131, 4294901760
    %v1133 = vsub.f32 %v1131, %v1132
    %v1134 = vand.u32 %v1133, 4294901760
    %1135 = vmatpush1.msra.mxu0 %v1134
    %v1136 = vand.u32 %v895, 4294901760
    %v1137 = vsub.f32 %v895, %v1136
    %v1138 = vand.u32 %v1137, 4294901760
    %v1139 = vsub.f32 %v1137, %v1138
    %v1140 = vand.u32 %v1139, 4294901760
    %1141 = vmatprep.subr.mxu0 %v1140
    %v1142 = vand.u32 %v894, 4294901760
    %v1143 = vsub.f32 %v894, %v1142
    %v1144 = vand.u32 %v1143, 4294901760
    %v1145 = vsub.f32 %v1143, %v1144
    %v1146 = vand.u32 %v1145, 4294901760
    %1147 = vmatpush1.msra.mxu0 %v1146
    %v1148 = vand.u32 %v897, 4294901760
    %v1149 = vsub.f32 %v897, %v1148
    %v1150 = vand.u32 %v1149, 4294901760
    %v1151 = vsub.f32 %v1149, %v1150
    %v1152 = vand.u32 %v1151, 4294901760
    %1153 = vmatprep.subr.mxu0 %v1152
    %v1154 = vand.u32 %v896, 4294901760
    %v1155 = vsub.f32 %v896, %v1154
    %v1156 = vand.u32 %v1155, 4294901760
    %v1157 = vsub.f32 %v1155, %v1156
    %v1158 = vand.u32 %v1157, 4294901760
    %1159 = vmatpush1.msra.mxu0 %v1158
    %v1160 = vand.u32 %v899, 4294901760
    %v1161 = vsub.f32 %v899, %v1160
    %v1162 = vand.u32 %v1161, 4294901760
    %v1163 = vsub.f32 %v1161, %v1162
    %v1164 = vand.u32 %v1163, 4294901760
    %1165 = vmatprep.subr.mxu0 %v1164
    %v1166 = vand.u32 %v898, 4294901760
    %v1167 = vsub.f32 %v898, %v1166
    %v1168 = vand.u32 %v1167, 4294901760
    %v1169 = vsub.f32 %v1167, %v1168
    %v1170 = vand.u32 %v1169, 4294901760
    %1171 = vmatpush1.msra.mxu0 %v1170
    %v1172 = vand.u32 %v901, 4294901760
    %v1173 = vsub.f32 %v901, %v1172
    %v1174 = vand.u32 %v1173, 4294901760
    %v1175 = vsub.f32 %v1173, %v1174
    %v1176 = vand.u32 %v1175, 4294901760
    %1177 = vmatprep.subr.mxu0 %v1176
    %v1178 = vand.u32 %v900, 4294901760
    %v1179 = vsub.f32 %v900, %v1178
    %v1180 = vand.u32 %v1179, 4294901760
    %v1181 = vsub.f32 %v1179, %v1180
    %v1182 = vand.u32 %v1181, 4294901760
    %1183 = vmatpush1.msra.mxu0 %v1182
    %v1184 = vand.u32 %v903, 4294901760
    %v1185 = vsub.f32 %v903, %v1184
    %v1186 = vand.u32 %v1185, 4294901760
    %v1187 = vsub.f32 %v1185, %v1186
    %v1188 = vand.u32 %v1187, 4294901760
    %1189 = vmatprep.subr.mxu0 %v1188
    %v1190 = vand.u32 %v902, 4294901760
    %v1191 = vsub.f32 %v902, %v1190
    %v1192 = vand.u32 %v1191, 4294901760
    %v1193 = vsub.f32 %v1191, %v1192
    %v1194 = vand.u32 %v1193, 4294901760
    %1195 = vmatpush1.msra.mxu0 %v1194
    %v1196 = vand.u32 %v905, 4294901760
    %v1197 = vsub.f32 %v905, %v1196
    %v1198 = vand.u32 %v1197, 4294901760
    %v1199 = vsub.f32 %v1197, %v1198
    %v1200 = vand.u32 %v1199, 4294901760
    %1201 = vmatprep.subr.mxu0 %v1200
    %v1202 = vand.u32 %v904, 4294901760
    %v1203 = vsub.f32 %v904, %v1202
    %v1204 = vand.u32 %v1203, 4294901760
    %v1205 = vsub.f32 %v1203, %v1204
    %v1206 = vand.u32 %v1205, 4294901760
    %1207 = vmatpush1.msra.mxu0 %v1206
    %v1208 = vand.u32 %v907, 4294901760
    %v1209 = vsub.f32 %v907, %v1208
    %v1210 = vand.u32 %v1209, 4294901760
    %v1211 = vsub.f32 %v1209, %v1210
    %v1212 = vand.u32 %v1211, 4294901760
    %1213 = vmatprep.subr.mxu0 %v1212
    %v1214 = vand.u32 %v906, 4294901760
    %v1215 = vsub.f32 %v906, %v1214
    %v1216 = vand.u32 %v1215, 4294901760
    %v1217 = vsub.f32 %v1215, %v1216
    %v1218 = vand.u32 %v1217, 4294901760
    %1219 = vmatpush1.msra.mxu0 %v1218
    %1220 = vmatprep.subr.mxu0 0.0
    %1221 = vmatpush1.msra.mxu0 0.0
    %1222 = vmatprep.subr.mxu0 0.0
    %1223 = vmatpush1.msra.mxu0 0.0
    %1224 = vmatprep.subr.mxu0 0.0
    %1225 = vmatpush1.msra.mxu0 0.0
    %1226 = vmatprep.subr.mxu0 0.0
    %1227 = vmatpush1.msra.mxu0 0.0
    %1228 = vmatprep.subr.mxu0 0.0
    %1229 = vmatpush1.msra.mxu0 0.0
    %1230 = vmatprep.subr.mxu0 0.0
    %1231 = vmatpush1.msra.mxu0 0.0
    %1232 = vmatprep.subr.mxu0 0.0
    %1233 = vmatpush1.msra.mxu0 0.0
    %1234 = vmatprep.subr.mxu0 0.0
    %1235 = vmatpush1.msra.mxu0 0.0
    %1236 = vmatprep.subr.mxu0 0.0
    %1237 = vmatpush1.msra.mxu0 0.0
    %1238 = vmatprep.subr.mxu0 0.0
    %1239 = vmatpush1.msra.mxu0 0.0
    %1240 = vmatprep.subr.mxu0 0.0
    %1241 = vmatpush1.msra.mxu0 0.0
    %1242 = vmatprep.subr.mxu0 0.0
    %1243 = vmatpush1.msra.mxu0 0.0
    %1244 = vmatprep.subr.mxu0 0.0
    %1245 = vmatpush1.msra.mxu0 0.0
    %1246 = vmatprep.subr.mxu0 0.0
    %1247 = vmatpush1.msra.mxu0 0.0
    %1248 = vmatprep.subr.mxu0 0.0
    %1249 = vmatpush1.msra.mxu0 0.0
    %1250 = vmatprep.subr.mxu0 0.0
    %1251 = vmatpush1.msra.mxu0 0.0
    %1252 = vmatprep.mubr.f32.mxu0 0.0
    %v1253 = vand.u32 %v875, 4294901760
    %1254 = vmatmul.mubr.f32.gmra.mrb[0].mxu0 %v1253
    %v1255 = vpop.f32.mrb[0].mxu0
    %v1256 = vadd.f32 %v1024, %v1255
    %v1257 = vpop.f32.mrb[0].mxu0
    %v1258 = vadd.f32 %v1026, %v1257
    %1259 = vdwg.mxu0
    %v1260 = vand.u32 %v877, 4294901760
    %v1261 = vsub.f32 %v877, %v1260
    %1262 = vmatprep.subr.mxu0 %v1261
    %v1263 = vand.u32 %v876, 4294901760
    %v1264 = vsub.f32 %v876, %v1263
    %1265 = vmatpush1.msra.mxu0 %v1264
    %v1266 = vand.u32 %v879, 4294901760
    %v1267 = vsub.f32 %v879, %v1266
    %1268 = vmatprep.subr.mxu0 %v1267
    %v1269 = vand.u32 %v878, 4294901760
    %v1270 = vsub.f32 %v878, %v1269
    %1271 = vmatpush1.msra.mxu0 %v1270
    %v1272 = vand.u32 %v881, 4294901760
    %v1273 = vsub.f32 %v881, %v1272
    %1274 = vmatprep.subr.mxu0 %v1273
    %v1275 = vand.u32 %v880, 4294901760
    %v1276 = vsub.f32 %v880, %v1275
    %1277 = vmatpush1.msra.mxu0 %v1276
    %v1278 = vand.u32 %v883, 4294901760
    %v1279 = vsub.f32 %v883, %v1278
    %1280 = vmatprep.subr.mxu0 %v1279
    %v1281 = vand.u32 %v882, 4294901760
    %v1282 = vsub.f32 %v882, %v1281
    %1283 = vmatpush1.msra.mxu0 %v1282
    %v1284 = vand.u32 %v885, 4294901760
    %v1285 = vsub.f32 %v885, %v1284
    %1286 = vmatprep.subr.mxu0 %v1285
    %v1287 = vand.u32 %v884, 4294901760
    %v1288 = vsub.f32 %v884, %v1287
    %1289 = vmatpush1.msra.mxu0 %v1288
    %v1290 = vand.u32 %v887, 4294901760
    %v1291 = vsub.f32 %v887, %v1290
    %1292 = vmatprep.subr.mxu0 %v1291
    %v1293 = vand.u32 %v886, 4294901760
    %v1294 = vsub.f32 %v886, %v1293
    %1295 = vmatpush1.msra.mxu0 %v1294
    %v1296 = vand.u32 %v889, 4294901760
    %v1297 = vsub.f32 %v889, %v1296
    %1298 = vmatprep.subr.mxu0 %v1297
    %v1299 = vand.u32 %v888, 4294901760
    %v1300 = vsub.f32 %v888, %v1299
    %1301 = vmatpush1.msra.mxu0 %v1300
    %v1302 = vand.u32 %v891, 4294901760
    %v1303 = vsub.f32 %v891, %v1302
    %1304 = vmatprep.subr.mxu0 %v1303
    %v1305 = vand.u32 %v890, 4294901760
    %v1306 = vsub.f32 %v890, %v1305
    %1307 = vmatpush1.msra.mxu0 %v1306
    %v1308 = vand.u32 %v893, 4294901760
    %v1309 = vsub.f32 %v893, %v1308
    %1310 = vmatprep.subr.mxu0 %v1309
    %v1311 = vand.u32 %v892, 4294901760
    %v1312 = vsub.f32 %v892, %v1311
    %1313 = vmatpush1.msra.mxu0 %v1312
    %v1314 = vand.u32 %v895, 4294901760
    %v1315 = vsub.f32 %v895, %v1314
    %1316 = vmatprep.subr.mxu0 %v1315
    %v1317 = vand.u32 %v894, 4294901760
    %v1318 = vsub.f32 %v894, %v1317
    %1319 = vmatpush1.msra.mxu0 %v1318
    %v1320 = vand.u32 %v897, 4294901760
    %v1321 = vsub.f32 %v897, %v1320
    %1322 = vmatprep.subr.mxu0 %v1321
    %v1323 = vand.u32 %v896, 4294901760
    %v1324 = vsub.f32 %v896, %v1323
    %1325 = vmatpush1.msra.mxu0 %v1324
    %v1326 = vand.u32 %v899, 4294901760
    %v1327 = vsub.f32 %v899, %v1326
    %1328 = vmatprep.subr.mxu0 %v1327
    %v1329 = vand.u32 %v898, 4294901760
    %v1330 = vsub.f32 %v898, %v1329
    %1331 = vmatpush1.msra.mxu0 %v1330
    %v1332 = vand.u32 %v901, 4294901760
    %v1333 = vsub.f32 %v901, %v1332
    %1334 = vmatprep.subr.mxu0 %v1333
    %v1335 = vand.u32 %v900, 4294901760
    %v1336 = vsub.f32 %v900, %v1335
    %1337 = vmatpush1.msra.mxu0 %v1336
    %v1338 = vand.u32 %v903, 4294901760
    %v1339 = vsub.f32 %v903, %v1338
    %1340 = vmatprep.subr.mxu0 %v1339
    %v1341 = vand.u32 %v902, 4294901760
    %v1342 = vsub.f32 %v902, %v1341
    %1343 = vmatpush1.msra.mxu0 %v1342
    %v1344 = vand.u32 %v905, 4294901760
    %v1345 = vsub.f32 %v905, %v1344
    %1346 = vmatprep.subr.mxu0 %v1345
    %v1347 = vand.u32 %v904, 4294901760
    %v1348 = vsub.f32 %v904, %v1347
    %1349 = vmatpush1.msra.mxu0 %v1348
    %v1350 = vand.u32 %v907, 4294901760
    %v1351 = vsub.f32 %v907, %v1350
    %1352 = vmatprep.subr.mxu0 %v1351
    %v1353 = vand.u32 %v906, 4294901760
    %v1354 = vsub.f32 %v906, %v1353
    %1355 = vmatpush1.msra.mxu0 %v1354
    %1356 = vmatprep.subr.mxu0 0.0
    %1357 = vmatpush1.msra.mxu0 0.0
    %1358 = vmatprep.subr.mxu0 0.0
    %1359 = vmatpush1.msra.mxu0 0.0
    %1360 = vmatprep.subr.mxu0 0.0
    %1361 = vmatpush1.msra.mxu0 0.0
    %1362 = vmatprep.subr.mxu0 0.0
    %1363 = vmatpush1.msra.mxu0 0.0
    %1364 = vmatprep.subr.mxu0 0.0
    %1365 = vmatpush1.msra.mxu0 0.0
    %1366 = vmatprep.subr.mxu0 0.0
    %1367 = vmatpush1.msra.mxu0 0.0
    %1368 = vmatprep.subr.mxu0 0.0
    %1369 = vmatpush1.msra.mxu0 0.0
    %1370 = vmatprep.subr.mxu0 0.0
    %1371 = vmatpush1.msra.mxu0 0.0
    %1372 = vmatprep.subr.mxu0 0.0
    %1373 = vmatpush1.msra.mxu0 0.0
    %1374 = vmatprep.subr.mxu0 0.0
    %1375 = vmatpush1.msra.mxu0 0.0
    %1376 = vmatprep.subr.mxu0 0.0
    %1377 = vmatpush1.msra.mxu0 0.0
    %1378 = vmatprep.subr.mxu0 0.0
    %1379 = vmatpush1.msra.mxu0 0.0
    %1380 = vmatprep.subr.mxu0 0.0
    %1381 = vmatpush1.msra.mxu0 0.0
    %1382 = vmatprep.subr.mxu0 0.0
    %1383 = vmatpush1.msra.mxu0 0.0
    %1384 = vmatprep.subr.mxu0 0.0
    %1385 = vmatpush1.msra.mxu0 0.0
    %1386 = vmatprep.subr.mxu0 0.0
    %1387 = vmatpush1.msra.mxu0 0.0
    %1388 = vmatprep.mubr.f32.mxu0 0.0
    %v1389 = vand.u32 %v875, 4294901760
    %v1390 = vsub.f32 %v875, %v1389
    %1391 = vmatmul.mubr.f32.gmra.mrb[0].mxu0 %v1390
    %v1392 = vpop.f32.mrb[0].mxu0
    %v1393 = vadd.f32 %v1256, %v1392
    %v1394 = vpop.f32.mrb[0].mxu0
    %v1395 = vadd.f32 %v1258, %v1394
    %1396 = vdwg.mxu0
    %v1397 = vand.u32 %v877, 4294901760
    %1398 = vmatprep.subr.mxu0 %v1397
    %v1399 = vand.u32 %v876, 4294901760
    %1400 = vmatpush1.msra.mxu0 %v1399
    %v1401 = vand.u32 %v879, 4294901760
    %1402 = vmatprep.subr.mxu0 %v1401
    %v1403 = vand.u32 %v878, 4294901760
    %1404 = vmatpush1.msra.mxu0 %v1403
    %v1405 = vand.u32 %v881, 4294901760
    %1406 = vmatprep.subr.mxu0 %v1405
    %v1407 = vand.u32 %v880, 4294901760
    %1408 = vmatpush1.msra.mxu0 %v1407
    %v1409 = vand.u32 %v883, 4294901760
    %1410 = vmatprep.subr.mxu0 %v1409
    %v1411 = vand.u32 %v882, 4294901760
    %1412 = vmatpush1.msra.mxu0 %v1411
    %v1413 = vand.u32 %v885, 4294901760
    %1414 = vmatprep.subr.mxu0 %v1413
    %v1415 = vand.u32 %v884, 4294901760
    %1416 = vmatpush1.msra.mxu0 %v1415
    %v1417 = vand.u32 %v887, 4294901760
    %1418 = vmatprep.subr.mxu0 %v1417
    %v1419 = vand.u32 %v886, 4294901760
    %1420 = vmatpush1.msra.mxu0 %v1419
    %v1421 = vand.u32 %v889, 4294901760
    %1422 = vmatprep.subr.mxu0 %v1421
    %v1423 = vand.u32 %v888, 4294901760
    %1424 = vmatpush1.msra.mxu0 %v1423
    %v1425 = vand.u32 %v891, 4294901760
    %1426 = vmatprep.subr.mxu0 %v1425
    %v1427 = vand.u32 %v890, 4294901760
    %1428 = vmatpush1.msra.mxu0 %v1427
    %v1429 = vand.u32 %v893, 4294901760
    %1430 = vmatprep.subr.mxu0 %v1429
    %v1431 = vand.u32 %v892, 4294901760
    %1432 = vmatpush1.msra.mxu0 %v1431
    %v1433 = vand.u32 %v895, 4294901760
    %1434 = vmatprep.subr.mxu0 %v1433
    %v1435 = vand.u32 %v894, 4294901760
    %1436 = vmatpush1.msra.mxu0 %v1435
    %v1437 = vand.u32 %v897, 4294901760
    %1438 = vmatprep.subr.mxu0 %v1437
    %v1439 = vand.u32 %v896, 4294901760
    %1440 = vmatpush1.msra.mxu0 %v1439
    %v1441 = vand.u32 %v899, 4294901760
    %1442 = vmatprep.subr.mxu0 %v1441
    %v1443 = vand.u32 %v898, 4294901760
    %1444 = vmatpush1.msra.mxu0 %v1443
    %v1445 = vand.u32 %v901, 4294901760
    %1446 = vmatprep.subr.mxu0 %v1445
    %v1447 = vand.u32 %v900, 4294901760
    %1448 = vmatpush1.msra.mxu0 %v1447
    %v1449 = vand.u32 %v903, 4294901760
    %1450 = vmatprep.subr.mxu0 %v1449
    %v1451 = vand.u32 %v902, 4294901760
    %1452 = vmatpush1.msra.mxu0 %v1451
    %v1453 = vand.u32 %v905, 4294901760
    %1454 = vmatprep.subr.mxu0 %v1453
    %v1455 = vand.u32 %v904, 4294901760
    %1456 = vmatpush1.msra.mxu0 %v1455
    %v1457 = vand.u32 %v907, 4294901760
    %1458 = vmatprep.subr.mxu0 %v1457
    %v1459 = vand.u32 %v906, 4294901760
    %1460 = vmatpush1.msra.mxu0 %v1459
    %1461 = vmatprep.subr.mxu0 0.0
    %1462 = vmatpush1.msra.mxu0 0.0
    %1463 = vmatprep.subr.mxu0 0.0
    %1464 = vmatpush1.msra.mxu0 0.0
    %1465 = vmatprep.subr.mxu0 0.0
    %1466 = vmatpush1.msra.mxu0 0.0
    %1467 = vmatprep.subr.mxu0 0.0
    %1468 = vmatpush1.msra.mxu0 0.0
    %1469 = vmatprep.subr.mxu0 0.0
    %1470 = vmatpush1.msra.mxu0 0.0
    %1471 = vmatprep.subr.mxu0 0.0
    %1472 = vmatpush1.msra.mxu0 0.0
    %1473 = vmatprep.subr.mxu0 0.0
    %1474 = vmatpush1.msra.mxu0 0.0
    %1475 = vmatprep.subr.mxu0 0.0
    %1476 = vmatpush1.msra.mxu0 0.0
    %1477 = vmatprep.subr.mxu0 0.0
    %1478 = vmatpush1.msra.mxu0 0.0
    %1479 = vmatprep.subr.mxu0 0.0
    %1480 = vmatpush1.msra.mxu0 0.0
    %1481 = vmatprep.subr.mxu0 0.0
    %1482 = vmatpush1.msra.mxu0 0.0
    %1483 = vmatprep.subr.mxu0 0.0
    %1484 = vmatpush1.msra.mxu0 0.0
    %1485 = vmatprep.subr.mxu0 0.0
    %1486 = vmatpush1.msra.mxu0 0.0
    %1487 = vmatprep.subr.mxu0 0.0
    %1488 = vmatpush1.msra.mxu0 0.0
    %1489 = vmatprep.subr.mxu0 0.0
    %1490 = vmatpush1.msra.mxu0 0.0
    %1491 = vmatprep.subr.mxu0 0.0
    %1492 = vmatpush1.msra.mxu0 0.0
    %1493 = vmatprep.mubr.f32.mxu0 0.0
    %v1494 = vand.u32 %v875, 4294901760
    %v1495 = vsub.f32 %v875, %v1494
    %v1496 = vand.u32 %v1495, 4294901760
    %1497 = vmatmul.mubr.f32.gmra.mrb[0].mxu0 %v1496
    %v1498 = vpop.f32.mrb[0].mxu0
    %v1499 = vadd.f32 %v1393, %v1498
    %v1500 = vpop.f32.mrb[0].mxu0
    %v1501 = vadd.f32 %v1395, %v1500
    %1502 = vdwg.mxu0
    %v1503 = vand.u32 %v877, 4294901760
    %v1504 = vsub.f32 %v877, %v1503
    %v1505 = vand.u32 %v1504, 4294901760
    %1506 = vmatprep.subr.mxu0 %v1505
    %v1507 = vand.u32 %v876, 4294901760
    %v1508 = vsub.f32 %v876, %v1507
    %v1509 = vand.u32 %v1508, 4294901760
    %1510 = vmatpush1.msra.mxu0 %v1509
    %v1511 = vand.u32 %v879, 4294901760
    %v1512 = vsub.f32 %v879, %v1511
    %v1513 = vand.u32 %v1512, 4294901760
    %1514 = vmatprep.subr.mxu0 %v1513
    %v1515 = vand.u32 %v878, 4294901760
    %v1516 = vsub.f32 %v878, %v1515
    %v1517 = vand.u32 %v1516, 4294901760
    %1518 = vmatpush1.msra.mxu0 %v1517
    %v1519 = vand.u32 %v881, 4294901760
    %v1520 = vsub.f32 %v881, %v1519
    %v1521 = vand.u32 %v1520, 4294901760
    %1522 = vmatprep.subr.mxu0 %v1521
    %v1523 = vand.u32 %v880, 4294901760
    %v1524 = vsub.f32 %v880, %v1523
    %v1525 = vand.u32 %v1524, 4294901760
    %1526 = vmatpush1.msra.mxu0 %v1525
    %v1527 = vand.u32 %v883, 4294901760
    %v1528 = vsub.f32 %v883, %v1527
    %v1529 = vand.u32 %v1528, 4294901760
    %1530 = vmatprep.subr.mxu0 %v1529
    %v1531 = vand.u32 %v882, 4294901760
    %v1532 = vsub.f32 %v882, %v1531
    %v1533 = vand.u32 %v1532, 4294901760
    %1534 = vmatpush1.msra.mxu0 %v1533
    %v1535 = vand.u32 %v885, 4294901760
    %v1536 = vsub.f32 %v885, %v1535
    %v1537 = vand.u32 %v1536, 4294901760
    %1538 = vmatprep.subr.mxu0 %v1537
    %v1539 = vand.u32 %v884, 4294901760
    %v1540 = vsub.f32 %v884, %v1539
    %v1541 = vand.u32 %v1540, 4294901760
    %1542 = vmatpush1.msra.mxu0 %v1541
    %v1543 = vand.u32 %v887, 4294901760
    %v1544 = vsub.f32 %v887, %v1543
    %v1545 = vand.u32 %v1544, 4294901760
    %1546 = vmatprep.subr.mxu0 %v1545
    %v1547 = vand.u32 %v886, 4294901760
    %v1548 = vsub.f32 %v886, %v1547
    %v1549 = vand.u32 %v1548, 4294901760
    %1550 = vmatpush1.msra.mxu0 %v1549
    %v1551 = vand.u32 %v889, 4294901760
    %v1552 = vsub.f32 %v889, %v1551
    %v1553 = vand.u32 %v1552, 4294901760
    %1554 = vmatprep.subr.mxu0 %v1553
    %v1555 = vand.u32 %v888, 4294901760
    %v1556 = vsub.f32 %v888, %v1555
    %v1557 = vand.u32 %v1556, 4294901760
    %1558 = vmatpush1.msra.mxu0 %v1557
    %v1559 = vand.u32 %v891, 4294901760
    %v1560 = vsub.f32 %v891, %v1559
    %v1561 = vand.u32 %v1560, 4294901760
    %1562 = vmatprep.subr.mxu0 %v1561
    %v1563 = vand.u32 %v890, 4294901760
    %v1564 = vsub.f32 %v890, %v1563
    %v1565 = vand.u32 %v1564, 4294901760
    %1566 = vmatpush1.msra.mxu0 %v1565
    %v1567 = vand.u32 %v893, 4294901760
    %v1568 = vsub.f32 %v893, %v1567
    %v1569 = vand.u32 %v1568, 4294901760
    %1570 = vmatprep.subr.mxu0 %v1569
    %v1571 = vand.u32 %v892, 4294901760
    %v1572 = vsub.f32 %v892, %v1571
    %v1573 = vand.u32 %v1572, 4294901760
    %1574 = vmatpush1.msra.mxu0 %v1573
    %v1575 = vand.u32 %v895, 4294901760
    %v1576 = vsub.f32 %v895, %v1575
    %v1577 = vand.u32 %v1576, 4294901760
    %1578 = vmatprep.subr.mxu0 %v1577
    %v1579 = vand.u32 %v894, 4294901760
    %v1580 = vsub.f32 %v894, %v1579
    %v1581 = vand.u32 %v1580, 4294901760
    %1582 = vmatpush1.msra.mxu0 %v1581
    %v1583 = vand.u32 %v897, 4294901760
    %v1584 = vsub.f32 %v897, %v1583
    %v1585 = vand.u32 %v1584, 4294901760
    %1586 = vmatprep.subr.mxu0 %v1585
    %v1587 = vand.u32 %v896, 4294901760
    %v1588 = vsub.f32 %v896, %v1587
    %v1589 = vand.u32 %v1588, 4294901760
    %1590 = vmatpush1.msra.mxu0 %v1589
    %v1591 = vand.u32 %v899, 4294901760
    %v1592 = vsub.f32 %v899, %v1591
    %v1593 = vand.u32 %v1592, 4294901760
    %1594 = vmatprep.subr.mxu0 %v1593
    %v1595 = vand.u32 %v898, 4294901760
    %v1596 = vsub.f32 %v898, %v1595
    %v1597 = vand.u32 %v1596, 4294901760
    %1598 = vmatpush1.msra.mxu0 %v1597
    %v1599 = vand.u32 %v901, 4294901760
    %v1600 = vsub.f32 %v901, %v1599
    %v1601 = vand.u32 %v1600, 4294901760
    %1602 = vmatprep.subr.mxu0 %v1601
    %v1603 = vand.u32 %v900, 4294901760
    %v1604 = vsub.f32 %v900, %v1603
    %v1605 = vand.u32 %v1604, 4294901760
    %1606 = vmatpush1.msra.mxu0 %v1605
    %v1607 = vand.u32 %v903, 4294901760
    %v1608 = vsub.f32 %v903, %v1607
    %v1609 = vand.u32 %v1608, 4294901760
    %1610 = vmatprep.subr.mxu0 %v1609
    %v1611 = vand.u32 %v902, 4294901760
    %v1612 = vsub.f32 %v902, %v1611
    %v1613 = vand.u32 %v1612, 4294901760
    %1614 = vmatpush1.msra.mxu0 %v1613
    %v1615 = vand.u32 %v905, 4294901760
    %v1616 = vsub.f32 %v905, %v1615
    %v1617 = vand.u32 %v1616, 4294901760
    %1618 = vmatprep.subr.mxu0 %v1617
    %v1619 = vand.u32 %v904, 4294901760
    %v1620 = vsub.f32 %v904, %v1619
    %v1621 = vand.u32 %v1620, 4294901760
    %1622 = vmatpush1.msra.mxu0 %v1621
    %v1623 = vand.u32 %v907, 4294901760
    %v1624 = vsub.f32 %v907, %v1623
    %v1625 = vand.u32 %v1624, 4294901760
    %1626 = vmatprep.subr.mxu0 %v1625
    %v1627 = vand.u32 %v906, 4294901760
    %v1628 = vsub.f32 %v906, %v1627
    %v1629 = vand.u32 %v1628, 4294901760
    %1630 = vmatpush1.msra.mxu0 %v1629
    %1631 = vmatprep.subr.mxu0 0.0
    %1632 = vmatpush1.msra.mxu0 0.0
    %1633 = vmatprep.subr.mxu0 0.0
    %1634 = vmatpush1.msra.mxu0 0.0
    %1635 = vmatprep.subr.mxu0 0.0
    %1636 = vmatpush1.msra.mxu0 0.0
    %1637 = vmatprep.subr.mxu0 0.0
    %1638 = vmatpush1.msra.mxu0 0.0
    %1639 = vmatprep.subr.mxu0 0.0
    %1640 = vmatpush1.msra.mxu0 0.0
    %1641 = vmatprep.subr.mxu0 0.0
    %1642 = vmatpush1.msra.mxu0 0.0
    %1643 = vmatprep.subr.mxu0 0.0
    %1644 = vmatpush1.msra.mxu0 0.0
    %1645 = vmatprep.subr.mxu0 0.0
    %1646 = vmatpush1.msra.mxu0 0.0
    %1647 = vmatprep.subr.mxu0 0.0
    %1648 = vmatpush1.msra.mxu0 0.0
    %1649 = vmatprep.subr.mxu0 0.0
    %1650 = vmatpush1.msra.mxu0 0.0
    %1651 = vmatprep.subr.mxu0 0.0
    %1652 = vmatpush1.msra.mxu0 0.0
    %1653 = vmatprep.subr.mxu0 0.0
    %1654 = vmatpush1.msra.mxu0 0.0
    %1655 = vmatprep.subr.mxu0 0.0
    %1656 = vmatpush1.msra.mxu0 0.0
    %1657 = vmatprep.subr.mxu0 0.0
    %1658 = vmatpush1.msra.mxu0 0.0
    %1659 = vmatprep.subr.mxu0 0.0
    %1660 = vmatpush1.msra.mxu0 0.0
    %1661 = vmatprep.subr.mxu0 0.0
    %1662 = vmatpush1.msra.mxu0 0.0
    %1663 = vmatprep.mubr.f32.mxu0 0.0
    %v1664 = vand.u32 %v875, 4294901760
    %1665 = vmatmul.mubr.f32.gmra.mrb[0].mxu0 %v1664
    %v1666 = vpop.f32.mrb[0].mxu0
    %v1667 = vadd.f32 %v1499, %v1666
    %v1668 = vpop.f32.mrb[0].mxu0
    %v1669 = vadd.f32 %v1501, %v1668
    %1670 = vdwg.mxu0
    %v1671 = vand.u32 %v877, 4294901760
    %1672 = vmatprep.subr.mxu0 %v1671
    %v1673 = vand.u32 %v876, 4294901760
    %1674 = vmatpush1.msra.mxu0 %v1673
    %v1675 = vand.u32 %v879, 4294901760
    %1676 = vmatprep.subr.mxu0 %v1675
    %v1677 = vand.u32 %v878, 4294901760
    %1678 = vmatpush1.msra.mxu0 %v1677
    %v1679 = vand.u32 %v881, 4294901760
    %1680 = vmatprep.subr.mxu0 %v1679
    %v1681 = vand.u32 %v880, 4294901760
    %1682 = vmatpush1.msra.mxu0 %v1681
    %v1683 = vand.u32 %v883, 4294901760
    %1684 = vmatprep.subr.mxu0 %v1683
    %v1685 = vand.u32 %v882, 4294901760
    %1686 = vmatpush1.msra.mxu0 %v1685
    %v1687 = vand.u32 %v885, 4294901760
    %1688 = vmatprep.subr.mxu0 %v1687
    %v1689 = vand.u32 %v884, 4294901760
    %1690 = vmatpush1.msra.mxu0 %v1689
    %v1691 = vand.u32 %v887, 4294901760
    %1692 = vmatprep.subr.mxu0 %v1691
    %v1693 = vand.u32 %v886, 4294901760
    %1694 = vmatpush1.msra.mxu0 %v1693
    %v1695 = vand.u32 %v889, 4294901760
    %1696 = vmatprep.subr.mxu0 %v1695
    %v1697 = vand.u32 %v888, 4294901760
    %1698 = vmatpush1.msra.mxu0 %v1697
    %v1699 = vand.u32 %v891, 4294901760
    %1700 = vmatprep.subr.mxu0 %v1699
    %v1701 = vand.u32 %v890, 4294901760
    %1702 = vmatpush1.msra.mxu0 %v1701
    %v1703 = vand.u32 %v893, 4294901760
    %1704 = vmatprep.subr.mxu0 %v1703
    %v1705 = vand.u32 %v892, 4294901760
    %1706 = vmatpush1.msra.mxu0 %v1705
    %v1707 = vand.u32 %v895, 4294901760
    %1708 = vmatprep.subr.mxu0 %v1707
    %v1709 = vand.u32 %v894, 4294901760
    %1710 = vmatpush1.msra.mxu0 %v1709
    %v1711 = vand.u32 %v897, 4294901760
    %1712 = vmatprep.subr.mxu0 %v1711
    %v1713 = vand.u32 %v896, 4294901760
    %1714 = vmatpush1.msra.mxu0 %v1713
    %v1715 = vand.u32 %v899, 4294901760
    %1716 = vmatprep.subr.mxu0 %v1715
    %v1717 = vand.u32 %v898, 4294901760
    %1718 = vmatpush1.msra.mxu0 %v1717
    %v1719 = vand.u32 %v901, 4294901760
    %1720 = vmatprep.subr.mxu0 %v1719
    %v1721 = vand.u32 %v900, 4294901760
    %1722 = vmatpush1.msra.mxu0 %v1721
    %v1723 = vand.u32 %v903, 4294901760
    %1724 = vmatprep.subr.mxu0 %v1723
    %v1725 = vand.u32 %v902, 4294901760
    %1726 = vmatpush1.msra.mxu0 %v1725
    %v1727 = vand.u32 %v905, 4294901760
    %1728 = vmatprep.subr.mxu0 %v1727
    %v1729 = vand.u32 %v904, 4294901760
    %1730 = vmatpush1.msra.mxu0 %v1729
    %v1731 = vand.u32 %v907, 4294901760
    %1732 = vmatprep.subr.mxu0 %v1731
    %v1733 = vand.u32 %v906, 4294901760
    %1734 = vmatpush1.msra.mxu0 %v1733
    %1735 = vmatprep.subr.mxu0 0.0
    %1736 = vmatpush1.msra.mxu0 0.0
    %1737 = vmatprep.subr.mxu0 0.0
    %1738 = vmatpush1.msra.mxu0 0.0
    %1739 = vmatprep.subr.mxu0 0.0
    %1740 = vmatpush1.msra.mxu0 0.0
    %1741 = vmatprep.subr.mxu0 0.0
    %1742 = vmatpush1.msra.mxu0 0.0
    %1743 = vmatprep.subr.mxu0 0.0
    %1744 = vmatpush1.msra.mxu0 0.0
    %1745 = vmatprep.subr.mxu0 0.0
    %1746 = vmatpush1.msra.mxu0 0.0
    %1747 = vmatprep.subr.mxu0 0.0
    %1748 = vmatpush1.msra.mxu0 0.0
    %1749 = vmatprep.subr.mxu0 0.0
    %1750 = vmatpush1.msra.mxu0 0.0
    %1751 = vmatprep.subr.mxu0 0.0
    %1752 = vmatpush1.msra.mxu0 0.0
    %1753 = vmatprep.subr.mxu0 0.0
    %1754 = vmatpush1.msra.mxu0 0.0
    %1755 = vmatprep.subr.mxu0 0.0
    %1756 = vmatpush1.msra.mxu0 0.0
    %1757 = vmatprep.subr.mxu0 0.0
    %1758 = vmatpush1.msra.mxu0 0.0
    %1759 = vmatprep.subr.mxu0 0.0
    %1760 = vmatpush1.msra.mxu0 0.0
    %1761 = vmatprep.subr.mxu0 0.0
    %1762 = vmatpush1.msra.mxu0 0.0
    %1763 = vmatprep.subr.mxu0 0.0
    %1764 = vmatpush1.msra.mxu0 0.0
    %1765 = vmatprep.subr.mxu0 0.0
    %1766 = vmatpush1.msra.mxu0 0.0
    %1767 = vmatprep.mubr.f32.mxu0 0.0
    %v1768 = vand.u32 %v875, 4294901760
    %1769 = vmatmul.mubr.f32.gmra.mrb[0].mxu0 %v1768
    %v1770 = vpop.f32.mrb[0].mxu0
    %v1771 = vadd.f32 %v1667, %v1770
    %v1772 = vpop.f32.mrb[0].mxu0
    %v1773 = vadd.f32 %v1669, %v1772
    %1774 = vdwg.mxu0
    %1776 = vrot.lane.b32.xlu0 %v859, 32
    %v1777 = vpop.permute.xlu0 %1776
    %v1779 = vsel %vm138, %v836, %v1777
    %v1780 = vld [vmem:[%s29] sm:$0xff]
    %v1781 = vld [vmem:[%s29 + $0x8] sm:$0xff]
    %v1782 = vld [vmem:[%s29 + $0x10] sm:$0xff]
    %v1783 = vld [vmem:[%s29 + $0x18] sm:$0xff]
    %v1784 = vld [vmem:[%s29 + $0x20] sm:$0xff]
    %v1785 = vld [vmem:[%s29 + $0x28] sm:$0xff]
    %v1786 = vld [vmem:[%s29 + $0x30] sm:$0xff]
    %v1787 = vld [vmem:[%s29 + $0x38] sm:$0xff]
    %v1788 = vld [vmem:[%s29 + $0x40] sm:$0xff]
    %v1789 = vld [vmem:[%s29 + $0x48] sm:$0xff]
    %v1790 = vld [vmem:[%s29 + $0x50] sm:$0xff]
    %v1791 = vld [vmem:[%s29 + $0x58] sm:$0xff]
    %v1792 = vld [vmem:[%s29 + $0x60] sm:$0xff]
    %v1793 = vld [vmem:[%s29 + $0x68] sm:$0xff]
    %v1794 = vld [vmem:[%s29 + $0x70] sm:$0xff]
    %v1795 = vld [vmem:[%s29 + $0x78] sm:$0xff]
    %v1796 = vld [vmem:[%s31] sm:$0x3]
    %v1798 = vlaneseq
    %v1799 = vshrl.u32 %v1798, 7
    %v1800 = vsub.s32 0, %v1799
    %v1801 = vrot.slane %v1796, %v1800
    %v1802 = vlaneseq
    %v1803 = vshrl.u32 %v1802, 7
    %v1804 = vsub.s32 1, %v1803
    %v1805 = vrot.slane %v1796, %v1804
    %v1809 = vsel %vm155, %v1779, 0
    %v1811 = vand.u32 %v1781, 4294901760
    %1812 = vmatprep.subr.mxu0 %v1811
    %v1813 = vand.u32 %v1780, 4294901760
    %1814 = vmatpush1.msra.mxu0 %v1813
    %v1815 = vand.u32 %v1783, 4294901760
    %1816 = vmatprep.subr.mxu0 %v1815
    %v1817 = vand.u32 %v1782, 4294901760
    %1818 = vmatpush1.msra.mxu0 %v1817
    %v1819 = vand.u32 %v1785, 4294901760
    %1820 = vmatprep.subr.mxu0 %v1819
    %v1821 = vand.u32 %v1784, 4294901760
    %1822 = vmatpush1.msra.mxu0 %v1821
    %v1823 = vand.u32 %v1787, 4294901760
    %1824 = vmatprep.subr.mxu0 %v1823
    %v1825 = vand.u32 %v1786, 4294901760
    %1826 = vmatpush1.msra.mxu0 %v1825
    %v1827 = vand.u32 %v1789, 4294901760
    %1828 = vmatprep.subr.mxu0 %v1827
    %v1829 = vand.u32 %v1788, 4294901760
    %1830 = vmatpush1.msra.mxu0 %v1829
    %v1831 = vand.u32 %v1791, 4294901760
    %1832 = vmatprep.subr.mxu0 %v1831
    %v1833 = vand.u32 %v1790, 4294901760
    %1834 = vmatpush1.msra.mxu0 %v1833
    %v1835 = vand.u32 %v1793, 4294901760
    %1836 = vmatprep.subr.mxu0 %v1835
    %v1837 = vand.u32 %v1792, 4294901760
    %1838 = vmatpush1.msra.mxu0 %v1837
    %v1839 = vand.u32 %v1795, 4294901760
    %1840 = vmatprep.subr.mxu0 %v1839
    %v1841 = vand.u32 %v1794, 4294901760
    %1842 = vmatpush1.msra.mxu0 %v1841
    %1843 = vmatprep.subr.mxu0 0.0
    %1844 = vmatpush1.msra.mxu0 0.0
    %1845 = vmatprep.subr.mxu0 0.0
    %1846 = vmatpush1.msra.mxu0 0.0
    %1847 = vmatprep.subr.mxu0 0.0
    %1848 = vmatpush1.msra.mxu0 0.0
    %1849 = vmatprep.subr.mxu0 0.0
    %1850 = vmatpush1.msra.mxu0 0.0
    %1851 = vmatprep.subr.mxu0 0.0
    %1852 = vmatpush1.msra.mxu0 0.0
    %1853 = vmatprep.subr.mxu0 0.0
    %1854 = vmatpush1.msra.mxu0 0.0
    %1855 = vmatprep.subr.mxu0 0.0
    %1856 = vmatpush1.msra.mxu0 0.0
    %1857 = vmatprep.subr.mxu0 0.0
    %1858 = vmatpush1.msra.mxu0 0.0
    %1859 = vmatprep.subr.mxu0 0.0
    %1860 = vmatpush1.msra.mxu0 0.0
    %1861 = vmatprep.subr.mxu0 0.0
    %1862 = vmatpush1.msra.mxu0 0.0
    %1863 = vmatprep.subr.mxu0 0.0
    %1864 = vmatpush1.msra.mxu0 0.0
    %1865 = vmatprep.subr.mxu0 0.0
    %1866 = vmatpush1.msra.mxu0 0.0
    %1867 = vmatprep.subr.mxu0 0.0
    %1868 = vmatpush1.msra.mxu0 0.0
    %1869 = vmatprep.subr.mxu0 0.0
    %1870 = vmatpush1.msra.mxu0 0.0
    %1871 = vmatprep.subr.mxu0 0.0
    %1872 = vmatpush1.msra.mxu0 0.0
    %1873 = vmatprep.subr.mxu0 0.0
    %1874 = vmatpush1.msra.mxu0 0.0
    %1875 = vmatprep.subr.mxu0 0.0
    %1876 = vmatpush1.msra.mxu0 0.0
    %1877 = vmatprep.subr.mxu0 0.0
    %1878 = vmatpush1.msra.mxu0 0.0
    %1879 = vmatprep.subr.mxu0 0.0
    %1880 = vmatpush1.msra.mxu0 0.0
    %1881 = vmatprep.subr.mxu0 0.0
    %1882 = vmatpush1.msra.mxu0 0.0
    %1883 = vmatprep.subr.mxu0 0.0
    %1884 = vmatpush1.msra.mxu0 0.0
    %1885 = vmatprep.subr.mxu0 0.0
    %1886 = vmatpush1.msra.mxu0 0.0
    %1887 = vmatprep.subr.mxu0 0.0
    %1888 = vmatpush1.msra.mxu0 0.0
    %1889 = vmatprep.subr.mxu0 0.0
    %1890 = vmatpush1.msra.mxu0 0.0
    %1891 = vmatprep.mubr.f32.mxu0 0.0
    %v1892 = vand.u32 %v1809, 4294901760
    %v1893 = vsub.f32 %v1809, %v1892
    %v1894 = vand.u32 %v1893, 4294901760
    %v1895 = vsub.f32 %v1893, %v1894
    %v1896 = vand.u32 %v1895, 4294901760
    %1897 = vmatmul.mubr.f32.gmra.mrb[0].mxu0 %v1896
    %v1898 = vpop.f32.mrb[0].mxu0
    %v1899 = vadd.f32 %v1801, %v1898
    %v1900 = vpop.f32.mrb[0].mxu0
    %v1901 = vadd.f32 %v1805, %v1900
    %1902 = vdwg.mxu0
    %v1903 = vand.u32 %v1781, 4294901760
    %v1904 = vsub.f32 %v1781, %v1903
    %v1905 = vand.u32 %v1904, 4294901760
    %v1906 = vsub.f32 %v1904, %v1905
    %v1907 = vand.u32 %v1906, 4294901760
    %1908 = vmatprep.subr.mxu0 %v1907
    %v1909 = vand.u32 %v1780, 4294901760
    %v1910 = vsub.f32 %v1780, %v1909
    %v1911 = vand.u32 %v1910, 4294901760
    %v1912 = vsub.f32 %v1910, %v1911
    %v1913 = vand.u32 %v1912, 4294901760
    %1914 = vmatpush1.msra.mxu0 %v1913
    %v1915 = vand.u32 %v1783, 4294901760
    %v1916 = vsub.f32 %v1783, %v1915
    %v1917 = vand.u32 %v1916, 4294901760
    %v1918 = vsub.f32 %v1916, %v1917
    %v1919 = vand.u32 %v1918, 4294901760
    %1920 = vmatprep.subr.mxu0 %v1919
    %v1921 = vand.u32 %v1782, 4294901760
    %v1922 = vsub.f32 %v1782, %v1921
    %v1923 = vand.u32 %v1922, 4294901760
    %v1924 = vsub.f32 %v1922, %v1923
    %v1925 = vand.u32 %v1924, 4294901760
    %1926 = vmatpush1.msra.mxu0 %v1925
    %v1927 = vand.u32 %v1785, 4294901760
    %v1928 = vsub.f32 %v1785, %v1927
    %v1929 = vand.u32 %v1928, 4294901760
    %v1930 = vsub.f32 %v1928, %v1929
    %v1931 = vand.u32 %v1930, 4294901760
    %1932 = vmatprep.subr.mxu0 %v1931
    %v1933 = vand.u32 %v1784, 4294901760
    %v1934 = vsub.f32 %v1784, %v1933
    %v1935 = vand.u32 %v1934, 4294901760
    %v1936 = vsub.f32 %v1934, %v1935
    %v1937 = vand.u32 %v1936, 4294901760
    %1938 = vmatpush1.msra.mxu0 %v1937
    %v1939 = vand.u32 %v1787, 4294901760
    %v1940 = vsub.f32 %v1787, %v1939
    %v1941 = vand.u32 %v1940, 4294901760
    %v1942 = vsub.f32 %v1940, %v1941
    %v1943 = vand.u32 %v1942, 4294901760
    %1944 = vmatprep.subr.mxu0 %v1943
    %v1945 = vand.u32 %v1786, 4294901760
    %v1946 = vsub.f32 %v1786, %v1945
    %v1947 = vand.u32 %v1946, 4294901760
    %v1948 = vsub.f32 %v1946, %v1947
    %v1949 = vand.u32 %v1948, 4294901760
    %1950 = vmatpush1.msra.mxu0 %v1949
    %v1951 = vand.u32 %v1789, 4294901760
    %v1952 = vsub.f32 %v1789, %v1951
    %v1953 = vand.u32 %v1952, 4294901760
    %v1954 = vsub.f32 %v1952, %v1953
    %v1955 = vand.u32 %v1954, 4294901760
    %1956 = vmatprep.subr.mxu0 %v1955
    %v1957 = vand.u32 %v1788, 4294901760
    %v1958 = vsub.f32 %v1788, %v1957
    %v1959 = vand.u32 %v1958, 4294901760
    %v1960 = vsub.f32 %v1958, %v1959
    %v1961 = vand.u32 %v1960, 4294901760
    %1962 = vmatpush1.msra.mxu0 %v1961
    %v1963 = vand.u32 %v1791, 4294901760
    %v1964 = vsub.f32 %v1791, %v1963
    %v1965 = vand.u32 %v1964, 4294901760
    %v1966 = vsub.f32 %v1964, %v1965
    %v1967 = vand.u32 %v1966, 4294901760
    %1968 = vmatprep.subr.mxu0 %v1967
    %v1969 = vand.u32 %v1790, 4294901760
    %v1970 = vsub.f32 %v1790, %v1969
    %v1971 = vand.u32 %v1970, 4294901760
    %v1972 = vsub.f32 %v1970, %v1971
    %v1973 = vand.u32 %v1972, 4294901760
    %1974 = vmatpush1.msra.mxu0 %v1973
    %v1975 = vand.u32 %v1793, 4294901760
    %v1976 = vsub.f32 %v1793, %v1975
    %v1977 = vand.u32 %v1976, 4294901760
    %v1978 = vsub.f32 %v1976, %v1977
    %v1979 = vand.u32 %v1978, 4294901760
    %1980 = vmatprep.subr.mxu0 %v1979
    %v1981 = vand.u32 %v1792, 4294901760
    %v1982 = vsub.f32 %v1792, %v1981
    %v1983 = vand.u32 %v1982, 4294901760
    %v1984 = vsub.f32 %v1982, %v1983
    %v1985 = vand.u32 %v1984, 4294901760
    %1986 = vmatpush1.msra.mxu0 %v1985
    %v1987 = vand.u32 %v1795, 4294901760
    %v1988 = vsub.f32 %v1795, %v1987
    %v1989 = vand.u32 %v1988, 4294901760
    %v1990 = vsub.f32 %v1988, %v1989
    %v1991 = vand.u32 %v1990, 4294901760
    %1992 = vmatprep.subr.mxu0 %v1991
    %v1993 = vand.u32 %v1794, 4294901760
    %v1994 = vsub.f32 %v1794, %v1993
    %v1995 = vand.u32 %v1994, 4294901760
    %v1996 = vsub.f32 %v1994, %v1995
    %v1997 = vand.u32 %v1996, 4294901760
    %1998 = vmatpush1.msra.mxu0 %v1997
    %1999 = vmatprep.subr.mxu0 0.0
    %2000 = vmatpush1.msra.mxu0 0.0
    %2001 = vmatprep.subr.mxu0 0.0
    %2002 = vmatpush1.msra.mxu0 0.0
    %2003 = vmatprep.subr.mxu0 0.0
    %2004 = vmatpush1.msra.mxu0 0.0
    %2005 = vmatprep.subr.mxu0 0.0
    %2006 = vmatpush1.msra.mxu0 0.0
    %2007 = vmatprep.subr.mxu0 0.0
    %2008 = vmatpush1.msra.mxu0 0.0
    %2009 = vmatprep.subr.mxu0 0.0
    %2010 = vmatpush1.msra.mxu0 0.0
    %2011 = vmatprep.subr.mxu0 0.0
    %2012 = vmatpush1.msra.mxu0 0.0
    %2013 = vmatprep.subr.mxu0 0.0
    %2014 = vmatpush1.msra.mxu0 0.0
    %2015 = vmatprep.subr.mxu0 0.0
    %2016 = vmatpush1.msra.mxu0 0.0
    %2017 = vmatprep.subr.mxu0 0.0
    %2018 = vmatpush1.msra.mxu0 0.0
    %2019 = vmatprep.subr.mxu0 0.0
    %2020 = vmatpush1.msra.mxu0 0.0
    %2021 = vmatprep.subr.mxu0 0.0
    %2022 = vmatpush1.msra.mxu0 0.0
    %2023 = vmatprep.subr.mxu0 0.0
    %2024 = vmatpush1.msra.mxu0 0.0
    %2025 = vmatprep.subr.mxu0 0.0
    %2026 = vmatpush1.msra.mxu0 0.0
    %2027 = vmatprep.subr.mxu0 0.0
    %2028 = vmatpush1.msra.mxu0 0.0
    %2029 = vmatprep.subr.mxu0 0.0
    %2030 = vmatpush1.msra.mxu0 0.0
    %2031 = vmatprep.subr.mxu0 0.0
    %2032 = vmatpush1.msra.mxu0 0.0
    %2033 = vmatprep.subr.mxu0 0.0
    %2034 = vmatpush1.msra.mxu0 0.0
    %2035 = vmatprep.subr.mxu0 0.0
    %2036 = vmatpush1.msra.mxu0 0.0
    %2037 = vmatprep.subr.mxu0 0.0
    %2038 = vmatpush1.msra.mxu0 0.0
    %2039 = vmatprep.subr.mxu0 0.0
    %2040 = vmatpush1.msra.mxu0 0.0
    %2041 = vmatprep.subr.mxu0 0.0
    %2042 = vmatpush1.msra.mxu0 0.0
    %2043 = vmatprep.subr.mxu0 0.0
    %2044 = vmatpush1.msra.mxu0 0.0
    %2045 = vmatprep.subr.mxu0 0.0
    %2046 = vmatpush1.msra.mxu0 0.0
    %2047 = vmatprep.mubr.f32.mxu0 0.0
    %v2048 = vand.u32 %v1809, 4294901760
    %2049 = vmatmul.mubr.f32.gmra.mrb[0].mxu0 %v2048
    %v2050 = vpop.f32.mrb[0].mxu0
    %v2051 = vadd.f32 %v1899, %v2050
    %v2052 = vpop.f32.mrb[0].mxu0
    %v2053 = vadd.f32 %v1901, %v2052
    %2054 = vdwg.mxu0
    %v2055 = vand.u32 %v1781, 4294901760
    %v2056 = vsub.f32 %v1781, %v2055
    %2057 = vmatprep.subr.mxu0 %v2056
    %v2058 = vand.u32 %v1780, 4294901760
    %v2059 = vsub.f32 %v1780, %v2058
    %2060 = vmatpush1.msra.mxu0 %v2059
    %v2061 = vand.u32 %v1783, 4294901760
    %v2062 = vsub.f32 %v1783, %v2061
    %2063 = vmatprep.subr.mxu0 %v2062
    %v2064 = vand.u32 %v1782, 4294901760
    %v2065 = vsub.f32 %v1782, %v2064
    %2066 = vmatpush1.msra.mxu0 %v2065
    %v2067 = vand.u32 %v1785, 4294901760
    %v2068 = vsub.f32 %v1785, %v2067
    %2069 = vmatprep.subr.mxu0 %v2068
    %v2070 = vand.u32 %v1784, 4294901760
    %v2071 = vsub.f32 %v1784, %v2070
    %2072 = vmatpush1.msra.mxu0 %v2071
    %v2073 = vand.u32 %v1787, 4294901760
    %v2074 = vsub.f32 %v1787, %v2073
    %2075 = vmatprep.subr.mxu0 %v2074
    %v2076 = vand.u32 %v1786, 4294901760
    %v2077 = vsub.f32 %v1786, %v2076
    %2078 = vmatpush1.msra.mxu0 %v2077
    %v2079 = vand.u32 %v1789, 4294901760
    %v2080 = vsub.f32 %v1789, %v2079
    %2081 = vmatprep.subr.mxu0 %v2080
    %v2082 = vand.u32 %v1788, 4294901760
    %v2083 = vsub.f32 %v1788, %v2082
    %2084 = vmatpush1.msra.mxu0 %v2083
    %v2085 = vand.u32 %v1791, 4294901760
    %v2086 = vsub.f32 %v1791, %v2085
    %2087 = vmatprep.subr.mxu0 %v2086
    %v2088 = vand.u32 %v1790, 4294901760
    %v2089 = vsub.f32 %v1790, %v2088
    %2090 = vmatpush1.msra.mxu0 %v2089
    %v2091 = vand.u32 %v1793, 4294901760
    %v2092 = vsub.f32 %v1793, %v2091
    %2093 = vmatprep.subr.mxu0 %v2092
    %v2094 = vand.u32 %v1792, 4294901760
    %v2095 = vsub.f32 %v1792, %v2094
    %2096 = vmatpush1.msra.mxu0 %v2095
    %v2097 = vand.u32 %v1795, 4294901760
    %v2098 = vsub.f32 %v1795, %v2097
    %2099 = vmatprep.subr.mxu0 %v2098
    %v2100 = vand.u32 %v1794, 4294901760
    %v2101 = vsub.f32 %v1794, %v2100
    %2102 = vmatpush1.msra.mxu0 %v2101
    %2103 = vmatprep.subr.mxu0 0.0
    %2104 = vmatpush1.msra.mxu0 0.0
    %2105 = vmatprep.subr.mxu0 0.0
    %2106 = vmatpush1.msra.mxu0 0.0
    %2107 = vmatprep.subr.mxu0 0.0
    %2108 = vmatpush1.msra.mxu0 0.0
    %2109 = vmatprep.subr.mxu0 0.0
    %2110 = vmatpush1.msra.mxu0 0.0
    %2111 = vmatprep.subr.mxu0 0.0
    %2112 = vmatpush1.msra.mxu0 0.0
    %2113 = vmatprep.subr.mxu0 0.0
    %2114 = vmatpush1.msra.mxu0 0.0
    %2115 = vmatprep.subr.mxu0 0.0
    %2116 = vmatpush1.msra.mxu0 0.0
    %2117 = vmatprep.subr.mxu0 0.0
    %2118 = vmatpush1.msra.mxu0 0.0
    %2119 = vmatprep.subr.mxu0 0.0
    %2120 = vmatpush1.msra.mxu0 0.0
    %2121 = vmatprep.subr.mxu0 0.0
    %2122 = vmatpush1.msra.mxu0 0.0
    %2123 = vmatprep.subr.mxu0 0.0
    %2124 = vmatpush1.msra.mxu0 0.0
    %2125 = vmatprep.subr.mxu0 0.0
    %2126 = vmatpush1.msra.mxu0 0.0
    %2127 = vmatprep.subr.mxu0 0.0
    %2128 = vmatpush1.msra.mxu0 0.0
    %2129 = vmatprep.subr.mxu0 0.0
    %2130 = vmatpush1.msra.mxu0 0.0
    %2131 = vmatprep.subr.mxu0 0.0
    %2132 = vmatpush1.msra.mxu0 0.0
    %2133 = vmatprep.subr.mxu0 0.0
    %2134 = vmatpush1.msra.mxu0 0.0
    %2135 = vmatprep.subr.mxu0 0.0
    %2136 = vmatpush1.msra.mxu0 0.0
    %2137 = vmatprep.subr.mxu0 0.0
    %2138 = vmatpush1.msra.mxu0 0.0
    %2139 = vmatprep.subr.mxu0 0.0
    %2140 = vmatpush1.msra.mxu0 0.0
    %2141 = vmatprep.subr.mxu0 0.0
    %2142 = vmatpush1.msra.mxu0 0.0
    %2143 = vmatprep.subr.mxu0 0.0
    %2144 = vmatpush1.msra.mxu0 0.0
    %2145 = vmatprep.subr.mxu0 0.0
    %2146 = vmatpush1.msra.mxu0 0.0
    %2147 = vmatprep.subr.mxu0 0.0
    %2148 = vmatpush1.msra.mxu0 0.0
    %2149 = vmatprep.subr.mxu0 0.0
    %2150 = vmatpush1.msra.mxu0 0.0
    %2151 = vmatprep.mubr.f32.mxu0 0.0
    %v2152 = vand.u32 %v1809, 4294901760
    %v2153 = vsub.f32 %v1809, %v2152
    %2154 = vmatmul.mubr.f32.gmra.mrb[0].mxu0 %v2153
    %v2155 = vpop.f32.mrb[0].mxu0
    %v2156 = vadd.f32 %v2051, %v2155
    %v2157 = vpop.f32.mrb[0].mxu0
    %v2158 = vadd.f32 %v2053, %v2157
    %2159 = vdwg.mxu0
    %v2160 = vand.u32 %v1781, 4294901760
    %2161 = vmatprep.subr.mxu0 %v2160
    %v2162 = vand.u32 %v1780, 4294901760
    %2163 = vmatpush1.msra.mxu0 %v2162
    %v2164 = vand.u32 %v1783, 4294901760
    %2165 = vmatprep.subr.mxu0 %v2164
    %v2166 = vand.u32 %v1782, 4294901760
    %2167 = vmatpush1.msra.mxu0 %v2166
    %v2168 = vand.u32 %v1785, 4294901760
    %2169 = vmatprep.subr.mxu0 %v2168
    %v2170 = vand.u32 %v1784, 4294901760
    %2171 = vmatpush1.msra.mxu0 %v2170
    %v2172 = vand.u32 %v1787, 4294901760
    %2173 = vmatprep.subr.mxu0 %v2172
    %v2174 = vand.u32 %v1786, 4294901760
    %2175 = vmatpush1.msra.mxu0 %v2174
    %v2176 = vand.u32 %v1789, 4294901760
    %2177 = vmatprep.subr.mxu0 %v2176
    %v2178 = vand.u32 %v1788, 4294901760
    %2179 = vmatpush1.msra.mxu0 %v2178
    %v2180 = vand.u32 %v1791, 4294901760
    %2181 = vmatprep.subr.mxu0 %v2180
    %v2182 = vand.u32 %v1790, 4294901760
    %2183 = vmatpush1.msra.mxu0 %v2182
    %v2184 = vand.u32 %v1793, 4294901760
    %2185 = vmatprep.subr.mxu0 %v2184
    %v2186 = vand.u32 %v1792, 4294901760
    %2187 = vmatpush1.msra.mxu0 %v2186
    %v2188 = vand.u32 %v1795, 4294901760
    %2189 = vmatprep.subr.mxu0 %v2188
    %v2190 = vand.u32 %v1794, 4294901760
    %2191 = vmatpush1.msra.mxu0 %v2190
    %2192 = vmatprep.subr.mxu0 0.0
    %2193 = vmatpush1.msra.mxu0 0.0
    %2194 = vmatprep.subr.mxu0 0.0
    %2195 = vmatpush1.msra.mxu0 0.0
    %2196 = vmatprep.subr.mxu0 0.0
    %2197 = vmatpush1.msra.mxu0 0.0
    %2198 = vmatprep.subr.mxu0 0.0
    %2199 = vmatpush1.msra.mxu0 0.0
    %2200 = vmatprep.subr.mxu0 0.0
    %2201 = vmatpush1.msra.mxu0 0.0
    %2202 = vmatprep.subr.mxu0 0.0
    %2203 = vmatpush1.msra.mxu0 0.0
    %2204 = vmatprep.subr.mxu0 0.0
    %2205 = vmatpush1.msra.mxu0 0.0
    %2206 = vmatprep.subr.mxu0 0.0
    %2207 = vmatpush1.msra.mxu0 0.0
    %2208 = vmatprep.subr.mxu0 0.0
    %2209 = vmatpush1.msra.mxu0 0.0
    %2210 = vmatprep.subr.mxu0 0.0
    %2211 = vmatpush1.msra.mxu0 0.0
    %2212 = vmatprep.subr.mxu0 0.0
    %2213 = vmatpush1.msra.mxu0 0.0
    %2214 = vmatprep.subr.mxu0 0.0
    %2215 = vmatpush1.msra.mxu0 0.0
    %2216 = vmatprep.subr.mxu0 0.0
    %2217 = vmatpush1.msra.mxu0 0.0
    %2218 = vmatprep.subr.mxu0 0.0
    %2219 = vmatpush1.msra.mxu0 0.0
    %2220 = vmatprep.subr.mxu0 0.0
    %2221 = vmatpush1.msra.mxu0 0.0
    %2222 = vmatprep.subr.mxu0 0.0
    %2223 = vmatpush1.msra.mxu0 0.0
    %2224 = vmatprep.subr.mxu0 0.0
    %2225 = vmatpush1.msra.mxu0 0.0
    %2226 = vmatprep.subr.mxu0 0.0
    %2227 = vmatpush1.msra.mxu0 0.0
    %2228 = vmatprep.subr.mxu0 0.0
    %2229 = vmatpush1.msra.mxu0 0.0
    %2230 = vmatprep.subr.mxu0 0.0
    %2231 = vmatpush1.msra.mxu0 0.0
    %2232 = vmatprep.subr.mxu0 0.0
    %2233 = vmatpush1.msra.mxu0 0.0
    %2234 = vmatprep.subr.mxu0 0.0
    %2235 = vmatpush1.msra.mxu0 0.0
    %2236 = vmatprep.subr.mxu0 0.0
    %2237 = vmatpush1.msra.mxu0 0.0
    %2238 = vmatprep.subr.mxu0 0.0
    %2239 = vmatpush1.msra.mxu0 0.0
    %2240 = vmatprep.mubr.f32.mxu0 0.0
    %v2241 = vand.u32 %v1809, 4294901760
    %v2242 = vsub.f32 %v1809, %v2241
    %v2243 = vand.u32 %v2242, 4294901760
    %2244 = vmatmul.mubr.f32.gmra.mrb[0].mxu0 %v2243
    %v2245 = vpop.f32.mrb[0].mxu0
    %v2246 = vadd.f32 %v2156, %v2245
    %v2247 = vpop.f32.mrb[0].mxu0
    %v2248 = vadd.f32 %v2158, %v2247
    %2249 = vdwg.mxu0
    %v2250 = vand.u32 %v1781, 4294901760
    %v2251 = vsub.f32 %v1781, %v2250
    %v2252 = vand.u32 %v2251, 4294901760
    %2253 = vmatprep.subr.mxu0 %v2252
    %v2254 = vand.u32 %v1780, 4294901760
    %v2255 = vsub.f32 %v1780, %v2254
    %v2256 = vand.u32 %v2255, 4294901760
    %2257 = vmatpush1.msra.mxu0 %v2256
    %v2258 = vand.u32 %v1783, 4294901760
    %v2259 = vsub.f32 %v1783, %v2258
    %v2260 = vand.u32 %v2259, 4294901760
    %2261 = vmatprep.subr.mxu0 %v2260
    %v2262 = vand.u32 %v1782, 4294901760
    %v2263 = vsub.f32 %v1782, %v2262
    %v2264 = vand.u32 %v2263, 4294901760
    %2265 = vmatpush1.msra.mxu0 %v2264
    %v2266 = vand.u32 %v1785, 4294901760
    %v2267 = vsub.f32 %v1785, %v2266
    %v2268 = vand.u32 %v2267, 4294901760
    %2269 = vmatprep.subr.mxu0 %v2268
    %v2270 = vand.u32 %v1784, 4294901760
    %v2271 = vsub.f32 %v1784, %v2270
    %v2272 = vand.u32 %v2271, 4294901760
    %2273 = vmatpush1.msra.mxu0 %v2272
    %v2274 = vand.u32 %v1787, 4294901760
    %v2275 = vsub.f32 %v1787, %v2274
    %v2276 = vand.u32 %v2275, 4294901760
    %2277 = vmatprep.subr.mxu0 %v2276
    %v2278 = vand.u32 %v1786, 4294901760
    %v2279 = vsub.f32 %v1786, %v2278
    %v2280 = vand.u32 %v2279, 4294901760
    %2281 = vmatpush1.msra.mxu0 %v2280
    %v2282 = vand.u32 %v1789, 4294901760
    %v2283 = vsub.f32 %v1789, %v2282
    %v2284 = vand.u32 %v2283, 4294901760
    %2285 = vmatprep.subr.mxu0 %v2284
    %v2286 = vand.u32 %v1788, 4294901760
    %v2287 = vsub.f32 %v1788, %v2286
    %v2288 = vand.u32 %v2287, 4294901760
    %2289 = vmatpush1.msra.mxu0 %v2288
    %v2290 = vand.u32 %v1791, 4294901760
    %v2291 = vsub.f32 %v1791, %v2290
    %v2292 = vand.u32 %v2291, 4294901760
    %2293 = vmatprep.subr.mxu0 %v2292
    %v2294 = vand.u32 %v1790, 4294901760
    %v2295 = vsub.f32 %v1790, %v2294
    %v2296 = vand.u32 %v2295, 4294901760
    %2297 = vmatpush1.msra.mxu0 %v2296
    %v2298 = vand.u32 %v1793, 4294901760
    %v2299 = vsub.f32 %v1793, %v2298
    %v2300 = vand.u32 %v2299, 4294901760
    %2301 = vmatprep.subr.mxu0 %v2300
    %v2302 = vand.u32 %v1792, 4294901760
    %v2303 = vsub.f32 %v1792, %v2302
    %v2304 = vand.u32 %v2303, 4294901760
    %2305 = vmatpush1.msra.mxu0 %v2304
    %v2306 = vand.u32 %v1795, 4294901760
    %v2307 = vsub.f32 %v1795, %v2306
    %v2308 = vand.u32 %v2307, 4294901760
    %2309 = vmatprep.subr.mxu0 %v2308
    %v2310 = vand.u32 %v1794, 4294901760
    %v2311 = vsub.f32 %v1794, %v2310
    %v2312 = vand.u32 %v2311, 4294901760
    %2313 = vmatpush1.msra.mxu0 %v2312
    %2314 = vmatprep.subr.mxu0 0.0
    %2315 = vmatpush1.msra.mxu0 0.0
    %2316 = vmatprep.subr.mxu0 0.0
    %2317 = vmatpush1.msra.mxu0 0.0
    %2318 = vmatprep.subr.mxu0 0.0
    %2319 = vmatpush1.msra.mxu0 0.0
    %2320 = vmatprep.subr.mxu0 0.0
    %2321 = vmatpush1.msra.mxu0 0.0
    %2322 = vmatprep.subr.mxu0 0.0
    %2323 = vmatpush1.msra.mxu0 0.0
    %2324 = vmatprep.subr.mxu0 0.0
    %2325 = vmatpush1.msra.mxu0 0.0
    %2326 = vmatprep.subr.mxu0 0.0
    %2327 = vmatpush1.msra.mxu0 0.0
    %2328 = vmatprep.subr.mxu0 0.0
    %2329 = vmatpush1.msra.mxu0 0.0
    %2330 = vmatprep.subr.mxu0 0.0
    %2331 = vmatpush1.msra.mxu0 0.0
    %2332 = vmatprep.subr.mxu0 0.0
    %2333 = vmatpush1.msra.mxu0 0.0
    %2334 = vmatprep.subr.mxu0 0.0
    %2335 = vmatpush1.msra.mxu0 0.0
    %2336 = vmatprep.subr.mxu0 0.0
    %2337 = vmatpush1.msra.mxu0 0.0
    %2338 = vmatprep.subr.mxu0 0.0
    %2339 = vmatpush1.msra.mxu0 0.0
    %2340 = vmatprep.subr.mxu0 0.0
    %2341 = vmatpush1.msra.mxu0 0.0
    %2342 = vmatprep.subr.mxu0 0.0
    %2343 = vmatpush1.msra.mxu0 0.0
    %2344 = vmatprep.subr.mxu0 0.0
    %2345 = vmatpush1.msra.mxu0 0.0
    %2346 = vmatprep.subr.mxu0 0.0
    %2347 = vmatpush1.msra.mxu0 0.0
    %2348 = vmatprep.subr.mxu0 0.0
    %2349 = vmatpush1.msra.mxu0 0.0
    %2350 = vmatprep.subr.mxu0 0.0
    %2351 = vmatpush1.msra.mxu0 0.0
    %2352 = vmatprep.subr.mxu0 0.0
    %2353 = vmatpush1.msra.mxu0 0.0
    %2354 = vmatprep.subr.mxu0 0.0
    %2355 = vmatpush1.msra.mxu0 0.0
    %2356 = vmatprep.subr.mxu0 0.0
    %2357 = vmatpush1.msra.mxu0 0.0
    %2358 = vmatprep.subr.mxu0 0.0
    %2359 = vmatpush1.msra.mxu0 0.0
    %2360 = vmatprep.subr.mxu0 0.0
    %2361 = vmatpush1.msra.mxu0 0.0
    %2362 = vmatprep.mubr.f32.mxu0 0.0
    %v2363 = vand.u32 %v1809, 4294901760
    %2364 = vmatmul.mubr.f32.gmra.mrb[0].mxu0 %v2363
    %v2365 = vpop.f32.mrb[0].mxu0
    %v2366 = vadd.f32 %v2246, %v2365
    %v2367 = vpop.f32.mrb[0].mxu0
    %v2368 = vadd.f32 %v2248, %v2367
    %2369 = vdwg.mxu0
    %v2370 = vand.u32 %v1781, 4294901760
    %2371 = vmatprep.subr.mxu0 %v2370
    %v2372 = vand.u32 %v1780, 4294901760
    %2373 = vmatpush1.msra.mxu0 %v2372
    %v2374 = vand.u32 %v1783, 4294901760
    %2375 = vmatprep.subr.mxu0 %v2374
    %v2376 = vand.u32 %v1782, 4294901760
    %2377 = vmatpush1.msra.mxu0 %v2376
    %v2378 = vand.u32 %v1785, 4294901760
    %2379 = vmatprep.subr.mxu0 %v2378
    %v2380 = vand.u32 %v1784, 4294901760
    %2381 = vmatpush1.msra.mxu0 %v2380
    %v2382 = vand.u32 %v1787, 4294901760
    %2383 = vmatprep.subr.mxu0 %v2382
    %v2384 = vand.u32 %v1786, 4294901760
    %2385 = vmatpush1.msra.mxu0 %v2384
    %v2386 = vand.u32 %v1789, 4294901760
    %2387 = vmatprep.subr.mxu0 %v2386
    %v2388 = vand.u32 %v1788, 4294901760
    %2389 = vmatpush1.msra.mxu0 %v2388
    %v2390 = vand.u32 %v1791, 4294901760
    %2391 = vmatprep.subr.mxu0 %v2390
    %v2392 = vand.u32 %v1790, 4294901760
    %2393 = vmatpush1.msra.mxu0 %v2392
    %v2394 = vand.u32 %v1793, 4294901760
    %2395 = vmatprep.subr.mxu0 %v2394
    %v2396 = vand.u32 %v1792, 4294901760
    %2397 = vmatpush1.msra.mxu0 %v2396
    %v2398 = vand.u32 %v1795, 4294901760
    %2399 = vmatprep.subr.mxu0 %v2398
    %v2400 = vand.u32 %v1794, 4294901760
    %2401 = vmatpush1.msra.mxu0 %v2400
    %2402 = vmatprep.subr.mxu0 0.0
    %2403 = vmatpush1.msra.mxu0 0.0
    %2404 = vmatprep.subr.mxu0 0.0
    %2405 = vmatpush1.msra.mxu0 0.0
    %2406 = vmatprep.subr.mxu0 0.0
    %2407 = vmatpush1.msra.mxu0 0.0
    %2408 = vmatprep.subr.mxu0 0.0
    %2409 = vmatpush1.msra.mxu0 0.0
    %2410 = vmatprep.subr.mxu0 0.0
    %2411 = vmatpush1.msra.mxu0 0.0
    %2412 = vmatprep.subr.mxu0 0.0
    %2413 = vmatpush1.msra.mxu0 0.0
    %2414 = vmatprep.subr.mxu0 0.0
    %2415 = vmatpush1.msra.mxu0 0.0
    %2416 = vmatprep.subr.mxu0 0.0
    %2417 = vmatpush1.msra.mxu0 0.0
    %2418 = vmatprep.subr.mxu0 0.0
    %2419 = vmatpush1.msra.mxu0 0.0
    %2420 = vmatprep.subr.mxu0 0.0
    %2421 = vmatpush1.msra.mxu0 0.0
    %2422 = vmatprep.subr.mxu0 0.0
    %2423 = vmatpush1.msra.mxu0 0.0
    %2424 = vmatprep.subr.mxu0 0.0
    %2425 = vmatpush1.msra.mxu0 0.0
    %2426 = vmatprep.subr.mxu0 0.0
    %2427 = vmatpush1.msra.mxu0 0.0
    %2428 = vmatprep.subr.mxu0 0.0
    %2429 = vmatpush1.msra.mxu0 0.0
    %2430 = vmatprep.subr.mxu0 0.0
    %2431 = vmatpush1.msra.mxu0 0.0
    %2432 = vmatprep.subr.mxu0 0.0
    %2433 = vmatpush1.msra.mxu0 0.0
    %2434 = vmatprep.subr.mxu0 0.0
    %2435 = vmatpush1.msra.mxu0 0.0
    %2436 = vmatprep.subr.mxu0 0.0
    %2437 = vmatpush1.msra.mxu0 0.0
    %2438 = vmatprep.subr.mxu0 0.0
    %2439 = vmatpush1.msra.mxu0 0.0
    %2440 = vmatprep.subr.mxu0 0.0
    %2441 = vmatpush1.msra.mxu0 0.0
    %2442 = vmatprep.subr.mxu0 0.0
    %2443 = vmatpush1.msra.mxu0 0.0
    %2444 = vmatprep.subr.mxu0 0.0
    %2445 = vmatpush1.msra.mxu0 0.0
    %2446 = vmatprep.subr.mxu0 0.0
    %2447 = vmatpush1.msra.mxu0 0.0
    %2448 = vmatprep.subr.mxu0 0.0
    %2449 = vmatpush1.msra.mxu0 0.0
    %2450 = vmatprep.mubr.f32.mxu0 0.0
    %v2451 = vand.u32 %v1809, 4294901760
    %2452 = vmatmul.mubr.f32.gmra.mrb[0].mxu0 %v2451
    %v2453 = vpop.f32.mrb[0].mxu0
    %v2454 = vadd.f32 %v2366, %v2453
    %v2455 = vpop.f32.mrb[0].mxu0
    %v2456 = vadd.f32 %v2368, %v2455
    %2457 = vdwg.mxu0
    %v2458 = vadd.f32 %v1771, %v2454
    %v2459 = vxor.u32 %v2458, 2147483648
    %v2460 = vmul.f32 %v2459, 1.442695
    %v2461 = vpow.pop %v2460
    %v2462 = vadd.f32 %v2461, 1.0
    %v2463 = vrcp.pop %v2462
    %v2464 = vmul.f32 1.0, %v2463
    %v2465 = vmul.f32 %v2464, %v2456
    %v2466 = vadd.f32 %v1773, %v2465
    %v2467 = vtanh.pop %v2466
    %v2468 = vsub.f32 1.0, %v2464
    %2470 = vrot.lane.b32.xlu0 %v2467, 64
    %v2471 = vpop.permute.xlu0 %2470
    %v2473 = vmul.f32 %v2468, %v2471
    %2474 = vrot.lane.b32.xlu0 %v1779, 64
    %v2475 = vpop.permute.xlu0 %2474
    %v2477 = vmul.f32 %v2464, %v2475
    %v2478 = vadd.f32 %v2473, %v2477
    %v2479 = vld [vmem:[%s49] sm:$0xf]
    %vm2480 = vcmp.gt.f32.partialorder %v737, 0.0
    %v2481 = vlaneseq
    %v2482 = vshrl.u32 %v2481, 7
    %v2483 = vsub.s32 0, %v2482
    %v2484 = vrot.slane %v2479, %v2483
    %v2485 = vmul.f32 %v756, %v2484
    %v2486 = vmul.f32 %v757, %v2484
    %v2487 = vmul.f32 %v758, %v2484
    %v2488 = vmul.f32 %v759, %v2484
    %v2489 = vmul.f32 %v760, %v2484
    %v2490 = vmul.f32 %v761, %v2484
    %v2491 = vmul.f32 %v762, %v2484
    %v2492 = vmul.f32 %v763, %v2484
    %v2493 = vsel %vm821, %v2485, 0.0
    %2494 = vadd.xlane.f32.xlu0 %v2493
    %v2495 = vpop.xlane.xlu0 %2494
    %v2496 = vsel %vm821, %v2486, 0.0
    %2497 = vadd.xlane.f32.xlu0 %v2496
    %v2498 = vpop.xlane.xlu0 %2497
    %v2499 = vsel %vm821, %v2487, 0.0
    %2500 = vadd.xlane.f32.xlu0 %v2499
    %v2501 = vpop.xlane.xlu0 %2500
    %v2502 = vsel %vm821, %v2488, 0.0
    %2503 = vadd.xlane.f32.xlu0 %v2502
    %v2504 = vpop.xlane.xlu0 %2503
    %v2505 = vsel %vm821, %v2489, 0.0
    %2506 = vadd.xlane.f32.xlu0 %v2505
    %v2507 = vpop.xlane.xlu0 %2506
    %v2508 = vsel %vm821, %v2490, 0.0
    %2509 = vadd.xlane.f32.xlu0 %v2508
    %v2510 = vpop.xlane.xlu0 %2509
    %v2511 = vsel %vm821, %v2491, 0.0
    %2512 = vadd.xlane.f32.xlu0 %v2511
    %v2513 = vpop.xlane.xlu0 %2512
    %v2514 = vsel %vm821, %v2492, 0.0
    %2515 = vadd.xlane.f32.xlu0 %v2514
    %v2516 = vpop.xlane.xlu0 %2515
    %v2517 = vsel %vm2480, 1, 0
    %2518 = vset.pattern.permute.xlu0 0
    %2519 = vperm.xlu0 %2518, %v2517
    %v2520 = vpop.permute.xlu0 %2519
    %vm2521 = vcmp.eq.s32.totalorder %v2520, 1
    %v2530 = vlaneseq
    %v2531 = vshrl.u32 %v2530, 7
    %v2532 = vsub.s32 %v697, %v2531
    %v2533 = vrot.slane %v2495, %v2532
    %v2534 = vlaneseq
    %v2535 = vshrl.u32 %v2534, 7
    %v2536 = vsub.s32 %v697, %v2535
    %v2537 = vrot.slane %v2498, %v2536
    %v2538 = vlaneseq
    %v2539 = vshrl.u32 %v2538, 7
    %v2540 = vsub.s32 %v697, %v2539
    %v2541 = vrot.slane %v2501, %v2540
    %v2542 = vlaneseq
    %v2543 = vshrl.u32 %v2542, 7
    %v2544 = vsub.s32 %v697, %v2543
    %v2545 = vrot.slane %v2504, %v2544
    %v2546 = vlaneseq
    %v2547 = vshrl.u32 %v2546, 7
    %v2548 = vsub.s32 %v697, %v2547
    %v2549 = vrot.slane %v2507, %v2548
    %v2550 = vlaneseq
    %v2551 = vshrl.u32 %v2550, 7
    %v2552 = vsub.s32 %v697, %v2551
    %v2553 = vrot.slane %v2510, %v2552
    %v2554 = vlaneseq
    %v2555 = vshrl.u32 %v2554, 7
    %v2556 = vsub.s32 %v697, %v2555
    %v2557 = vrot.slane %v2513, %v2556
    %v2558 = vlaneseq
    %v2559 = vshrl.u32 %v2558, 7
    %v2560 = vsub.s32 %v697, %v2559
    %v2561 = vrot.slane %v2516, %v2560
    %vm2562 = vcmask 1041409
    %v2563 = vsel %vm2562, %v2537, %v2533
    %vm2564 = vcmask 1042434
    %v2565 = vsel %vm2564, %v2541, %v2563
    %vm2566 = vcmask 1043459
    %v2567 = vsel %vm2566, %v2545, %v2565
    %vm2568 = vcmask 1044484
    %v2569 = vsel %vm2568, %v2549, %v2567
    %vm2570 = vcmask 1045509
    %v2571 = vsel %vm2570, %v2553, %v2569
    %vm2572 = vcmask 1046534
    %v2573 = vsel %vm2572, %v2557, %v2571
    %vm2574 = vcmask 1047559
    %v2575 = vsel %vm2574, %v2561, %v2573
    %v2577 = vsel %vm2521, %v2575, -1e+30
    %vm2578 = vcmask 15360
    %v2579 = vsel %vm2578, %v2577, -inf
    %v2580 = vrot.slane %v2579, 4
    %v2581 = vmax.f32 %v2579, %v2580
    %v2582 = vrot.slane %v2581, 2
    %v2583 = vmax.f32 %v2581, %v2582
    %v2584 = vrot.slane %v2583, 1
    %v2585 = vmax.f32 %v2583, %v2584
    %v2586 = vsub.f32 %v2577, %v2585
    %v2587 = vmul.f32 %v2586, 1.442695
    %v2588 = vpow.pop %v2587
    %v2589 = vsel %vm2578, %v2588, 0.0
    %v2590 = vrot.slane %v2589, 4
    %v2591 = vadd.f32 %v2589, %v2590
    %v2592 = vrot.slane %v2591, 2
    %v2593 = vadd.f32 %v2591, %v2592
    %v2594 = vrot.slane %v2593, 1
    %v2595 = vadd.f32 %v2593, %v2594
    %v2596 = vrcp.pop %v2595
    %v2597 = vmul.f32 %v2588, %v2596
    %v2598 = vlaneseq
    %v2599 = vshrl.u32 %v2598, 7
    %v2600 = vsub.s32 0, %v2599
    %v2601 = vrot.slane %v2597, %v2600
    %2603 = vbcast.lane.b32.xlu0 %v2601, 256
    %v2604 = vpop.permute.xlu0 %2603
    %v2605 = vlaneseq
    %v2606 = vshrl.u32 %v2605, 7
    %v2607 = vsub.s32 1, %v2606
    %v2608 = vrot.slane %v2597, %v2607
    %2610 = vbcast.lane.b32.xlu0 %v2608, 256
    %v2611 = vpop.permute.xlu0 %2610
    %v2612 = vlaneseq
    %v2613 = vshrl.u32 %v2612, 7
    %v2614 = vsub.s32 2, %v2613
    %v2615 = vrot.slane %v2597, %v2614
    %2617 = vbcast.lane.b32.xlu0 %v2615, 256
    %v2618 = vpop.permute.xlu0 %2617
    %v2619 = vlaneseq
    %v2620 = vshrl.u32 %v2619, 7
    %v2621 = vsub.s32 3, %v2620
    %v2622 = vrot.slane %v2597, %v2621
    %2624 = vbcast.lane.b32.xlu0 %v2622, 256
    %v2625 = vpop.permute.xlu0 %2624
    %v2626 = vlaneseq
    %v2627 = vshrl.u32 %v2626, 7
    %v2628 = vsub.s32 4, %v2627
    %v2629 = vrot.slane %v2597, %v2628
    %2631 = vbcast.lane.b32.xlu0 %v2629, 256
    %v2632 = vpop.permute.xlu0 %2631
    %v2633 = vlaneseq
    %v2634 = vshrl.u32 %v2633, 7
    %v2635 = vsub.s32 5, %v2634
    %v2636 = vrot.slane %v2597, %v2635
    %2638 = vbcast.lane.b32.xlu0 %v2636, 256
    %v2639 = vpop.permute.xlu0 %2638
    %v2640 = vlaneseq
    %v2641 = vshrl.u32 %v2640, 7
    %v2642 = vsub.s32 6, %v2641
    %v2643 = vrot.slane %v2597, %v2642
    %2645 = vbcast.lane.b32.xlu0 %v2643, 256
    %v2646 = vpop.permute.xlu0 %2645
    %v2647 = vlaneseq
    %v2648 = vshrl.u32 %v2647, 7
    %v2649 = vsub.s32 7, %v2648
    %v2650 = vrot.slane %v2597, %v2649
    %2652 = vbcast.lane.b32.xlu0 %v2650, 256
    %v2653 = vpop.permute.xlu0 %2652
    %v2654 = vmul.f32 %v2604, %v756
    %v2655 = vmul.f32 %v2611, %v757
    %v2656 = vmul.f32 %v2618, %v758
    %v2657 = vmul.f32 %v2625, %v759
    %v2658 = vmul.f32 %v2632, %v760
    %v2659 = vmul.f32 %v2639, %v761
    %v2660 = vmul.f32 %v2646, %v762
    %v2661 = vmul.f32 %v2653, %v763
    %v2662 = vsel %vm821, %v2654, 0.0
    %v2663 = vsel %vm821, %v2655, 0.0
    %v2664 = vadd.f32 %v2662, %v2663
    %v2665 = vsel %vm821, %v2656, 0.0
    %v2666 = vadd.f32 %v2664, %v2665
    %v2667 = vsel %vm821, %v2657, 0.0
    %v2668 = vadd.f32 %v2666, %v2667
    %v2669 = vsel %vm821, %v2658, 0.0
    %v2670 = vadd.f32 %v2668, %v2669
    %v2671 = vsel %vm821, %v2659, 0.0
    %v2672 = vadd.f32 %v2670, %v2671
    %v2673 = vsel %vm821, %v2660, 0.0
    %v2674 = vadd.f32 %v2672, %v2673
    %v2675 = vsel %vm821, %v2661, 0.0
    %v2676 = vadd.f32 %v2674, %v2675
    %v2677 = vlaneseq
    %v2678 = vshrl.u32 %v2677, 7
    %v2679 = vsub.s32 1, %v2678
    %v2680 = vrot.slane %v2479, %v2679
    %v2681 = vmul.f32 %v756, %v2680
    %v2682 = vmul.f32 %v757, %v2680
    %v2683 = vmul.f32 %v758, %v2680
    %v2684 = vmul.f32 %v759, %v2680
    %v2685 = vmul.f32 %v760, %v2680
    %v2686 = vmul.f32 %v761, %v2680
    %v2687 = vmul.f32 %v762, %v2680
    %v2688 = vmul.f32 %v763, %v2680
    %v2689 = vsel %vm821, %v2681, 0.0
    %2690 = vadd.xlane.f32.xlu0 %v2689
    %v2691 = vpop.xlane.xlu0 %2690
    %v2692 = vsel %vm821, %v2682, 0.0
    %2693 = vadd.xlane.f32.xlu0 %v2692
    %v2694 = vpop.xlane.xlu0 %2693
    %v2695 = vsel %vm821, %v2683, 0.0
    %2696 = vadd.xlane.f32.xlu0 %v2695
    %v2697 = vpop.xlane.xlu0 %2696
    %v2698 = vsel %vm821, %v2684, 0.0
    %2699 = vadd.xlane.f32.xlu0 %v2698
    %v2700 = vpop.xlane.xlu0 %2699
    %v2701 = vsel %vm821, %v2685, 0.0
    %2702 = vadd.xlane.f32.xlu0 %v2701
    %v2703 = vpop.xlane.xlu0 %2702
    %v2704 = vsel %vm821, %v2686, 0.0
    %2705 = vadd.xlane.f32.xlu0 %v2704
    %v2706 = vpop.xlane.xlu0 %2705
    %v2707 = vsel %vm821, %v2687, 0.0
    %2708 = vadd.xlane.f32.xlu0 %v2707
    %v2709 = vpop.xlane.xlu0 %2708
    %v2710 = vsel %vm821, %v2688, 0.0
    %2711 = vadd.xlane.f32.xlu0 %v2710
    %v2712 = vpop.xlane.xlu0 %2711
    %v2721 = vlaneseq
    %v2722 = vshrl.u32 %v2721, 7
    %v2723 = vsub.s32 %v697, %v2722
    %v2724 = vrot.slane %v2691, %v2723
    %v2725 = vlaneseq
    %v2726 = vshrl.u32 %v2725, 7
    %v2727 = vsub.s32 %v697, %v2726
    %v2728 = vrot.slane %v2694, %v2727
    %v2729 = vlaneseq
    %v2730 = vshrl.u32 %v2729, 7
    %v2731 = vsub.s32 %v697, %v2730
    %v2732 = vrot.slane %v2697, %v2731
    %v2733 = vlaneseq
    %v2734 = vshrl.u32 %v2733, 7
    %v2735 = vsub.s32 %v697, %v2734
    %v2736 = vrot.slane %v2700, %v2735
    %v2737 = vlaneseq
    %v2738 = vshrl.u32 %v2737, 7
    %v2739 = vsub.s32 %v697, %v2738
    %v2740 = vrot.slane %v2703, %v2739
    %v2741 = vlaneseq
    %v2742 = vshrl.u32 %v2741, 7
    %v2743 = vsub.s32 %v697, %v2742
    %v2744 = vrot.slane %v2706, %v2743
    %v2745 = vlaneseq
    %v2746 = vshrl.u32 %v2745, 7
    %v2747 = vsub.s32 %v697, %v2746
    %v2748 = vrot.slane %v2709, %v2747
    %v2749 = vlaneseq
    %v2750 = vshrl.u32 %v2749, 7
    %v2751 = vsub.s32 %v697, %v2750
    %v2752 = vrot.slane %v2712, %v2751
    %v2753 = vsel %vm2562, %v2728, %v2724
    %v2754 = vsel %vm2564, %v2732, %v2753
    %v2755 = vsel %vm2566, %v2736, %v2754
    %v2756 = vsel %vm2568, %v2740, %v2755
    %v2757 = vsel %vm2570, %v2744, %v2756
    %v2758 = vsel %vm2572, %v2748, %v2757
    %v2759 = vsel %vm2574, %v2752, %v2758
    %v2761 = vsel %vm2521, %v2759, -1e+30
    %v2762 = vsel %vm2578, %v2761, -inf
    %v2763 = vrot.slane %v2762, 4
    %v2764 = vmax.f32 %v2762, %v2763
    %v2765 = vrot.slane %v2764, 2
    %v2766 = vmax.f32 %v2764, %v2765
    %v2767 = vrot.slane %v2766, 1
    %v2768 = vmax.f32 %v2766, %v2767
    %v2769 = vsub.f32 %v2761, %v2768
    %v2770 = vmul.f32 %v2769, 1.442695
    %v2771 = vpow.pop %v2770
    %v2772 = vsel %vm2578, %v2771, 0.0
    %v2773 = vrot.slane %v2772, 4
    %v2774 = vadd.f32 %v2772, %v2773
    %v2775 = vrot.slane %v2774, 2
    %v2776 = vadd.f32 %v2774, %v2775
    %v2777 = vrot.slane %v2776, 1
    %v2778 = vadd.f32 %v2776, %v2777
    %v2779 = vrcp.pop %v2778
    %v2780 = vmul.f32 %v2771, %v2779
    %v2781 = vlaneseq
    %v2782 = vshrl.u32 %v2781, 7
    %v2783 = vsub.s32 0, %v2782
    %v2784 = vrot.slane %v2780, %v2783
    %2786 = vbcast.lane.b32.xlu0 %v2784, 256
    %v2787 = vpop.permute.xlu0 %2786
    %v2788 = vlaneseq
    %v2789 = vshrl.u32 %v2788, 7
    %v2790 = vsub.s32 1, %v2789
    %v2791 = vrot.slane %v2780, %v2790
    %2793 = vbcast.lane.b32.xlu0 %v2791, 256
    %v2794 = vpop.permute.xlu0 %2793
    %v2795 = vlaneseq
    %v2796 = vshrl.u32 %v2795, 7
    %v2797 = vsub.s32 2, %v2796
    %v2798 = vrot.slane %v2780, %v2797
    %2800 = vbcast.lane.b32.xlu0 %v2798, 256
    %v2801 = vpop.permute.xlu0 %2800
    %v2802 = vlaneseq
    %v2803 = vshrl.u32 %v2802, 7
    %v2804 = vsub.s32 3, %v2803
    %v2805 = vrot.slane %v2780, %v2804
    %2807 = vbcast.lane.b32.xlu0 %v2805, 256
    %v2808 = vpop.permute.xlu0 %2807
    %v2809 = vlaneseq
    %v2810 = vshrl.u32 %v2809, 7
    %v2811 = vsub.s32 4, %v2810
    %v2812 = vrot.slane %v2780, %v2811
    %2814 = vbcast.lane.b32.xlu0 %v2812, 256
    %v2815 = vpop.permute.xlu0 %2814
    %v2816 = vlaneseq
    %v2817 = vshrl.u32 %v2816, 7
    %v2818 = vsub.s32 5, %v2817
    %v2819 = vrot.slane %v2780, %v2818
    %2821 = vbcast.lane.b32.xlu0 %v2819, 256
    %v2822 = vpop.permute.xlu0 %2821
    %v2823 = vlaneseq
    %v2824 = vshrl.u32 %v2823, 7
    %v2825 = vsub.s32 6, %v2824
    %v2826 = vrot.slane %v2780, %v2825
    %2828 = vbcast.lane.b32.xlu0 %v2826, 256
    %v2829 = vpop.permute.xlu0 %2828
    %v2830 = vlaneseq
    %v2831 = vshrl.u32 %v2830, 7
    %v2832 = vsub.s32 7, %v2831
    %v2833 = vrot.slane %v2780, %v2832
    %2835 = vbcast.lane.b32.xlu0 %v2833, 256
    %v2836 = vpop.permute.xlu0 %2835
    %v2837 = vmul.f32 %v2787, %v756
    %v2838 = vmul.f32 %v2794, %v757
    %v2839 = vmul.f32 %v2801, %v758
    %v2840 = vmul.f32 %v2808, %v759
    %v2841 = vmul.f32 %v2815, %v760
    %v2842 = vmul.f32 %v2822, %v761
    %v2843 = vmul.f32 %v2829, %v762
    %v2844 = vmul.f32 %v2836, %v763
    %v2845 = vsel %vm821, %v2837, 0.0
    %v2846 = vsel %vm821, %v2838, 0.0
    %v2847 = vadd.f32 %v2845, %v2846
    %v2848 = vsel %vm821, %v2839, 0.0
    %v2849 = vadd.f32 %v2847, %v2848
    %v2850 = vsel %vm821, %v2840, 0.0
    %v2851 = vadd.f32 %v2849, %v2850
    %v2852 = vsel %vm821, %v2841, 0.0
    %v2853 = vadd.f32 %v2851, %v2852
    %v2854 = vsel %vm821, %v2842, 0.0
    %v2855 = vadd.f32 %v2853, %v2854
    %v2856 = vsel %vm821, %v2843, 0.0
    %v2857 = vadd.f32 %v2855, %v2856
    %v2858 = vsel %vm821, %v2844, 0.0
    %v2859 = vadd.f32 %v2857, %v2858
    %v2860 = vlaneseq
    %v2861 = vshrl.u32 %v2860, 7
    %v2862 = vsub.s32 2, %v2861
    %v2863 = vrot.slane %v2479, %v2862
    %v2864 = vmul.f32 %v764, %v2863
    %v2865 = vmul.f32 %v765, %v2863
    %v2866 = vmul.f32 %v766, %v2863
    %v2867 = vmul.f32 %v767, %v2863
    %v2868 = vmul.f32 %v768, %v2863
    %v2869 = vmul.f32 %v769, %v2863
    %v2870 = vmul.f32 %v770, %v2863
    %v2871 = vmul.f32 %v771, %v2863
    %v2872 = vsel %vm821, %v2864, 0.0
    %2873 = vadd.xlane.f32.xlu0 %v2872
    %v2874 = vpop.xlane.xlu0 %2873
    %v2875 = vsel %vm821, %v2865, 0.0
    %2876 = vadd.xlane.f32.xlu0 %v2875
    %v2877 = vpop.xlane.xlu0 %2876
    %v2878 = vsel %vm821, %v2866, 0.0
    %2879 = vadd.xlane.f32.xlu0 %v2878
    %v2880 = vpop.xlane.xlu0 %2879
    %v2881 = vsel %vm821, %v2867, 0.0
    %2882 = vadd.xlane.f32.xlu0 %v2881
    %v2883 = vpop.xlane.xlu0 %2882
    %v2884 = vsel %vm821, %v2868, 0.0
    %2885 = vadd.xlane.f32.xlu0 %v2884
    %v2886 = vpop.xlane.xlu0 %2885
    %v2887 = vsel %vm821, %v2869, 0.0
    %2888 = vadd.xlane.f32.xlu0 %v2887
    %v2889 = vpop.xlane.xlu0 %2888
    %v2890 = vsel %vm821, %v2870, 0.0
    %2891 = vadd.xlane.f32.xlu0 %v2890
    %v2892 = vpop.xlane.xlu0 %2891
    %v2893 = vsel %vm821, %v2871, 0.0
    %2894 = vadd.xlane.f32.xlu0 %v2893
    %v2895 = vpop.xlane.xlu0 %2894
    %v2904 = vlaneseq
    %v2905 = vshrl.u32 %v2904, 7
    %v2906 = vsub.s32 %v697, %v2905
    %v2907 = vrot.slane %v2874, %v2906
    %v2908 = vlaneseq
    %v2909 = vshrl.u32 %v2908, 7
    %v2910 = vsub.s32 %v697, %v2909
    %v2911 = vrot.slane %v2877, %v2910
    %v2912 = vlaneseq
    %v2913 = vshrl.u32 %v2912, 7
    %v2914 = vsub.s32 %v697, %v2913
    %v2915 = vrot.slane %v2880, %v2914
    %v2916 = vlaneseq
    %v2917 = vshrl.u32 %v2916, 7
    %v2918 = vsub.s32 %v697, %v2917
    %v2919 = vrot.slane %v2883, %v2918
    %v2920 = vlaneseq
    %v2921 = vshrl.u32 %v2920, 7
    %v2922 = vsub.s32 %v697, %v2921
    %v2923 = vrot.slane %v2886, %v2922
    %v2924 = vlaneseq
    %v2925 = vshrl.u32 %v2924, 7
    %v2926 = vsub.s32 %v697, %v2925
    %v2927 = vrot.slane %v2889, %v2926
    %v2928 = vlaneseq
    %v2929 = vshrl.u32 %v2928, 7
    %v2930 = vsub.s32 %v697, %v2929
    %v2931 = vrot.slane %v2892, %v2930
    %v2932 = vlaneseq
    %v2933 = vshrl.u32 %v2932, 7
    %v2934 = vsub.s32 %v697, %v2933
    %v2935 = vrot.slane %v2895, %v2934
    %v2936 = vsel %vm2562, %v2911, %v2907
    %v2937 = vsel %vm2564, %v2915, %v2936
    %v2938 = vsel %vm2566, %v2919, %v2937
    %v2939 = vsel %vm2568, %v2923, %v2938
    %v2940 = vsel %vm2570, %v2927, %v2939
    %v2941 = vsel %vm2572, %v2931, %v2940
    %v2942 = vsel %vm2574, %v2935, %v2941
    %v2944 = vsel %vm2521, %v2942, -1e+30
    %v2945 = vsel %vm2578, %v2944, -inf
    %v2946 = vrot.slane %v2945, 4
    %v2947 = vmax.f32 %v2945, %v2946
    %v2948 = vrot.slane %v2947, 2
    %v2949 = vmax.f32 %v2947, %v2948
    %v2950 = vrot.slane %v2949, 1
    %v2951 = vmax.f32 %v2949, %v2950
    %v2952 = vsub.f32 %v2944, %v2951
    %v2953 = vmul.f32 %v2952, 1.442695
    %v2954 = vpow.pop %v2953
    %v2955 = vsel %vm2578, %v2954, 0.0
    %v2956 = vrot.slane %v2955, 4
    %v2957 = vadd.f32 %v2955, %v2956
    %v2958 = vrot.slane %v2957, 2
    %v2959 = vadd.f32 %v2957, %v2958
    %v2960 = vrot.slane %v2959, 1
    %v2961 = vadd.f32 %v2959, %v2960
    %v2962 = vrcp.pop %v2961
    %v2963 = vmul.f32 %v2954, %v2962
    %v2964 = vlaneseq
    %v2965 = vshrl.u32 %v2964, 7
    %v2966 = vsub.s32 0, %v2965
    %v2967 = vrot.slane %v2963, %v2966
    %2969 = vbcast.lane.b32.xlu0 %v2967, 256
    %v2970 = vpop.permute.xlu0 %2969
    %v2971 = vlaneseq
    %v2972 = vshrl.u32 %v2971, 7
    %v2973 = vsub.s32 1, %v2972
    %v2974 = vrot.slane %v2963, %v2973
    %2976 = vbcast.lane.b32.xlu0 %v2974, 256
    %v2977 = vpop.permute.xlu0 %2976
    %v2978 = vlaneseq
    %v2979 = vshrl.u32 %v2978, 7
    %v2980 = vsub.s32 2, %v2979
    %v2981 = vrot.slane %v2963, %v2980
    %2983 = vbcast.lane.b32.xlu0 %v2981, 256
    %v2984 = vpop.permute.xlu0 %2983
    %v2985 = vlaneseq
    %v2986 = vshrl.u32 %v2985, 7
    %v2987 = vsub.s32 3, %v2986
    %v2988 = vrot.slane %v2963, %v2987
    %2990 = vbcast.lane.b32.xlu0 %v2988, 256
    %v2991 = vpop.permute.xlu0 %2990
    %v2992 = vlaneseq
    %v2993 = vshrl.u32 %v2992, 7
    %v2994 = vsub.s32 4, %v2993
    %v2995 = vrot.slane %v2963, %v2994
    %2997 = vbcast.lane.b32.xlu0 %v2995, 256
    %v2998 = vpop.permute.xlu0 %2997
    %v2999 = vlaneseq
    %v3000 = vshrl.u32 %v2999, 7
    %v3001 = vsub.s32 5, %v3000
    %v3002 = vrot.slane %v2963, %v3001
    %3004 = vbcast.lane.b32.xlu0 %v3002, 256
    %v3005 = vpop.permute.xlu0 %3004
    %v3006 = vlaneseq
    %v3007 = vshrl.u32 %v3006, 7
    %v3008 = vsub.s32 6, %v3007
    %v3009 = vrot.slane %v2963, %v3008
    %3011 = vbcast.lane.b32.xlu0 %v3009, 256
    %v3012 = vpop.permute.xlu0 %3011
    %v3013 = vlaneseq
    %v3014 = vshrl.u32 %v3013, 7
    %v3015 = vsub.s32 7, %v3014
    %v3016 = vrot.slane %v2963, %v3015
    %3018 = vbcast.lane.b32.xlu0 %v3016, 256
    %v3019 = vpop.permute.xlu0 %3018
    %v3020 = vmul.f32 %v2970, %v764
    %v3021 = vmul.f32 %v2977, %v765
    %v3022 = vmul.f32 %v2984, %v766
    %v3023 = vmul.f32 %v2991, %v767
    %v3024 = vmul.f32 %v2998, %v768
    %v3025 = vmul.f32 %v3005, %v769
    %v3026 = vmul.f32 %v3012, %v770
    %v3027 = vmul.f32 %v3019, %v771
    %v3028 = vsel %vm821, %v3020, 0.0
    %v3029 = vsel %vm821, %v3021, 0.0
    %v3030 = vadd.f32 %v3028, %v3029
    %v3031 = vsel %vm821, %v3022, 0.0
    %v3032 = vadd.f32 %v3030, %v3031
    %v3033 = vsel %vm821, %v3023, 0.0
    %v3034 = vadd.f32 %v3032, %v3033
    %v3035 = vsel %vm821, %v3024, 0.0
    %v3036 = vadd.f32 %v3034, %v3035
    %v3037 = vsel %vm821, %v3025, 0.0
    %v3038 = vadd.f32 %v3036, %v3037
    %v3039 = vsel %vm821, %v3026, 0.0
    %v3040 = vadd.f32 %v3038, %v3039
    %v3041 = vsel %vm821, %v3027, 0.0
    %v3042 = vadd.f32 %v3040, %v3041
    %v3043 = vlaneseq
    %v3044 = vshrl.u32 %v3043, 7
    %v3045 = vsub.s32 3, %v3044
    %v3046 = vrot.slane %v2479, %v3045
    %v3047 = vmul.f32 %v764, %v3046
    %v3048 = vmul.f32 %v765, %v3046
    %v3049 = vmul.f32 %v766, %v3046
    %v3050 = vmul.f32 %v767, %v3046
    %v3051 = vmul.f32 %v768, %v3046
    %v3052 = vmul.f32 %v769, %v3046
    %v3053 = vmul.f32 %v770, %v3046
    %v3054 = vmul.f32 %v771, %v3046
    %v3055 = vsel %vm821, %v3047, 0.0
    %3056 = vadd.xlane.f32.xlu0 %v3055
    %v3057 = vpop.xlane.xlu0 %3056
    %v3058 = vsel %vm821, %v3048, 0.0
    %3059 = vadd.xlane.f32.xlu0 %v3058
    %v3060 = vpop.xlane.xlu0 %3059
    %v3061 = vsel %vm821, %v3049, 0.0
    %3062 = vadd.xlane.f32.xlu0 %v3061
    %v3063 = vpop.xlane.xlu0 %3062
    %v3064 = vsel %vm821, %v3050, 0.0
    %3065 = vadd.xlane.f32.xlu0 %v3064
    %v3066 = vpop.xlane.xlu0 %3065
    %v3067 = vsel %vm821, %v3051, 0.0
    %3068 = vadd.xlane.f32.xlu0 %v3067
    %v3069 = vpop.xlane.xlu0 %3068
    %v3070 = vsel %vm821, %v3052, 0.0
    %3071 = vadd.xlane.f32.xlu0 %v3070
    %v3072 = vpop.xlane.xlu0 %3071
    %v3073 = vsel %vm821, %v3053, 0.0
    %3074 = vadd.xlane.f32.xlu0 %v3073
    %v3075 = vpop.xlane.xlu0 %3074
    %v3076 = vsel %vm821, %v3054, 0.0
    %3077 = vadd.xlane.f32.xlu0 %v3076
    %v3078 = vpop.xlane.xlu0 %3077
    %v3087 = vlaneseq
    %v3088 = vshrl.u32 %v3087, 7
    %v3089 = vsub.s32 %v697, %v3088
    %v3090 = vrot.slane %v3057, %v3089
    %v3091 = vlaneseq
    %v3092 = vshrl.u32 %v3091, 7
    %v3093 = vsub.s32 %v697, %v3092
    %v3094 = vrot.slane %v3060, %v3093
    %v3095 = vlaneseq
    %v3096 = vshrl.u32 %v3095, 7
    %v3097 = vsub.s32 %v697, %v3096
    %v3098 = vrot.slane %v3063, %v3097
    %v3099 = vlaneseq
    %v3100 = vshrl.u32 %v3099, 7
    %v3101 = vsub.s32 %v697, %v3100
    %v3102 = vrot.slane %v3066, %v3101
    %v3103 = vlaneseq
    %v3104 = vshrl.u32 %v3103, 7
    %v3105 = vsub.s32 %v697, %v3104
    %v3106 = vrot.slane %v3069, %v3105
    %v3107 = vlaneseq
    %v3108 = vshrl.u32 %v3107, 7
    %v3109 = vsub.s32 %v697, %v3108
    %v3110 = vrot.slane %v3072, %v3109
    %v3111 = vlaneseq
    %v3112 = vshrl.u32 %v3111, 7
    %v3113 = vsub.s32 %v697, %v3112
    %v3114 = vrot.slane %v3075, %v3113
    %v3115 = vlaneseq
    %v3116 = vshrl.u32 %v3115, 7
    %v3117 = vsub.s32 %v697, %v3116
    %v3118 = vrot.slane %v3078, %v3117
    %v3119 = vsel %vm2562, %v3094, %v3090
    %v3120 = vsel %vm2564, %v3098, %v3119
    %v3121 = vsel %vm2566, %v3102, %v3120
    %v3122 = vsel %vm2568, %v3106, %v3121
    %v3123 = vsel %vm2570, %v3110, %v3122
    %v3124 = vsel %vm2572, %v3114, %v3123
    %v3125 = vsel %vm2574, %v3118, %v3124
    %v3127 = vsel %vm2521, %v3125, -1e+30
    %v3128 = vsel %vm2578, %v3127, -inf
    %v3129 = vrot.slane %v3128, 4
    %v3130 = vmax.f32 %v3128, %v3129
    %v3131 = vrot.slane %v3130, 2
    %v3132 = vmax.f32 %v3130, %v3131
    %v3133 = vrot.slane %v3132, 1
    %v3134 = vmax.f32 %v3132, %v3133
    %v3135 = vsub.f32 %v3127, %v3134
    %v3136 = vmul.f32 %v3135, 1.442695
    %v3137 = vpow.pop %v3136
    %v3138 = vsel %vm2578, %v3137, 0.0
    %v3139 = vrot.slane %v3138, 4
    %v3140 = vadd.f32 %v3138, %v3139
    %v3141 = vrot.slane %v3140, 2
    %v3142 = vadd.f32 %v3140, %v3141
    %v3143 = vrot.slane %v3142, 1
    %v3144 = vadd.f32 %v3142, %v3143
    %v3145 = vrcp.pop %v3144
    %v3146 = vmul.f32 %v3137, %v3145
    %v3147 = vlaneseq
    %v3148 = vshrl.u32 %v3147, 7
    %v3149 = vsub.s32 0, %v3148
    %v3150 = vrot.slane %v3146, %v3149
    %3152 = vbcast.lane.b32.xlu0 %v3150, 256
    %v3153 = vpop.permute.xlu0 %3152
    %v3154 = vlaneseq
    %v3155 = vshrl.u32 %v3154, 7
    %v3156 = vsub.s32 1, %v3155
    %v3157 = vrot.slane %v3146, %v3156
    %3159 = vbcast.lane.b32.xlu0 %v3157, 256
    %v3160 = vpop.permute.xlu0 %3159
    %v3161 = vlaneseq
    %v3162 = vshrl.u32 %v3161, 7
    %v3163 = vsub.s32 2, %v3162
    %v3164 = vrot.slane %v3146, %v3163
    %3166 = vbcast.lane.b32.xlu0 %v3164, 256
    %v3167 = vpop.permute.xlu0 %3166
    %v3168 = vlaneseq
    %v3169 = vshrl.u32 %v3168, 7
    %v3170 = vsub.s32 3, %v3169
    %v3171 = vrot.slane %v3146, %v3170
    %3173 = vbcast.lane.b32.xlu0 %v3171, 256
    %v3174 = vpop.permute.xlu0 %3173
    %v3175 = vlaneseq
    %v3176 = vshrl.u32 %v3175, 7
    %v3177 = vsub.s32 4, %v3176
    %v3178 = vrot.slane %v3146, %v3177
    %3180 = vbcast.lane.b32.xlu0 %v3178, 256
    %v3181 = vpop.permute.xlu0 %3180
    %v3182 = vlaneseq
    %v3183 = vshrl.u32 %v3182, 7
    %v3184 = vsub.s32 5, %v3183
    %v3185 = vrot.slane %v3146, %v3184
    %3187 = vbcast.lane.b32.xlu0 %v3185, 256
    %v3188 = vpop.permute.xlu0 %3187
    %v3189 = vlaneseq
    %v3190 = vshrl.u32 %v3189, 7
    %v3191 = vsub.s32 6, %v3190
    %v3192 = vrot.slane %v3146, %v3191
    %3194 = vbcast.lane.b32.xlu0 %v3192, 256
    %v3195 = vpop.permute.xlu0 %3194
    %v3196 = vlaneseq
    %v3197 = vshrl.u32 %v3196, 7
    %v3198 = vsub.s32 7, %v3197
    %v3199 = vrot.slane %v3146, %v3198
    %3201 = vbcast.lane.b32.xlu0 %v3199, 256
    %v3202 = vpop.permute.xlu0 %3201
    %v3203 = vmul.f32 %v3153, %v764
    %v3204 = vmul.f32 %v3160, %v765
    %v3205 = vmul.f32 %v3167, %v766
    %v3206 = vmul.f32 %v3174, %v767
    %v3207 = vmul.f32 %v3181, %v768
    %v3208 = vmul.f32 %v3188, %v769
    %v3209 = vmul.f32 %v3195, %v770
    %v3210 = vmul.f32 %v3202, %v771
    %v3211 = vsel %vm821, %v3203, 0.0
    %v3212 = vsel %vm821, %v3204, 0.0
    %v3213 = vadd.f32 %v3211, %v3212
    %v3214 = vsel %vm821, %v3205, 0.0
    %v3215 = vadd.f32 %v3213, %v3214
    %v3216 = vsel %vm821, %v3206, 0.0
    %v3217 = vadd.f32 %v3215, %v3216
    %v3218 = vsel %vm821, %v3207, 0.0
    %v3219 = vadd.f32 %v3217, %v3218
    %v3220 = vsel %vm821, %v3208, 0.0
    %v3221 = vadd.f32 %v3219, %v3220
    %v3222 = vsel %vm821, %v3209, 0.0
    %v3223 = vadd.f32 %v3221, %v3222
    %v3224 = vsel %vm821, %v3210, 0.0
    %v3225 = vadd.f32 %v3223, %v3224
    %v3226 = vadd.f32 %v2597, %v2963
    %v3227 = vadd.f32 %v3226, %v2780
    %v3228 = vadd.f32 %v3227, %v3146
    %3230 = vset.pattern.permute.xlu0 0
    %3231 = vperm.xlu0 %3230, %v737
    %v3232 = vpop.permute.xlu0 %3231
    %v3234 = vmul.f32 %v3228, %v3232
    %3235 = vst.msk [vmem:[%s65] sm:$0xff] %vm2578, %v3234
    %3237 = vrot.lane.b32.xlu0 %v3042, 32
    %v3238 = vpop.permute.xlu0 %3237
    %3241 = vrot.lane.b32.xlu0 %v3225, 64
    %v3242 = vpop.permute.xlu0 %3241
    %3245 = vrot.lane.b32.xlu0 %v2859, 96
    %v3246 = vpop.permute.xlu0 %3245
    %v3248 = vsel %vm138, %v2676, %v3238
    %v3249 = vsel %vm155, %v3248, %v3242
    %v3250 = vsel %vm874, %v3249, %v3246
    %v3251 = vld [vmem:[%s51] sm:$0xff]
    %v3252 = vld [vmem:[%s51 + $0x8] sm:$0xff]
    %v3253 = vld [vmem:[%s51 + $0x10] sm:$0xff]
    %v3254 = vld [vmem:[%s51 + $0x18] sm:$0xff]
    %v3255 = vld [vmem:[%s51 + $0x20] sm:$0xff]
    %v3256 = vld [vmem:[%s51 + $0x28] sm:$0xff]
    %v3257 = vld [vmem:[%s51 + $0x30] sm:$0xff]
    %v3258 = vld [vmem:[%s51 + $0x38] sm:$0xff]
    %v3259 = vld [vmem:[%s51 + $0x40] sm:$0xff]
    %v3260 = vld [vmem:[%s51 + $0x48] sm:$0xff]
    %v3261 = vld [vmem:[%s51 + $0x50] sm:$0xff]
    %v3262 = vld [vmem:[%s51 + $0x58] sm:$0xff]
    %v3263 = vld [vmem:[%s51 + $0x60] sm:$0xff]
    %v3264 = vld [vmem:[%s51 + $0x68] sm:$0xff]
    %v3265 = vld [vmem:[%s51 + $0x70] sm:$0xff]
    %v3266 = vld [vmem:[%s51 + $0x78] sm:$0xff]
    %v3267 = vld [vmem:[%s53] sm:$0x1]
    %v3269 = vlaneseq
    %v3270 = vshrl.u32 %v3269, 7
    %v3271 = vsub.s32 0, %v3270
    %v3272 = vrot.slane %v3267, %v3271
    %3274 = vmatprep.subr.mxu0 0.0
    %v3275 = vand.u32 %v3251, 4294901760
    %3276 = vmatpush1.msra.mxu0 %v3275
    %3277 = vmatprep.subr.mxu0 0.0
    %v3278 = vand.u32 %v3252, 4294901760
    %3279 = vmatpush1.msra.mxu0 %v3278
    %3280 = vmatprep.subr.mxu0 0.0
    %v3281 = vand.u32 %v3253, 4294901760
    %3282 = vmatpush1.msra.mxu0 %v3281
    %3283 = vmatprep.subr.mxu0 0.0
    %v3284 = vand.u32 %v3254, 4294901760
    %3285 = vmatpush1.msra.mxu0 %v3284
    %3286 = vmatprep.subr.mxu0 0.0
    %v3287 = vand.u32 %v3255, 4294901760
    %3288 = vmatpush1.msra.mxu0 %v3287
    %3289 = vmatprep.subr.mxu0 0.0
    %v3290 = vand.u32 %v3256, 4294901760
    %3291 = vmatpush1.msra.mxu0 %v3290
    %3292 = vmatprep.subr.mxu0 0.0
    %v3293 = vand.u32 %v3257, 4294901760
    %3294 = vmatpush1.msra.mxu0 %v3293
    %3295 = vmatprep.subr.mxu0 0.0
    %v3296 = vand.u32 %v3258, 4294901760
    %3297 = vmatpush1.msra.mxu0 %v3296
    %3298 = vmatprep.subr.mxu0 0.0
    %v3299 = vand.u32 %v3259, 4294901760
    %3300 = vmatpush1.msra.mxu0 %v3299
    %3301 = vmatprep.subr.mxu0 0.0
    %v3302 = vand.u32 %v3260, 4294901760
    %3303 = vmatpush1.msra.mxu0 %v3302
    %3304 = vmatprep.subr.mxu0 0.0
    %v3305 = vand.u32 %v3261, 4294901760
    %3306 = vmatpush1.msra.mxu0 %v3305
    %3307 = vmatprep.subr.mxu0 0.0
    %v3308 = vand.u32 %v3262, 4294901760
    %3309 = vmatpush1.msra.mxu0 %v3308
    %3310 = vmatprep.subr.mxu0 0.0
    %v3311 = vand.u32 %v3263, 4294901760
    %3312 = vmatpush1.msra.mxu0 %v3311
    %3313 = vmatprep.subr.mxu0 0.0
    %v3314 = vand.u32 %v3264, 4294901760
    %3315 = vmatpush1.msra.mxu0 %v3314
    %3316 = vmatprep.subr.mxu0 0.0
    %v3317 = vand.u32 %v3265, 4294901760
    %3318 = vmatpush1.msra.mxu0 %v3317
    %3319 = vmatprep.subr.mxu0 0.0
    %v3320 = vand.u32 %v3266, 4294901760
    %3321 = vmatpush1.msra.mxu0 %v3320
    %3322 = vmatprep.subr.mxu0 0.0
    %3323 = vmatpush1.msra.mxu0 0.0
    %3324 = vmatprep.subr.mxu0 0.0
    %3325 = vmatpush1.msra.mxu0 0.0
    %3326 = vmatprep.subr.mxu0 0.0
    %3327 = vmatpush1.msra.mxu0 0.0
    %3328 = vmatprep.subr.mxu0 0.0
    %3329 = vmatpush1.msra.mxu0 0.0
    %3330 = vmatprep.subr.mxu0 0.0
    %3331 = vmatpush1.msra.mxu0 0.0
    %3332 = vmatprep.subr.mxu0 0.0
    %3333 = vmatpush1.msra.mxu0 0.0
    %3334 = vmatprep.subr.mxu0 0.0
    %3335 = vmatpush1.msra.mxu0 0.0
    %3336 = vmatprep.subr.mxu0 0.0
    %3337 = vmatpush1.msra.mxu0 0.0
    %3338 = vmatprep.subr.mxu0 0.0
    %3339 = vmatpush1.msra.mxu0 0.0
    %3340 = vmatprep.subr.mxu0 0.0
    %3341 = vmatpush1.msra.mxu0 0.0
    %3342 = vmatprep.subr.mxu0 0.0
    %3343 = vmatpush1.msra.mxu0 0.0
    %3344 = vmatprep.subr.mxu0 0.0
    %3345 = vmatpush1.msra.mxu0 0.0
    %3346 = vmatprep.subr.mxu0 0.0
    %3347 = vmatpush1.msra.mxu0 0.0
    %3348 = vmatprep.subr.mxu0 0.0
    %3349 = vmatpush1.msra.mxu0 0.0
    %3350 = vmatprep.subr.mxu0 0.0
    %3351 = vmatpush1.msra.mxu0 0.0
    %3352 = vmatprep.subr.mxu0 0.0
    %3353 = vmatpush1.msra.mxu0 0.0
    %3354 = vmatprep.mubr.f32.mxu0 0.0
    %v3355 = vand.u32 %v3250, 4294901760
    %v3356 = vsub.f32 %v3250, %v3355
    %v3357 = vand.u32 %v3356, 4294901760
    %v3358 = vsub.f32 %v3356, %v3357
    %v3359 = vand.u32 %v3358, 4294901760
    %3360 = vmatmul.mubr.f32.gmra.mrb[0].mxu0 %v3359
    %v3361 = vpop.f32.mrb[0].mxu0
    %v3362 = vadd.f32 %v3272, %v3361
    %v3363 = vpop.f32.mrb[0].mxu0
    %3364 = vdwg.mxu0
    %3365 = vmatprep.subr.mxu0 0.0
    %v3366 = vand.u32 %v3251, 4294901760
    %v3367 = vsub.f32 %v3251, %v3366
    %v3368 = vand.u32 %v3367, 4294901760
    %v3369 = vsub.f32 %v3367, %v3368
    %v3370 = vand.u32 %v3369, 4294901760
    %3371 = vmatpush1.msra.mxu0 %v3370
    %3372 = vmatprep.subr.mxu0 0.0
    %v3373 = vand.u32 %v3252, 4294901760
    %v3374 = vsub.f32 %v3252, %v3373
    %v3375 = vand.u32 %v3374, 4294901760
    %v3376 = vsub.f32 %v3374, %v3375
    %v3377 = vand.u32 %v3376, 4294901760
    %3378 = vmatpush1.msra.mxu0 %v3377
    %3379 = vmatprep.subr.mxu0 0.0
    %v3380 = vand.u32 %v3253, 4294901760
    %v3381 = vsub.f32 %v3253, %v3380
    %v3382 = vand.u32 %v3381, 4294901760
    %v3383 = vsub.f32 %v3381, %v3382
    %v3384 = vand.u32 %v3383, 4294901760
    %3385 = vmatpush1.msra.mxu0 %v3384
    %3386 = vmatprep.subr.mxu0 0.0
    %v3387 = vand.u32 %v3254, 4294901760
    %v3388 = vsub.f32 %v3254, %v3387
    %v3389 = vand.u32 %v3388, 4294901760
    %v3390 = vsub.f32 %v3388, %v3389
    %v3391 = vand.u32 %v3390, 4294901760
    %3392 = vmatpush1.msra.mxu0 %v3391
    %3393 = vmatprep.subr.mxu0 0.0
    %v3394 = vand.u32 %v3255, 4294901760
    %v3395 = vsub.f32 %v3255, %v3394
    %v3396 = vand.u32 %v3395, 4294901760
    %v3397 = vsub.f32 %v3395, %v3396
    %v3398 = vand.u32 %v3397, 4294901760
    %3399 = vmatpush1.msra.mxu0 %v3398
    %3400 = vmatprep.subr.mxu0 0.0
    %v3401 = vand.u32 %v3256, 4294901760
    %v3402 = vsub.f32 %v3256, %v3401
    %v3403 = vand.u32 %v3402, 4294901760
    %v3404 = vsub.f32 %v3402, %v3403
    %v3405 = vand.u32 %v3404, 4294901760
    %3406 = vmatpush1.msra.mxu0 %v3405
    %3407 = vmatprep.subr.mxu0 0.0
    %v3408 = vand.u32 %v3257, 4294901760
    %v3409 = vsub.f32 %v3257, %v3408
    %v3410 = vand.u32 %v3409, 4294901760
    %v3411 = vsub.f32 %v3409, %v3410
    %v3412 = vand.u32 %v3411, 4294901760
    %3413 = vmatpush1.msra.mxu0 %v3412
    %3414 = vmatprep.subr.mxu0 0.0
    %v3415 = vand.u32 %v3258, 4294901760
    %v3416 = vsub.f32 %v3258, %v3415
    %v3417 = vand.u32 %v3416, 4294901760
    %v3418 = vsub.f32 %v3416, %v3417
    %v3419 = vand.u32 %v3418, 4294901760
    %3420 = vmatpush1.msra.mxu0 %v3419
    %3421 = vmatprep.subr.mxu0 0.0
    %v3422 = vand.u32 %v3259, 4294901760
    %v3423 = vsub.f32 %v3259, %v3422
    %v3424 = vand.u32 %v3423, 4294901760
    %v3425 = vsub.f32 %v3423, %v3424
    %v3426 = vand.u32 %v3425, 4294901760
    %3427 = vmatpush1.msra.mxu0 %v3426
    %3428 = vmatprep.subr.mxu0 0.0
    %v3429 = vand.u32 %v3260, 4294901760
    %v3430 = vsub.f32 %v3260, %v3429
    %v3431 = vand.u32 %v3430, 4294901760
    %v3432 = vsub.f32 %v3430, %v3431
    %v3433 = vand.u32 %v3432, 4294901760
    %3434 = vmatpush1.msra.mxu0 %v3433
    %3435 = vmatprep.subr.mxu0 0.0
    %v3436 = vand.u32 %v3261, 4294901760
    %v3437 = vsub.f32 %v3261, %v3436
    %v3438 = vand.u32 %v3437, 4294901760
    %v3439 = vsub.f32 %v3437, %v3438
    %v3440 = vand.u32 %v3439, 4294901760
    %3441 = vmatpush1.msra.mxu0 %v3440
    %3442 = vmatprep.subr.mxu0 0.0
    %v3443 = vand.u32 %v3262, 4294901760
    %v3444 = vsub.f32 %v3262, %v3443
    %v3445 = vand.u32 %v3444, 4294901760
    %v3446 = vsub.f32 %v3444, %v3445
    %v3447 = vand.u32 %v3446, 4294901760
    %3448 = vmatpush1.msra.mxu0 %v3447
    %3449 = vmatprep.subr.mxu0 0.0
    %v3450 = vand.u32 %v3263, 4294901760
    %v3451 = vsub.f32 %v3263, %v3450
    %v3452 = vand.u32 %v3451, 4294901760
    %v3453 = vsub.f32 %v3451, %v3452
    %v3454 = vand.u32 %v3453, 4294901760
    %3455 = vmatpush1.msra.mxu0 %v3454
    %3456 = vmatprep.subr.mxu0 0.0
    %v3457 = vand.u32 %v3264, 4294901760
    %v3458 = vsub.f32 %v3264, %v3457
    %v3459 = vand.u32 %v3458, 4294901760
    %v3460 = vsub.f32 %v3458, %v3459
    %v3461 = vand.u32 %v3460, 4294901760
    %3462 = vmatpush1.msra.mxu0 %v3461
    %3463 = vmatprep.subr.mxu0 0.0
    %v3464 = vand.u32 %v3265, 4294901760
    %v3465 = vsub.f32 %v3265, %v3464
    %v3466 = vand.u32 %v3465, 4294901760
    %v3467 = vsub.f32 %v3465, %v3466
    %v3468 = vand.u32 %v3467, 4294901760
    %3469 = vmatpush1.msra.mxu0 %v3468
    %3470 = vmatprep.subr.mxu0 0.0
    %v3471 = vand.u32 %v3266, 4294901760
    %v3472 = vsub.f32 %v3266, %v3471
    %v3473 = vand.u32 %v3472, 4294901760
    %v3474 = vsub.f32 %v3472, %v3473
    %v3475 = vand.u32 %v3474, 4294901760
    %3476 = vmatpush1.msra.mxu0 %v3475
    %3477 = vmatprep.subr.mxu0 0.0
    %3478 = vmatpush1.msra.mxu0 0.0
    %3479 = vmatprep.subr.mxu0 0.0
    %3480 = vmatpush1.msra.mxu0 0.0
    %3481 = vmatprep.subr.mxu0 0.0
    %3482 = vmatpush1.msra.mxu0 0.0
    %3483 = vmatprep.subr.mxu0 0.0
    %3484 = vmatpush1.msra.mxu0 0.0
    %3485 = vmatprep.subr.mxu0 0.0
    %3486 = vmatpush1.msra.mxu0 0.0
    %3487 = vmatprep.subr.mxu0 0.0
    %3488 = vmatpush1.msra.mxu0 0.0
    %3489 = vmatprep.subr.mxu0 0.0
    %3490 = vmatpush1.msra.mxu0 0.0
    %3491 = vmatprep.subr.mxu0 0.0
    %3492 = vmatpush1.msra.mxu0 0.0
    %3493 = vmatprep.subr.mxu0 0.0
    %3494 = vmatpush1.msra.mxu0 0.0
    %3495 = vmatprep.subr.mxu0 0.0
    %3496 = vmatpush1.msra.mxu0 0.0
    %3497 = vmatprep.subr.mxu0 0.0
    %3498 = vmatpush1.msra.mxu0 0.0
    %3499 = vmatprep.subr.mxu0 0.0
    %3500 = vmatpush1.msra.mxu0 0.0
    %3501 = vmatprep.subr.mxu0 0.0
    %3502 = vmatpush1.msra.mxu0 0.0
    %3503 = vmatprep.subr.mxu0 0.0
    %3504 = vmatpush1.msra.mxu0 0.0
    %3505 = vmatprep.subr.mxu0 0.0
    %3506 = vmatpush1.msra.mxu0 0.0
    %3507 = vmatprep.subr.mxu0 0.0
    %3508 = vmatpush1.msra.mxu0 0.0
    %3509 = vmatprep.mubr.f32.mxu0 0.0
    %v3510 = vand.u32 %v3250, 4294901760
    %3511 = vmatmul.mubr.f32.gmra.mrb[0].mxu0 %v3510
    %v3512 = vpop.f32.mrb[0].mxu0
    %v3513 = vadd.f32 %v3362, %v3512
    %v3514 = vpop.f32.mrb[0].mxu0
    %3515 = vdwg.mxu0
    %3516 = vmatprep.subr.mxu0 0.0
    %v3517 = vand.u32 %v3251, 4294901760
    %v3518 = vsub.f32 %v3251, %v3517
    %3519 = vmatpush1.msra.mxu0 %v3518
    %3520 = vmatprep.subr.mxu0 0.0
    %v3521 = vand.u32 %v3252, 4294901760
    %v3522 = vsub.f32 %v3252, %v3521
    %3523 = vmatpush1.msra.mxu0 %v3522
    %3524 = vmatprep.subr.mxu0 0.0
    %v3525 = vand.u32 %v3253, 4294901760
    %v3526 = vsub.f32 %v3253, %v3525
    %3527 = vmatpush1.msra.mxu0 %v3526
    %3528 = vmatprep.subr.mxu0 0.0
    %v3529 = vand.u32 %v3254, 4294901760
    %v3530 = vsub.f32 %v3254, %v3529
    %3531 = vmatpush1.msra.mxu0 %v3530
    %3532 = vmatprep.subr.mxu0 0.0
    %v3533 = vand.u32 %v3255, 4294901760
    %v3534 = vsub.f32 %v3255, %v3533
    %3535 = vmatpush1.msra.mxu0 %v3534
    %3536 = vmatprep.subr.mxu0 0.0
    %v3537 = vand.u32 %v3256, 4294901760
    %v3538 = vsub.f32 %v3256, %v3537
    %3539 = vmatpush1.msra.mxu0 %v3538
    %3540 = vmatprep.subr.mxu0 0.0
    %v3541 = vand.u32 %v3257, 4294901760
    %v3542 = vsub.f32 %v3257, %v3541
    %3543 = vmatpush1.msra.mxu0 %v3542
    %3544 = vmatprep.subr.mxu0 0.0
    %v3545 = vand.u32 %v3258, 4294901760
    %v3546 = vsub.f32 %v3258, %v3545
    %3547 = vmatpush1.msra.mxu0 %v3546
    %3548 = vmatprep.subr.mxu0 0.0
    %v3549 = vand.u32 %v3259, 4294901760
    %v3550 = vsub.f32 %v3259, %v3549
    %3551 = vmatpush1.msra.mxu0 %v3550
    %3552 = vmatprep.subr.mxu0 0.0
    %v3553 = vand.u32 %v3260, 4294901760
    %v3554 = vsub.f32 %v3260, %v3553
    %3555 = vmatpush1.msra.mxu0 %v3554
    %3556 = vmatprep.subr.mxu0 0.0
    %v3557 = vand.u32 %v3261, 4294901760
    %v3558 = vsub.f32 %v3261, %v3557
    %3559 = vmatpush1.msra.mxu0 %v3558
    %3560 = vmatprep.subr.mxu0 0.0
    %v3561 = vand.u32 %v3262, 4294901760
    %v3562 = vsub.f32 %v3262, %v3561
    %3563 = vmatpush1.msra.mxu0 %v3562
    %3564 = vmatprep.subr.mxu0 0.0
    %v3565 = vand.u32 %v3263, 4294901760
    %v3566 = vsub.f32 %v3263, %v3565
    %3567 = vmatpush1.msra.mxu0 %v3566
    %3568 = vmatprep.subr.mxu0 0.0
    %v3569 = vand.u32 %v3264, 4294901760
    %v3570 = vsub.f32 %v3264, %v3569
    %3571 = vmatpush1.msra.mxu0 %v3570
    %3572 = vmatprep.subr.mxu0 0.0
    %v3573 = vand.u32 %v3265, 4294901760
    %v3574 = vsub.f32 %v3265, %v3573
    %3575 = vmatpush1.msra.mxu0 %v3574
    %3576 = vmatprep.subr.mxu0 0.0
    %v3577 = vand.u32 %v3266, 4294901760
    %v3578 = vsub.f32 %v3266, %v3577
    %3579 = vmatpush1.msra.mxu0 %v3578
    %3580 = vmatprep.subr.mxu0 0.0
    %3581 = vmatpush1.msra.mxu0 0.0
    %3582 = vmatprep.subr.mxu0 0.0
    %3583 = vmatpush1.msra.mxu0 0.0
    %3584 = vmatprep.subr.mxu0 0.0
    %3585 = vmatpush1.msra.mxu0 0.0
    %3586 = vmatprep.subr.mxu0 0.0
    %3587 = vmatpush1.msra.mxu0 0.0
    %3588 = vmatprep.subr.mxu0 0.0
    %3589 = vmatpush1.msra.mxu0 0.0
    %3590 = vmatprep.subr.mxu0 0.0
    %3591 = vmatpush1.msra.mxu0 0.0
    %3592 = vmatprep.subr.mxu0 0.0
    %3593 = vmatpush1.msra.mxu0 0.0
    %3594 = vmatprep.subr.mxu0 0.0
    %3595 = vmatpush1.msra.mxu0 0.0
    %3596 = vmatprep.subr.mxu0 0.0
    %3597 = vmatpush1.msra.mxu0 0.0
    %3598 = vmatprep.subr.mxu0 0.0
    %3599 = vmatpush1.msra.mxu0 0.0
    %3600 = vmatprep.subr.mxu0 0.0
    %3601 = vmatpush1.msra.mxu0 0.0
    %3602 = vmatprep.subr.mxu0 0.0
    %3603 = vmatpush1.msra.mxu0 0.0
    %3604 = vmatprep.subr.mxu0 0.0
    %3605 = vmatpush1.msra.mxu0 0.0
    %3606 = vmatprep.subr.mxu0 0.0
    %3607 = vmatpush1.msra.mxu0 0.0
    %3608 = vmatprep.subr.mxu0 0.0
    %3609 = vmatpush1.msra.mxu0 0.0
    %3610 = vmatprep.subr.mxu0 0.0
    %3611 = vmatpush1.msra.mxu0 0.0
    %3612 = vmatprep.mubr.f32.mxu0 0.0
    %v3613 = vand.u32 %v3250, 4294901760
    %v3614 = vsub.f32 %v3250, %v3613
    %3615 = vmatmul.mubr.f32.gmra.mrb[0].mxu0 %v3614
    %v3616 = vpop.f32.mrb[0].mxu0
    %v3617 = vadd.f32 %v3513, %v3616
    %v3618 = vpop.f32.mrb[0].mxu0
    %3619 = vdwg.mxu0
    %3620 = vmatprep.subr.mxu0 0.0
    %v3621 = vand.u32 %v3251, 4294901760
    %3622 = vmatpush1.msra.mxu0 %v3621
    %3623 = vmatprep.subr.mxu0 0.0
    %v3624 = vand.u32 %v3252, 4294901760
    %3625 = vmatpush1.msra.mxu0 %v3624
    %3626 = vmatprep.subr.mxu0 0.0
    %v3627 = vand.u32 %v3253, 4294901760
    %3628 = vmatpush1.msra.mxu0 %v3627
    %3629 = vmatprep.subr.mxu0 0.0
    %v3630 = vand.u32 %v3254, 4294901760
    %3631 = vmatpush1.msra.mxu0 %v3630
    %3632 = vmatprep.subr.mxu0 0.0
    %v3633 = vand.u32 %v3255, 4294901760
    %3634 = vmatpush1.msra.mxu0 %v3633
    %3635 = vmatprep.subr.mxu0 0.0
    %v3636 = vand.u32 %v3256, 4294901760
    %3637 = vmatpush1.msra.mxu0 %v3636
    %3638 = vmatprep.subr.mxu0 0.0
    %v3639 = vand.u32 %v3257, 4294901760
    %3640 = vmatpush1.msra.mxu0 %v3639
    %3641 = vmatprep.subr.mxu0 0.0
    %v3642 = vand.u32 %v3258, 4294901760
    %3643 = vmatpush1.msra.mxu0 %v3642
    %3644 = vmatprep.subr.mxu0 0.0
    %v3645 = vand.u32 %v3259, 4294901760
    %3646 = vmatpush1.msra.mxu0 %v3645
    %3647 = vmatprep.subr.mxu0 0.0
    %v3648 = vand.u32 %v3260, 4294901760
    %3649 = vmatpush1.msra.mxu0 %v3648
    %3650 = vmatprep.subr.mxu0 0.0
    %v3651 = vand.u32 %v3261, 4294901760
    %3652 = vmatpush1.msra.mxu0 %v3651
    %3653 = vmatprep.subr.mxu0 0.0
    %v3654 = vand.u32 %v3262, 4294901760
    %3655 = vmatpush1.msra.mxu0 %v3654
    %3656 = vmatprep.subr.mxu0 0.0
    %v3657 = vand.u32 %v3263, 4294901760
    %3658 = vmatpush1.msra.mxu0 %v3657
    %3659 = vmatprep.subr.mxu0 0.0
    %v3660 = vand.u32 %v3264, 4294901760
    %3661 = vmatpush1.msra.mxu0 %v3660
    %3662 = vmatprep.subr.mxu0 0.0
    %v3663 = vand.u32 %v3265, 4294901760
    %3664 = vmatpush1.msra.mxu0 %v3663
    %3665 = vmatprep.subr.mxu0 0.0
    %v3666 = vand.u32 %v3266, 4294901760
    %3667 = vmatpush1.msra.mxu0 %v3666
    %3668 = vmatprep.subr.mxu0 0.0
    %3669 = vmatpush1.msra.mxu0 0.0
    %3670 = vmatprep.subr.mxu0 0.0
    %3671 = vmatpush1.msra.mxu0 0.0
    %3672 = vmatprep.subr.mxu0 0.0
    %3673 = vmatpush1.msra.mxu0 0.0
    %3674 = vmatprep.subr.mxu0 0.0
    %3675 = vmatpush1.msra.mxu0 0.0
    %3676 = vmatprep.subr.mxu0 0.0
    %3677 = vmatpush1.msra.mxu0 0.0
    %3678 = vmatprep.subr.mxu0 0.0
    %3679 = vmatpush1.msra.mxu0 0.0
    %3680 = vmatprep.subr.mxu0 0.0
    %3681 = vmatpush1.msra.mxu0 0.0
    %3682 = vmatprep.subr.mxu0 0.0
    %3683 = vmatpush1.msra.mxu0 0.0
    %3684 = vmatprep.subr.mxu0 0.0
    %3685 = vmatpush1.msra.mxu0 0.0
    %3686 = vmatprep.subr.mxu0 0.0
    %3687 = vmatpush1.msra.mxu0 0.0
    %3688 = vmatprep.subr.mxu0 0.0
    %3689 = vmatpush1.msra.mxu0 0.0
    %3690 = vmatprep.subr.mxu0 0.0
    %3691 = vmatpush1.msra.mxu0 0.0
    %3692 = vmatprep.subr.mxu0 0.0
    %3693 = vmatpush1.msra.mxu0 0.0
    %3694 = vmatprep.subr.mxu0 0.0
    %3695 = vmatpush1.msra.mxu0 0.0
    %3696 = vmatprep.subr.mxu0 0.0
    %3697 = vmatpush1.msra.mxu0 0.0
    %3698 = vmatprep.subr.mxu0 0.0
    %3699 = vmatpush1.msra.mxu0 0.0
    %3700 = vmatprep.mubr.f32.mxu0 0.0
    %v3701 = vand.u32 %v3250, 4294901760
    %v3702 = vsub.f32 %v3250, %v3701
    %v3703 = vand.u32 %v3702, 4294901760
    %3704 = vmatmul.mubr.f32.gmra.mrb[0].mxu0 %v3703
    %v3705 = vpop.f32.mrb[0].mxu0
    %v3706 = vadd.f32 %v3617, %v3705
    %v3707 = vpop.f32.mrb[0].mxu0
    %3708 = vdwg.mxu0
    %3709 = vmatprep.subr.mxu0 0.0
    %v3710 = vand.u32 %v3251, 4294901760
    %v3711 = vsub.f32 %v3251, %v3710
    %v3712 = vand.u32 %v3711, 4294901760
    %3713 = vmatpush1.msra.mxu0 %v3712
    %3714 = vmatprep.subr.mxu0 0.0
    %v3715 = vand.u32 %v3252, 4294901760
    %v3716 = vsub.f32 %v3252, %v3715
    %v3717 = vand.u32 %v3716, 4294901760
    %3718 = vmatpush1.msra.mxu0 %v3717
    %3719 = vmatprep.subr.mxu0 0.0
    %v3720 = vand.u32 %v3253, 4294901760
    %v3721 = vsub.f32 %v3253, %v3720
    %v3722 = vand.u32 %v3721, 4294901760
    %3723 = vmatpush1.msra.mxu0 %v3722
    %3724 = vmatprep.subr.mxu0 0.0
    %v3725 = vand.u32 %v3254, 4294901760
    %v3726 = vsub.f32 %v3254, %v3725
    %v3727 = vand.u32 %v3726, 4294901760
    %3728 = vmatpush1.msra.mxu0 %v3727
    %3729 = vmatprep.subr.mxu0 0.0
    %v3730 = vand.u32 %v3255, 4294901760
    %v3731 = vsub.f32 %v3255, %v3730
    %v3732 = vand.u32 %v3731, 4294901760
    %3733 = vmatpush1.msra.mxu0 %v3732
    %3734 = vmatprep.subr.mxu0 0.0
    %v3735 = vand.u32 %v3256, 4294901760
    %v3736 = vsub.f32 %v3256, %v3735
    %v3737 = vand.u32 %v3736, 4294901760
    %3738 = vmatpush1.msra.mxu0 %v3737
    %3739 = vmatprep.subr.mxu0 0.0
    %v3740 = vand.u32 %v3257, 4294901760
    %v3741 = vsub.f32 %v3257, %v3740
    %v3742 = vand.u32 %v3741, 4294901760
    %3743 = vmatpush1.msra.mxu0 %v3742
    %3744 = vmatprep.subr.mxu0 0.0
    %v3745 = vand.u32 %v3258, 4294901760
    %v3746 = vsub.f32 %v3258, %v3745
    %v3747 = vand.u32 %v3746, 4294901760
    %3748 = vmatpush1.msra.mxu0 %v3747
    %3749 = vmatprep.subr.mxu0 0.0
    %v3750 = vand.u32 %v3259, 4294901760
    %v3751 = vsub.f32 %v3259, %v3750
    %v3752 = vand.u32 %v3751, 4294901760
    %3753 = vmatpush1.msra.mxu0 %v3752
    %3754 = vmatprep.subr.mxu0 0.0
    %v3755 = vand.u32 %v3260, 4294901760
    %v3756 = vsub.f32 %v3260, %v3755
    %v3757 = vand.u32 %v3756, 4294901760
    %3758 = vmatpush1.msra.mxu0 %v3757
    %3759 = vmatprep.subr.mxu0 0.0
    %v3760 = vand.u32 %v3261, 4294901760
    %v3761 = vsub.f32 %v3261, %v3760
    %v3762 = vand.u32 %v3761, 4294901760
    %3763 = vmatpush1.msra.mxu0 %v3762
    %3764 = vmatprep.subr.mxu0 0.0
    %v3765 = vand.u32 %v3262, 4294901760
    %v3766 = vsub.f32 %v3262, %v3765
    %v3767 = vand.u32 %v3766, 4294901760
    %3768 = vmatpush1.msra.mxu0 %v3767
    %3769 = vmatprep.subr.mxu0 0.0
    %v3770 = vand.u32 %v3263, 4294901760
    %v3771 = vsub.f32 %v3263, %v3770
    %v3772 = vand.u32 %v3771, 4294901760
    %3773 = vmatpush1.msra.mxu0 %v3772
    %3774 = vmatprep.subr.mxu0 0.0
    %v3775 = vand.u32 %v3264, 4294901760
    %v3776 = vsub.f32 %v3264, %v3775
    %v3777 = vand.u32 %v3776, 4294901760
    %3778 = vmatpush1.msra.mxu0 %v3777
    %3779 = vmatprep.subr.mxu0 0.0
    %v3780 = vand.u32 %v3265, 4294901760
    %v3781 = vsub.f32 %v3265, %v3780
    %v3782 = vand.u32 %v3781, 4294901760
    %3783 = vmatpush1.msra.mxu0 %v3782
    %3784 = vmatprep.subr.mxu0 0.0
    %v3785 = vand.u32 %v3266, 4294901760
    %v3786 = vsub.f32 %v3266, %v3785
    %v3787 = vand.u32 %v3786, 4294901760
    %3788 = vmatpush1.msra.mxu0 %v3787
    %3789 = vmatprep.subr.mxu0 0.0
    %3790 = vmatpush1.msra.mxu0 0.0
    %3791 = vmatprep.subr.mxu0 0.0
    %3792 = vmatpush1.msra.mxu0 0.0
    %3793 = vmatprep.subr.mxu0 0.0
    %3794 = vmatpush1.msra.mxu0 0.0
    %3795 = vmatprep.subr.mxu0 0.0
    %3796 = vmatpush1.msra.mxu0 0.0
    %3797 = vmatprep.subr.mxu0 0.0
    %3798 = vmatpush1.msra.mxu0 0.0
    %3799 = vmatprep.subr.mxu0 0.0
    %3800 = vmatpush1.msra.mxu0 0.0
    %3801 = vmatprep.subr.mxu0 0.0
    %3802 = vmatpush1.msra.mxu0 0.0
    %3803 = vmatprep.subr.mxu0 0.0
    %3804 = vmatpush1.msra.mxu0 0.0
    %3805 = vmatprep.subr.mxu0 0.0
    %3806 = vmatpush1.msra.mxu0 0.0
    %3807 = vmatprep.subr.mxu0 0.0
    %3808 = vmatpush1.msra.mxu0 0.0
    %3809 = vmatprep.subr.mxu0 0.0
    %3810 = vmatpush1.msra.mxu0 0.0
    %3811 = vmatprep.subr.mxu0 0.0
    %3812 = vmatpush1.msra.mxu0 0.0
    %3813 = vmatprep.subr.mxu0 0.0
    %3814 = vmatpush1.msra.mxu0 0.0
    %3815 = vmatprep.subr.mxu0 0.0
    %3816 = vmatpush1.msra.mxu0 0.0
    %3817 = vmatprep.subr.mxu0 0.0
    %3818 = vmatpush1.msra.mxu0 0.0
    %3819 = vmatprep.subr.mxu0 0.0
    %3820 = vmatpush1.msra.mxu0 0.0
    %3821 = vmatprep.mubr.f32.mxu0 0.0
    %v3822 = vand.u32 %v3250, 4294901760
    %3823 = vmatmul.mubr.f32.gmra.mrb[0].mxu0 %v3822
    %v3824 = vpop.f32.mrb[0].mxu0
    %v3825 = vadd.f32 %v3706, %v3824
    %v3826 = vpop.f32.mrb[0].mxu0
    %3827 = vdwg.mxu0
    %3828 = vmatprep.subr.mxu0 0.0
    %v3829 = vand.u32 %v3251, 4294901760
    %3830 = vmatpush1.msra.mxu0 %v3829
    %3831 = vmatprep.subr.mxu0 0.0
    %v3832 = vand.u32 %v3252, 4294901760
    %3833 = vmatpush1.msra.mxu0 %v3832
    %3834 = vmatprep.subr.mxu0 0.0
    %v3835 = vand.u32 %v3253, 4294901760
    %3836 = vmatpush1.msra.mxu0 %v3835
    %3837 = vmatprep.subr.mxu0 0.0
    %v3838 = vand.u32 %v3254, 4294901760
    %3839 = vmatpush1.msra.mxu0 %v3838
    %3840 = vmatprep.subr.mxu0 0.0
    %v3841 = vand.u32 %v3255, 4294901760
    %3842 = vmatpush1.msra.mxu0 %v3841
    %3843 = vmatprep.subr.mxu0 0.0
    %v3844 = vand.u32 %v3256, 4294901760
    %3845 = vmatpush1.msra.mxu0 %v3844
    %3846 = vmatprep.subr.mxu0 0.0
    %v3847 = vand.u32 %v3257, 4294901760
    %3848 = vmatpush1.msra.mxu0 %v3847
    %3849 = vmatprep.subr.mxu0 0.0
    %v3850 = vand.u32 %v3258, 4294901760
    %3851 = vmatpush1.msra.mxu0 %v3850
    %3852 = vmatprep.subr.mxu0 0.0
    %v3853 = vand.u32 %v3259, 4294901760
    %3854 = vmatpush1.msra.mxu0 %v3853
    %3855 = vmatprep.subr.mxu0 0.0
    %v3856 = vand.u32 %v3260, 4294901760
    %3857 = vmatpush1.msra.mxu0 %v3856
    %3858 = vmatprep.subr.mxu0 0.0
    %v3859 = vand.u32 %v3261, 4294901760
    %3860 = vmatpush1.msra.mxu0 %v3859
    %3861 = vmatprep.subr.mxu0 0.0
    %v3862 = vand.u32 %v3262, 4294901760
    %3863 = vmatpush1.msra.mxu0 %v3862
    %3864 = vmatprep.subr.mxu0 0.0
    %v3865 = vand.u32 %v3263, 4294901760
    %3866 = vmatpush1.msra.mxu0 %v3865
    %3867 = vmatprep.subr.mxu0 0.0
    %v3868 = vand.u32 %v3264, 4294901760
    %3869 = vmatpush1.msra.mxu0 %v3868
    %3870 = vmatprep.subr.mxu0 0.0
    %v3871 = vand.u32 %v3265, 4294901760
    %3872 = vmatpush1.msra.mxu0 %v3871
    %3873 = vmatprep.subr.mxu0 0.0
    %v3874 = vand.u32 %v3266, 4294901760
    %3875 = vmatpush1.msra.mxu0 %v3874
    %3876 = vmatprep.subr.mxu0 0.0
    %3877 = vmatpush1.msra.mxu0 0.0
    %3878 = vmatprep.subr.mxu0 0.0
    %3879 = vmatpush1.msra.mxu0 0.0
    %3880 = vmatprep.subr.mxu0 0.0
    %3881 = vmatpush1.msra.mxu0 0.0
    %3882 = vmatprep.subr.mxu0 0.0
    %3883 = vmatpush1.msra.mxu0 0.0
    %3884 = vmatprep.subr.mxu0 0.0
    %3885 = vmatpush1.msra.mxu0 0.0
    %3886 = vmatprep.subr.mxu0 0.0
    %3887 = vmatpush1.msra.mxu0 0.0
    %3888 = vmatprep.subr.mxu0 0.0
    %3889 = vmatpush1.msra.mxu0 0.0
    %3890 = vmatprep.subr.mxu0 0.0
    %3891 = vmatpush1.msra.mxu0 0.0
    %3892 = vmatprep.subr.mxu0 0.0
    %3893 = vmatpush1.msra.mxu0 0.0
    %3894 = vmatprep.subr.mxu0 0.0
    %3895 = vmatpush1.msra.mxu0 0.0
    %3896 = vmatprep.subr.mxu0 0.0
    %3897 = vmatpush1.msra.mxu0 0.0
    %3898 = vmatprep.subr.mxu0 0.0
    %3899 = vmatpush1.msra.mxu0 0.0
    %3900 = vmatprep.subr.mxu0 0.0
    %3901 = vmatpush1.msra.mxu0 0.0
    %3902 = vmatprep.subr.mxu0 0.0
    %3903 = vmatpush1.msra.mxu0 0.0
    %3904 = vmatprep.subr.mxu0 0.0
    %3905 = vmatpush1.msra.mxu0 0.0
    %3906 = vmatprep.subr.mxu0 0.0
    %3907 = vmatpush1.msra.mxu0 0.0
    %3908 = vmatprep.mubr.f32.mxu0 0.0
    %v3909 = vand.u32 %v3250, 4294901760
    %3910 = vmatmul.mubr.f32.gmra.mrb[0].mxu0 %v3909
    %v3911 = vpop.f32.mrb[0].mxu0
    %v3912 = vadd.f32 %v3825, %v3911
    %v3913 = vpop.f32.mrb[0].mxu0
    %3914 = vdwg.mxu0
    %vm3915 = vcmask 25600
    %v3916 = vsel %vm3915, %v3912, -inf
    %v3917 = vrot.slane %v3916, 4
    %v3918 = vmax.f32 %v3916, %v3917
    %v3919 = vrot.slane %v3918, 2
    %v3920 = vmax.f32 %v3918, %v3919
    %v3921 = vrot.slane %v3920, 1
    %v3922 = vmax.f32 %v3920, %v3921
    %v3923 = vsub.f32 %v3912, %v3922
    %v3924 = vmul.f32 %v3923, 1.442695
    %v3925 = vpow.pop %v3924
    %v3926 = vsel %vm3915, %v3925, 0.0
    %v3927 = vrot.slane %v3926, 4
    %v3928 = vadd.f32 %v3926, %v3927
    %v3929 = vrot.slane %v3928, 2
    %v3930 = vadd.f32 %v3928, %v3929
    %v3931 = vrot.slane %v3930, 1
    %v3932 = vadd.f32 %v3930, %v3931
    %v3933 = vrcp.pop %v3932
    %v3934 = vmul.f32 %v3925, %v3933
    %v3935 = vadd.f32 %v3934, 1.0
    %3937 = vset.pattern.permute.xlu0 0
    %3938 = vperm.xlu0 %3937, %v3935
    %v3939 = vpop.permute.xlu0 %3938
    %v3941 = vmul.f32 %v3939, %v2676
    %3942 = vset.pattern.permute.xlu0 1
    %3943 = vperm.xlu0 %3942, %v3935
    %v3944 = vpop.permute.xlu0 %3943
    %v3946 = vmul.f32 %v3944, %v3042
    %3947 = vset.pattern.permute.xlu0 2
    %3948 = vperm.xlu0 %3947, %v3935
    %v3949 = vpop.permute.xlu0 %3948
    %v3951 = vmul.f32 %v3949, %v3225
    %3952 = vset.pattern.permute.xlu0 3
    %3953 = vperm.xlu0 %3952, %v3935
    %v3954 = vpop.permute.xlu0 %3953
    %v3956 = vmul.f32 %v3954, %v2859
    %3958 = vrot.lane.b32.xlu0 %v3946, 32
    %v3959 = vpop.permute.xlu0 %3958
    %3962 = vrot.lane.b32.xlu0 %v3951, 64
    %v3963 = vpop.permute.xlu0 %3962
    %3966 = vrot.lane.b32.xlu0 %v3956, 96
    %v3967 = vpop.permute.xlu0 %3966
    %v3969 = vsel %vm138, %v3941, %v3959
    %v3970 = vsel %vm155, %v3969, %v3963
    %v3971 = vsel %vm874, %v3970, %v3967
    %v3972 = vld [vmem:[%s55] sm:$0xff]
    %v3973 = vld [vmem:[%s55 + $0x8] sm:$0xff]
    %v3974 = vld [vmem:[%s55 + $0x10] sm:$0xff]
    %v3975 = vld [vmem:[%s55 + $0x18] sm:$0xff]
    %v3976 = vld [vmem:[%s55 + $0x20] sm:$0xff]
    %v3977 = vld [vmem:[%s55 + $0x28] sm:$0xff]
    %v3978 = vld [vmem:[%s55 + $0x30] sm:$0xff]
    %v3979 = vld [vmem:[%s55 + $0x38] sm:$0xff]
    %v3980 = vld [vmem:[%s55 + $0x40] sm:$0xff]
    %v3981 = vld [vmem:[%s55 + $0x48] sm:$0xff]
    %v3982 = vld [vmem:[%s55 + $0x50] sm:$0xff]
    %v3983 = vld [vmem:[%s55 + $0x58] sm:$0xff]
    %v3984 = vld [vmem:[%s55 + $0x60] sm:$0xff]
    %v3985 = vld [vmem:[%s55 + $0x68] sm:$0xff]
    %v3986 = vld [vmem:[%s55 + $0x70] sm:$0xff]
    %v3987 = vld [vmem:[%s55 + $0x78] sm:$0xff]
    %v3988 = vld [vmem:[%s57] sm:$0x1]
    %v3990 = vlaneseq
    %v3991 = vshrl.u32 %v3990, 7
    %v3992 = vsub.s32 0, %v3991
    %v3993 = vrot.slane %v3988, %v3992
    %3995 = vmatprep.subr.mxu0 0.0
    %v3996 = vand.u32 %v3972, 4294901760
    %3997 = vmatpush1.msra.mxu0 %v3996
    %3998 = vmatprep.subr.mxu0 0.0
    %v3999 = vand.u32 %v3973, 4294901760
    %4000 = vmatpush1.msra.mxu0 %v3999
    %4001 = vmatprep.subr.mxu0 0.0
    %v4002 = vand.u32 %v3974, 4294901760
    %4003 = vmatpush1.msra.mxu0 %v4002
    %4004 = vmatprep.subr.mxu0 0.0
    %v4005 = vand.u32 %v3975, 4294901760
    %4006 = vmatpush1.msra.mxu0 %v4005
    %4007 = vmatprep.subr.mxu0 0.0
    %v4008 = vand.u32 %v3976, 4294901760
    %4009 = vmatpush1.msra.mxu0 %v4008
    %4010 = vmatprep.subr.mxu0 0.0
    %v4011 = vand.u32 %v3977, 4294901760
    %4012 = vmatpush1.msra.mxu0 %v4011
    %4013 = vmatprep.subr.mxu0 0.0
    %v4014 = vand.u32 %v3978, 4294901760
    %4015 = vmatpush1.msra.mxu0 %v4014
    %4016 = vmatprep.subr.mxu0 0.0
    %v4017 = vand.u32 %v3979, 4294901760
    %4018 = vmatpush1.msra.mxu0 %v4017
    %4019 = vmatprep.subr.mxu0 0.0
    %v4020 = vand.u32 %v3980, 4294901760
    %4021 = vmatpush1.msra.mxu0 %v4020
    %4022 = vmatprep.subr.mxu0 0.0
    %v4023 = vand.u32 %v3981, 4294901760
    %4024 = vmatpush1.msra.mxu0 %v4023
    %4025 = vmatprep.subr.mxu0 0.0
    %v4026 = vand.u32 %v3982, 4294901760
    %4027 = vmatpush1.msra.mxu0 %v4026
    %4028 = vmatprep.subr.mxu0 0.0
    %v4029 = vand.u32 %v3983, 4294901760
    %4030 = vmatpush1.msra.mxu0 %v4029
    %4031 = vmatprep.subr.mxu0 0.0
    %v4032 = vand.u32 %v3984, 4294901760
    %4033 = vmatpush1.msra.mxu0 %v4032
    %4034 = vmatprep.subr.mxu0 0.0
    %v4035 = vand.u32 %v3985, 4294901760
    %4036 = vmatpush1.msra.mxu0 %v4035
    %4037 = vmatprep.subr.mxu0 0.0
    %v4038 = vand.u32 %v3986, 4294901760
    %4039 = vmatpush1.msra.mxu0 %v4038
    %4040 = vmatprep.subr.mxu0 0.0
    %v4041 = vand.u32 %v3987, 4294901760
    %4042 = vmatpush1.msra.mxu0 %v4041
    %4043 = vmatprep.subr.mxu0 0.0
    %4044 = vmatpush1.msra.mxu0 0.0
    %4045 = vmatprep.subr.mxu0 0.0
    %4046 = vmatpush1.msra.mxu0 0.0
    %4047 = vmatprep.subr.mxu0 0.0
    %4048 = vmatpush1.msra.mxu0 0.0
    %4049 = vmatprep.subr.mxu0 0.0
    %4050 = vmatpush1.msra.mxu0 0.0
    %4051 = vmatprep.subr.mxu0 0.0
    %4052 = vmatpush1.msra.mxu0 0.0
    %4053 = vmatprep.subr.mxu0 0.0
    %4054 = vmatpush1.msra.mxu0 0.0
    %4055 = vmatprep.subr.mxu0 0.0
    %4056 = vmatpush1.msra.mxu0 0.0
    %4057 = vmatprep.subr.mxu0 0.0
    %4058 = vmatpush1.msra.mxu0 0.0
    %4059 = vmatprep.subr.mxu0 0.0
    %4060 = vmatpush1.msra.mxu0 0.0
    %4061 = vmatprep.subr.mxu0 0.0
    %4062 = vmatpush1.msra.mxu0 0.0
    %4063 = vmatprep.subr.mxu0 0.0
    %4064 = vmatpush1.msra.mxu0 0.0
    %4065 = vmatprep.subr.mxu0 0.0
    %4066 = vmatpush1.msra.mxu0 0.0
    %4067 = vmatprep.subr.mxu0 0.0
    %4068 = vmatpush1.msra.mxu0 0.0
    %4069 = vmatprep.subr.mxu0 0.0
    %4070 = vmatpush1.msra.mxu0 0.0
    %4071 = vmatprep.subr.mxu0 0.0
    %4072 = vmatpush1.msra.mxu0 0.0
    %4073 = vmatprep.subr.mxu0 0.0
    %4074 = vmatpush1.msra.mxu0 0.0
    %4075 = vmatprep.mubr.f32.mxu0 0.0
    %v4076 = vand.u32 %v3971, 4294901760
    %v4077 = vsub.f32 %v3971, %v4076
    %v4078 = vand.u32 %v4077, 4294901760
    %v4079 = vsub.f32 %v4077, %v4078
    %v4080 = vand.u32 %v4079, 4294901760
    %4081 = vmatmul.mubr.f32.gmra.mrb[0].mxu0 %v4080
    %v4082 = vpop.f32.mrb[0].mxu0
    %v4083 = vadd.f32 %v3993, %v4082
    %v4084 = vpop.f32.mrb[0].mxu0
    %4085 = vdwg.mxu0
    %4086 = vmatprep.subr.mxu0 0.0
    %v4087 = vand.u32 %v3972, 4294901760
    %v4088 = vsub.f32 %v3972, %v4087
    %v4089 = vand.u32 %v4088, 4294901760
    %v4090 = vsub.f32 %v4088, %v4089
    %v4091 = vand.u32 %v4090, 4294901760
    %4092 = vmatpush1.msra.mxu0 %v4091
    %4093 = vmatprep.subr.mxu0 0.0
    %v4094 = vand.u32 %v3973, 4294901760
    %v4095 = vsub.f32 %v3973, %v4094
    %v4096 = vand.u32 %v4095, 4294901760
    %v4097 = vsub.f32 %v4095, %v4096
    %v4098 = vand.u32 %v4097, 4294901760
    %4099 = vmatpush1.msra.mxu0 %v4098
    %4100 = vmatprep.subr.mxu0 0.0
    %v4101 = vand.u32 %v3974, 4294901760
    %v4102 = vsub.f32 %v3974, %v4101
    %v4103 = vand.u32 %v4102, 4294901760
    %v4104 = vsub.f32 %v4102, %v4103
    %v4105 = vand.u32 %v4104, 4294901760
    %4106 = vmatpush1.msra.mxu0 %v4105
    %4107 = vmatprep.subr.mxu0 0.0
    %v4108 = vand.u32 %v3975, 4294901760
    %v4109 = vsub.f32 %v3975, %v4108
    %v4110 = vand.u32 %v4109, 4294901760
    %v4111 = vsub.f32 %v4109, %v4110
    %v4112 = vand.u32 %v4111, 4294901760
    %4113 = vmatpush1.msra.mxu0 %v4112
    %4114 = vmatprep.subr.mxu0 0.0
    %v4115 = vand.u32 %v3976, 4294901760
    %v4116 = vsub.f32 %v3976, %v4115
    %v4117 = vand.u32 %v4116, 4294901760
    %v4118 = vsub.f32 %v4116, %v4117
    %v4119 = vand.u32 %v4118, 4294901760
    %4120 = vmatpush1.msra.mxu0 %v4119
    %4121 = vmatprep.subr.mxu0 0.0
    %v4122 = vand.u32 %v3977, 4294901760
    %v4123 = vsub.f32 %v3977, %v4122
    %v4124 = vand.u32 %v4123, 4294901760
    %v4125 = vsub.f32 %v4123, %v4124
    %v4126 = vand.u32 %v4125, 4294901760
    %4127 = vmatpush1.msra.mxu0 %v4126
    %4128 = vmatprep.subr.mxu0 0.0
    %v4129 = vand.u32 %v3978, 4294901760
    %v4130 = vsub.f32 %v3978, %v4129
    %v4131 = vand.u32 %v4130, 4294901760
    %v4132 = vsub.f32 %v4130, %v4131
    %v4133 = vand.u32 %v4132, 4294901760
    %4134 = vmatpush1.msra.mxu0 %v4133
    %4135 = vmatprep.subr.mxu0 0.0
    %v4136 = vand.u32 %v3979, 4294901760
    %v4137 = vsub.f32 %v3979, %v4136
    %v4138 = vand.u32 %v4137, 4294901760
    %v4139 = vsub.f32 %v4137, %v4138
    %v4140 = vand.u32 %v4139, 4294901760
    %4141 = vmatpush1.msra.mxu0 %v4140
    %4142 = vmatprep.subr.mxu0 0.0
    %v4143 = vand.u32 %v3980, 4294901760
    %v4144 = vsub.f32 %v3980, %v4143
    %v4145 = vand.u32 %v4144, 4294901760
    %v4146 = vsub.f32 %v4144, %v4145
    %v4147 = vand.u32 %v4146, 4294901760
    %4148 = vmatpush1.msra.mxu0 %v4147
    %4149 = vmatprep.subr.mxu0 0.0
    %v4150 = vand.u32 %v3981, 4294901760
    %v4151 = vsub.f32 %v3981, %v4150
    %v4152 = vand.u32 %v4151, 4294901760
    %v4153 = vsub.f32 %v4151, %v4152
    %v4154 = vand.u32 %v4153, 4294901760
    %4155 = vmatpush1.msra.mxu0 %v4154
    %4156 = vmatprep.subr.mxu0 0.0
    %v4157 = vand.u32 %v3982, 4294901760
    %v4158 = vsub.f32 %v3982, %v4157
    %v4159 = vand.u32 %v4158, 4294901760
    %v4160 = vsub.f32 %v4158, %v4159
    %v4161 = vand.u32 %v4160, 4294901760
    %4162 = vmatpush1.msra.mxu0 %v4161
    %4163 = vmatprep.subr.mxu0 0.0
    %v4164 = vand.u32 %v3983, 4294901760
    %v4165 = vsub.f32 %v3983, %v4164
    %v4166 = vand.u32 %v4165, 4294901760
    %v4167 = vsub.f32 %v4165, %v4166
    %v4168 = vand.u32 %v4167, 4294901760
    %4169 = vmatpush1.msra.mxu0 %v4168
    %4170 = vmatprep.subr.mxu0 0.0
    %v4171 = vand.u32 %v3984, 4294901760
    %v4172 = vsub.f32 %v3984, %v4171
    %v4173 = vand.u32 %v4172, 4294901760
    %v4174 = vsub.f32 %v4172, %v4173
    %v4175 = vand.u32 %v4174, 4294901760
    %4176 = vmatpush1.msra.mxu0 %v4175
    %4177 = vmatprep.subr.mxu0 0.0
    %v4178 = vand.u32 %v3985, 4294901760
    %v4179 = vsub.f32 %v3985, %v4178
    %v4180 = vand.u32 %v4179, 4294901760
    %v4181 = vsub.f32 %v4179, %v4180
    %v4182 = vand.u32 %v4181, 4294901760
    %4183 = vmatpush1.msra.mxu0 %v4182
    %4184 = vmatprep.subr.mxu0 0.0
    %v4185 = vand.u32 %v3986, 4294901760
    %v4186 = vsub.f32 %v3986, %v4185
    %v4187 = vand.u32 %v4186, 4294901760
    %v4188 = vsub.f32 %v4186, %v4187
    %v4189 = vand.u32 %v4188, 4294901760
    %4190 = vmatpush1.msra.mxu0 %v4189
    %4191 = vmatprep.subr.mxu0 0.0
    %v4192 = vand.u32 %v3987, 4294901760
    %v4193 = vsub.f32 %v3987, %v4192
    %v4194 = vand.u32 %v4193, 4294901760
    %v4195 = vsub.f32 %v4193, %v4194
    %v4196 = vand.u32 %v4195, 4294901760
    %4197 = vmatpush1.msra.mxu0 %v4196
    %4198 = vmatprep.subr.mxu0 0.0
    %4199 = vmatpush1.msra.mxu0 0.0
    %4200 = vmatprep.subr.mxu0 0.0
    %4201 = vmatpush1.msra.mxu0 0.0
    %4202 = vmatprep.subr.mxu0 0.0
    %4203 = vmatpush1.msra.mxu0 0.0
    %4204 = vmatprep.subr.mxu0 0.0
    %4205 = vmatpush1.msra.mxu0 0.0
    %4206 = vmatprep.subr.mxu0 0.0
    %4207 = vmatpush1.msra.mxu0 0.0
    %4208 = vmatprep.subr.mxu0 0.0
    %4209 = vmatpush1.msra.mxu0 0.0
    %4210 = vmatprep.subr.mxu0 0.0
    %4211 = vmatpush1.msra.mxu0 0.0
    %4212 = vmatprep.subr.mxu0 0.0
    %4213 = vmatpush1.msra.mxu0 0.0
    %4214 = vmatprep.subr.mxu0 0.0
    %4215 = vmatpush1.msra.mxu0 0.0
    %4216 = vmatprep.subr.mxu0 0.0
    %4217 = vmatpush1.msra.mxu0 0.0
    %4218 = vmatprep.subr.mxu0 0.0
    %4219 = vmatpush1.msra.mxu0 0.0
    %4220 = vmatprep.subr.mxu0 0.0
    %4221 = vmatpush1.msra.mxu0 0.0
    %4222 = vmatprep.subr.mxu0 0.0
    %4223 = vmatpush1.msra.mxu0 0.0
    %4224 = vmatprep.subr.mxu0 0.0
    %4225 = vmatpush1.msra.mxu0 0.0
    %4226 = vmatprep.subr.mxu0 0.0
    %4227 = vmatpush1.msra.mxu0 0.0
    %4228 = vmatprep.subr.mxu0 0.0
    %4229 = vmatpush1.msra.mxu0 0.0
    %4230 = vmatprep.mubr.f32.mxu0 0.0
    %v4231 = vand.u32 %v3971, 4294901760
    %4232 = vmatmul.mubr.f32.gmra.mrb[0].mxu0 %v4231
    %v4233 = vpop.f32.mrb[0].mxu0
    %v4234 = vadd.f32 %v4083, %v4233
    %v4235 = vpop.f32.mrb[0].mxu0
    %4236 = vdwg.mxu0
    %4237 = vmatprep.subr.mxu0 0.0
    %v4238 = vand.u32 %v3972, 4294901760
    %v4239 = vsub.f32 %v3972, %v4238
    %4240 = vmatpush1.msra.mxu0 %v4239
    %4241 = vmatprep.subr.mxu0 0.0
    %v4242 = vand.u32 %v3973, 4294901760
    %v4243 = vsub.f32 %v3973, %v4242
    %4244 = vmatpush1.msra.mxu0 %v4243
    %4245 = vmatprep.subr.mxu0 0.0
    %v4246 = vand.u32 %v3974, 4294901760
    %v4247 = vsub.f32 %v3974, %v4246
    %4248 = vmatpush1.msra.mxu0 %v4247
    %4249 = vmatprep.subr.mxu0 0.0
    %v4250 = vand.u32 %v3975, 4294901760
    %v4251 = vsub.f32 %v3975, %v4250
    %4252 = vmatpush1.msra.mxu0 %v4251
    %4253 = vmatprep.subr.mxu0 0.0
    %v4254 = vand.u32 %v3976, 4294901760
    %v4255 = vsub.f32 %v3976, %v4254
    %4256 = vmatpush1.msra.mxu0 %v4255
    %4257 = vmatprep.subr.mxu0 0.0
    %v4258 = vand.u32 %v3977, 4294901760
    %v4259 = vsub.f32 %v3977, %v4258
    %4260 = vmatpush1.msra.mxu0 %v4259
    %4261 = vmatprep.subr.mxu0 0.0
    %v4262 = vand.u32 %v3978, 4294901760
    %v4263 = vsub.f32 %v3978, %v4262
    %4264 = vmatpush1.msra.mxu0 %v4263
    %4265 = vmatprep.subr.mxu0 0.0
    %v4266 = vand.u32 %v3979, 4294901760
    %v4267 = vsub.f32 %v3979, %v4266
    %4268 = vmatpush1.msra.mxu0 %v4267
    %4269 = vmatprep.subr.mxu0 0.0
    %v4270 = vand.u32 %v3980, 4294901760
    %v4271 = vsub.f32 %v3980, %v4270
    %4272 = vmatpush1.msra.mxu0 %v4271
    %4273 = vmatprep.subr.mxu0 0.0
    %v4274 = vand.u32 %v3981, 4294901760
    %v4275 = vsub.f32 %v3981, %v4274
    %4276 = vmatpush1.msra.mxu0 %v4275
    %4277 = vmatprep.subr.mxu0 0.0
    %v4278 = vand.u32 %v3982, 4294901760
    %v4279 = vsub.f32 %v3982, %v4278
    %4280 = vmatpush1.msra.mxu0 %v4279
    %4281 = vmatprep.subr.mxu0 0.0
    %v4282 = vand.u32 %v3983, 4294901760
    %v4283 = vsub.f32 %v3983, %v4282
    %4284 = vmatpush1.msra.mxu0 %v4283
    %4285 = vmatprep.subr.mxu0 0.0
    %v4286 = vand.u32 %v3984, 4294901760
    %v4287 = vsub.f32 %v3984, %v4286
    %4288 = vmatpush1.msra.mxu0 %v4287
    %4289 = vmatprep.subr.mxu0 0.0
    %v4290 = vand.u32 %v3985, 4294901760
    %v4291 = vsub.f32 %v3985, %v4290
    %4292 = vmatpush1.msra.mxu0 %v4291
    %4293 = vmatprep.subr.mxu0 0.0
    %v4294 = vand.u32 %v3986, 4294901760
    %v4295 = vsub.f32 %v3986, %v4294
    %4296 = vmatpush1.msra.mxu0 %v4295
    %4297 = vmatprep.subr.mxu0 0.0
    %v4298 = vand.u32 %v3987, 4294901760
    %v4299 = vsub.f32 %v3987, %v4298
    %4300 = vmatpush1.msra.mxu0 %v4299
    %4301 = vmatprep.subr.mxu0 0.0
    %4302 = vmatpush1.msra.mxu0 0.0
    %4303 = vmatprep.subr.mxu0 0.0
    %4304 = vmatpush1.msra.mxu0 0.0
    %4305 = vmatprep.subr.mxu0 0.0
    %4306 = vmatpush1.msra.mxu0 0.0
    %4307 = vmatprep.subr.mxu0 0.0
    %4308 = vmatpush1.msra.mxu0 0.0
    %4309 = vmatprep.subr.mxu0 0.0
    %4310 = vmatpush1.msra.mxu0 0.0
    %4311 = vmatprep.subr.mxu0 0.0
    %4312 = vmatpush1.msra.mxu0 0.0
    %4313 = vmatprep.subr.mxu0 0.0
    %4314 = vmatpush1.msra.mxu0 0.0
    %4315 = vmatprep.subr.mxu0 0.0
    %4316 = vmatpush1.msra.mxu0 0.0
    %4317 = vmatprep.subr.mxu0 0.0
    %4318 = vmatpush1.msra.mxu0 0.0
    %4319 = vmatprep.subr.mxu0 0.0
    %4320 = vmatpush1.msra.mxu0 0.0
    %4321 = vmatprep.subr.mxu0 0.0
    %4322 = vmatpush1.msra.mxu0 0.0
    %4323 = vmatprep.subr.mxu0 0.0
    %4324 = vmatpush1.msra.mxu0 0.0
    %4325 = vmatprep.subr.mxu0 0.0
    %4326 = vmatpush1.msra.mxu0 0.0
    %4327 = vmatprep.subr.mxu0 0.0
    %4328 = vmatpush1.msra.mxu0 0.0
    %4329 = vmatprep.subr.mxu0 0.0
    %4330 = vmatpush1.msra.mxu0 0.0
    %4331 = vmatprep.subr.mxu0 0.0
    %4332 = vmatpush1.msra.mxu0 0.0
    %4333 = vmatprep.mubr.f32.mxu0 0.0
    %v4334 = vand.u32 %v3971, 4294901760
    %v4335 = vsub.f32 %v3971, %v4334
    %4336 = vmatmul.mubr.f32.gmra.mrb[0].mxu0 %v4335
    %v4337 = vpop.f32.mrb[0].mxu0
    %v4338 = vadd.f32 %v4234, %v4337
    %v4339 = vpop.f32.mrb[0].mxu0
    %4340 = vdwg.mxu0
    %4341 = vmatprep.subr.mxu0 0.0
    %v4342 = vand.u32 %v3972, 4294901760
    %4343 = vmatpush1.msra.mxu0 %v4342
    %4344 = vmatprep.subr.mxu0 0.0
    %v4345 = vand.u32 %v3973, 4294901760
    %4346 = vmatpush1.msra.mxu0 %v4345
    %4347 = vmatprep.subr.mxu0 0.0
    %v4348 = vand.u32 %v3974, 4294901760
    %4349 = vmatpush1.msra.mxu0 %v4348
    %4350 = vmatprep.subr.mxu0 0.0
    %v4351 = vand.u32 %v3975, 4294901760
    %4352 = vmatpush1.msra.mxu0 %v4351
    %4353 = vmatprep.subr.mxu0 0.0
    %v4354 = vand.u32 %v3976, 4294901760
    %4355 = vmatpush1.msra.mxu0 %v4354
    %4356 = vmatprep.subr.mxu0 0.0
    %v4357 = vand.u32 %v3977, 4294901760
    %4358 = vmatpush1.msra.mxu0 %v4357
    %4359 = vmatprep.subr.mxu0 0.0
    %v4360 = vand.u32 %v3978, 4294901760
    %4361 = vmatpush1.msra.mxu0 %v4360
    %4362 = vmatprep.subr.mxu0 0.0
    %v4363 = vand.u32 %v3979, 4294901760
    %4364 = vmatpush1.msra.mxu0 %v4363
    %4365 = vmatprep.subr.mxu0 0.0
    %v4366 = vand.u32 %v3980, 4294901760
    %4367 = vmatpush1.msra.mxu0 %v4366
    %4368 = vmatprep.subr.mxu0 0.0
    %v4369 = vand.u32 %v3981, 4294901760
    %4370 = vmatpush1.msra.mxu0 %v4369
    %4371 = vmatprep.subr.mxu0 0.0
    %v4372 = vand.u32 %v3982, 4294901760
    %4373 = vmatpush1.msra.mxu0 %v4372
    %4374 = vmatprep.subr.mxu0 0.0
    %v4375 = vand.u32 %v3983, 4294901760
    %4376 = vmatpush1.msra.mxu0 %v4375
    %4377 = vmatprep.subr.mxu0 0.0
    %v4378 = vand.u32 %v3984, 4294901760
    %4379 = vmatpush1.msra.mxu0 %v4378
    %4380 = vmatprep.subr.mxu0 0.0
    %v4381 = vand.u32 %v3985, 4294901760
    %4382 = vmatpush1.msra.mxu0 %v4381
    %4383 = vmatprep.subr.mxu0 0.0
    %v4384 = vand.u32 %v3986, 4294901760
    %4385 = vmatpush1.msra.mxu0 %v4384
    %4386 = vmatprep.subr.mxu0 0.0
    %v4387 = vand.u32 %v3987, 4294901760
    %4388 = vmatpush1.msra.mxu0 %v4387
    %4389 = vmatprep.subr.mxu0 0.0
    %4390 = vmatpush1.msra.mxu0 0.0
    %4391 = vmatprep.subr.mxu0 0.0
    %4392 = vmatpush1.msra.mxu0 0.0
    %4393 = vmatprep.subr.mxu0 0.0
    %4394 = vmatpush1.msra.mxu0 0.0
    %4395 = vmatprep.subr.mxu0 0.0
    %4396 = vmatpush1.msra.mxu0 0.0
    %4397 = vmatprep.subr.mxu0 0.0
    %4398 = vmatpush1.msra.mxu0 0.0
    %4399 = vmatprep.subr.mxu0 0.0
    %4400 = vmatpush1.msra.mxu0 0.0
    %4401 = vmatprep.subr.mxu0 0.0
    %4402 = vmatpush1.msra.mxu0 0.0
    %4403 = vmatprep.subr.mxu0 0.0
    %4404 = vmatpush1.msra.mxu0 0.0
    %4405 = vmatprep.subr.mxu0 0.0
    %4406 = vmatpush1.msra.mxu0 0.0
    %4407 = vmatprep.subr.mxu0 0.0
    %4408 = vmatpush1.msra.mxu0 0.0
    %4409 = vmatprep.subr.mxu0 0.0
    %4410 = vmatpush1.msra.mxu0 0.0
    %4411 = vmatprep.subr.mxu0 0.0
    %4412 = vmatpush1.msra.mxu0 0.0
    %4413 = vmatprep.subr.mxu0 0.0
    %4414 = vmatpush1.msra.mxu0 0.0
    %4415 = vmatprep.subr.mxu0 0.0
    %4416 = vmatpush1.msra.mxu0 0.0
    %4417 = vmatprep.subr.mxu0 0.0
    %4418 = vmatpush1.msra.mxu0 0.0
    %4419 = vmatprep.subr.mxu0 0.0
    %4420 = vmatpush1.msra.mxu0 0.0
    %4421 = vmatprep.mubr.f32.mxu0 0.0
    %v4422 = vand.u32 %v3971, 4294901760
    %v4423 = vsub.f32 %v3971, %v4422
    %v4424 = vand.u32 %v4423, 4294901760
    %4425 = vmatmul.mubr.f32.gmra.mrb[0].mxu0 %v4424
    %v4426 = vpop.f32.mrb[0].mxu0
    %v4427 = vadd.f32 %v4338, %v4426
    %v4428 = vpop.f32.mrb[0].mxu0
    %4429 = vdwg.mxu0
    %4430 = vmatprep.subr.mxu0 0.0
    %v4431 = vand.u32 %v3972, 4294901760
    %v4432 = vsub.f32 %v3972, %v4431
    %v4433 = vand.u32 %v4432, 4294901760
    %4434 = vmatpush1.msra.mxu0 %v4433
    %4435 = vmatprep.subr.mxu0 0.0
    %v4436 = vand.u32 %v3973, 4294901760
    %v4437 = vsub.f32 %v3973, %v4436
    %v4438 = vand.u32 %v4437, 4294901760
    %4439 = vmatpush1.msra.mxu0 %v4438
    %4440 = vmatprep.subr.mxu0 0.0
    %v4441 = vand.u32 %v3974, 4294901760
    %v4442 = vsub.f32 %v3974, %v4441
    %v4443 = vand.u32 %v4442, 4294901760
    %4444 = vmatpush1.msra.mxu0 %v4443
    %4445 = vmatprep.subr.mxu0 0.0
    %v4446 = vand.u32 %v3975, 4294901760
    %v4447 = vsub.f32 %v3975, %v4446
    %v4448 = vand.u32 %v4447, 4294901760
    %4449 = vmatpush1.msra.mxu0 %v4448
    %4450 = vmatprep.subr.mxu0 0.0
    %v4451 = vand.u32 %v3976, 4294901760
    %v4452 = vsub.f32 %v3976, %v4451
    %v4453 = vand.u32 %v4452, 4294901760
    %4454 = vmatpush1.msra.mxu0 %v4453
    %4455 = vmatprep.subr.mxu0 0.0
    %v4456 = vand.u32 %v3977, 4294901760
    %v4457 = vsub.f32 %v3977, %v4456
    %v4458 = vand.u32 %v4457, 4294901760
    %4459 = vmatpush1.msra.mxu0 %v4458
    %4460 = vmatprep.subr.mxu0 0.0
    %v4461 = vand.u32 %v3978, 4294901760
    %v4462 = vsub.f32 %v3978, %v4461
    %v4463 = vand.u32 %v4462, 4294901760
    %4464 = vmatpush1.msra.mxu0 %v4463
    %4465 = vmatprep.subr.mxu0 0.0
    %v4466 = vand.u32 %v3979, 4294901760
    %v4467 = vsub.f32 %v3979, %v4466
    %v4468 = vand.u32 %v4467, 4294901760
    %4469 = vmatpush1.msra.mxu0 %v4468
    %4470 = vmatprep.subr.mxu0 0.0
    %v4471 = vand.u32 %v3980, 4294901760
    %v4472 = vsub.f32 %v3980, %v4471
    %v4473 = vand.u32 %v4472, 4294901760
    %4474 = vmatpush1.msra.mxu0 %v4473
    %4475 = vmatprep.subr.mxu0 0.0
    %v4476 = vand.u32 %v3981, 4294901760
    %v4477 = vsub.f32 %v3981, %v4476
    %v4478 = vand.u32 %v4477, 4294901760
    %4479 = vmatpush1.msra.mxu0 %v4478
    %4480 = vmatprep.subr.mxu0 0.0
    %v4481 = vand.u32 %v3982, 4294901760
    %v4482 = vsub.f32 %v3982, %v4481
    %v4483 = vand.u32 %v4482, 4294901760
    %4484 = vmatpush1.msra.mxu0 %v4483
    %4485 = vmatprep.subr.mxu0 0.0
    %v4486 = vand.u32 %v3983, 4294901760
    %v4487 = vsub.f32 %v3983, %v4486
    %v4488 = vand.u32 %v4487, 4294901760
    %4489 = vmatpush1.msra.mxu0 %v4488
    %4490 = vmatprep.subr.mxu0 0.0
    %v4491 = vand.u32 %v3984, 4294901760
    %v4492 = vsub.f32 %v3984, %v4491
    %v4493 = vand.u32 %v4492, 4294901760
    %4494 = vmatpush1.msra.mxu0 %v4493
    %4495 = vmatprep.subr.mxu0 0.0
    %v4496 = vand.u32 %v3985, 4294901760
    %v4497 = vsub.f32 %v3985, %v4496
    %v4498 = vand.u32 %v4497, 4294901760
    %4499 = vmatpush1.msra.mxu0 %v4498
    %4500 = vmatprep.subr.mxu0 0.0
    %v4501 = vand.u32 %v3986, 4294901760
    %v4502 = vsub.f32 %v3986, %v4501
    %v4503 = vand.u32 %v4502, 4294901760
    %4504 = vmatpush1.msra.mxu0 %v4503
    %4505 = vmatprep.subr.mxu0 0.0
    %v4506 = vand.u32 %v3987, 4294901760
    %v4507 = vsub.f32 %v3987, %v4506
    %v4508 = vand.u32 %v4507, 4294901760
    %4509 = vmatpush1.msra.mxu0 %v4508
    %4510 = vmatprep.subr.mxu0 0.0
    %4511 = vmatpush1.msra.mxu0 0.0
    %4512 = vmatprep.subr.mxu0 0.0
    %4513 = vmatpush1.msra.mxu0 0.0
    %4514 = vmatprep.subr.mxu0 0.0
    %4515 = vmatpush1.msra.mxu0 0.0
    %4516 = vmatprep.subr.mxu0 0.0
    %4517 = vmatpush1.msra.mxu0 0.0
    %4518 = vmatprep.subr.mxu0 0.0
    %4519 = vmatpush1.msra.mxu0 0.0
    %4520 = vmatprep.subr.mxu0 0.0
    %4521 = vmatpush1.msra.mxu0 0.0
    %4522 = vmatprep.subr.mxu0 0.0
    %4523 = vmatpush1.msra.mxu0 0.0
    %4524 = vmatprep.subr.mxu0 0.0
    %4525 = vmatpush1.msra.mxu0 0.0
    %4526 = vmatprep.subr.mxu0 0.0
    %4527 = vmatpush1.msra.mxu0 0.0
    %4528 = vmatprep.subr.mxu0 0.0
    %4529 = vmatpush1.msra.mxu0 0.0
    %4530 = vmatprep.subr.mxu0 0.0
    %4531 = vmatpush1.msra.mxu0 0.0
    %4532 = vmatprep.subr.mxu0 0.0
    %4533 = vmatpush1.msra.mxu0 0.0
    %4534 = vmatprep.subr.mxu0 0.0
    %4535 = vmatpush1.msra.mxu0 0.0
    %4536 = vmatprep.subr.mxu0 0.0
    %4537 = vmatpush1.msra.mxu0 0.0
    %4538 = vmatprep.subr.mxu0 0.0
    %4539 = vmatpush1.msra.mxu0 0.0
    %4540 = vmatprep.subr.mxu0 0.0
    %4541 = vmatpush1.msra.mxu0 0.0
    %4542 = vmatprep.mubr.f32.mxu0 0.0
    %v4543 = vand.u32 %v3971, 4294901760
    %4544 = vmatmul.mubr.f32.gmra.mrb[0].mxu0 %v4543
    %v4545 = vpop.f32.mrb[0].mxu0
    %v4546 = vadd.f32 %v4427, %v4545
    %v4547 = vpop.f32.mrb[0].mxu0
    %4548 = vdwg.mxu0
    %4549 = vmatprep.subr.mxu0 0.0
    %v4550 = vand.u32 %v3972, 4294901760
    %4551 = vmatpush1.msra.mxu0 %v4550
    %4552 = vmatprep.subr.mxu0 0.0
    %v4553 = vand.u32 %v3973, 4294901760
    %4554 = vmatpush1.msra.mxu0 %v4553
    %4555 = vmatprep.subr.mxu0 0.0
    %v4556 = vand.u32 %v3974, 4294901760
    %4557 = vmatpush1.msra.mxu0 %v4556
    %4558 = vmatprep.subr.mxu0 0.0
    %v4559 = vand.u32 %v3975, 4294901760
    %4560 = vmatpush1.msra.mxu0 %v4559
    %4561 = vmatprep.subr.mxu0 0.0
    %v4562 = vand.u32 %v3976, 4294901760
    %4563 = vmatpush1.msra.mxu0 %v4562
    %4564 = vmatprep.subr.mxu0 0.0
    %v4565 = vand.u32 %v3977, 4294901760
    %4566 = vmatpush1.msra.mxu0 %v4565
    %4567 = vmatprep.subr.mxu0 0.0
    %v4568 = vand.u32 %v3978, 4294901760
    %4569 = vmatpush1.msra.mxu0 %v4568
    %4570 = vmatprep.subr.mxu0 0.0
    %v4571 = vand.u32 %v3979, 4294901760
    %4572 = vmatpush1.msra.mxu0 %v4571
    %4573 = vmatprep.subr.mxu0 0.0
    %v4574 = vand.u32 %v3980, 4294901760
    %4575 = vmatpush1.msra.mxu0 %v4574
    %4576 = vmatprep.subr.mxu0 0.0
    %v4577 = vand.u32 %v3981, 4294901760
    %4578 = vmatpush1.msra.mxu0 %v4577
    %4579 = vmatprep.subr.mxu0 0.0
    %v4580 = vand.u32 %v3982, 4294901760
    %4581 = vmatpush1.msra.mxu0 %v4580
    %4582 = vmatprep.subr.mxu0 0.0
    %v4583 = vand.u32 %v3983, 4294901760
    %4584 = vmatpush1.msra.mxu0 %v4583
    %4585 = vmatprep.subr.mxu0 0.0
    %v4586 = vand.u32 %v3984, 4294901760
    %4587 = vmatpush1.msra.mxu0 %v4586
    %4588 = vmatprep.subr.mxu0 0.0
    %v4589 = vand.u32 %v3985, 4294901760
    %4590 = vmatpush1.msra.mxu0 %v4589
    %4591 = vmatprep.subr.mxu0 0.0
    %v4592 = vand.u32 %v3986, 4294901760
    %4593 = vmatpush1.msra.mxu0 %v4592
    %4594 = vmatprep.subr.mxu0 0.0
    %v4595 = vand.u32 %v3987, 4294901760
    %4596 = vmatpush1.msra.mxu0 %v4595
    %4597 = vmatprep.subr.mxu0 0.0
    %4598 = vmatpush1.msra.mxu0 0.0
    %4599 = vmatprep.subr.mxu0 0.0
    %4600 = vmatpush1.msra.mxu0 0.0
    %4601 = vmatprep.subr.mxu0 0.0
    %4602 = vmatpush1.msra.mxu0 0.0
    %4603 = vmatprep.subr.mxu0 0.0
    %4604 = vmatpush1.msra.mxu0 0.0
    %4605 = vmatprep.subr.mxu0 0.0
    %4606 = vmatpush1.msra.mxu0 0.0
    %4607 = vmatprep.subr.mxu0 0.0
    %4608 = vmatpush1.msra.mxu0 0.0
    %4609 = vmatprep.subr.mxu0 0.0
    %4610 = vmatpush1.msra.mxu0 0.0
    %4611 = vmatprep.subr.mxu0 0.0
    %4612 = vmatpush1.msra.mxu0 0.0
    %4613 = vmatprep.subr.mxu0 0.0
    %4614 = vmatpush1.msra.mxu0 0.0
    %4615 = vmatprep.subr.mxu0 0.0
    %4616 = vmatpush1.msra.mxu0 0.0
    %4617 = vmatprep.subr.mxu0 0.0
    %4618 = vmatpush1.msra.mxu0 0.0
    %4619 = vmatprep.subr.mxu0 0.0
    %4620 = vmatpush1.msra.mxu0 0.0
    %4621 = vmatprep.subr.mxu0 0.0
    %4622 = vmatpush1.msra.mxu0 0.0
    %4623 = vmatprep.subr.mxu0 0.0
    %4624 = vmatpush1.msra.mxu0 0.0
    %4625 = vmatprep.subr.mxu0 0.0
    %4626 = vmatpush1.msra.mxu0 0.0
    %4627 = vmatprep.subr.mxu0 0.0
    %4628 = vmatpush1.msra.mxu0 0.0
    %4629 = vmatprep.mubr.f32.mxu0 0.0
    %v4630 = vand.u32 %v3971, 4294901760
    %4631 = vmatmul.mubr.f32.gmra.mrb[0].mxu0 %v4630
    %v4632 = vpop.f32.mrb[0].mxu0
    %v4633 = vadd.f32 %v4546, %v4632
    %v4634 = vpop.f32.mrb[0].mxu0
    %4635 = vdwg.mxu0
    %p4636 = scmp.gt.f32.partialorder %s748, 0.0
    %s4637 = scalar_select %p4636, 1.0, 0.0
    %v4638 = vstv %s4637
    %v4639 = vmul.f32 %v4633, %v4638
    %4641 = vrot.lane.b32.xlu0 %v4639, 32
    %v4642 = vpop.permute.xlu0 %4641
    %4644 = vrot.lane.b32.xlu0 %v4639, 64
    %v4645 = vpop.permute.xlu0 %4644
    %v4647 = vsel %vm138, %v693, %v4642
    %v4648 = vsel %vm155, %v4647, %v866
    %v4649 = vsel %vm874, %v4648, %v4645
    %v4650 = vld [vmem:[%s33] sm:$0xff]
    %v4651 = vld [vmem:[%s33 + $0x8] sm:$0xff]
    %v4652 = vld [vmem:[%s33 + $0x10] sm:$0xff]
    %v4653 = vld [vmem:[%s33 + $0x18] sm:$0xff]
    %v4654 = vld [vmem:[%s33 + $0x20] sm:$0xff]
    %v4655 = vld [vmem:[%s33 + $0x28] sm:$0xff]
    %v4656 = vld [vmem:[%s33 + $0x30] sm:$0xff]
    %v4657 = vld [vmem:[%s33 + $0x38] sm:$0xff]
    %v4658 = vld [vmem:[%s33 + $0x40] sm:$0xff]
    %v4659 = vld [vmem:[%s33 + $0x48] sm:$0xff]
    %v4660 = vld [vmem:[%s33 + $0x50] sm:$0xff]
    %v4661 = vld [vmem:[%s33 + $0x58] sm:$0xff]
    %v4662 = vld [vmem:[%s33 + $0x60] sm:$0xff]
    %v4663 = vld [vmem:[%s33 + $0x68] sm:$0xff]
    %v4664 = vld [vmem:[%s33 + $0x70] sm:$0xff]
    %v4665 = vld [vmem:[%s33 + $0x78] sm:$0xff]
    %v4666 = vld [vmem:[%s33 + $0x80] sm:$0xff]
    %v4667 = vld [vmem:[%s33 + $0x88] sm:$0xff]
    %v4668 = vld [vmem:[%s33 + $0x90] sm:$0xff]
    %v4669 = vld [vmem:[%s33 + $0x98] sm:$0xff]
    %v4670 = vld [vmem:[%s33 + $0xa0] sm:$0xff]
    %v4671 = vld [vmem:[%s33 + $0xa8] sm:$0xff]
    %v4672 = vld [vmem:[%s33 + $0xb0] sm:$0xff]
    %v4673 = vld [vmem:[%s33 + $0xb8] sm:$0xff]
    %v4674 = vld [vmem:[%s33 + $0xc0] sm:$0xff]
    %v4675 = vld [vmem:[%s33 + $0xc8] sm:$0xff]
    %v4676 = vld [vmem:[%s33 + $0xd0] sm:$0xff]
    %v4677 = vld [vmem:[%s33 + $0xd8] sm:$0xff]
    %v4678 = vld [vmem:[%s33 + $0xe0] sm:$0xff]
    %v4679 = vld [vmem:[%s33 + $0xe8] sm:$0xff]
    %v4680 = vld [vmem:[%s33 + $0xf0] sm:$0xff]
    %v4681 = vld [vmem:[%s33 + $0xf8] sm:$0xff]
    %v4682 = vld [vmem:[%s35] sm:$0x3]
    %v4684 = vlaneseq
    %v4685 = vshrl.u32 %v4684, 7
    %v4686 = vsub.s32 0, %v4685
    %v4687 = vrot.slane %v4682, %v4686
    %v4688 = vlaneseq
    %v4689 = vshrl.u32 %v4688, 7
    %v4690 = vsub.s32 1, %v4689
    %v4691 = vrot.slane %v4682, %v4690
    %v4694 = vand.u32 %v4651, 4294901760
    %4695 = vmatprep.subr.mxu0 %v4694
    %v4696 = vand.u32 %v4650, 4294901760
    %4697 = vmatpush1.msra.mxu0 %v4696
    %v4698 = vand.u32 %v4653, 4294901760
    %4699 = vmatprep.subr.mxu0 %v4698
    %v4700 = vand.u32 %v4652, 4294901760
    %4701 = vmatpush1.msra.mxu0 %v4700
    %v4702 = vand.u32 %v4655, 4294901760
    %4703 = vmatprep.subr.mxu0 %v4702
    %v4704 = vand.u32 %v4654, 4294901760
    %4705 = vmatpush1.msra.mxu0 %v4704
    %v4706 = vand.u32 %v4657, 4294901760
    %4707 = vmatprep.subr.mxu0 %v4706
    %v4708 = vand.u32 %v4656, 4294901760
    %4709 = vmatpush1.msra.mxu0 %v4708
    %v4710 = vand.u32 %v4659, 4294901760
    %4711 = vmatprep.subr.mxu0 %v4710
    %v4712 = vand.u32 %v4658, 4294901760
    %4713 = vmatpush1.msra.mxu0 %v4712
    %v4714 = vand.u32 %v4661, 4294901760
    %4715 = vmatprep.subr.mxu0 %v4714
    %v4716 = vand.u32 %v4660, 4294901760
    %4717 = vmatpush1.msra.mxu0 %v4716
    %v4718 = vand.u32 %v4663, 4294901760
    %4719 = vmatprep.subr.mxu0 %v4718
    %v4720 = vand.u32 %v4662, 4294901760
    %4721 = vmatpush1.msra.mxu0 %v4720
    %v4722 = vand.u32 %v4665, 4294901760
    %4723 = vmatprep.subr.mxu0 %v4722
    %v4724 = vand.u32 %v4664, 4294901760
    %4725 = vmatpush1.msra.mxu0 %v4724
    %v4726 = vand.u32 %v4667, 4294901760
    %4727 = vmatprep.subr.mxu0 %v4726
    %v4728 = vand.u32 %v4666, 4294901760
    %4729 = vmatpush1.msra.mxu0 %v4728
    %v4730 = vand.u32 %v4669, 4294901760
    %4731 = vmatprep.subr.mxu0 %v4730
    %v4732 = vand.u32 %v4668, 4294901760
    %4733 = vmatpush1.msra.mxu0 %v4732
    %v4734 = vand.u32 %v4671, 4294901760
    %4735 = vmatprep.subr.mxu0 %v4734
    %v4736 = vand.u32 %v4670, 4294901760
    %4737 = vmatpush1.msra.mxu0 %v4736
    %v4738 = vand.u32 %v4673, 4294901760
    %4739 = vmatprep.subr.mxu0 %v4738
    %v4740 = vand.u32 %v4672, 4294901760
    %4741 = vmatpush1.msra.mxu0 %v4740
    %v4742 = vand.u32 %v4675, 4294901760
    %4743 = vmatprep.subr.mxu0 %v4742
    %v4744 = vand.u32 %v4674, 4294901760
    %4745 = vmatpush1.msra.mxu0 %v4744
    %v4746 = vand.u32 %v4677, 4294901760
    %4747 = vmatprep.subr.mxu0 %v4746
    %v4748 = vand.u32 %v4676, 4294901760
    %4749 = vmatpush1.msra.mxu0 %v4748
    %v4750 = vand.u32 %v4679, 4294901760
    %4751 = vmatprep.subr.mxu0 %v4750
    %v4752 = vand.u32 %v4678, 4294901760
    %4753 = vmatpush1.msra.mxu0 %v4752
    %v4754 = vand.u32 %v4681, 4294901760
    %4755 = vmatprep.subr.mxu0 %v4754
    %v4756 = vand.u32 %v4680, 4294901760
    %4757 = vmatpush1.msra.mxu0 %v4756
    %4758 = vmatprep.subr.mxu0 0.0
    %4759 = vmatpush1.msra.mxu0 0.0
    %4760 = vmatprep.subr.mxu0 0.0
    %4761 = vmatpush1.msra.mxu0 0.0
    %4762 = vmatprep.subr.mxu0 0.0
    %4763 = vmatpush1.msra.mxu0 0.0
    %4764 = vmatprep.subr.mxu0 0.0
    %4765 = vmatpush1.msra.mxu0 0.0
    %4766 = vmatprep.subr.mxu0 0.0
    %4767 = vmatpush1.msra.mxu0 0.0
    %4768 = vmatprep.subr.mxu0 0.0
    %4769 = vmatpush1.msra.mxu0 0.0
    %4770 = vmatprep.subr.mxu0 0.0
    %4771 = vmatpush1.msra.mxu0 0.0
    %4772 = vmatprep.subr.mxu0 0.0
    %4773 = vmatpush1.msra.mxu0 0.0
    %4774 = vmatprep.subr.mxu0 0.0
    %4775 = vmatpush1.msra.mxu0 0.0
    %4776 = vmatprep.subr.mxu0 0.0
    %4777 = vmatpush1.msra.mxu0 0.0
    %4778 = vmatprep.subr.mxu0 0.0
    %4779 = vmatpush1.msra.mxu0 0.0
    %4780 = vmatprep.subr.mxu0 0.0
    %4781 = vmatpush1.msra.mxu0 0.0
    %4782 = vmatprep.subr.mxu0 0.0
    %4783 = vmatpush1.msra.mxu0 0.0
    %4784 = vmatprep.subr.mxu0 0.0
    %4785 = vmatpush1.msra.mxu0 0.0
    %4786 = vmatprep.subr.mxu0 0.0
    %4787 = vmatpush1.msra.mxu0 0.0
    %4788 = vmatprep.subr.mxu0 0.0
    %4789 = vmatpush1.msra.mxu0 0.0
    %4790 = vmatprep.mubr.f32.mxu0 0.0
    %v4791 = vand.u32 %v4649, 4294901760
    %v4792 = vsub.f32 %v4649, %v4791
    %v4793 = vand.u32 %v4792, 4294901760
    %v4794 = vsub.f32 %v4792, %v4793
    %v4795 = vand.u32 %v4794, 4294901760
    %4796 = vmatmul.mubr.f32.gmra.mrb[0].mxu0 %v4795
    %v4797 = vpop.f32.mrb[0].mxu0
    %v4798 = vadd.f32 %v4687, %v4797
    %v4799 = vpop.f32.mrb[0].mxu0
    %v4800 = vadd.f32 %v4691, %v4799
    %4801 = vdwg.mxu0
    %v4802 = vand.u32 %v4651, 4294901760
    %v4803 = vsub.f32 %v4651, %v4802
    %v4804 = vand.u32 %v4803, 4294901760
    %v4805 = vsub.f32 %v4803, %v4804
    %v4806 = vand.u32 %v4805, 4294901760
    %4807 = vmatprep.subr.mxu0 %v4806
    %v4808 = vand.u32 %v4650, 4294901760
    %v4809 = vsub.f32 %v4650, %v4808
    %v4810 = vand.u32 %v4809, 4294901760
    %v4811 = vsub.f32 %v4809, %v4810
    %v4812 = vand.u32 %v4811, 4294901760
    %4813 = vmatpush1.msra.mxu0 %v4812
    %v4814 = vand.u32 %v4653, 4294901760
    %v4815 = vsub.f32 %v4653, %v4814
    %v4816 = vand.u32 %v4815, 4294901760
    %v4817 = vsub.f32 %v4815, %v4816
    %v4818 = vand.u32 %v4817, 4294901760
    %4819 = vmatprep.subr.mxu0 %v4818
    %v4820 = vand.u32 %v4652, 4294901760
    %v4821 = vsub.f32 %v4652, %v4820
    %v4822 = vand.u32 %v4821, 4294901760
    %v4823 = vsub.f32 %v4821, %v4822
    %v4824 = vand.u32 %v4823, 4294901760
    %4825 = vmatpush1.msra.mxu0 %v4824
    %v4826 = vand.u32 %v4655, 4294901760
    %v4827 = vsub.f32 %v4655, %v4826
    %v4828 = vand.u32 %v4827, 4294901760
    %v4829 = vsub.f32 %v4827, %v4828
    %v4830 = vand.u32 %v4829, 4294901760
    %4831 = vmatprep.subr.mxu0 %v4830
    %v4832 = vand.u32 %v4654, 4294901760
    %v4833 = vsub.f32 %v4654, %v4832
    %v4834 = vand.u32 %v4833, 4294901760
    %v4835 = vsub.f32 %v4833, %v4834
    %v4836 = vand.u32 %v4835, 4294901760
    %4837 = vmatpush1.msra.mxu0 %v4836
    %v4838 = vand.u32 %v4657, 4294901760
    %v4839 = vsub.f32 %v4657, %v4838
    %v4840 = vand.u32 %v4839, 4294901760
    %v4841 = vsub.f32 %v4839, %v4840
    %v4842 = vand.u32 %v4841, 4294901760
    %4843 = vmatprep.subr.mxu0 %v4842
    %v4844 = vand.u32 %v4656, 4294901760
    %v4845 = vsub.f32 %v4656, %v4844
    %v4846 = vand.u32 %v4845, 4294901760
    %v4847 = vsub.f32 %v4845, %v4846
    %v4848 = vand.u32 %v4847, 4294901760
    %4849 = vmatpush1.msra.mxu0 %v4848
    %v4850 = vand.u32 %v4659, 4294901760
    %v4851 = vsub.f32 %v4659, %v4850
    %v4852 = vand.u32 %v4851, 4294901760
    %v4853 = vsub.f32 %v4851, %v4852
    %v4854 = vand.u32 %v4853, 4294901760
    %4855 = vmatprep.subr.mxu0 %v4854
    %v4856 = vand.u32 %v4658, 4294901760
    %v4857 = vsub.f32 %v4658, %v4856
    %v4858 = vand.u32 %v4857, 4294901760
    %v4859 = vsub.f32 %v4857, %v4858
    %v4860 = vand.u32 %v4859, 4294901760
    %4861 = vmatpush1.msra.mxu0 %v4860
    %v4862 = vand.u32 %v4661, 4294901760
    %v4863 = vsub.f32 %v4661, %v4862
    %v4864 = vand.u32 %v4863, 4294901760
    %v4865 = vsub.f32 %v4863, %v4864
    %v4866 = vand.u32 %v4865, 4294901760
    %4867 = vmatprep.subr.mxu0 %v4866
    %v4868 = vand.u32 %v4660, 4294901760
    %v4869 = vsub.f32 %v4660, %v4868
    %v4870 = vand.u32 %v4869, 4294901760
    %v4871 = vsub.f32 %v4869, %v4870
    %v4872 = vand.u32 %v4871, 4294901760
    %4873 = vmatpush1.msra.mxu0 %v4872
    %v4874 = vand.u32 %v4663, 4294901760
    %v4875 = vsub.f32 %v4663, %v4874
    %v4876 = vand.u32 %v4875, 4294901760
    %v4877 = vsub.f32 %v4875, %v4876
    %v4878 = vand.u32 %v4877, 4294901760
    %4879 = vmatprep.subr.mxu0 %v4878
    %v4880 = vand.u32 %v4662, 4294901760
    %v4881 = vsub.f32 %v4662, %v4880
    %v4882 = vand.u32 %v4881, 4294901760
    %v4883 = vsub.f32 %v4881, %v4882
    %v4884 = vand.u32 %v4883, 4294901760
    %4885 = vmatpush1.msra.mxu0 %v4884
    %v4886 = vand.u32 %v4665, 4294901760
    %v4887 = vsub.f32 %v4665, %v4886
    %v4888 = vand.u32 %v4887, 4294901760
    %v4889 = vsub.f32 %v4887, %v4888
    %v4890 = vand.u32 %v4889, 4294901760
    %4891 = vmatprep.subr.mxu0 %v4890
    %v4892 = vand.u32 %v4664, 4294901760
    %v4893 = vsub.f32 %v4664, %v4892
    %v4894 = vand.u32 %v4893, 4294901760
    %v4895 = vsub.f32 %v4893, %v4894
    %v4896 = vand.u32 %v4895, 4294901760
    %4897 = vmatpush1.msra.mxu0 %v4896
    %v4898 = vand.u32 %v4667, 4294901760
    %v4899 = vsub.f32 %v4667, %v4898
    %v4900 = vand.u32 %v4899, 4294901760
    %v4901 = vsub.f32 %v4899, %v4900
    %v4902 = vand.u32 %v4901, 4294901760
    %4903 = vmatprep.subr.mxu0 %v4902
    %v4904 = vand.u32 %v4666, 4294901760
    %v4905 = vsub.f32 %v4666, %v4904
    %v4906 = vand.u32 %v4905, 4294901760
    %v4907 = vsub.f32 %v4905, %v4906
    %v4908 = vand.u32 %v4907, 4294901760
    %4909 = vmatpush1.msra.mxu0 %v4908
    %v4910 = vand.u32 %v4669, 4294901760
    %v4911 = vsub.f32 %v4669, %v4910
    %v4912 = vand.u32 %v4911, 4294901760
    %v4913 = vsub.f32 %v4911, %v4912
    %v4914 = vand.u32 %v4913, 4294901760
    %4915 = vmatprep.subr.mxu0 %v4914
    %v4916 = vand.u32 %v4668, 4294901760
    %v4917 = vsub.f32 %v4668, %v4916
    %v4918 = vand.u32 %v4917, 4294901760
    %v4919 = vsub.f32 %v4917, %v4918
    %v4920 = vand.u32 %v4919, 4294901760
    %4921 = vmatpush1.msra.mxu0 %v4920
    %v4922 = vand.u32 %v4671, 4294901760
    %v4923 = vsub.f32 %v4671, %v4922
    %v4924 = vand.u32 %v4923, 4294901760
    %v4925 = vsub.f32 %v4923, %v4924
    %v4926 = vand.u32 %v4925, 4294901760
    %4927 = vmatprep.subr.mxu0 %v4926
    %v4928 = vand.u32 %v4670, 4294901760
    %v4929 = vsub.f32 %v4670, %v4928
    %v4930 = vand.u32 %v4929, 4294901760
    %v4931 = vsub.f32 %v4929, %v4930
    %v4932 = vand.u32 %v4931, 4294901760
    %4933 = vmatpush1.msra.mxu0 %v4932
    %v4934 = vand.u32 %v4673, 4294901760
    %v4935 = vsub.f32 %v4673, %v4934
    %v4936 = vand.u32 %v4935, 4294901760
    %v4937 = vsub.f32 %v4935, %v4936
    %v4938 = vand.u32 %v4937, 4294901760
    %4939 = vmatprep.subr.mxu0 %v4938
    %v4940 = vand.u32 %v4672, 4294901760
    %v4941 = vsub.f32 %v4672, %v4940
    %v4942 = vand.u32 %v4941, 4294901760
    %v4943 = vsub.f32 %v4941, %v4942
    %v4944 = vand.u32 %v4943, 4294901760
    %4945 = vmatpush1.msra.mxu0 %v4944
    %v4946 = vand.u32 %v4675, 4294901760
    %v4947 = vsub.f32 %v4675, %v4946
    %v4948 = vand.u32 %v4947, 4294901760
    %v4949 = vsub.f32 %v4947, %v4948
    %v4950 = vand.u32 %v4949, 4294901760
    %4951 = vmatprep.subr.mxu0 %v4950
    %v4952 = vand.u32 %v4674, 4294901760
    %v4953 = vsub.f32 %v4674, %v4952
    %v4954 = vand.u32 %v4953, 4294901760
    %v4955 = vsub.f32 %v4953, %v4954
    %v4956 = vand.u32 %v4955, 4294901760
    %4957 = vmatpush1.msra.mxu0 %v4956
    %v4958 = vand.u32 %v4677, 4294901760
    %v4959 = vsub.f32 %v4677, %v4958
    %v4960 = vand.u32 %v4959, 4294901760
    %v4961 = vsub.f32 %v4959, %v4960
    %v4962 = vand.u32 %v4961, 4294901760
    %4963 = vmatprep.subr.mxu0 %v4962
    %v4964 = vand.u32 %v4676, 4294901760
    %v4965 = vsub.f32 %v4676, %v4964
    %v4966 = vand.u32 %v4965, 4294901760
    %v4967 = vsub.f32 %v4965, %v4966
    %v4968 = vand.u32 %v4967, 4294901760
    %4969 = vmatpush1.msra.mxu0 %v4968
    %v4970 = vand.u32 %v4679, 4294901760
    %v4971 = vsub.f32 %v4679, %v4970
    %v4972 = vand.u32 %v4971, 4294901760
    %v4973 = vsub.f32 %v4971, %v4972
    %v4974 = vand.u32 %v4973, 4294901760
    %4975 = vmatprep.subr.mxu0 %v4974
    %v4976 = vand.u32 %v4678, 4294901760
    %v4977 = vsub.f32 %v4678, %v4976
    %v4978 = vand.u32 %v4977, 4294901760
    %v4979 = vsub.f32 %v4977, %v4978
    %v4980 = vand.u32 %v4979, 4294901760
    %4981 = vmatpush1.msra.mxu0 %v4980
    %v4982 = vand.u32 %v4681, 4294901760
    %v4983 = vsub.f32 %v4681, %v4982
    %v4984 = vand.u32 %v4983, 4294901760
    %v4985 = vsub.f32 %v4983, %v4984
    %v4986 = vand.u32 %v4985, 4294901760
    %4987 = vmatprep.subr.mxu0 %v4986
    %v4988 = vand.u32 %v4680, 4294901760
    %v4989 = vsub.f32 %v4680, %v4988
    %v4990 = vand.u32 %v4989, 4294901760
    %v4991 = vsub.f32 %v4989, %v4990
    %v4992 = vand.u32 %v4991, 4294901760
    %4993 = vmatpush1.msra.mxu0 %v4992
    %4994 = vmatprep.subr.mxu0 0.0
    %4995 = vmatpush1.msra.mxu0 0.0
    %4996 = vmatprep.subr.mxu0 0.0
    %4997 = vmatpush1.msra.mxu0 0.0
    %4998 = vmatprep.subr.mxu0 0.0
    %4999 = vmatpush1.msra.mxu0 0.0
    %5000 = vmatprep.subr.mxu0 0.0
    %5001 = vmatpush1.msra.mxu0 0.0
    %5002 = vmatprep.subr.mxu0 0.0
    %5003 = vmatpush1.msra.mxu0 0.0
    %5004 = vmatprep.subr.mxu0 0.0
    %5005 = vmatpush1.msra.mxu0 0.0
    %5006 = vmatprep.subr.mxu0 0.0
    %5007 = vmatpush1.msra.mxu0 0.0
    %5008 = vmatprep.subr.mxu0 0.0
    %5009 = vmatpush1.msra.mxu0 0.0
    %5010 = vmatprep.subr.mxu0 0.0
    %5011 = vmatpush1.msra.mxu0 0.0
    %5012 = vmatprep.subr.mxu0 0.0
    %5013 = vmatpush1.msra.mxu0 0.0
    %5014 = vmatprep.subr.mxu0 0.0
    %5015 = vmatpush1.msra.mxu0 0.0
    %5016 = vmatprep.subr.mxu0 0.0
    %5017 = vmatpush1.msra.mxu0 0.0
    %5018 = vmatprep.subr.mxu0 0.0
    %5019 = vmatpush1.msra.mxu0 0.0
    %5020 = vmatprep.subr.mxu0 0.0
    %5021 = vmatpush1.msra.mxu0 0.0
    %5022 = vmatprep.subr.mxu0 0.0
    %5023 = vmatpush1.msra.mxu0 0.0
    %5024 = vmatprep.subr.mxu0 0.0
    %5025 = vmatpush1.msra.mxu0 0.0
    %5026 = vmatprep.mubr.f32.mxu0 0.0
    %v5027 = vand.u32 %v4649, 4294901760
    %5028 = vmatmul.mubr.f32.gmra.mrb[0].mxu0 %v5027
    %v5029 = vpop.f32.mrb[0].mxu0
    %v5030 = vadd.f32 %v4798, %v5029
    %v5031 = vpop.f32.mrb[0].mxu0
    %v5032 = vadd.f32 %v4800, %v5031
    %5033 = vdwg.mxu0
    %v5034 = vand.u32 %v4651, 4294901760
    %v5035 = vsub.f32 %v4651, %v5034
    %5036 = vmatprep.subr.mxu0 %v5035
    %v5037 = vand.u32 %v4650, 4294901760
    %v5038 = vsub.f32 %v4650, %v5037
    %5039 = vmatpush1.msra.mxu0 %v5038
    %v5040 = vand.u32 %v4653, 4294901760
    %v5041 = vsub.f32 %v4653, %v5040
    %5042 = vmatprep.subr.mxu0 %v5041
    %v5043 = vand.u32 %v4652, 4294901760
    %v5044 = vsub.f32 %v4652, %v5043
    %5045 = vmatpush1.msra.mxu0 %v5044
    %v5046 = vand.u32 %v4655, 4294901760
    %v5047 = vsub.f32 %v4655, %v5046
    %5048 = vmatprep.subr.mxu0 %v5047
    %v5049 = vand.u32 %v4654, 4294901760
    %v5050 = vsub.f32 %v4654, %v5049
    %5051 = vmatpush1.msra.mxu0 %v5050
    %v5052 = vand.u32 %v4657, 4294901760
    %v5053 = vsub.f32 %v4657, %v5052
    %5054 = vmatprep.subr.mxu0 %v5053
    %v5055 = vand.u32 %v4656, 4294901760
    %v5056 = vsub.f32 %v4656, %v5055
    %5057 = vmatpush1.msra.mxu0 %v5056
    %v5058 = vand.u32 %v4659, 4294901760
    %v5059 = vsub.f32 %v4659, %v5058
    %5060 = vmatprep.subr.mxu0 %v5059
    %v5061 = vand.u32 %v4658, 4294901760
    %v5062 = vsub.f32 %v4658, %v5061
    %5063 = vmatpush1.msra.mxu0 %v5062
    %v5064 = vand.u32 %v4661, 4294901760
    %v5065 = vsub.f32 %v4661, %v5064
    %5066 = vmatprep.subr.mxu0 %v5065
    %v5067 = vand.u32 %v4660, 4294901760
    %v5068 = vsub.f32 %v4660, %v5067
    %5069 = vmatpush1.msra.mxu0 %v5068
    %v5070 = vand.u32 %v4663, 4294901760
    %v5071 = vsub.f32 %v4663, %v5070
    %5072 = vmatprep.subr.mxu0 %v5071
    %v5073 = vand.u32 %v4662, 4294901760
    %v5074 = vsub.f32 %v4662, %v5073
    %5075 = vmatpush1.msra.mxu0 %v5074
    %v5076 = vand.u32 %v4665, 4294901760
    %v5077 = vsub.f32 %v4665, %v5076
    %5078 = vmatprep.subr.mxu0 %v5077
    %v5079 = vand.u32 %v4664, 4294901760
    %v5080 = vsub.f32 %v4664, %v5079
    %5081 = vmatpush1.msra.mxu0 %v5080
    %v5082 = vand.u32 %v4667, 4294901760
    %v5083 = vsub.f32 %v4667, %v5082
    %5084 = vmatprep.subr.mxu0 %v5083
    %v5085 = vand.u32 %v4666, 4294901760
    %v5086 = vsub.f32 %v4666, %v5085
    %5087 = vmatpush1.msra.mxu0 %v5086
    %v5088 = vand.u32 %v4669, 4294901760
    %v5089 = vsub.f32 %v4669, %v5088
    %5090 = vmatprep.subr.mxu0 %v5089
    %v5091 = vand.u32 %v4668, 4294901760
    %v5092 = vsub.f32 %v4668, %v5091
    %5093 = vmatpush1.msra.mxu0 %v5092
    %v5094 = vand.u32 %v4671, 4294901760
    %v5095 = vsub.f32 %v4671, %v5094
    %5096 = vmatprep.subr.mxu0 %v5095
    %v5097 = vand.u32 %v4670, 4294901760
    %v5098 = vsub.f32 %v4670, %v5097
    %5099 = vmatpush1.msra.mxu0 %v5098
    %v5100 = vand.u32 %v4673, 4294901760
    %v5101 = vsub.f32 %v4673, %v5100
    %5102 = vmatprep.subr.mxu0 %v5101
    %v5103 = vand.u32 %v4672, 4294901760
    %v5104 = vsub.f32 %v4672, %v5103
    %5105 = vmatpush1.msra.mxu0 %v5104
    %v5106 = vand.u32 %v4675, 4294901760
    %v5107 = vsub.f32 %v4675, %v5106
    %5108 = vmatprep.subr.mxu0 %v5107
    %v5109 = vand.u32 %v4674, 4294901760
    %v5110 = vsub.f32 %v4674, %v5109
    %5111 = vmatpush1.msra.mxu0 %v5110
    %v5112 = vand.u32 %v4677, 4294901760
    %v5113 = vsub.f32 %v4677, %v5112
    %5114 = vmatprep.subr.mxu0 %v5113
    %v5115 = vand.u32 %v4676, 4294901760
    %v5116 = vsub.f32 %v4676, %v5115
    %5117 = vmatpush1.msra.mxu0 %v5116
    %v5118 = vand.u32 %v4679, 4294901760
    %v5119 = vsub.f32 %v4679, %v5118
    %5120 = vmatprep.subr.mxu0 %v5119
    %v5121 = vand.u32 %v4678, 4294901760
    %v5122 = vsub.f32 %v4678, %v5121
    %5123 = vmatpush1.msra.mxu0 %v5122
    %v5124 = vand.u32 %v4681, 4294901760
    %v5125 = vsub.f32 %v4681, %v5124
    %5126 = vmatprep.subr.mxu0 %v5125
    %v5127 = vand.u32 %v4680, 4294901760
    %v5128 = vsub.f32 %v4680, %v5127
    %5129 = vmatpush1.msra.mxu0 %v5128
    %5130 = vmatprep.subr.mxu0 0.0
    %5131 = vmatpush1.msra.mxu0 0.0
    %5132 = vmatprep.subr.mxu0 0.0
    %5133 = vmatpush1.msra.mxu0 0.0
    %5134 = vmatprep.subr.mxu0 0.0
    %5135 = vmatpush1.msra.mxu0 0.0
    %5136 = vmatprep.subr.mxu0 0.0
    %5137 = vmatpush1.msra.mxu0 0.0
    %5138 = vmatprep.subr.mxu0 0.0
    %5139 = vmatpush1.msra.mxu0 0.0
    %5140 = vmatprep.subr.mxu0 0.0
    %5141 = vmatpush1.msra.mxu0 0.0
    %5142 = vmatprep.subr.mxu0 0.0
    %5143 = vmatpush1.msra.mxu0 0.0
    %5144 = vmatprep.subr.mxu0 0.0
    %5145 = vmatpush1.msra.mxu0 0.0
    %5146 = vmatprep.subr.mxu0 0.0
    %5147 = vmatpush1.msra.mxu0 0.0
    %5148 = vmatprep.subr.mxu0 0.0
    %5149 = vmatpush1.msra.mxu0 0.0
    %5150 = vmatprep.subr.mxu0 0.0
    %5151 = vmatpush1.msra.mxu0 0.0
    %5152 = vmatprep.subr.mxu0 0.0
    %5153 = vmatpush1.msra.mxu0 0.0
    %5154 = vmatprep.subr.mxu0 0.0
    %5155 = vmatpush1.msra.mxu0 0.0
    %5156 = vmatprep.subr.mxu0 0.0
    %5157 = vmatpush1.msra.mxu0 0.0
    %5158 = vmatprep.subr.mxu0 0.0
    %5159 = vmatpush1.msra.mxu0 0.0
    %5160 = vmatprep.subr.mxu0 0.0
    %5161 = vmatpush1.msra.mxu0 0.0
    %5162 = vmatprep.mubr.f32.mxu0 0.0
    %v5163 = vand.u32 %v4649, 4294901760
    %v5164 = vsub.f32 %v4649, %v5163
    %5165 = vmatmul.mubr.f32.gmra.mrb[0].mxu0 %v5164
    %v5166 = vpop.f32.mrb[0].mxu0
    %v5167 = vadd.f32 %v5030, %v5166
    %v5168 = vpop.f32.mrb[0].mxu0
    %v5169 = vadd.f32 %v5032, %v5168
    %5170 = vdwg.mxu0
    %v5171 = vand.u32 %v4651, 4294901760
    %5172 = vmatprep.subr.mxu0 %v5171
    %v5173 = vand.u32 %v4650, 4294901760
    %5174 = vmatpush1.msra.mxu0 %v5173
    %v5175 = vand.u32 %v4653, 4294901760
    %5176 = vmatprep.subr.mxu0 %v5175
    %v5177 = vand.u32 %v4652, 4294901760
    %5178 = vmatpush1.msra.mxu0 %v5177
    %v5179 = vand.u32 %v4655, 4294901760
    %5180 = vmatprep.subr.mxu0 %v5179
    %v5181 = vand.u32 %v4654, 4294901760
    %5182 = vmatpush1.msra.mxu0 %v5181
    %v5183 = vand.u32 %v4657, 4294901760
    %5184 = vmatprep.subr.mxu0 %v5183
    %v5185 = vand.u32 %v4656, 4294901760
    %5186 = vmatpush1.msra.mxu0 %v5185
    %v5187 = vand.u32 %v4659, 4294901760
    %5188 = vmatprep.subr.mxu0 %v5187
    %v5189 = vand.u32 %v4658, 4294901760
    %5190 = vmatpush1.msra.mxu0 %v5189
    %v5191 = vand.u32 %v4661, 4294901760
    %5192 = vmatprep.subr.mxu0 %v5191
    %v5193 = vand.u32 %v4660, 4294901760
    %5194 = vmatpush1.msra.mxu0 %v5193
    %v5195 = vand.u32 %v4663, 4294901760
    %5196 = vmatprep.subr.mxu0 %v5195
    %v5197 = vand.u32 %v4662, 4294901760
    %5198 = vmatpush1.msra.mxu0 %v5197
    %v5199 = vand.u32 %v4665, 4294901760
    %5200 = vmatprep.subr.mxu0 %v5199
    %v5201 = vand.u32 %v4664, 4294901760
    %5202 = vmatpush1.msra.mxu0 %v5201
    %v5203 = vand.u32 %v4667, 4294901760
    %5204 = vmatprep.subr.mxu0 %v5203
    %v5205 = vand.u32 %v4666, 4294901760
    %5206 = vmatpush1.msra.mxu0 %v5205
    %v5207 = vand.u32 %v4669, 4294901760
    %5208 = vmatprep.subr.mxu0 %v5207
    %v5209 = vand.u32 %v4668, 4294901760
    %5210 = vmatpush1.msra.mxu0 %v5209
    %v5211 = vand.u32 %v4671, 4294901760
    %5212 = vmatprep.subr.mxu0 %v5211
    %v5213 = vand.u32 %v4670, 4294901760
    %5214 = vmatpush1.msra.mxu0 %v5213
    %v5215 = vand.u32 %v4673, 4294901760
    %5216 = vmatprep.subr.mxu0 %v5215
    %v5217 = vand.u32 %v4672, 4294901760
    %5218 = vmatpush1.msra.mxu0 %v5217
    %v5219 = vand.u32 %v4675, 4294901760
    %5220 = vmatprep.subr.mxu0 %v5219
    %v5221 = vand.u32 %v4674, 4294901760
    %5222 = vmatpush1.msra.mxu0 %v5221
    %v5223 = vand.u32 %v4677, 4294901760
    %5224 = vmatprep.subr.mxu0 %v5223
    %v5225 = vand.u32 %v4676, 4294901760
    %5226 = vmatpush1.msra.mxu0 %v5225
    %v5227 = vand.u32 %v4679, 4294901760
    %5228 = vmatprep.subr.mxu0 %v5227
    %v5229 = vand.u32 %v4678, 4294901760
    %5230 = vmatpush1.msra.mxu0 %v5229
    %v5231 = vand.u32 %v4681, 4294901760
    %5232 = vmatprep.subr.mxu0 %v5231
    %v5233 = vand.u32 %v4680, 4294901760
    %5234 = vmatpush1.msra.mxu0 %v5233
    %5235 = vmatprep.subr.mxu0 0.0
    %5236 = vmatpush1.msra.mxu0 0.0
    %5237 = vmatprep.subr.mxu0 0.0
    %5238 = vmatpush1.msra.mxu0 0.0
    %5239 = vmatprep.subr.mxu0 0.0
    %5240 = vmatpush1.msra.mxu0 0.0
    %5241 = vmatprep.subr.mxu0 0.0
    %5242 = vmatpush1.msra.mxu0 0.0
    %5243 = vmatprep.subr.mxu0 0.0
    %5244 = vmatpush1.msra.mxu0 0.0
    %5245 = vmatprep.subr.mxu0 0.0
    %5246 = vmatpush1.msra.mxu0 0.0
    %5247 = vmatprep.subr.mxu0 0.0
    %5248 = vmatpush1.msra.mxu0 0.0
    %5249 = vmatprep.subr.mxu0 0.0
    %5250 = vmatpush1.msra.mxu0 0.0
    %5251 = vmatprep.subr.mxu0 0.0
    %5252 = vmatpush1.msra.mxu0 0.0
    %5253 = vmatprep.subr.mxu0 0.0
    %5254 = vmatpush1.msra.mxu0 0.0
    %5255 = vmatprep.subr.mxu0 0.0
    %5256 = vmatpush1.msra.mxu0 0.0
    %5257 = vmatprep.subr.mxu0 0.0
    %5258 = vmatpush1.msra.mxu0 0.0
    %5259 = vmatprep.subr.mxu0 0.0
    %5260 = vmatpush1.msra.mxu0 0.0
    %5261 = vmatprep.subr.mxu0 0.0
    %5262 = vmatpush1.msra.mxu0 0.0
    %5263 = vmatprep.subr.mxu0 0.0
    %5264 = vmatpush1.msra.mxu0 0.0
    %5265 = vmatprep.subr.mxu0 0.0
    %5266 = vmatpush1.msra.mxu0 0.0
    %5267 = vmatprep.mubr.f32.mxu0 0.0
    %v5268 = vand.u32 %v4649, 4294901760
    %v5269 = vsub.f32 %v4649, %v5268
    %v5270 = vand.u32 %v5269, 4294901760
    %5271 = vmatmul.mubr.f32.gmra.mrb[0].mxu0 %v5270
    %v5272 = vpop.f32.mrb[0].mxu0
    %v5273 = vadd.f32 %v5167, %v5272
    %v5274 = vpop.f32.mrb[0].mxu0
    %v5275 = vadd.f32 %v5169, %v5274
    %5276 = vdwg.mxu0
    %v5277 = vand.u32 %v4651, 4294901760
    %v5278 = vsub.f32 %v4651, %v5277
    %v5279 = vand.u32 %v5278, 4294901760
    %5280 = vmatprep.subr.mxu0 %v5279
    %v5281 = vand.u32 %v4650, 4294901760
    %v5282 = vsub.f32 %v4650, %v5281
    %v5283 = vand.u32 %v5282, 4294901760
    %5284 = vmatpush1.msra.mxu0 %v5283
    %v5285 = vand.u32 %v4653, 4294901760
    %v5286 = vsub.f32 %v4653, %v5285
    %v5287 = vand.u32 %v5286, 4294901760
    %5288 = vmatprep.subr.mxu0 %v5287
    %v5289 = vand.u32 %v4652, 4294901760
    %v5290 = vsub.f32 %v4652, %v5289
    %v5291 = vand.u32 %v5290, 4294901760
    %5292 = vmatpush1.msra.mxu0 %v5291
    %v5293 = vand.u32 %v4655, 4294901760
    %v5294 = vsub.f32 %v4655, %v5293
    %v5295 = vand.u32 %v5294, 4294901760
    %5296 = vmatprep.subr.mxu0 %v5295
    %v5297 = vand.u32 %v4654, 4294901760
    %v5298 = vsub.f32 %v4654, %v5297
    %v5299 = vand.u32 %v5298, 4294901760
    %5300 = vmatpush1.msra.mxu0 %v5299
    %v5301 = vand.u32 %v4657, 4294901760
    %v5302 = vsub.f32 %v4657, %v5301
    %v5303 = vand.u32 %v5302, 4294901760
    %5304 = vmatprep.subr.mxu0 %v5303
    %v5305 = vand.u32 %v4656, 4294901760
    %v5306 = vsub.f32 %v4656, %v5305
    %v5307 = vand.u32 %v5306, 4294901760
    %5308 = vmatpush1.msra.mxu0 %v5307
    %v5309 = vand.u32 %v4659, 4294901760
    %v5310 = vsub.f32 %v4659, %v5309
    %v5311 = vand.u32 %v5310, 4294901760
    %5312 = vmatprep.subr.mxu0 %v5311
    %v5313 = vand.u32 %v4658, 4294901760
    %v5314 = vsub.f32 %v4658, %v5313
    %v5315 = vand.u32 %v5314, 4294901760
    %5316 = vmatpush1.msra.mxu0 %v5315
    %v5317 = vand.u32 %v4661, 4294901760
    %v5318 = vsub.f32 %v4661, %v5317
    %v5319 = vand.u32 %v5318, 4294901760
    %5320 = vmatprep.subr.mxu0 %v5319
    %v5321 = vand.u32 %v4660, 4294901760
    %v5322 = vsub.f32 %v4660, %v5321
    %v5323 = vand.u32 %v5322, 4294901760
    %5324 = vmatpush1.msra.mxu0 %v5323
    %v5325 = vand.u32 %v4663, 4294901760
    %v5326 = vsub.f32 %v4663, %v5325
    %v5327 = vand.u32 %v5326, 4294901760
    %5328 = vmatprep.subr.mxu0 %v5327
    %v5329 = vand.u32 %v4662, 4294901760
    %v5330 = vsub.f32 %v4662, %v5329
    %v5331 = vand.u32 %v5330, 4294901760
    %5332 = vmatpush1.msra.mxu0 %v5331
    %v5333 = vand.u32 %v4665, 4294901760
    %v5334 = vsub.f32 %v4665, %v5333
    %v5335 = vand.u32 %v5334, 4294901760
    %5336 = vmatprep.subr.mxu0 %v5335
    %v5337 = vand.u32 %v4664, 4294901760
    %v5338 = vsub.f32 %v4664, %v5337
    %v5339 = vand.u32 %v5338, 4294901760
    %5340 = vmatpush1.msra.mxu0 %v5339
    %v5341 = vand.u32 %v4667, 4294901760
    %v5342 = vsub.f32 %v4667, %v5341
    %v5343 = vand.u32 %v5342, 4294901760
    %5344 = vmatprep.subr.mxu0 %v5343
    %v5345 = vand.u32 %v4666, 4294901760
    %v5346 = vsub.f32 %v4666, %v5345
    %v5347 = vand.u32 %v5346, 4294901760
    %5348 = vmatpush1.msra.mxu0 %v5347
    %v5349 = vand.u32 %v4669, 4294901760
    %v5350 = vsub.f32 %v4669, %v5349
    %v5351 = vand.u32 %v5350, 4294901760
    %5352 = vmatprep.subr.mxu0 %v5351
    %v5353 = vand.u32 %v4668, 4294901760
    %v5354 = vsub.f32 %v4668, %v5353
    %v5355 = vand.u32 %v5354, 4294901760
    %5356 = vmatpush1.msra.mxu0 %v5355
    %v5357 = vand.u32 %v4671, 4294901760
    %v5358 = vsub.f32 %v4671, %v5357
    %v5359 = vand.u32 %v5358, 4294901760
    %5360 = vmatprep.subr.mxu0 %v5359
    %v5361 = vand.u32 %v4670, 4294901760
    %v5362 = vsub.f32 %v4670, %v5361
    %v5363 = vand.u32 %v5362, 4294901760
    %5364 = vmatpush1.msra.mxu0 %v5363
    %v5365 = vand.u32 %v4673, 4294901760
    %v5366 = vsub.f32 %v4673, %v5365
    %v5367 = vand.u32 %v5366, 4294901760
    %5368 = vmatprep.subr.mxu0 %v5367
    %v5369 = vand.u32 %v4672, 4294901760
    %v5370 = vsub.f32 %v4672, %v5369
    %v5371 = vand.u32 %v5370, 4294901760
    %5372 = vmatpush1.msra.mxu0 %v5371
    %v5373 = vand.u32 %v4675, 4294901760
    %v5374 = vsub.f32 %v4675, %v5373
    %v5375 = vand.u32 %v5374, 4294901760
    %5376 = vmatprep.subr.mxu0 %v5375
    %v5377 = vand.u32 %v4674, 4294901760
    %v5378 = vsub.f32 %v4674, %v5377
    %v5379 = vand.u32 %v5378, 4294901760
    %5380 = vmatpush1.msra.mxu0 %v5379
    %v5381 = vand.u32 %v4677, 4294901760
    %v5382 = vsub.f32 %v4677, %v5381
    %v5383 = vand.u32 %v5382, 4294901760
    %5384 = vmatprep.subr.mxu0 %v5383
    %v5385 = vand.u32 %v4676, 4294901760
    %v5386 = vsub.f32 %v4676, %v5385
    %v5387 = vand.u32 %v5386, 4294901760
    %5388 = vmatpush1.msra.mxu0 %v5387
    %v5389 = vand.u32 %v4679, 4294901760
    %v5390 = vsub.f32 %v4679, %v5389
    %v5391 = vand.u32 %v5390, 4294901760
    %5392 = vmatprep.subr.mxu0 %v5391
    %v5393 = vand.u32 %v4678, 4294901760
    %v5394 = vsub.f32 %v4678, %v5393
    %v5395 = vand.u32 %v5394, 4294901760
    %5396 = vmatpush1.msra.mxu0 %v5395
    %v5397 = vand.u32 %v4681, 4294901760
    %v5398 = vsub.f32 %v4681, %v5397
    %v5399 = vand.u32 %v5398, 4294901760
    %5400 = vmatprep.subr.mxu0 %v5399
    %v5401 = vand.u32 %v4680, 4294901760
    %v5402 = vsub.f32 %v4680, %v5401
    %v5403 = vand.u32 %v5402, 4294901760
    %5404 = vmatpush1.msra.mxu0 %v5403
    %5405 = vmatprep.subr.mxu0 0.0
    %5406 = vmatpush1.msra.mxu0 0.0
    %5407 = vmatprep.subr.mxu0 0.0
    %5408 = vmatpush1.msra.mxu0 0.0
    %5409 = vmatprep.subr.mxu0 0.0
    %5410 = vmatpush1.msra.mxu0 0.0
    %5411 = vmatprep.subr.mxu0 0.0
    %5412 = vmatpush1.msra.mxu0 0.0
    %5413 = vmatprep.subr.mxu0 0.0
    %5414 = vmatpush1.msra.mxu0 0.0
    %5415 = vmatprep.subr.mxu0 0.0
    %5416 = vmatpush1.msra.mxu0 0.0
    %5417 = vmatprep.subr.mxu0 0.0
    %5418 = vmatpush1.msra.mxu0 0.0
    %5419 = vmatprep.subr.mxu0 0.0
    %5420 = vmatpush1.msra.mxu0 0.0
    %5421 = vmatprep.subr.mxu0 0.0
    %5422 = vmatpush1.msra.mxu0 0.0
    %5423 = vmatprep.subr.mxu0 0.0
    %5424 = vmatpush1.msra.mxu0 0.0
    %5425 = vmatprep.subr.mxu0 0.0
    %5426 = vmatpush1.msra.mxu0 0.0
    %5427 = vmatprep.subr.mxu0 0.0
    %5428 = vmatpush1.msra.mxu0 0.0
    %5429 = vmatprep.subr.mxu0 0.0
    %5430 = vmatpush1.msra.mxu0 0.0
    %5431 = vmatprep.subr.mxu0 0.0
    %5432 = vmatpush1.msra.mxu0 0.0
    %5433 = vmatprep.subr.mxu0 0.0
    %5434 = vmatpush1.msra.mxu0 0.0
    %5435 = vmatprep.subr.mxu0 0.0
    %5436 = vmatpush1.msra.mxu0 0.0
    %5437 = vmatprep.mubr.f32.mxu0 0.0
    %v5438 = vand.u32 %v4649, 4294901760
    %5439 = vmatmul.mubr.f32.gmra.mrb[0].mxu0 %v5438
    %v5440 = vpop.f32.mrb[0].mxu0
    %v5441 = vadd.f32 %v5273, %v5440
    %v5442 = vpop.f32.mrb[0].mxu0
    %v5443 = vadd.f32 %v5275, %v5442
    %5444 = vdwg.mxu0
    %v5445 = vand.u32 %v4651, 4294901760
    %5446 = vmatprep.subr.mxu0 %v5445
    %v5447 = vand.u32 %v4650, 4294901760
    %5448 = vmatpush1.msra.mxu0 %v5447
    %v5449 = vand.u32 %v4653, 4294901760
    %5450 = vmatprep.subr.mxu0 %v5449
    %v5451 = vand.u32 %v4652, 4294901760
    %5452 = vmatpush1.msra.mxu0 %v5451
    %v5453 = vand.u32 %v4655, 4294901760
    %5454 = vmatprep.subr.mxu0 %v5453
    %v5455 = vand.u32 %v4654, 4294901760
    %5456 = vmatpush1.msra.mxu0 %v5455
    %v5457 = vand.u32 %v4657, 4294901760
    %5458 = vmatprep.subr.mxu0 %v5457
    %v5459 = vand.u32 %v4656, 4294901760
    %5460 = vmatpush1.msra.mxu0 %v5459
    %v5461 = vand.u32 %v4659, 4294901760
    %5462 = vmatprep.subr.mxu0 %v5461
    %v5463 = vand.u32 %v4658, 4294901760
    %5464 = vmatpush1.msra.mxu0 %v5463
    %v5465 = vand.u32 %v4661, 4294901760
    %5466 = vmatprep.subr.mxu0 %v5465
    %v5467 = vand.u32 %v4660, 4294901760
    %5468 = vmatpush1.msra.mxu0 %v5467
    %v5469 = vand.u32 %v4663, 4294901760
    %5470 = vmatprep.subr.mxu0 %v5469
    %v5471 = vand.u32 %v4662, 4294901760
    %5472 = vmatpush1.msra.mxu0 %v5471
    %v5473 = vand.u32 %v4665, 4294901760
    %5474 = vmatprep.subr.mxu0 %v5473
    %v5475 = vand.u32 %v4664, 4294901760
    %5476 = vmatpush1.msra.mxu0 %v5475
    %v5477 = vand.u32 %v4667, 4294901760
    %5478 = vmatprep.subr.mxu0 %v5477
    %v5479 = vand.u32 %v4666, 4294901760
    %5480 = vmatpush1.msra.mxu0 %v5479
    %v5481 = vand.u32 %v4669, 4294901760
    %5482 = vmatprep.subr.mxu0 %v5481
    %v5483 = vand.u32 %v4668, 4294901760
    %5484 = vmatpush1.msra.mxu0 %v5483
    %v5485 = vand.u32 %v4671, 4294901760
    %5486 = vmatprep.subr.mxu0 %v5485
    %v5487 = vand.u32 %v4670, 4294901760
    %5488 = vmatpush1.msra.mxu0 %v5487
    %v5489 = vand.u32 %v4673, 4294901760
    %5490 = vmatprep.subr.mxu0 %v5489
    %v5491 = vand.u32 %v4672, 4294901760
    %5492 = vmatpush1.msra.mxu0 %v5491
    %v5493 = vand.u32 %v4675, 4294901760
    %5494 = vmatprep.subr.mxu0 %v5493
    %v5495 = vand.u32 %v4674, 4294901760
    %5496 = vmatpush1.msra.mxu0 %v5495
    %v5497 = vand.u32 %v4677, 4294901760
    %5498 = vmatprep.subr.mxu0 %v5497
    %v5499 = vand.u32 %v4676, 4294901760
    %5500 = vmatpush1.msra.mxu0 %v5499
    %v5501 = vand.u32 %v4679, 4294901760
    %5502 = vmatprep.subr.mxu0 %v5501
    %v5503 = vand.u32 %v4678, 4294901760
    %5504 = vmatpush1.msra.mxu0 %v5503
    %v5505 = vand.u32 %v4681, 4294901760
    %5506 = vmatprep.subr.mxu0 %v5505
    %v5507 = vand.u32 %v4680, 4294901760
    %5508 = vmatpush1.msra.mxu0 %v5507
    %5509 = vmatprep.subr.mxu0 0.0
    %5510 = vmatpush1.msra.mxu0 0.0
    %5511 = vmatprep.subr.mxu0 0.0
    %5512 = vmatpush1.msra.mxu0 0.0
    %5513 = vmatprep.subr.mxu0 0.0
    %5514 = vmatpush1.msra.mxu0 0.0
    %5515 = vmatprep.subr.mxu0 0.0
    %5516 = vmatpush1.msra.mxu0 0.0
    %5517 = vmatprep.subr.mxu0 0.0
    %5518 = vmatpush1.msra.mxu0 0.0
    %5519 = vmatprep.subr.mxu0 0.0
    %5520 = vmatpush1.msra.mxu0 0.0
    %5521 = vmatprep.subr.mxu0 0.0
    %5522 = vmatpush1.msra.mxu0 0.0
    %5523 = vmatprep.subr.mxu0 0.0
    %5524 = vmatpush1.msra.mxu0 0.0
    %5525 = vmatprep.subr.mxu0 0.0
    %5526 = vmatpush1.msra.mxu0 0.0
    %5527 = vmatprep.subr.mxu0 0.0
    %5528 = vmatpush1.msra.mxu0 0.0
    %5529 = vmatprep.subr.mxu0 0.0
    %5530 = vmatpush1.msra.mxu0 0.0
    %5531 = vmatprep.subr.mxu0 0.0
    %5532 = vmatpush1.msra.mxu0 0.0
    %5533 = vmatprep.subr.mxu0 0.0
    %5534 = vmatpush1.msra.mxu0 0.0
    %5535 = vmatprep.subr.mxu0 0.0
    %5536 = vmatpush1.msra.mxu0 0.0
    %5537 = vmatprep.subr.mxu0 0.0
    %5538 = vmatpush1.msra.mxu0 0.0
    %5539 = vmatprep.subr.mxu0 0.0
    %5540 = vmatpush1.msra.mxu0 0.0
    %5541 = vmatprep.mubr.f32.mxu0 0.0
    %v5542 = vand.u32 %v4649, 4294901760
    %5543 = vmatmul.mubr.f32.gmra.mrb[0].mxu0 %v5542
    %v5544 = vpop.f32.mrb[0].mxu0
    %v5545 = vadd.f32 %v5441, %v5544
    %v5546 = vpop.f32.mrb[0].mxu0
    %v5547 = vadd.f32 %v5443, %v5546
    %5548 = vdwg.mxu0
    %5550 = vrot.lane.b32.xlu0 %v711, 32
    %v5551 = vpop.permute.xlu0 %5550
    %v5553 = vsel %vm138, %v710, %v5551
    %v5554 = vld [vmem:[%s37] sm:$0xff]
    %v5555 = vld [vmem:[%s37 + $0x8] sm:$0xff]
    %v5556 = vld [vmem:[%s37 + $0x10] sm:$0xff]
    %v5557 = vld [vmem:[%s37 + $0x18] sm:$0xff]
    %v5558 = vld [vmem:[%s37 + $0x20] sm:$0xff]
    %v5559 = vld [vmem:[%s37 + $0x28] sm:$0xff]
    %v5560 = vld [vmem:[%s37 + $0x30] sm:$0xff]
    %v5561 = vld [vmem:[%s37 + $0x38] sm:$0xff]
    %v5562 = vld [vmem:[%s37 + $0x40] sm:$0xff]
    %v5563 = vld [vmem:[%s37 + $0x48] sm:$0xff]
    %v5564 = vld [vmem:[%s37 + $0x50] sm:$0xff]
    %v5565 = vld [vmem:[%s37 + $0x58] sm:$0xff]
    %v5566 = vld [vmem:[%s37 + $0x60] sm:$0xff]
    %v5567 = vld [vmem:[%s37 + $0x68] sm:$0xff]
    %v5568 = vld [vmem:[%s37 + $0x70] sm:$0xff]
    %v5569 = vld [vmem:[%s37 + $0x78] sm:$0xff]
    %v5570 = vld [vmem:[%s39] sm:$0x3]
    %v5572 = vlaneseq
    %v5573 = vshrl.u32 %v5572, 7
    %v5574 = vsub.s32 0, %v5573
    %v5575 = vrot.slane %v5570, %v5574
    %v5576 = vlaneseq
    %v5577 = vshrl.u32 %v5576, 7
    %v5578 = vsub.s32 1, %v5577
    %v5579 = vrot.slane %v5570, %v5578
    %v5583 = vsel %vm155, %v5553, 0
    %v5585 = vand.u32 %v5555, 4294901760
    %5586 = vmatprep.subr.mxu0 %v5585
    %v5587 = vand.u32 %v5554, 4294901760
    %5588 = vmatpush1.msra.mxu0 %v5587
    %v5589 = vand.u32 %v5557, 4294901760
    %5590 = vmatprep.subr.mxu0 %v5589
    %v5591 = vand.u32 %v5556, 4294901760
    %5592 = vmatpush1.msra.mxu0 %v5591
    %v5593 = vand.u32 %v5559, 4294901760
    %5594 = vmatprep.subr.mxu0 %v5593
    %v5595 = vand.u32 %v5558, 4294901760
    %5596 = vmatpush1.msra.mxu0 %v5595
    %v5597 = vand.u32 %v5561, 4294901760
    %5598 = vmatprep.subr.mxu0 %v5597
    %v5599 = vand.u32 %v5560, 4294901760
    %5600 = vmatpush1.msra.mxu0 %v5599
    %v5601 = vand.u32 %v5563, 4294901760
    %5602 = vmatprep.subr.mxu0 %v5601
    %v5603 = vand.u32 %v5562, 4294901760
    %5604 = vmatpush1.msra.mxu0 %v5603
    %v5605 = vand.u32 %v5565, 4294901760
    %5606 = vmatprep.subr.mxu0 %v5605
    %v5607 = vand.u32 %v5564, 4294901760
    %5608 = vmatpush1.msra.mxu0 %v5607
    %v5609 = vand.u32 %v5567, 4294901760
    %5610 = vmatprep.subr.mxu0 %v5609
    %v5611 = vand.u32 %v5566, 4294901760
    %5612 = vmatpush1.msra.mxu0 %v5611
    %v5613 = vand.u32 %v5569, 4294901760
    %5614 = vmatprep.subr.mxu0 %v5613
    %v5615 = vand.u32 %v5568, 4294901760
    %5616 = vmatpush1.msra.mxu0 %v5615
    %5617 = vmatprep.subr.mxu0 0.0
    %5618 = vmatpush1.msra.mxu0 0.0
    %5619 = vmatprep.subr.mxu0 0.0
    %5620 = vmatpush1.msra.mxu0 0.0
    %5621 = vmatprep.subr.mxu0 0.0
    %5622 = vmatpush1.msra.mxu0 0.0
    %5623 = vmatprep.subr.mxu0 0.0
    %5624 = vmatpush1.msra.mxu0 0.0
    %5625 = vmatprep.subr.mxu0 0.0
    %5626 = vmatpush1.msra.mxu0 0.0
    %5627 = vmatprep.subr.mxu0 0.0
    %5628 = vmatpush1.msra.mxu0 0.0
    %5629 = vmatprep.subr.mxu0 0.0
    %5630 = vmatpush1.msra.mxu0 0.0
    %5631 = vmatprep.subr.mxu0 0.0
    %5632 = vmatpush1.msra.mxu0 0.0
    %5633 = vmatprep.subr.mxu0 0.0
    %5634 = vmatpush1.msra.mxu0 0.0
    %5635 = vmatprep.subr.mxu0 0.0
    %5636 = vmatpush1.msra.mxu0 0.0
    %5637 = vmatprep.subr.mxu0 0.0
    %5638 = vmatpush1.msra.mxu0 0.0
    %5639 = vmatprep.subr.mxu0 0.0
    %5640 = vmatpush1.msra.mxu0 0.0
    %5641 = vmatprep.subr.mxu0 0.0
    %5642 = vmatpush1.msra.mxu0 0.0
    %5643 = vmatprep.subr.mxu0 0.0
    %5644 = vmatpush1.msra.mxu0 0.0
    %5645 = vmatprep.subr.mxu0 0.0
    %5646 = vmatpush1.msra.mxu0 0.0
    %5647 = vmatprep.subr.mxu0 0.0
    %5648 = vmatpush1.msra.mxu0 0.0
    %5649 = vmatprep.subr.mxu0 0.0
    %5650 = vmatpush1.msra.mxu0 0.0
    %5651 = vmatprep.subr.mxu0 0.0
    %5652 = vmatpush1.msra.mxu0 0.0
    %5653 = vmatprep.subr.mxu0 0.0
    %5654 = vmatpush1.msra.mxu0 0.0
    %5655 = vmatprep.subr.mxu0 0.0
    %5656 = vmatpush1.msra.mxu0 0.0
    %5657 = vmatprep.subr.mxu0 0.0
    %5658 = vmatpush1.msra.mxu0 0.0
    %5659 = vmatprep.subr.mxu0 0.0
    %5660 = vmatpush1.msra.mxu0 0.0
    %5661 = vmatprep.subr.mxu0 0.0
    %5662 = vmatpush1.msra.mxu0 0.0
    %5663 = vmatprep.subr.mxu0 0.0
    %5664 = vmatpush1.msra.mxu0 0.0
    %5665 = vmatprep.mubr.f32.mxu0 0.0
    %v5666 = vand.u32 %v5583, 4294901760
    %v5667 = vsub.f32 %v5583, %v5666
    %v5668 = vand.u32 %v5667, 4294901760
    %v5669 = vsub.f32 %v5667, %v5668
    %v5670 = vand.u32 %v5669, 4294901760
    %5671 = vmatmul.mubr.f32.gmra.mrb[0].mxu0 %v5670
    %v5672 = vpop.f32.mrb[0].mxu0
    %v5673 = vadd.f32 %v5575, %v5672
    %v5674 = vpop.f32.mrb[0].mxu0
    %v5675 = vadd.f32 %v5579, %v5674
    %5676 = vdwg.mxu0
    %v5677 = vand.u32 %v5555, 4294901760
    %v5678 = vsub.f32 %v5555, %v5677
    %v5679 = vand.u32 %v5678, 4294901760
    %v5680 = vsub.f32 %v5678, %v5679
    %v5681 = vand.u32 %v5680, 4294901760
    %5682 = vmatprep.subr.mxu0 %v5681
    %v5683 = vand.u32 %v5554, 4294901760
    %v5684 = vsub.f32 %v5554, %v5683
    %v5685 = vand.u32 %v5684, 4294901760
    %v5686 = vsub.f32 %v5684, %v5685
    %v5687 = vand.u32 %v5686, 4294901760
    %5688 = vmatpush1.msra.mxu0 %v5687
    %v5689 = vand.u32 %v5557, 4294901760
    %v5690 = vsub.f32 %v5557, %v5689
    %v5691 = vand.u32 %v5690, 4294901760
    %v5692 = vsub.f32 %v5690, %v5691
    %v5693 = vand.u32 %v5692, 4294901760
    %5694 = vmatprep.subr.mxu0 %v5693
    %v5695 = vand.u32 %v5556, 4294901760
    %v5696 = vsub.f32 %v5556, %v5695
    %v5697 = vand.u32 %v5696, 4294901760
    %v5698 = vsub.f32 %v5696, %v5697
    %v5699 = vand.u32 %v5698, 4294901760
    %5700 = vmatpush1.msra.mxu0 %v5699
    %v5701 = vand.u32 %v5559, 4294901760
    %v5702 = vsub.f32 %v5559, %v5701
    %v5703 = vand.u32 %v5702, 4294901760
    %v5704 = vsub.f32 %v5702, %v5703
    %v5705 = vand.u32 %v5704, 4294901760
    %5706 = vmatprep.subr.mxu0 %v5705
    %v5707 = vand.u32 %v5558, 4294901760
    %v5708 = vsub.f32 %v5558, %v5707
    %v5709 = vand.u32 %v5708, 4294901760
    %v5710 = vsub.f32 %v5708, %v5709
    %v5711 = vand.u32 %v5710, 4294901760
    %5712 = vmatpush1.msra.mxu0 %v5711
    %v5713 = vand.u32 %v5561, 4294901760
    %v5714 = vsub.f32 %v5561, %v5713
    %v5715 = vand.u32 %v5714, 4294901760
    %v5716 = vsub.f32 %v5714, %v5715
    %v5717 = vand.u32 %v5716, 4294901760
    %5718 = vmatprep.subr.mxu0 %v5717
    %v5719 = vand.u32 %v5560, 4294901760
    %v5720 = vsub.f32 %v5560, %v5719
    %v5721 = vand.u32 %v5720, 4294901760
    %v5722 = vsub.f32 %v5720, %v5721
    %v5723 = vand.u32 %v5722, 4294901760
    %5724 = vmatpush1.msra.mxu0 %v5723
    %v5725 = vand.u32 %v5563, 4294901760
    %v5726 = vsub.f32 %v5563, %v5725
    %v5727 = vand.u32 %v5726, 4294901760
    %v5728 = vsub.f32 %v5726, %v5727
    %v5729 = vand.u32 %v5728, 4294901760
    %5730 = vmatprep.subr.mxu0 %v5729
    %v5731 = vand.u32 %v5562, 4294901760
    %v5732 = vsub.f32 %v5562, %v5731
    %v5733 = vand.u32 %v5732, 4294901760
    %v5734 = vsub.f32 %v5732, %v5733
    %v5735 = vand.u32 %v5734, 4294901760
    %5736 = vmatpush1.msra.mxu0 %v5735
    %v5737 = vand.u32 %v5565, 4294901760
    %v5738 = vsub.f32 %v5565, %v5737
    %v5739 = vand.u32 %v5738, 4294901760
    %v5740 = vsub.f32 %v5738, %v5739
    %v5741 = vand.u32 %v5740, 4294901760
    %5742 = vmatprep.subr.mxu0 %v5741
    %v5743 = vand.u32 %v5564, 4294901760
    %v5744 = vsub.f32 %v5564, %v5743
    %v5745 = vand.u32 %v5744, 4294901760
    %v5746 = vsub.f32 %v5744, %v5745
    %v5747 = vand.u32 %v5746, 4294901760
    %5748 = vmatpush1.msra.mxu0 %v5747
    %v5749 = vand.u32 %v5567, 4294901760
    %v5750 = vsub.f32 %v5567, %v5749
    %v5751 = vand.u32 %v5750, 4294901760
    %v5752 = vsub.f32 %v5750, %v5751
    %v5753 = vand.u32 %v5752, 4294901760
    %5754 = vmatprep.subr.mxu0 %v5753
    %v5755 = vand.u32 %v5566, 4294901760
    %v5756 = vsub.f32 %v5566, %v5755
    %v5757 = vand.u32 %v5756, 4294901760
    %v5758 = vsub.f32 %v5756, %v5757
    %v5759 = vand.u32 %v5758, 4294901760
    %5760 = vmatpush1.msra.mxu0 %v5759
    %v5761 = vand.u32 %v5569, 4294901760
    %v5762 = vsub.f32 %v5569, %v5761
    %v5763 = vand.u32 %v5762, 4294901760
    %v5764 = vsub.f32 %v5762, %v5763
    %v5765 = vand.u32 %v5764, 4294901760
    %5766 = vmatprep.subr.mxu0 %v5765
    %v5767 = vand.u32 %v5568, 4294901760
    %v5768 = vsub.f32 %v5568, %v5767
    %v5769 = vand.u32 %v5768, 4294901760
    %v5770 = vsub.f32 %v5768, %v5769
    %v5771 = vand.u32 %v5770, 4294901760
    %5772 = vmatpush1.msra.mxu0 %v5771
    %5773 = vmatprep.subr.mxu0 0.0
    %5774 = vmatpush1.msra.mxu0 0.0
    %5775 = vmatprep.subr.mxu0 0.0
    %5776 = vmatpush1.msra.mxu0 0.0
    %5777 = vmatprep.subr.mxu0 0.0
    %5778 = vmatpush1.msra.mxu0 0.0
    %5779 = vmatprep.subr.mxu0 0.0
    %5780 = vmatpush1.msra.mxu0 0.0
    %5781 = vmatprep.subr.mxu0 0.0
    %5782 = vmatpush1.msra.mxu0 0.0
    %5783 = vmatprep.subr.mxu0 0.0
    %5784 = vmatpush1.msra.mxu0 0.0
    %5785 = vmatprep.subr.mxu0 0.0
    %5786 = vmatpush1.msra.mxu0 0.0
    %5787 = vmatprep.subr.mxu0 0.0
    %5788 = vmatpush1.msra.mxu0 0.0
    %5789 = vmatprep.subr.mxu0 0.0
    %5790 = vmatpush1.msra.mxu0 0.0
    %5791 = vmatprep.subr.mxu0 0.0
    %5792 = vmatpush1.msra.mxu0 0.0
    %5793 = vmatprep.subr.mxu0 0.0
    %5794 = vmatpush1.msra.mxu0 0.0
    %5795 = vmatprep.subr.mxu0 0.0
    %5796 = vmatpush1.msra.mxu0 0.0
    %5797 = vmatprep.subr.mxu0 0.0
    %5798 = vmatpush1.msra.mxu0 0.0
    %5799 = vmatprep.subr.mxu0 0.0
    %5800 = vmatpush1.msra.mxu0 0.0
    %5801 = vmatprep.subr.mxu0 0.0
    %5802 = vmatpush1.msra.mxu0 0.0
    %5803 = vmatprep.subr.mxu0 0.0
    %5804 = vmatpush1.msra.mxu0 0.0
    %5805 = vmatprep.subr.mxu0 0.0
    %5806 = vmatpush1.msra.mxu0 0.0
    %5807 = vmatprep.subr.mxu0 0.0
    %5808 = vmatpush1.msra.mxu0 0.0
    %5809 = vmatprep.subr.mxu0 0.0
    %5810 = vmatpush1.msra.mxu0 0.0
    %5811 = vmatprep.subr.mxu0 0.0
    %5812 = vmatpush1.msra.mxu0 0.0
    %5813 = vmatprep.subr.mxu0 0.0
    %5814 = vmatpush1.msra.mxu0 0.0
    %5815 = vmatprep.subr.mxu0 0.0
    %5816 = vmatpush1.msra.mxu0 0.0
    %5817 = vmatprep.subr.mxu0 0.0
    %5818 = vmatpush1.msra.mxu0 0.0
    %5819 = vmatprep.subr.mxu0 0.0
    %5820 = vmatpush1.msra.mxu0 0.0
    %5821 = vmatprep.mubr.f32.mxu0 0.0
    %v5822 = vand.u32 %v5583, 4294901760
    %5823 = vmatmul.mubr.f32.gmra.mrb[0].mxu0 %v5822
    %v5824 = vpop.f32.mrb[0].mxu0
    %v5825 = vadd.f32 %v5673, %v5824
    %v5826 = vpop.f32.mrb[0].mxu0
    %v5827 = vadd.f32 %v5675, %v5826
    %5828 = vdwg.mxu0
    %v5829 = vand.u32 %v5555, 4294901760
    %v5830 = vsub.f32 %v5555, %v5829
    %5831 = vmatprep.subr.mxu0 %v5830
    %v5832 = vand.u32 %v5554, 4294901760
    %v5833 = vsub.f32 %v5554, %v5832
    %5834 = vmatpush1.msra.mxu0 %v5833
    %v5835 = vand.u32 %v5557, 4294901760
    %v5836 = vsub.f32 %v5557, %v5835
    %5837 = vmatprep.subr.mxu0 %v5836
    %v5838 = vand.u32 %v5556, 4294901760
    %v5839 = vsub.f32 %v5556, %v5838
    %5840 = vmatpush1.msra.mxu0 %v5839
    %v5841 = vand.u32 %v5559, 4294901760
    %v5842 = vsub.f32 %v5559, %v5841
    %5843 = vmatprep.subr.mxu0 %v5842
    %v5844 = vand.u32 %v5558, 4294901760
    %v5845 = vsub.f32 %v5558, %v5844
    %5846 = vmatpush1.msra.mxu0 %v5845
    %v5847 = vand.u32 %v5561, 4294901760
    %v5848 = vsub.f32 %v5561, %v5847
    %5849 = vmatprep.subr.mxu0 %v5848
    %v5850 = vand.u32 %v5560, 4294901760
    %v5851 = vsub.f32 %v5560, %v5850
    %5852 = vmatpush1.msra.mxu0 %v5851
    %v5853 = vand.u32 %v5563, 4294901760
    %v5854 = vsub.f32 %v5563, %v5853
    %5855 = vmatprep.subr.mxu0 %v5854
    %v5856 = vand.u32 %v5562, 4294901760
    %v5857 = vsub.f32 %v5562, %v5856
    %5858 = vmatpush1.msra.mxu0 %v5857
    %v5859 = vand.u32 %v5565, 4294901760
    %v5860 = vsub.f32 %v5565, %v5859
    %5861 = vmatprep.subr.mxu0 %v5860
    %v5862 = vand.u32 %v5564, 4294901760
    %v5863 = vsub.f32 %v5564, %v5862
    %5864 = vmatpush1.msra.mxu0 %v5863
    %v5865 = vand.u32 %v5567, 4294901760
    %v5866 = vsub.f32 %v5567, %v5865
    %5867 = vmatprep.subr.mxu0 %v5866
    %v5868 = vand.u32 %v5566, 4294901760
    %v5869 = vsub.f32 %v5566, %v5868
    %5870 = vmatpush1.msra.mxu0 %v5869
    %v5871 = vand.u32 %v5569, 4294901760
    %v5872 = vsub.f32 %v5569, %v5871
    %5873 = vmatprep.subr.mxu0 %v5872
    %v5874 = vand.u32 %v5568, 4294901760
    %v5875 = vsub.f32 %v5568, %v5874
    %5876 = vmatpush1.msra.mxu0 %v5875
    %5877 = vmatprep.subr.mxu0 0.0
    %5878 = vmatpush1.msra.mxu0 0.0
    %5879 = vmatprep.subr.mxu0 0.0
    %5880 = vmatpush1.msra.mxu0 0.0
    %5881 = vmatprep.subr.mxu0 0.0
    %5882 = vmatpush1.msra.mxu0 0.0
    %5883 = vmatprep.subr.mxu0 0.0
    %5884 = vmatpush1.msra.mxu0 0.0
    %5885 = vmatprep.subr.mxu0 0.0
    %5886 = vmatpush1.msra.mxu0 0.0
    %5887 = vmatprep.subr.mxu0 0.0
    %5888 = vmatpush1.msra.mxu0 0.0
    %5889 = vmatprep.subr.mxu0 0.0
    %5890 = vmatpush1.msra.mxu0 0.0
    %5891 = vmatprep.subr.mxu0 0.0
    %5892 = vmatpush1.msra.mxu0 0.0
    %5893 = vmatprep.subr.mxu0 0.0
    %5894 = vmatpush1.msra.mxu0 0.0
    %5895 = vmatprep.subr.mxu0 0.0
    %5896 = vmatpush1.msra.mxu0 0.0
    %5897 = vmatprep.subr.mxu0 0.0
    %5898 = vmatpush1.msra.mxu0 0.0
    %5899 = vmatprep.subr.mxu0 0.0
    %5900 = vmatpush1.msra.mxu0 0.0
    %5901 = vmatprep.subr.mxu0 0.0
    %5902 = vmatpush1.msra.mxu0 0.0
    %5903 = vmatprep.subr.mxu0 0.0
    %5904 = vmatpush1.msra.mxu0 0.0
    %5905 = vmatprep.subr.mxu0 0.0
    %5906 = vmatpush1.msra.mxu0 0.0
    %5907 = vmatprep.subr.mxu0 0.0
    %5908 = vmatpush1.msra.mxu0 0.0
    %5909 = vmatprep.subr.mxu0 0.0
    %5910 = vmatpush1.msra.mxu0 0.0
    %5911 = vmatprep.subr.mxu0 0.0
    %5912 = vmatpush1.msra.mxu0 0.0
    %5913 = vmatprep.subr.mxu0 0.0
    %5914 = vmatpush1.msra.mxu0 0.0
    %5915 = vmatprep.subr.mxu0 0.0
    %5916 = vmatpush1.msra.mxu0 0.0
    %5917 = vmatprep.subr.mxu0 0.0
    %5918 = vmatpush1.msra.mxu0 0.0
    %5919 = vmatprep.subr.mxu0 0.0
    %5920 = vmatpush1.msra.mxu0 0.0
    %5921 = vmatprep.subr.mxu0 0.0
    %5922 = vmatpush1.msra.mxu0 0.0
    %5923 = vmatprep.subr.mxu0 0.0
    %5924 = vmatpush1.msra.mxu0 0.0
    %5925 = vmatprep.mubr.f32.mxu0 0.0
    %v5926 = vand.u32 %v5583, 4294901760
    %v5927 = vsub.f32 %v5583, %v5926
    %5928 = vmatmul.mubr.f32.gmra.mrb[0].mxu0 %v5927
    %v5929 = vpop.f32.mrb[0].mxu0
    %v5930 = vadd.f32 %v5825, %v5929
    %v5931 = vpop.f32.mrb[0].mxu0
    %v5932 = vadd.f32 %v5827, %v5931
    %5933 = vdwg.mxu0
    %v5934 = vand.u32 %v5555, 4294901760
    %5935 = vmatprep.subr.mxu0 %v5934
    %v5936 = vand.u32 %v5554, 4294901760
    %5937 = vmatpush1.msra.mxu0 %v5936
    %v5938 = vand.u32 %v5557, 4294901760
    %5939 = vmatprep.subr.mxu0 %v5938
    %v5940 = vand.u32 %v5556, 4294901760
    %5941 = vmatpush1.msra.mxu0 %v5940
    %v5942 = vand.u32 %v5559, 4294901760
    %5943 = vmatprep.subr.mxu0 %v5942
    %v5944 = vand.u32 %v5558, 4294901760
    %5945 = vmatpush1.msra.mxu0 %v5944
    %v5946 = vand.u32 %v5561, 4294901760
    %5947 = vmatprep.subr.mxu0 %v5946
    %v5948 = vand.u32 %v5560, 4294901760
    %5949 = vmatpush1.msra.mxu0 %v5948
    %v5950 = vand.u32 %v5563, 4294901760
    %5951 = vmatprep.subr.mxu0 %v5950
    %v5952 = vand.u32 %v5562, 4294901760
    %5953 = vmatpush1.msra.mxu0 %v5952
    %v5954 = vand.u32 %v5565, 4294901760
    %5955 = vmatprep.subr.mxu0 %v5954
    %v5956 = vand.u32 %v5564, 4294901760
    %5957 = vmatpush1.msra.mxu0 %v5956
    %v5958 = vand.u32 %v5567, 4294901760
    %5959 = vmatprep.subr.mxu0 %v5958
    %v5960 = vand.u32 %v5566, 4294901760
    %5961 = vmatpush1.msra.mxu0 %v5960
    %v5962 = vand.u32 %v5569, 4294901760
    %5963 = vmatprep.subr.mxu0 %v5962
    %v5964 = vand.u32 %v5568, 4294901760
    %5965 = vmatpush1.msra.mxu0 %v5964
    %5966 = vmatprep.subr.mxu0 0.0
    %5967 = vmatpush1.msra.mxu0 0.0
    %5968 = vmatprep.subr.mxu0 0.0
    %5969 = vmatpush1.msra.mxu0 0.0
    %5970 = vmatprep.subr.mxu0 0.0
    %5971 = vmatpush1.msra.mxu0 0.0
    %5972 = vmatprep.subr.mxu0 0.0
    %5973 = vmatpush1.msra.mxu0 0.0
    %5974 = vmatprep.subr.mxu0 0.0
    %5975 = vmatpush1.msra.mxu0 0.0
    %5976 = vmatprep.subr.mxu0 0.0
    %5977 = vmatpush1.msra.mxu0 0.0
    %5978 = vmatprep.subr.mxu0 0.0
    %5979 = vmatpush1.msra.mxu0 0.0
    %5980 = vmatprep.subr.mxu0 0.0
    %5981 = vmatpush1.msra.mxu0 0.0
    %5982 = vmatprep.subr.mxu0 0.0
    %5983 = vmatpush1.msra.mxu0 0.0
    %5984 = vmatprep.subr.mxu0 0.0
    %5985 = vmatpush1.msra.mxu0 0.0
    %5986 = vmatprep.subr.mxu0 0.0
    %5987 = vmatpush1.msra.mxu0 0.0
    %5988 = vmatprep.subr.mxu0 0.0
    %5989 = vmatpush1.msra.mxu0 0.0
    %5990 = vmatprep.subr.mxu0 0.0
    %5991 = vmatpush1.msra.mxu0 0.0
    %5992 = vmatprep.subr.mxu0 0.0
    %5993 = vmatpush1.msra.mxu0 0.0
    %5994 = vmatprep.subr.mxu0 0.0
    %5995 = vmatpush1.msra.mxu0 0.0
    %5996 = vmatprep.subr.mxu0 0.0
    %5997 = vmatpush1.msra.mxu0 0.0
    %5998 = vmatprep.subr.mxu0 0.0
    %5999 = vmatpush1.msra.mxu0 0.0
    %6000 = vmatprep.subr.mxu0 0.0
    %6001 = vmatpush1.msra.mxu0 0.0
    %6002 = vmatprep.subr.mxu0 0.0
    %6003 = vmatpush1.msra.mxu0 0.0
    %6004 = vmatprep.subr.mxu0 0.0
    %6005 = vmatpush1.msra.mxu0 0.0
    %6006 = vmatprep.subr.mxu0 0.0
    %6007 = vmatpush1.msra.mxu0 0.0
    %6008 = vmatprep.subr.mxu0 0.0
    %6009 = vmatpush1.msra.mxu0 0.0
    %6010 = vmatprep.subr.mxu0 0.0
    %6011 = vmatpush1.msra.mxu0 0.0
    %6012 = vmatprep.subr.mxu0 0.0
    %6013 = vmatpush1.msra.mxu0 0.0
    %6014 = vmatprep.mubr.f32.mxu0 0.0
    %v6015 = vand.u32 %v5583, 4294901760
    %v6016 = vsub.f32 %v5583, %v6015
    %v6017 = vand.u32 %v6016, 4294901760
    %6018 = vmatmul.mubr.f32.gmra.mrb[0].mxu0 %v6017
    %v6019 = vpop.f32.mrb[0].mxu0
    %v6020 = vadd.f32 %v5930, %v6019
    %v6021 = vpop.f32.mrb[0].mxu0
    %v6022 = vadd.f32 %v5932, %v6021
    %6023 = vdwg.mxu0
    %v6024 = vand.u32 %v5555, 4294901760
    %v6025 = vsub.f32 %v5555, %v6024
    %v6026 = vand.u32 %v6025, 4294901760
    %6027 = vmatprep.subr.mxu0 %v6026
    %v6028 = vand.u32 %v5554, 4294901760
    %v6029 = vsub.f32 %v5554, %v6028
    %v6030 = vand.u32 %v6029, 4294901760
    %6031 = vmatpush1.msra.mxu0 %v6030
    %v6032 = vand.u32 %v5557, 4294901760
    %v6033 = vsub.f32 %v5557, %v6032
    %v6034 = vand.u32 %v6033, 4294901760
    %6035 = vmatprep.subr.mxu0 %v6034
    %v6036 = vand.u32 %v5556, 4294901760
    %v6037 = vsub.f32 %v5556, %v6036
    %v6038 = vand.u32 %v6037, 4294901760
    %6039 = vmatpush1.msra.mxu0 %v6038
    %v6040 = vand.u32 %v5559, 4294901760
    %v6041 = vsub.f32 %v5559, %v6040
    %v6042 = vand.u32 %v6041, 4294901760
    %6043 = vmatprep.subr.mxu0 %v6042
    %v6044 = vand.u32 %v5558, 4294901760
    %v6045 = vsub.f32 %v5558, %v6044
    %v6046 = vand.u32 %v6045, 4294901760
    %6047 = vmatpush1.msra.mxu0 %v6046
    %v6048 = vand.u32 %v5561, 4294901760
    %v6049 = vsub.f32 %v5561, %v6048
    %v6050 = vand.u32 %v6049, 4294901760
    %6051 = vmatprep.subr.mxu0 %v6050
    %v6052 = vand.u32 %v5560, 4294901760
    %v6053 = vsub.f32 %v5560, %v6052
    %v6054 = vand.u32 %v6053, 4294901760
    %6055 = vmatpush1.msra.mxu0 %v6054
    %v6056 = vand.u32 %v5563, 4294901760
    %v6057 = vsub.f32 %v5563, %v6056
    %v6058 = vand.u32 %v6057, 4294901760
    %6059 = vmatprep.subr.mxu0 %v6058
    %v6060 = vand.u32 %v5562, 4294901760
    %v6061 = vsub.f32 %v5562, %v6060
    %v6062 = vand.u32 %v6061, 4294901760
    %6063 = vmatpush1.msra.mxu0 %v6062
    %v6064 = vand.u32 %v5565, 4294901760
    %v6065 = vsub.f32 %v5565, %v6064
    %v6066 = vand.u32 %v6065, 4294901760
    %6067 = vmatprep.subr.mxu0 %v6066
    %v6068 = vand.u32 %v5564, 4294901760
    %v6069 = vsub.f32 %v5564, %v6068
    %v6070 = vand.u32 %v6069, 4294901760
    %6071 = vmatpush1.msra.mxu0 %v6070
    %v6072 = vand.u32 %v5567, 4294901760
    %v6073 = vsub.f32 %v5567, %v6072
    %v6074 = vand.u32 %v6073, 4294901760
    %6075 = vmatprep.subr.mxu0 %v6074
    %v6076 = vand.u32 %v5566, 4294901760
    %v6077 = vsub.f32 %v5566, %v6076
    %v6078 = vand.u32 %v6077, 4294901760
    %6079 = vmatpush1.msra.mxu0 %v6078
    %v6080 = vand.u32 %v5569, 4294901760
    %v6081 = vsub.f32 %v5569, %v6080
    %v6082 = vand.u32 %v6081, 4294901760
    %6083 = vmatprep.subr.mxu0 %v6082
    %v6084 = vand.u32 %v5568, 4294901760
    %v6085 = vsub.f32 %v5568, %v6084
    %v6086 = vand.u32 %v6085, 4294901760
    %6087 = vmatpush1.msra.mxu0 %v6086
    %6088 = vmatprep.subr.mxu0 0.0
    %6089 = vmatpush1.msra.mxu0 0.0
    %6090 = vmatprep.subr.mxu0 0.0
    %6091 = vmatpush1.msra.mxu0 0.0
    %6092 = vmatprep.subr.mxu0 0.0
    %6093 = vmatpush1.msra.mxu0 0.0
    %6094 = vmatprep.subr.mxu0 0.0
    %6095 = vmatpush1.msra.mxu0 0.0
    %6096 = vmatprep.subr.mxu0 0.0
    %6097 = vmatpush1.msra.mxu0 0.0
    %6098 = vmatprep.subr.mxu0 0.0
    %6099 = vmatpush1.msra.mxu0 0.0
    %6100 = vmatprep.subr.mxu0 0.0
    %6101 = vmatpush1.msra.mxu0 0.0
    %6102 = vmatprep.subr.mxu0 0.0
    %6103 = vmatpush1.msra.mxu0 0.0
    %6104 = vmatprep.subr.mxu0 0.0
    %6105 = vmatpush1.msra.mxu0 0.0
    %6106 = vmatprep.subr.mxu0 0.0
    %6107 = vmatpush1.msra.mxu0 0.0
    %6108 = vmatprep.subr.mxu0 0.0
    %6109 = vmatpush1.msra.mxu0 0.0
    %6110 = vmatprep.subr.mxu0 0.0
    %6111 = vmatpush1.msra.mxu0 0.0
    %6112 = vmatprep.subr.mxu0 0.0
    %6113 = vmatpush1.msra.mxu0 0.0
    %6114 = vmatprep.subr.mxu0 0.0
    %6115 = vmatpush1.msra.mxu0 0.0
    %6116 = vmatprep.subr.mxu0 0.0
    %6117 = vmatpush1.msra.mxu0 0.0
    %6118 = vmatprep.subr.mxu0 0.0
    %6119 = vmatpush1.msra.mxu0 0.0
    %6120 = vmatprep.subr.mxu0 0.0
    %6121 = vmatpush1.msra.mxu0 0.0
    %6122 = vmatprep.subr.mxu0 0.0
    %6123 = vmatpush1.msra.mxu0 0.0
    %6124 = vmatprep.subr.mxu0 0.0
    %6125 = vmatpush1.msra.mxu0 0.0
    %6126 = vmatprep.subr.mxu0 0.0
    %6127 = vmatpush1.msra.mxu0 0.0
    %6128 = vmatprep.subr.mxu0 0.0
    %6129 = vmatpush1.msra.mxu0 0.0
    %6130 = vmatprep.subr.mxu0 0.0
    %6131 = vmatpush1.msra.mxu0 0.0
    %6132 = vmatprep.subr.mxu0 0.0
    %6133 = vmatpush1.msra.mxu0 0.0
    %6134 = vmatprep.subr.mxu0 0.0
    %6135 = vmatpush1.msra.mxu0 0.0
    %6136 = vmatprep.mubr.f32.mxu0 0.0
    %v6137 = vand.u32 %v5583, 4294901760
    %6138 = vmatmul.mubr.f32.gmra.mrb[0].mxu0 %v6137
    %v6139 = vpop.f32.mrb[0].mxu0
    %v6140 = vadd.f32 %v6020, %v6139
    %v6141 = vpop.f32.mrb[0].mxu0
    %v6142 = vadd.f32 %v6022, %v6141
    %6143 = vdwg.mxu0
    %v6144 = vand.u32 %v5555, 4294901760
    %6145 = vmatprep.subr.mxu0 %v6144
    %v6146 = vand.u32 %v5554, 4294901760
    %6147 = vmatpush1.msra.mxu0 %v6146
    %v6148 = vand.u32 %v5557, 4294901760
    %6149 = vmatprep.subr.mxu0 %v6148
    %v6150 = vand.u32 %v5556, 4294901760
    %6151 = vmatpush1.msra.mxu0 %v6150
    %v6152 = vand.u32 %v5559, 4294901760
    %6153 = vmatprep.subr.mxu0 %v6152
    %v6154 = vand.u32 %v5558, 4294901760
    %6155 = vmatpush1.msra.mxu0 %v6154
    %v6156 = vand.u32 %v5561, 4294901760
    %6157 = vmatprep.subr.mxu0 %v6156
    %v6158 = vand.u32 %v5560, 4294901760
    %6159 = vmatpush1.msra.mxu0 %v6158
    %v6160 = vand.u32 %v5563, 4294901760
    %6161 = vmatprep.subr.mxu0 %v6160
    %v6162 = vand.u32 %v5562, 4294901760
    %6163 = vmatpush1.msra.mxu0 %v6162
    %v6164 = vand.u32 %v5565, 4294901760
    %6165 = vmatprep.subr.mxu0 %v6164
    %v6166 = vand.u32 %v5564, 4294901760
    %6167 = vmatpush1.msra.mxu0 %v6166
    %v6168 = vand.u32 %v5567, 4294901760
    %6169 = vmatprep.subr.mxu0 %v6168
    %v6170 = vand.u32 %v5566, 4294901760
    %6171 = vmatpush1.msra.mxu0 %v6170
    %v6172 = vand.u32 %v5569, 4294901760
    %6173 = vmatprep.subr.mxu0 %v6172
    %v6174 = vand.u32 %v5568, 4294901760
    %6175 = vmatpush1.msra.mxu0 %v6174
    %6176 = vmatprep.subr.mxu0 0.0
    %6177 = vmatpush1.msra.mxu0 0.0
    %6178 = vmatprep.subr.mxu0 0.0
    %6179 = vmatpush1.msra.mxu0 0.0
    %6180 = vmatprep.subr.mxu0 0.0
    %6181 = vmatpush1.msra.mxu0 0.0
    %6182 = vmatprep.subr.mxu0 0.0
    %6183 = vmatpush1.msra.mxu0 0.0
    %6184 = vmatprep.subr.mxu0 0.0
    %6185 = vmatpush1.msra.mxu0 0.0
    %6186 = vmatprep.subr.mxu0 0.0
    %6187 = vmatpush1.msra.mxu0 0.0
    %6188 = vmatprep.subr.mxu0 0.0
    %6189 = vmatpush1.msra.mxu0 0.0
    %6190 = vmatprep.subr.mxu0 0.0
    %6191 = vmatpush1.msra.mxu0 0.0
    %6192 = vmatprep.subr.mxu0 0.0
    %6193 = vmatpush1.msra.mxu0 0.0
    %6194 = vmatprep.subr.mxu0 0.0
    %6195 = vmatpush1.msra.mxu0 0.0
    %6196 = vmatprep.subr.mxu0 0.0
    %6197 = vmatpush1.msra.mxu0 0.0
    %6198 = vmatprep.subr.mxu0 0.0
    %6199 = vmatpush1.msra.mxu0 0.0
    %6200 = vmatprep.subr.mxu0 0.0
    %6201 = vmatpush1.msra.mxu0 0.0
    %6202 = vmatprep.subr.mxu0 0.0
    %6203 = vmatpush1.msra.mxu0 0.0
    %6204 = vmatprep.subr.mxu0 0.0
    %6205 = vmatpush1.msra.mxu0 0.0
    %6206 = vmatprep.subr.mxu0 0.0
    %6207 = vmatpush1.msra.mxu0 0.0
    %6208 = vmatprep.subr.mxu0 0.0
    %6209 = vmatpush1.msra.mxu0 0.0
    %6210 = vmatprep.subr.mxu0 0.0
    %6211 = vmatpush1.msra.mxu0 0.0
    %6212 = vmatprep.subr.mxu0 0.0
    %6213 = vmatpush1.msra.mxu0 0.0
    %6214 = vmatprep.subr.mxu0 0.0
    %6215 = vmatpush1.msra.mxu0 0.0
    %6216 = vmatprep.subr.mxu0 0.0
    %6217 = vmatpush1.msra.mxu0 0.0
    %6218 = vmatprep.subr.mxu0 0.0
    %6219 = vmatpush1.msra.mxu0 0.0
    %6220 = vmatprep.subr.mxu0 0.0
    %6221 = vmatpush1.msra.mxu0 0.0
    %6222 = vmatprep.subr.mxu0 0.0
    %6223 = vmatpush1.msra.mxu0 0.0
    %6224 = vmatprep.mubr.f32.mxu0 0.0
    %v6225 = vand.u32 %v5583, 4294901760
    %6226 = vmatmul.mubr.f32.gmra.mrb[0].mxu0 %v6225
    %v6227 = vpop.f32.mrb[0].mxu0
    %v6228 = vadd.f32 %v6140, %v6227
    %v6229 = vpop.f32.mrb[0].mxu0
    %v6230 = vadd.f32 %v6142, %v6229
    %6231 = vdwg.mxu0
    %v6232 = vadd.f32 %v5545, %v6228
    %v6233 = vxor.u32 %v6232, 2147483648
    %v6234 = vmul.f32 %v6233, 1.442695
    %v6235 = vpow.pop %v6234
    %v6236 = vadd.f32 %v6235, 1.0
    %v6237 = vrcp.pop %v6236
    %v6238 = vmul.f32 1.0, %v6237
    %v6239 = vmul.f32 %v6238, %v6230
    %v6240 = vadd.f32 %v5547, %v6239
    %v6241 = vtanh.pop %v6240
    %v6242 = vsub.f32 1.0, %v6238
    %6244 = vrot.lane.b32.xlu0 %v6241, 64
    %v6245 = vpop.permute.xlu0 %6244
    %v6247 = vmul.f32 %v6242, %v6245
    %6248 = vrot.lane.b32.xlu0 %v5553, 64
    %v6249 = vpop.permute.xlu0 %6248
    %v6251 = vmul.f32 %v6238, %v6249
    %v6252 = vadd.f32 %v6247, %v6251
    %v6253 = vsub.f32 1.0, %v131
    %6255 = vset.pattern.permute.xlu0 0
    %6256 = vperm.xlu0 %6255, %v6253
    %v6257 = vpop.permute.xlu0 %6256
    %v6259 = vmul.f32 %v710, %v6257
    %6261 = vset.pattern.permute.xlu0 0
    %6262 = vperm.xlu0 %6261, %v131
    %v6263 = vpop.permute.xlu0 %6262
    %v6265 = vmul.f32 %v6252, %v6263
    %6267 = vrot.lane.b32.xlu0 %v6265, 64
    %v6268 = vpop.permute.xlu0 %6267
    %v6270 = vadd.f32 %v6259, %v6268
    %v6271 = vmul.f32 %v711, %v6257
    %6272 = vrot.lane.b32.xlu0 %v6265, 32
    %v6273 = vpop.permute.xlu0 %6272
    %v6275 = vadd.f32 %v6271, %v6273
    %v6276 = vmul.f32 %v715, %v6270
    %v6277 = vadd.f32 %v6276, 0.0
    %v6278 = vmul.f32 %v715, %v6275
    %v6279 = vadd.f32 %v6278, 0.0
    %6281 = vrot.lane.b32.xlu0 %v710, 96
    %v6282 = vpop.permute.xlu0 %6281
    %v6284 = vsel %vm138, %v6282, %v711
    %v6286 = vsel %vm155, %v6284, 0
    %v6288 = vand.u32 %v5555, 4294901760
    %6289 = vmatprep.subr.mxu0 %v6288
    %v6290 = vand.u32 %v5554, 4294901760
    %6291 = vmatpush1.msra.mxu0 %v6290
    %v6292 = vand.u32 %v5557, 4294901760
    %6293 = vmatprep.subr.mxu0 %v6292
    %v6294 = vand.u32 %v5556, 4294901760
    %6295 = vmatpush1.msra.mxu0 %v6294
    %v6296 = vand.u32 %v5559, 4294901760
    %6297 = vmatprep.subr.mxu0 %v6296
    %v6298 = vand.u32 %v5558, 4294901760
    %6299 = vmatpush1.msra.mxu0 %v6298
    %v6300 = vand.u32 %v5561, 4294901760
    %6301 = vmatprep.subr.mxu0 %v6300
    %v6302 = vand.u32 %v5560, 4294901760
    %6303 = vmatpush1.msra.mxu0 %v6302
    %v6304 = vand.u32 %v5563, 4294901760
    %6305 = vmatprep.subr.mxu0 %v6304
    %v6306 = vand.u32 %v5562, 4294901760
    %6307 = vmatpush1.msra.mxu0 %v6306
    %v6308 = vand.u32 %v5565, 4294901760
    %6309 = vmatprep.subr.mxu0 %v6308
    %v6310 = vand.u32 %v5564, 4294901760
    %6311 = vmatpush1.msra.mxu0 %v6310
    %v6312 = vand.u32 %v5567, 4294901760
    %6313 = vmatprep.subr.mxu0 %v6312
    %v6314 = vand.u32 %v5566, 4294901760
    %6315 = vmatpush1.msra.mxu0 %v6314
    %v6316 = vand.u32 %v5569, 4294901760
    %6317 = vmatprep.subr.mxu0 %v6316
    %v6318 = vand.u32 %v5568, 4294901760
    %6319 = vmatpush1.msra.mxu0 %v6318
    %6320 = vmatprep.subr.mxu0 0.0
    %6321 = vmatpush1.msra.mxu0 0.0
    %6322 = vmatprep.subr.mxu0 0.0
    %6323 = vmatpush1.msra.mxu0 0.0
    %6324 = vmatprep.subr.mxu0 0.0
    %6325 = vmatpush1.msra.mxu0 0.0
    %6326 = vmatprep.subr.mxu0 0.0
    %6327 = vmatpush1.msra.mxu0 0.0
    %6328 = vmatprep.subr.mxu0 0.0
    %6329 = vmatpush1.msra.mxu0 0.0
    %6330 = vmatprep.subr.mxu0 0.0
    %6331 = vmatpush1.msra.mxu0 0.0
    %6332 = vmatprep.subr.mxu0 0.0
    %6333 = vmatpush1.msra.mxu0 0.0
    %6334 = vmatprep.subr.mxu0 0.0
    %6335 = vmatpush1.msra.mxu0 0.0
    %6336 = vmatprep.subr.mxu0 0.0
    %6337 = vmatpush1.msra.mxu0 0.0
    %6338 = vmatprep.subr.mxu0 0.0
    %6339 = vmatpush1.msra.mxu0 0.0
    %6340 = vmatprep.subr.mxu0 0.0
    %6341 = vmatpush1.msra.mxu0 0.0
    %6342 = vmatprep.subr.mxu0 0.0
    %6343 = vmatpush1.msra.mxu0 0.0
    %6344 = vmatprep.subr.mxu0 0.0
    %6345 = vmatpush1.msra.mxu0 0.0
    %6346 = vmatprep.subr.mxu0 0.0
    %6347 = vmatpush1.msra.mxu0 0.0
    %6348 = vmatprep.subr.mxu0 0.0
    %6349 = vmatpush1.msra.mxu0 0.0
    %6350 = vmatprep.subr.mxu0 0.0
    %6351 = vmatpush1.msra.mxu0 0.0
    %6352 = vmatprep.subr.mxu0 0.0
    %6353 = vmatpush1.msra.mxu0 0.0
    %6354 = vmatprep.subr.mxu0 0.0
    %6355 = vmatpush1.msra.mxu0 0.0
    %6356 = vmatprep.subr.mxu0 0.0
    %6357 = vmatpush1.msra.mxu0 0.0
    %6358 = vmatprep.subr.mxu0 0.0
    %6359 = vmatpush1.msra.mxu0 0.0
    %6360 = vmatprep.subr.mxu0 0.0
    %6361 = vmatpush1.msra.mxu0 0.0
    %6362 = vmatprep.subr.mxu0 0.0
    %6363 = vmatpush1.msra.mxu0 0.0
    %6364 = vmatprep.subr.mxu0 0.0
    %6365 = vmatpush1.msra.mxu0 0.0
    %6366 = vmatprep.subr.mxu0 0.0
    %6367 = vmatpush1.msra.mxu0 0.0
    %6368 = vmatprep.mubr.f32.mxu0 0.0
    %v6369 = vand.u32 %v6286, 4294901760
    %v6370 = vsub.f32 %v6286, %v6369
    %v6371 = vand.u32 %v6370, 4294901760
    %v6372 = vsub.f32 %v6370, %v6371
    %v6373 = vand.u32 %v6372, 4294901760
    %6374 = vmatmul.mubr.f32.gmra.mrb[0].mxu0 %v6373
    %v6375 = vpop.f32.mrb[0].mxu0
    %v6376 = vadd.f32 %v5575, %v6375
    %v6377 = vpop.f32.mrb[0].mxu0
    %v6378 = vadd.f32 %v5579, %v6377
    %6379 = vdwg.mxu0
    %v6380 = vand.u32 %v5555, 4294901760
    %v6381 = vsub.f32 %v5555, %v6380
    %v6382 = vand.u32 %v6381, 4294901760
    %v6383 = vsub.f32 %v6381, %v6382
    %v6384 = vand.u32 %v6383, 4294901760
    %6385 = vmatprep.subr.mxu0 %v6384
    %v6386 = vand.u32 %v5554, 4294901760
    %v6387 = vsub.f32 %v5554, %v6386
    %v6388 = vand.u32 %v6387, 4294901760
    %v6389 = vsub.f32 %v6387, %v6388
    %v6390 = vand.u32 %v6389, 4294901760
    %6391 = vmatpush1.msra.mxu0 %v6390
    %v6392 = vand.u32 %v5557, 4294901760
    %v6393 = vsub.f32 %v5557, %v6392
    %v6394 = vand.u32 %v6393, 4294901760
    %v6395 = vsub.f32 %v6393, %v6394
    %v6396 = vand.u32 %v6395, 4294901760
    %6397 = vmatprep.subr.mxu0 %v6396
    %v6398 = vand.u32 %v5556, 4294901760
    %v6399 = vsub.f32 %v5556, %v6398
    %v6400 = vand.u32 %v6399, 4294901760
    %v6401 = vsub.f32 %v6399, %v6400
    %v6402 = vand.u32 %v6401, 4294901760
    %6403 = vmatpush1.msra.mxu0 %v6402
    %v6404 = vand.u32 %v5559, 4294901760
    %v6405 = vsub.f32 %v5559, %v6404
    %v6406 = vand.u32 %v6405, 4294901760
    %v6407 = vsub.f32 %v6405, %v6406
    %v6408 = vand.u32 %v6407, 4294901760
    %6409 = vmatprep.subr.mxu0 %v6408
    %v6410 = vand.u32 %v5558, 4294901760
    %v6411 = vsub.f32 %v5558, %v6410
    %v6412 = vand.u32 %v6411, 4294901760
    %v6413 = vsub.f32 %v6411, %v6412
    %v6414 = vand.u32 %v6413, 4294901760
    %6415 = vmatpush1.msra.mxu0 %v6414
    %v6416 = vand.u32 %v5561, 4294901760
    %v6417 = vsub.f32 %v5561, %v6416
    %v6418 = vand.u32 %v6417, 4294901760
    %v6419 = vsub.f32 %v6417, %v6418
    %v6420 = vand.u32 %v6419, 4294901760
    %6421 = vmatprep.subr.mxu0 %v6420
    %v6422 = vand.u32 %v5560, 4294901760
    %v6423 = vsub.f32 %v5560, %v6422
    %v6424 = vand.u32 %v6423, 4294901760
    %v6425 = vsub.f32 %v6423, %v6424
    %v6426 = vand.u32 %v6425, 4294901760
    %6427 = vmatpush1.msra.mxu0 %v6426
    %v6428 = vand.u32 %v5563, 4294901760
    %v6429 = vsub.f32 %v5563, %v6428
    %v6430 = vand.u32 %v6429, 4294901760
    %v6431 = vsub.f32 %v6429, %v6430
    %v6432 = vand.u32 %v6431, 4294901760
    %6433 = vmatprep.subr.mxu0 %v6432
    %v6434 = vand.u32 %v5562, 4294901760
    %v6435 = vsub.f32 %v5562, %v6434
    %v6436 = vand.u32 %v6435, 4294901760
    %v6437 = vsub.f32 %v6435, %v6436
    %v6438 = vand.u32 %v6437, 4294901760
    %6439 = vmatpush1.msra.mxu0 %v6438
    %v6440 = vand.u32 %v5565, 4294901760
    %v6441 = vsub.f32 %v5565, %v6440
    %v6442 = vand.u32 %v6441, 4294901760
    %v6443 = vsub.f32 %v6441, %v6442
    %v6444 = vand.u32 %v6443, 4294901760
    %6445 = vmatprep.subr.mxu0 %v6444
    %v6446 = vand.u32 %v5564, 4294901760
    %v6447 = vsub.f32 %v5564, %v6446
    %v6448 = vand.u32 %v6447, 4294901760
    %v6449 = vsub.f32 %v6447, %v6448
    %v6450 = vand.u32 %v6449, 4294901760
    %6451 = vmatpush1.msra.mxu0 %v6450
    %v6452 = vand.u32 %v5567, 4294901760
    %v6453 = vsub.f32 %v5567, %v6452
    %v6454 = vand.u32 %v6453, 4294901760
    %v6455 = vsub.f32 %v6453, %v6454
    %v6456 = vand.u32 %v6455, 4294901760
    %6457 = vmatprep.subr.mxu0 %v6456
    %v6458 = vand.u32 %v5566, 4294901760
    %v6459 = vsub.f32 %v5566, %v6458
    %v6460 = vand.u32 %v6459, 4294901760
    %v6461 = vsub.f32 %v6459, %v6460
    %v6462 = vand.u32 %v6461, 4294901760
    %6463 = vmatpush1.msra.mxu0 %v6462
    %v6464 = vand.u32 %v5569, 4294901760
    %v6465 = vsub.f32 %v5569, %v6464
    %v6466 = vand.u32 %v6465, 4294901760
    %v6467 = vsub.f32 %v6465, %v6466
    %v6468 = vand.u32 %v6467, 4294901760
    %6469 = vmatprep.subr.mxu0 %v6468
    %v6470 = vand.u32 %v5568, 4294901760
    %v6471 = vsub.f32 %v5568, %v6470
    %v6472 = vand.u32 %v6471, 4294901760
    %v6473 = vsub.f32 %v6471, %v6472
    %v6474 = vand.u32 %v6473, 4294901760
    %6475 = vmatpush1.msra.mxu0 %v6474
    %6476 = vmatprep.subr.mxu0 0.0
    %6477 = vmatpush1.msra.mxu0 0.0
    %6478 = vmatprep.subr.mxu0 0.0
    %6479 = vmatpush1.msra.mxu0 0.0
    %6480 = vmatprep.subr.mxu0 0.0
    %6481 = vmatpush1.msra.mxu0 0.0
    %6482 = vmatprep.subr.mxu0 0.0
    %6483 = vmatpush1.msra.mxu0 0.0
    %6484 = vmatprep.subr.mxu0 0.0
    %6485 = vmatpush1.msra.mxu0 0.0
    %6486 = vmatprep.subr.mxu0 0.0
    %6487 = vmatpush1.msra.mxu0 0.0
    %6488 = vmatprep.subr.mxu0 0.0
    %6489 = vmatpush1.msra.mxu0 0.0
    %6490 = vmatprep.subr.mxu0 0.0
    %6491 = vmatpush1.msra.mxu0 0.0
    %6492 = vmatprep.subr.mxu0 0.0
    %6493 = vmatpush1.msra.mxu0 0.0
    %6494 = vmatprep.subr.mxu0 0.0
    %6495 = vmatpush1.msra.mxu0 0.0
    %6496 = vmatprep.subr.mxu0 0.0
    %6497 = vmatpush1.msra.mxu0 0.0
    %6498 = vmatprep.subr.mxu0 0.0
    %6499 = vmatpush1.msra.mxu0 0.0
    %6500 = vmatprep.subr.mxu0 0.0
    %6501 = vmatpush1.msra.mxu0 0.0
    %6502 = vmatprep.subr.mxu0 0.0
    %6503 = vmatpush1.msra.mxu0 0.0
    %6504 = vmatprep.subr.mxu0 0.0
    %6505 = vmatpush1.msra.mxu0 0.0
    %6506 = vmatprep.subr.mxu0 0.0
    %6507 = vmatpush1.msra.mxu0 0.0
    %6508 = vmatprep.subr.mxu0 0.0
    %6509 = vmatpush1.msra.mxu0 0.0
    %6510 = vmatprep.subr.mxu0 0.0
    %6511 = vmatpush1.msra.mxu0 0.0
    %6512 = vmatprep.subr.mxu0 0.0
    %6513 = vmatpush1.msra.mxu0 0.0
    %6514 = vmatprep.subr.mxu0 0.0
    %6515 = vmatpush1.msra.mxu0 0.0
    %6516 = vmatprep.subr.mxu0 0.0
    %6517 = vmatpush1.msra.mxu0 0.0
    %6518 = vmatprep.subr.mxu0 0.0
    %6519 = vmatpush1.msra.mxu0 0.0
    %6520 = vmatprep.subr.mxu0 0.0
    %6521 = vmatpush1.msra.mxu0 0.0
    %6522 = vmatprep.subr.mxu0 0.0
    %6523 = vmatpush1.msra.mxu0 0.0
    %6524 = vmatprep.mubr.f32.mxu0 0.0
    %v6525 = vand.u32 %v6286, 4294901760
    %6526 = vmatmul.mubr.f32.gmra.mrb[0].mxu0 %v6525
    %v6527 = vpop.f32.mrb[0].mxu0
    %v6528 = vadd.f32 %v6376, %v6527
    %v6529 = vpop.f32.mrb[0].mxu0
    %v6530 = vadd.f32 %v6378, %v6529
    %6531 = vdwg.mxu0
    %v6532 = vand.u32 %v5555, 4294901760
    %v6533 = vsub.f32 %v5555, %v6532
    %6534 = vmatprep.subr.mxu0 %v6533
    %v6535 = vand.u32 %v5554, 4294901760
    %v6536 = vsub.f32 %v5554, %v6535
    %6537 = vmatpush1.msra.mxu0 %v6536
    %v6538 = vand.u32 %v5557, 4294901760
    %v6539 = vsub.f32 %v5557, %v6538
    %6540 = vmatprep.subr.mxu0 %v6539
    %v6541 = vand.u32 %v5556, 4294901760
    %v6542 = vsub.f32 %v5556, %v6541
    %6543 = vmatpush1.msra.mxu0 %v6542
    %v6544 = vand.u32 %v5559, 4294901760
    %v6545 = vsub.f32 %v5559, %v6544
    %6546 = vmatprep.subr.mxu0 %v6545
    %v6547 = vand.u32 %v5558, 4294901760
    %v6548 = vsub.f32 %v5558, %v6547
    %6549 = vmatpush1.msra.mxu0 %v6548
    %v6550 = vand.u32 %v5561, 4294901760
    %v6551 = vsub.f32 %v5561, %v6550
    %6552 = vmatprep.subr.mxu0 %v6551
    %v6553 = vand.u32 %v5560, 4294901760
    %v6554 = vsub.f32 %v5560, %v6553
    %6555 = vmatpush1.msra.mxu0 %v6554
    %v6556 = vand.u32 %v5563, 4294901760
    %v6557 = vsub.f32 %v5563, %v6556
    %6558 = vmatprep.subr.mxu0 %v6557
    %v6559 = vand.u32 %v5562, 4294901760
    %v6560 = vsub.f32 %v5562, %v6559
    %6561 = vmatpush1.msra.mxu0 %v6560
    %v6562 = vand.u32 %v5565, 4294901760
    %v6563 = vsub.f32 %v5565, %v6562
    %6564 = vmatprep.subr.mxu0 %v6563
    %v6565 = vand.u32 %v5564, 4294901760
    %v6566 = vsub.f32 %v5564, %v6565
    %6567 = vmatpush1.msra.mxu0 %v6566
    %v6568 = vand.u32 %v5567, 4294901760
    %v6569 = vsub.f32 %v5567, %v6568
    %6570 = vmatprep.subr.mxu0 %v6569
    %v6571 = vand.u32 %v5566, 4294901760
    %v6572 = vsub.f32 %v5566, %v6571
    %6573 = vmatpush1.msra.mxu0 %v6572
    %v6574 = vand.u32 %v5569, 4294901760
    %v6575 = vsub.f32 %v5569, %v6574
    %6576 = vmatprep.subr.mxu0 %v6575
    %v6577 = vand.u32 %v5568, 4294901760
    %v6578 = vsub.f32 %v5568, %v6577
    %6579 = vmatpush1.msra.mxu0 %v6578
    %6580 = vmatprep.subr.mxu0 0.0
    %6581 = vmatpush1.msra.mxu0 0.0
    %6582 = vmatprep.subr.mxu0 0.0
    %6583 = vmatpush1.msra.mxu0 0.0
    %6584 = vmatprep.subr.mxu0 0.0
    %6585 = vmatpush1.msra.mxu0 0.0
    %6586 = vmatprep.subr.mxu0 0.0
    %6587 = vmatpush1.msra.mxu0 0.0
    %6588 = vmatprep.subr.mxu0 0.0
    %6589 = vmatpush1.msra.mxu0 0.0
    %6590 = vmatprep.subr.mxu0 0.0
    %6591 = vmatpush1.msra.mxu0 0.0
    %6592 = vmatprep.subr.mxu0 0.0
    %6593 = vmatpush1.msra.mxu0 0.0
    %6594 = vmatprep.subr.mxu0 0.0
    %6595 = vmatpush1.msra.mxu0 0.0
    %6596 = vmatprep.subr.mxu0 0.0
    %6597 = vmatpush1.msra.mxu0 0.0
    %6598 = vmatprep.subr.mxu0 0.0
    %6599 = vmatpush1.msra.mxu0 0.0
    %6600 = vmatprep.subr.mxu0 0.0
    %6601 = vmatpush1.msra.mxu0 0.0
    %6602 = vmatprep.subr.mxu0 0.0
    %6603 = vmatpush1.msra.mxu0 0.0
    %6604 = vmatprep.subr.mxu0 0.0
    %6605 = vmatpush1.msra.mxu0 0.0
    %6606 = vmatprep.subr.mxu0 0.0
    %6607 = vmatpush1.msra.mxu0 0.0
    %6608 = vmatprep.subr.mxu0 0.0
    %6609 = vmatpush1.msra.mxu0 0.0
    %6610 = vmatprep.subr.mxu0 0.0
    %6611 = vmatpush1.msra.mxu0 0.0
    %6612 = vmatprep.subr.mxu0 0.0
    %6613 = vmatpush1.msra.mxu0 0.0
    %6614 = vmatprep.subr.mxu0 0.0
    %6615 = vmatpush1.msra.mxu0 0.0
    %6616 = vmatprep.subr.mxu0 0.0
    %6617 = vmatpush1.msra.mxu0 0.0
    %6618 = vmatprep.subr.mxu0 0.0
    %6619 = vmatpush1.msra.mxu0 0.0
    %6620 = vmatprep.subr.mxu0 0.0
    %6621 = vmatpush1.msra.mxu0 0.0
    %6622 = vmatprep.subr.mxu0 0.0
    %6623 = vmatpush1.msra.mxu0 0.0
    %6624 = vmatprep.subr.mxu0 0.0
    %6625 = vmatpush1.msra.mxu0 0.0
    %6626 = vmatprep.subr.mxu0 0.0
    %6627 = vmatpush1.msra.mxu0 0.0
    %6628 = vmatprep.mubr.f32.mxu0 0.0
    %v6629 = vand.u32 %v6286, 4294901760
    %v6630 = vsub.f32 %v6286, %v6629
    %6631 = vmatmul.mubr.f32.gmra.mrb[0].mxu0 %v6630
    %v6632 = vpop.f32.mrb[0].mxu0
    %v6633 = vadd.f32 %v6528, %v6632
    %v6634 = vpop.f32.mrb[0].mxu0
    %v6635 = vadd.f32 %v6530, %v6634
    %6636 = vdwg.mxu0
    %v6637 = vand.u32 %v5555, 4294901760
    %6638 = vmatprep.subr.mxu0 %v6637
    %v6639 = vand.u32 %v5554, 4294901760
    %6640 = vmatpush1.msra.mxu0 %v6639
    %v6641 = vand.u32 %v5557, 4294901760
    %6642 = vmatprep.subr.mxu0 %v6641
    %v6643 = vand.u32 %v5556, 4294901760
    %6644 = vmatpush1.msra.mxu0 %v6643
    %v6645 = vand.u32 %v5559, 4294901760
    %6646 = vmatprep.subr.mxu0 %v6645
    %v6647 = vand.u32 %v5558, 4294901760
    %6648 = vmatpush1.msra.mxu0 %v6647
    %v6649 = vand.u32 %v5561, 4294901760
    %6650 = vmatprep.subr.mxu0 %v6649
    %v6651 = vand.u32 %v5560, 4294901760
    %6652 = vmatpush1.msra.mxu0 %v6651
    %v6653 = vand.u32 %v5563, 4294901760
    %6654 = vmatprep.subr.mxu0 %v6653
    %v6655 = vand.u32 %v5562, 4294901760
    %6656 = vmatpush1.msra.mxu0 %v6655
    %v6657 = vand.u32 %v5565, 4294901760
    %6658 = vmatprep.subr.mxu0 %v6657
    %v6659 = vand.u32 %v5564, 4294901760
    %6660 = vmatpush1.msra.mxu0 %v6659
    %v6661 = vand.u32 %v5567, 4294901760
    %6662 = vmatprep.subr.mxu0 %v6661
    %v6663 = vand.u32 %v5566, 4294901760
    %6664 = vmatpush1.msra.mxu0 %v6663
    %v6665 = vand.u32 %v5569, 4294901760
    %6666 = vmatprep.subr.mxu0 %v6665
    %v6667 = vand.u32 %v5568, 4294901760
    %6668 = vmatpush1.msra.mxu0 %v6667
    %6669 = vmatprep.subr.mxu0 0.0
    %6670 = vmatpush1.msra.mxu0 0.0
    %6671 = vmatprep.subr.mxu0 0.0
    %6672 = vmatpush1.msra.mxu0 0.0
    %6673 = vmatprep.subr.mxu0 0.0
    %6674 = vmatpush1.msra.mxu0 0.0
    %6675 = vmatprep.subr.mxu0 0.0
    %6676 = vmatpush1.msra.mxu0 0.0
    %6677 = vmatprep.subr.mxu0 0.0
    %6678 = vmatpush1.msra.mxu0 0.0
    %6679 = vmatprep.subr.mxu0 0.0
    %6680 = vmatpush1.msra.mxu0 0.0
    %6681 = vmatprep.subr.mxu0 0.0
    %6682 = vmatpush1.msra.mxu0 0.0
    %6683 = vmatprep.subr.mxu0 0.0
    %6684 = vmatpush1.msra.mxu0 0.0
    %6685 = vmatprep.subr.mxu0 0.0
    %6686 = vmatpush1.msra.mxu0 0.0
    %6687 = vmatprep.subr.mxu0 0.0
    %6688 = vmatpush1.msra.mxu0 0.0
    %6689 = vmatprep.subr.mxu0 0.0
    %6690 = vmatpush1.msra.mxu0 0.0
    %6691 = vmatprep.subr.mxu0 0.0
    %6692 = vmatpush1.msra.mxu0 0.0
    %6693 = vmatprep.subr.mxu0 0.0
    %6694 = vmatpush1.msra.mxu0 0.0
    %6695 = vmatprep.subr.mxu0 0.0
    %6696 = vmatpush1.msra.mxu0 0.0
    %6697 = vmatprep.subr.mxu0 0.0
    %6698 = vmatpush1.msra.mxu0 0.0
    %6699 = vmatprep.subr.mxu0 0.0
    %6700 = vmatpush1.msra.mxu0 0.0
    %6701 = vmatprep.subr.mxu0 0.0
    %6702 = vmatpush1.msra.mxu0 0.0
    %6703 = vmatprep.subr.mxu0 0.0
    %6704 = vmatpush1.msra.mxu0 0.0
    %6705 = vmatprep.subr.mxu0 0.0
    %6706 = vmatpush1.msra.mxu0 0.0
    %6707 = vmatprep.subr.mxu0 0.0
    %6708 = vmatpush1.msra.mxu0 0.0
    %6709 = vmatprep.subr.mxu0 0.0
    %6710 = vmatpush1.msra.mxu0 0.0
    %6711 = vmatprep.subr.mxu0 0.0
    %6712 = vmatpush1.msra.mxu0 0.0
    %6713 = vmatprep.subr.mxu0 0.0
    %6714 = vmatpush1.msra.mxu0 0.0
    %6715 = vmatprep.subr.mxu0 0.0
    %6716 = vmatpush1.msra.mxu0 0.0
    %6717 = vmatprep.mubr.f32.mxu0 0.0
    %v6718 = vand.u32 %v6286, 4294901760
    %v6719 = vsub.f32 %v6286, %v6718
    %v6720 = vand.u32 %v6719, 4294901760
    %6721 = vmatmul.mubr.f32.gmra.mrb[0].mxu0 %v6720
    %v6722 = vpop.f32.mrb[0].mxu0
    %v6723 = vadd.f32 %v6633, %v6722
    %v6724 = vpop.f32.mrb[0].mxu0
    %v6725 = vadd.f32 %v6635, %v6724
    %6726 = vdwg.mxu0
    %v6727 = vand.u32 %v5555, 4294901760
    %v6728 = vsub.f32 %v5555, %v6727
    %v6729 = vand.u32 %v6728, 4294901760
    %6730 = vmatprep.subr.mxu0 %v6729
    %v6731 = vand.u32 %v5554, 4294901760
    %v6732 = vsub.f32 %v5554, %v6731
    %v6733 = vand.u32 %v6732, 4294901760
    %6734 = vmatpush1.msra.mxu0 %v6733
    %v6735 = vand.u32 %v5557, 4294901760
    %v6736 = vsub.f32 %v5557, %v6735
    %v6737 = vand.u32 %v6736, 4294901760
    %6738 = vmatprep.subr.mxu0 %v6737
    %v6739 = vand.u32 %v5556, 4294901760
    %v6740 = vsub.f32 %v5556, %v6739
    %v6741 = vand.u32 %v6740, 4294901760
    %6742 = vmatpush1.msra.mxu0 %v6741
    %v6743 = vand.u32 %v5559, 4294901760
    %v6744 = vsub.f32 %v5559, %v6743
    %v6745 = vand.u32 %v6744, 4294901760
    %6746 = vmatprep.subr.mxu0 %v6745
    %v6747 = vand.u32 %v5558, 4294901760
    %v6748 = vsub.f32 %v5558, %v6747
    %v6749 = vand.u32 %v6748, 4294901760
    %6750 = vmatpush1.msra.mxu0 %v6749
    %v6751 = vand.u32 %v5561, 4294901760
    %v6752 = vsub.f32 %v5561, %v6751
    %v6753 = vand.u32 %v6752, 4294901760
    %6754 = vmatprep.subr.mxu0 %v6753
    %v6755 = vand.u32 %v5560, 4294901760
    %v6756 = vsub.f32 %v5560, %v6755
    %v6757 = vand.u32 %v6756, 4294901760
    %6758 = vmatpush1.msra.mxu0 %v6757
    %v6759 = vand.u32 %v5563, 4294901760
    %v6760 = vsub.f32 %v5563, %v6759
    %v6761 = vand.u32 %v6760, 4294901760
    %6762 = vmatprep.subr.mxu0 %v6761
    %v6763 = vand.u32 %v5562, 4294901760
    %v6764 = vsub.f32 %v5562, %v6763
    %v6765 = vand.u32 %v6764, 4294901760
    %6766 = vmatpush1.msra.mxu0 %v6765
    %v6767 = vand.u32 %v5565, 4294901760
    %v6768 = vsub.f32 %v5565, %v6767
    %v6769 = vand.u32 %v6768, 4294901760
    %6770 = vmatprep.subr.mxu0 %v6769
    %v6771 = vand.u32 %v5564, 4294901760
    %v6772 = vsub.f32 %v5564, %v6771
    %v6773 = vand.u32 %v6772, 4294901760
    %6774 = vmatpush1.msra.mxu0 %v6773
    %v6775 = vand.u32 %v5567, 4294901760
    %v6776 = vsub.f32 %v5567, %v6775
    %v6777 = vand.u32 %v6776, 4294901760
    %6778 = vmatprep.subr.mxu0 %v6777
    %v6779 = vand.u32 %v5566, 4294901760
    %v6780 = vsub.f32 %v5566, %v6779
    %v6781 = vand.u32 %v6780, 4294901760
    %6782 = vmatpush1.msra.mxu0 %v6781
    %v6783 = vand.u32 %v5569, 4294901760
    %v6784 = vsub.f32 %v5569, %v6783
    %v6785 = vand.u32 %v6784, 4294901760
    %6786 = vmatprep.subr.mxu0 %v6785
    %v6787 = vand.u32 %v5568, 4294901760
    %v6788 = vsub.f32 %v5568, %v6787
    %v6789 = vand.u32 %v6788, 4294901760
    %6790 = vmatpush1.msra.mxu0 %v6789
    %6791 = vmatprep.subr.mxu0 0.0
    %6792 = vmatpush1.msra.mxu0 0.0
    %6793 = vmatprep.subr.mxu0 0.0
    %6794 = vmatpush1.msra.mxu0 0.0
    %6795 = vmatprep.subr.mxu0 0.0
    %6796 = vmatpush1.msra.mxu0 0.0
    %6797 = vmatprep.subr.mxu0 0.0
    %6798 = vmatpush1.msra.mxu0 0.0
    %6799 = vmatprep.subr.mxu0 0.0
    %6800 = vmatpush1.msra.mxu0 0.0
    %6801 = vmatprep.subr.mxu0 0.0
    %6802 = vmatpush1.msra.mxu0 0.0
    %6803 = vmatprep.subr.mxu0 0.0
    %6804 = vmatpush1.msra.mxu0 0.0
    %6805 = vmatprep.subr.mxu0 0.0
    %6806 = vmatpush1.msra.mxu0 0.0
    %6807 = vmatprep.subr.mxu0 0.0
    %6808 = vmatpush1.msra.mxu0 0.0
    %6809 = vmatprep.subr.mxu0 0.0
    %6810 = vmatpush1.msra.mxu0 0.0
    %6811 = vmatprep.subr.mxu0 0.0
    %6812 = vmatpush1.msra.mxu0 0.0
    %6813 = vmatprep.subr.mxu0 0.0
    %6814 = vmatpush1.msra.mxu0 0.0
    %6815 = vmatprep.subr.mxu0 0.0
    %6816 = vmatpush1.msra.mxu0 0.0
    %6817 = vmatprep.subr.mxu0 0.0
    %6818 = vmatpush1.msra.mxu0 0.0
    %6819 = vmatprep.subr.mxu0 0.0
    %6820 = vmatpush1.msra.mxu0 0.0
    %6821 = vmatprep.subr.mxu0 0.0
    %6822 = vmatpush1.msra.mxu0 0.0
    %6823 = vmatprep.subr.mxu0 0.0
    %6824 = vmatpush1.msra.mxu0 0.0
    %6825 = vmatprep.subr.mxu0 0.0
    %6826 = vmatpush1.msra.mxu0 0.0
    %6827 = vmatprep.subr.mxu0 0.0
    %6828 = vmatpush1.msra.mxu0 0.0
    %6829 = vmatprep.subr.mxu0 0.0
    %6830 = vmatpush1.msra.mxu0 0.0
    %6831 = vmatprep.subr.mxu0 0.0
    %6832 = vmatpush1.msra.mxu0 0.0
    %6833 = vmatprep.subr.mxu0 0.0
    %6834 = vmatpush1.msra.mxu0 0.0
    %6835 = vmatprep.subr.mxu0 0.0
    %6836 = vmatpush1.msra.mxu0 0.0
    %6837 = vmatprep.subr.mxu0 0.0
    %6838 = vmatpush1.msra.mxu0 0.0
    %6839 = vmatprep.mubr.f32.mxu0 0.0
    %v6840 = vand.u32 %v6286, 4294901760
    %6841 = vmatmul.mubr.f32.gmra.mrb[0].mxu0 %v6840
    %v6842 = vpop.f32.mrb[0].mxu0
    %v6843 = vadd.f32 %v6723, %v6842
    %v6844 = vpop.f32.mrb[0].mxu0
    %v6845 = vadd.f32 %v6725, %v6844
    %6846 = vdwg.mxu0
    %v6847 = vand.u32 %v5555, 4294901760
    %6848 = vmatprep.subr.mxu0 %v6847
    %v6849 = vand.u32 %v5554, 4294901760
    %6850 = vmatpush1.msra.mxu0 %v6849
    %v6851 = vand.u32 %v5557, 4294901760
    %6852 = vmatprep.subr.mxu0 %v6851
    %v6853 = vand.u32 %v5556, 4294901760
    %6854 = vmatpush1.msra.mxu0 %v6853
    %v6855 = vand.u32 %v5559, 4294901760
    %6856 = vmatprep.subr.mxu0 %v6855
    %v6857 = vand.u32 %v5558, 4294901760
    %6858 = vmatpush1.msra.mxu0 %v6857
    %v6859 = vand.u32 %v5561, 4294901760
    %6860 = vmatprep.subr.mxu0 %v6859
    %v6861 = vand.u32 %v5560, 4294901760
    %6862 = vmatpush1.msra.mxu0 %v6861
    %v6863 = vand.u32 %v5563, 4294901760
    %6864 = vmatprep.subr.mxu0 %v6863
    %v6865 = vand.u32 %v5562, 4294901760
    %6866 = vmatpush1.msra.mxu0 %v6865
    %v6867 = vand.u32 %v5565, 4294901760
    %6868 = vmatprep.subr.mxu0 %v6867
    %v6869 = vand.u32 %v5564, 4294901760
    %6870 = vmatpush1.msra.mxu0 %v6869
    %v6871 = vand.u32 %v5567, 4294901760
    %6872 = vmatprep.subr.mxu0 %v6871
    %v6873 = vand.u32 %v5566, 4294901760
    %6874 = vmatpush1.msra.mxu0 %v6873
    %v6875 = vand.u32 %v5569, 4294901760
    %6876 = vmatprep.subr.mxu0 %v6875
    %v6877 = vand.u32 %v5568, 4294901760
    %6878 = vmatpush1.msra.mxu0 %v6877
    %6879 = vmatprep.subr.mxu0 0.0
    %6880 = vmatpush1.msra.mxu0 0.0
    %6881 = vmatprep.subr.mxu0 0.0
    %6882 = vmatpush1.msra.mxu0 0.0
    %6883 = vmatprep.subr.mxu0 0.0
    %6884 = vmatpush1.msra.mxu0 0.0
    %6885 = vmatprep.subr.mxu0 0.0
    %6886 = vmatpush1.msra.mxu0 0.0
    %6887 = vmatprep.subr.mxu0 0.0
    %6888 = vmatpush1.msra.mxu0 0.0
    %6889 = vmatprep.subr.mxu0 0.0
    %6890 = vmatpush1.msra.mxu0 0.0
    %6891 = vmatprep.subr.mxu0 0.0
    %6892 = vmatpush1.msra.mxu0 0.0
    %6893 = vmatprep.subr.mxu0 0.0
    %6894 = vmatpush1.msra.mxu0 0.0
    %6895 = vmatprep.subr.mxu0 0.0
    %6896 = vmatpush1.msra.mxu0 0.0
    %6897 = vmatprep.subr.mxu0 0.0
    %6898 = vmatpush1.msra.mxu0 0.0
    %6899 = vmatprep.subr.mxu0 0.0
    %6900 = vmatpush1.msra.mxu0 0.0
    %6901 = vmatprep.subr.mxu0 0.0
    %6902 = vmatpush1.msra.mxu0 0.0
    %6903 = vmatprep.subr.mxu0 0.0
    %6904 = vmatpush1.msra.mxu0 0.0
    %6905 = vmatprep.subr.mxu0 0.0
    %6906 = vmatpush1.msra.mxu0 0.0
    %6907 = vmatprep.subr.mxu0 0.0
    %6908 = vmatpush1.msra.mxu0 0.0
    %6909 = vmatprep.subr.mxu0 0.0
    %6910 = vmatpush1.msra.mxu0 0.0
    %6911 = vmatprep.subr.mxu0 0.0
    %6912 = vmatpush1.msra.mxu0 0.0
    %6913 = vmatprep.subr.mxu0 0.0
    %6914 = vmatpush1.msra.mxu0 0.0
    %6915 = vmatprep.subr.mxu0 0.0
    %6916 = vmatpush1.msra.mxu0 0.0
    %6917 = vmatprep.subr.mxu0 0.0
    %6918 = vmatpush1.msra.mxu0 0.0
    %6919 = vmatprep.subr.mxu0 0.0
    %6920 = vmatpush1.msra.mxu0 0.0
    %6921 = vmatprep.subr.mxu0 0.0
    %6922 = vmatpush1.msra.mxu0 0.0
    %6923 = vmatprep.subr.mxu0 0.0
    %6924 = vmatpush1.msra.mxu0 0.0
    %6925 = vmatprep.subr.mxu0 0.0
    %6926 = vmatpush1.msra.mxu0 0.0
    %6927 = vmatprep.mubr.f32.mxu0 0.0
    %v6928 = vand.u32 %v6286, 4294901760
    %6929 = vmatmul.mubr.f32.gmra.mrb[0].mxu0 %v6928
    %v6930 = vpop.f32.mrb[0].mxu0
    %v6931 = vadd.f32 %v6843, %v6930
    %v6932 = vpop.f32.mrb[0].mxu0
    %v6933 = vadd.f32 %v6845, %v6932
    %6934 = vdwg.mxu0
    %v6935 = vadd.f32 %v5545, %v6931
    %v6936 = vxor.u32 %v6935, 2147483648
    %v6937 = vmul.f32 %v6936, 1.442695
    %v6938 = vpow.pop %v6937
    %v6939 = vadd.f32 %v6938, 1.0
    %v6940 = vrcp.pop %v6939
    %v6941 = vmul.f32 1.0, %v6940
    %v6942 = vmul.f32 %v6941, %v6933
    %v6943 = vadd.f32 %v5547, %v6942
    %v6944 = vtanh.pop %v6943
    %v6945 = vsub.f32 1.0, %v6941
    %6947 = vrot.lane.b32.xlu0 %v6944, 64
    %v6948 = vpop.permute.xlu0 %6947
    %v6950 = vmul.f32 %v6945, %v6948
    %6951 = vrot.lane.b32.xlu0 %v6284, 64
    %v6952 = vpop.permute.xlu0 %6951
    %v6954 = vmul.f32 %v6941, %v6952
    %v6955 = vadd.f32 %v6950, %v6954
    %6956 = vset.pattern.permute.xlu0 1
    %6957 = vperm.xlu0 %6956, %v6253
    %v6958 = vpop.permute.xlu0 %6957
    %v6960 = vmul.f32 %v710, %v6958
    %6961 = vset.pattern.permute.xlu0 1
    %6962 = vperm.xlu0 %6961, %v131
    %v6963 = vpop.permute.xlu0 %6962
    %v6965 = vmul.f32 %v6955, %v6963
    %6967 = vrot.lane.b32.xlu0 %v6965, 96
    %v6968 = vpop.permute.xlu0 %6967
    %v6970 = vadd.f32 %v6960, %v6968
    %v6971 = vmul.f32 %v711, %v6958
    %6972 = vrot.lane.b32.xlu0 %v6965, 64
    %v6973 = vpop.permute.xlu0 %6972
    %v6975 = vadd.f32 %v6971, %v6973
    %v6976 = vmul.f32 %v723, %v6970
    %6978 = vrot.lane.b32.xlu0 %v6976, 96
    %v6979 = vpop.permute.xlu0 %6978
    %v6981 = vadd.f32 %v6277, %v6979
    %v6982 = vmul.f32 %v723, %v6975
    %6984 = vrot.lane.b32.xlu0 %v6982, 96
    %v6985 = vpop.permute.xlu0 %6984
    %v6987 = vadd.f32 %v6279, %v6985
    %6989 = vrot.lane.b32.xlu0 %v6275, 32
    %v6990 = vpop.permute.xlu0 %6989
    %6993 = vrot.lane.b32.xlu0 %v6970, 32
    %v6994 = vpop.permute.xlu0 %6993
    %6997 = vrot.lane.b32.xlu0 %v6975, 64
    %v6998 = vpop.permute.xlu0 %6997
    %v7000 = vsel %vm138, %v6270, %v6990
    %v7001 = vsel %vm155, %v7000, %v6994
    %v7002 = vsel %vm874, %v7001, %v6998
    %7003 = vst [vmem:[#allocation4] sm:$0x3] %v7002
    %7005 = vrot.lane.b32.xlu0 %v6987, 32
    %v7006 = vpop.permute.xlu0 %7005
    %v7008 = vsel %vm138, %v6981, %v7006
    %v7009 = vld [vmem:[%s41] sm:$0xff]
    %v7010 = vld [vmem:[%s41 + $0x8] sm:$0xff]
    %v7011 = vld [vmem:[%s41 + $0x10] sm:$0xff]
    %v7012 = vld [vmem:[%s41 + $0x18] sm:$0xff]
    %v7013 = vld [vmem:[%s41 + $0x20] sm:$0xff]
    %v7014 = vld [vmem:[%s41 + $0x28] sm:$0xff]
    %v7015 = vld [vmem:[%s41 + $0x30] sm:$0xff]
    %v7016 = vld [vmem:[%s41 + $0x38] sm:$0xff]
    %v7017 = vld [vmem:[%s41 + $0x40] sm:$0xff]
    %v7018 = vld [vmem:[%s41 + $0x48] sm:$0xff]
    %v7019 = vld [vmem:[%s41 + $0x50] sm:$0xff]
    %v7020 = vld [vmem:[%s41 + $0x58] sm:$0xff]
    %v7021 = vld [vmem:[%s41 + $0x60] sm:$0xff]
    %v7022 = vld [vmem:[%s41 + $0x68] sm:$0xff]
    %v7023 = vld [vmem:[%s41 + $0x70] sm:$0xff]
    %v7024 = vld [vmem:[%s41 + $0x78] sm:$0xff]
    %v7025 = vld [vmem:[%s43] sm:$0x3]
    %v7027 = vlaneseq
    %v7028 = vshrl.u32 %v7027, 7
    %v7029 = vsub.s32 0, %v7028
    %v7030 = vrot.slane %v7025, %v7029
    %v7031 = vlaneseq
    %v7032 = vshrl.u32 %v7031, 7
    %v7033 = vsub.s32 1, %v7032
    %v7034 = vrot.slane %v7025, %v7033
    %v7038 = vsel %vm155, %v7008, 0
    %v7040 = vand.u32 %v7010, 4294901760
    %7041 = vmatprep.subr.mxu0 %v7040
    %v7042 = vand.u32 %v7009, 4294901760
    %7043 = vmatpush1.msra.mxu0 %v7042
    %v7044 = vand.u32 %v7012, 4294901760
    %7045 = vmatprep.subr.mxu0 %v7044
    %v7046 = vand.u32 %v7011, 4294901760
    %7047 = vmatpush1.msra.mxu0 %v7046
    %v7048 = vand.u32 %v7014, 4294901760
    %7049 = vmatprep.subr.mxu0 %v7048
    %v7050 = vand.u32 %v7013, 4294901760
    %7051 = vmatpush1.msra.mxu0 %v7050
    %v7052 = vand.u32 %v7016, 4294901760
    %7053 = vmatprep.subr.mxu0 %v7052
    %v7054 = vand.u32 %v7015, 4294901760
    %7055 = vmatpush1.msra.mxu0 %v7054
    %v7056 = vand.u32 %v7018, 4294901760
    %7057 = vmatprep.subr.mxu0 %v7056
    %v7058 = vand.u32 %v7017, 4294901760
    %7059 = vmatpush1.msra.mxu0 %v7058
    %v7060 = vand.u32 %v7020, 4294901760
    %7061 = vmatprep.subr.mxu0 %v7060
    %v7062 = vand.u32 %v7019, 4294901760
    %7063 = vmatpush1.msra.mxu0 %v7062
    %v7064 = vand.u32 %v7022, 4294901760
    %7065 = vmatprep.subr.mxu0 %v7064
    %v7066 = vand.u32 %v7021, 4294901760
    %7067 = vmatpush1.msra.mxu0 %v7066
    %v7068 = vand.u32 %v7024, 4294901760
    %7069 = vmatprep.subr.mxu0 %v7068
    %v7070 = vand.u32 %v7023, 4294901760
    %7071 = vmatpush1.msra.mxu0 %v7070
    %7072 = vmatprep.subr.mxu0 0.0
    %7073 = vmatpush1.msra.mxu0 0.0
    %7074 = vmatprep.subr.mxu0 0.0
    %7075 = vmatpush1.msra.mxu0 0.0
    %7076 = vmatprep.subr.mxu0 0.0
    %7077 = vmatpush1.msra.mxu0 0.0
    %7078 = vmatprep.subr.mxu0 0.0
    %7079 = vmatpush1.msra.mxu0 0.0
    %7080 = vmatprep.subr.mxu0 0.0
    %7081 = vmatpush1.msra.mxu0 0.0
    %7082 = vmatprep.subr.mxu0 0.0
    %7083 = vmatpush1.msra.mxu0 0.0
    %7084 = vmatprep.subr.mxu0 0.0
    %7085 = vmatpush1.msra.mxu0 0.0
    %7086 = vmatprep.subr.mxu0 0.0
    %7087 = vmatpush1.msra.mxu0 0.0
    %7088 = vmatprep.subr.mxu0 0.0
    %7089 = vmatpush1.msra.mxu0 0.0
    %7090 = vmatprep.subr.mxu0 0.0
    %7091 = vmatpush1.msra.mxu0 0.0
    %7092 = vmatprep.subr.mxu0 0.0
    %7093 = vmatpush1.msra.mxu0 0.0
    %7094 = vmatprep.subr.mxu0 0.0
    %7095 = vmatpush1.msra.mxu0 0.0
    %7096 = vmatprep.subr.mxu0 0.0
    %7097 = vmatpush1.msra.mxu0 0.0
    %7098 = vmatprep.subr.mxu0 0.0
    %7099 = vmatpush1.msra.mxu0 0.0
    %7100 = vmatprep.subr.mxu0 0.0
    %7101 = vmatpush1.msra.mxu0 0.0
    %7102 = vmatprep.subr.mxu0 0.0
    %7103 = vmatpush1.msra.mxu0 0.0
    %7104 = vmatprep.subr.mxu0 0.0
    %7105 = vmatpush1.msra.mxu0 0.0
    %7106 = vmatprep.subr.mxu0 0.0
    %7107 = vmatpush1.msra.mxu0 0.0
    %7108 = vmatprep.subr.mxu0 0.0
    %7109 = vmatpush1.msra.mxu0 0.0
    %7110 = vmatprep.subr.mxu0 0.0
    %7111 = vmatpush1.msra.mxu0 0.0
    %7112 = vmatprep.subr.mxu0 0.0
    %7113 = vmatpush1.msra.mxu0 0.0
    %7114 = vmatprep.subr.mxu0 0.0
    %7115 = vmatpush1.msra.mxu0 0.0
    %7116 = vmatprep.subr.mxu0 0.0
    %7117 = vmatpush1.msra.mxu0 0.0
    %7118 = vmatprep.subr.mxu0 0.0
    %7119 = vmatpush1.msra.mxu0 0.0
    %7120 = vmatprep.mubr.f32.mxu0 0.0
    %v7121 = vand.u32 %v7038, 4294901760
    %v7122 = vsub.f32 %v7038, %v7121
    %v7123 = vand.u32 %v7122, 4294901760
    %v7124 = vsub.f32 %v7122, %v7123
    %v7125 = vand.u32 %v7124, 4294901760
    %7126 = vmatmul.mubr.f32.gmra.mrb[0].mxu0 %v7125
    %v7127 = vpop.f32.mrb[0].mxu0
    %v7128 = vadd.f32 %v7030, %v7127
    %v7129 = vpop.f32.mrb[0].mxu0
    %v7130 = vadd.f32 %v7034, %v7129
    %7131 = vdwg.mxu0
    %v7132 = vand.u32 %v7010, 4294901760
    %v7133 = vsub.f32 %v7010, %v7132
    %v7134 = vand.u32 %v7133, 4294901760
    %v7135 = vsub.f32 %v7133, %v7134
    %v7136 = vand.u32 %v7135, 4294901760
    %7137 = vmatprep.subr.mxu0 %v7136
    %v7138 = vand.u32 %v7009, 4294901760
    %v7139 = vsub.f32 %v7009, %v7138
    %v7140 = vand.u32 %v7139, 4294901760
    %v7141 = vsub.f32 %v7139, %v7140
    %v7142 = vand.u32 %v7141, 4294901760
    %7143 = vmatpush1.msra.mxu0 %v7142
    %v7144 = vand.u32 %v7012, 4294901760
    %v7145 = vsub.f32 %v7012, %v7144
    %v7146 = vand.u32 %v7145, 4294901760
    %v7147 = vsub.f32 %v7145, %v7146
    %v7148 = vand.u32 %v7147, 4294901760
    %7149 = vmatprep.subr.mxu0 %v7148
    %v7150 = vand.u32 %v7011, 4294901760
    %v7151 = vsub.f32 %v7011, %v7150
    %v7152 = vand.u32 %v7151, 4294901760
    %v7153 = vsub.f32 %v7151, %v7152
    %v7154 = vand.u32 %v7153, 4294901760
    %7155 = vmatpush1.msra.mxu0 %v7154
    %v7156 = vand.u32 %v7014, 4294901760
    %v7157 = vsub.f32 %v7014, %v7156
    %v7158 = vand.u32 %v7157, 4294901760
    %v7159 = vsub.f32 %v7157, %v7158
    %v7160 = vand.u32 %v7159, 4294901760
    %7161 = vmatprep.subr.mxu0 %v7160
    %v7162 = vand.u32 %v7013, 4294901760
    %v7163 = vsub.f32 %v7013, %v7162
    %v7164 = vand.u32 %v7163, 4294901760
    %v7165 = vsub.f32 %v7163, %v7164
    %v7166 = vand.u32 %v7165, 4294901760
    %7167 = vmatpush1.msra.mxu0 %v7166
    %v7168 = vand.u32 %v7016, 4294901760
    %v7169 = vsub.f32 %v7016, %v7168
    %v7170 = vand.u32 %v7169, 4294901760
    %v7171 = vsub.f32 %v7169, %v7170
    %v7172 = vand.u32 %v7171, 4294901760
    %7173 = vmatprep.subr.mxu0 %v7172
    %v7174 = vand.u32 %v7015, 4294901760
    %v7175 = vsub.f32 %v7015, %v7174
    %v7176 = vand.u32 %v7175, 4294901760
    %v7177 = vsub.f32 %v7175, %v7176
    %v7178 = vand.u32 %v7177, 4294901760
    %7179 = vmatpush1.msra.mxu0 %v7178
    %v7180 = vand.u32 %v7018, 4294901760
    %v7181 = vsub.f32 %v7018, %v7180
    %v7182 = vand.u32 %v7181, 4294901760
    %v7183 = vsub.f32 %v7181, %v7182
    %v7184 = vand.u32 %v7183, 4294901760
    %7185 = vmatprep.subr.mxu0 %v7184
    %v7186 = vand.u32 %v7017, 4294901760
    %v7187 = vsub.f32 %v7017, %v7186
    %v7188 = vand.u32 %v7187, 4294901760
    %v7189 = vsub.f32 %v7187, %v7188
    %v7190 = vand.u32 %v7189, 4294901760
    %7191 = vmatpush1.msra.mxu0 %v7190
    %v7192 = vand.u32 %v7020, 4294901760
    %v7193 = vsub.f32 %v7020, %v7192
    %v7194 = vand.u32 %v7193, 4294901760
    %v7195 = vsub.f32 %v7193, %v7194
    %v7196 = vand.u32 %v7195, 4294901760
    %7197 = vmatprep.subr.mxu0 %v7196
    %v7198 = vand.u32 %v7019, 4294901760
    %v7199 = vsub.f32 %v7019, %v7198
    %v7200 = vand.u32 %v7199, 4294901760
    %v7201 = vsub.f32 %v7199, %v7200
    %v7202 = vand.u32 %v7201, 4294901760
    %7203 = vmatpush1.msra.mxu0 %v7202
    %v7204 = vand.u32 %v7022, 4294901760
    %v7205 = vsub.f32 %v7022, %v7204
    %v7206 = vand.u32 %v7205, 4294901760
    %v7207 = vsub.f32 %v7205, %v7206
    %v7208 = vand.u32 %v7207, 4294901760
    %7209 = vmatprep.subr.mxu0 %v7208
    %v7210 = vand.u32 %v7021, 4294901760
    %v7211 = vsub.f32 %v7021, %v7210
    %v7212 = vand.u32 %v7211, 4294901760
    %v7213 = vsub.f32 %v7211, %v7212
    %v7214 = vand.u32 %v7213, 4294901760
    %7215 = vmatpush1.msra.mxu0 %v7214
    %v7216 = vand.u32 %v7024, 4294901760
    %v7217 = vsub.f32 %v7024, %v7216
    %v7218 = vand.u32 %v7217, 4294901760
    %v7219 = vsub.f32 %v7217, %v7218
    %v7220 = vand.u32 %v7219, 4294901760
    %7221 = vmatprep.subr.mxu0 %v7220
    %v7222 = vand.u32 %v7023, 4294901760
    %v7223 = vsub.f32 %v7023, %v7222
    %v7224 = vand.u32 %v7223, 4294901760
    %v7225 = vsub.f32 %v7223, %v7224
    %v7226 = vand.u32 %v7225, 4294901760
    %7227 = vmatpush1.msra.mxu0 %v7226
    %7228 = vmatprep.subr.mxu0 0.0
    %7229 = vmatpush1.msra.mxu0 0.0
    %7230 = vmatprep.subr.mxu0 0.0
    %7231 = vmatpush1.msra.mxu0 0.0
    %7232 = vmatprep.subr.mxu0 0.0
    %7233 = vmatpush1.msra.mxu0 0.0
    %7234 = vmatprep.subr.mxu0 0.0
    %7235 = vmatpush1.msra.mxu0 0.0
    %7236 = vmatprep.subr.mxu0 0.0
    %7237 = vmatpush1.msra.mxu0 0.0
    %7238 = vmatprep.subr.mxu0 0.0
    %7239 = vmatpush1.msra.mxu0 0.0
    %7240 = vmatprep.subr.mxu0 0.0
    %7241 = vmatpush1.msra.mxu0 0.0
    %7242 = vmatprep.subr.mxu0 0.0
    %7243 = vmatpush1.msra.mxu0 0.0
    %7244 = vmatprep.subr.mxu0 0.0
    %7245 = vmatpush1.msra.mxu0 0.0
    %7246 = vmatprep.subr.mxu0 0.0
    %7247 = vmatpush1.msra.mxu0 0.0
    %7248 = vmatprep.subr.mxu0 0.0
    %7249 = vmatpush1.msra.mxu0 0.0
    %7250 = vmatprep.subr.mxu0 0.0
    %7251 = vmatpush1.msra.mxu0 0.0
    %7252 = vmatprep.subr.mxu0 0.0
    %7253 = vmatpush1.msra.mxu0 0.0
    %7254 = vmatprep.subr.mxu0 0.0
    %7255 = vmatpush1.msra.mxu0 0.0
    %7256 = vmatprep.subr.mxu0 0.0
    %7257 = vmatpush1.msra.mxu0 0.0
    %7258 = vmatprep.subr.mxu0 0.0
    %7259 = vmatpush1.msra.mxu0 0.0
    %7260 = vmatprep.subr.mxu0 0.0
    %7261 = vmatpush1.msra.mxu0 0.0
    %7262 = vmatprep.subr.mxu0 0.0
    %7263 = vmatpush1.msra.mxu0 0.0
    %7264 = vmatprep.subr.mxu0 0.0
    %7265 = vmatpush1.msra.mxu0 0.0
    %7266 = vmatprep.subr.mxu0 0.0
    %7267 = vmatpush1.msra.mxu0 0.0
    %7268 = vmatprep.subr.mxu0 0.0
    %7269 = vmatpush1.msra.mxu0 0.0
    %7270 = vmatprep.subr.mxu0 0.0
    %7271 = vmatpush1.msra.mxu0 0.0
    %7272 = vmatprep.subr.mxu0 0.0
    %7273 = vmatpush1.msra.mxu0 0.0
    %7274 = vmatprep.subr.mxu0 0.0
    %7275 = vmatpush1.msra.mxu0 0.0
    %7276 = vmatprep.mubr.f32.mxu0 0.0
    %v7277 = vand.u32 %v7038, 4294901760
    %7278 = vmatmul.mubr.f32.gmra.mrb[0].mxu0 %v7277
    %v7279 = vpop.f32.mrb[0].mxu0
    %v7280 = vadd.f32 %v7128, %v7279
    %v7281 = vpop.f32.mrb[0].mxu0
    %v7282 = vadd.f32 %v7130, %v7281
    %7283 = vdwg.mxu0
    %v7284 = vand.u32 %v7010, 4294901760
    %v7285 = vsub.f32 %v7010, %v7284
    %7286 = vmatprep.subr.mxu0 %v7285
    %v7287 = vand.u32 %v7009, 4294901760
    %v7288 = vsub.f32 %v7009, %v7287
    %7289 = vmatpush1.msra.mxu0 %v7288
    %v7290 = vand.u32 %v7012, 4294901760
    %v7291 = vsub.f32 %v7012, %v7290
    %7292 = vmatprep.subr.mxu0 %v7291
    %v7293 = vand.u32 %v7011, 4294901760
    %v7294 = vsub.f32 %v7011, %v7293
    %7295 = vmatpush1.msra.mxu0 %v7294
    %v7296 = vand.u32 %v7014, 4294901760
    %v7297 = vsub.f32 %v7014, %v7296
    %7298 = vmatprep.subr.mxu0 %v7297
    %v7299 = vand.u32 %v7013, 4294901760
    %v7300 = vsub.f32 %v7013, %v7299
    %7301 = vmatpush1.msra.mxu0 %v7300
    %v7302 = vand.u32 %v7016, 4294901760
    %v7303 = vsub.f32 %v7016, %v7302
    %7304 = vmatprep.subr.mxu0 %v7303
    %v7305 = vand.u32 %v7015, 4294901760
    %v7306 = vsub.f32 %v7015, %v7305
    %7307 = vmatpush1.msra.mxu0 %v7306
    %v7308 = vand.u32 %v7018, 4294901760
    %v7309 = vsub.f32 %v7018, %v7308
    %7310 = vmatprep.subr.mxu0 %v7309
    %v7311 = vand.u32 %v7017, 4294901760
    %v7312 = vsub.f32 %v7017, %v7311
    %7313 = vmatpush1.msra.mxu0 %v7312
    %v7314 = vand.u32 %v7020, 4294901760
    %v7315 = vsub.f32 %v7020, %v7314
    %7316 = vmatprep.subr.mxu0 %v7315
    %v7317 = vand.u32 %v7019, 4294901760
    %v7318 = vsub.f32 %v7019, %v7317
    %7319 = vmatpush1.msra.mxu0 %v7318
    %v7320 = vand.u32 %v7022, 4294901760
    %v7321 = vsub.f32 %v7022, %v7320
    %7322 = vmatprep.subr.mxu0 %v7321
    %v7323 = vand.u32 %v7021, 4294901760
    %v7324 = vsub.f32 %v7021, %v7323
    %7325 = vmatpush1.msra.mxu0 %v7324
    %v7326 = vand.u32 %v7024, 4294901760
    %v7327 = vsub.f32 %v7024, %v7326
    %7328 = vmatprep.subr.mxu0 %v7327
    %v7329 = vand.u32 %v7023, 4294901760
    %v7330 = vsub.f32 %v7023, %v7329
    %7331 = vmatpush1.msra.mxu0 %v7330
    %7332 = vmatprep.subr.mxu0 0.0
    %7333 = vmatpush1.msra.mxu0 0.0
    %7334 = vmatprep.subr.mxu0 0.0
    %7335 = vmatpush1.msra.mxu0 0.0
    %7336 = vmatprep.subr.mxu0 0.0
    %7337 = vmatpush1.msra.mxu0 0.0
    %7338 = vmatprep.subr.mxu0 0.0
    %7339 = vmatpush1.msra.mxu0 0.0
    %7340 = vmatprep.subr.mxu0 0.0
    %7341 = vmatpush1.msra.mxu0 0.0
    %7342 = vmatprep.subr.mxu0 0.0
    %7343 = vmatpush1.msra.mxu0 0.0
    %7344 = vmatprep.subr.mxu0 0.0
    %7345 = vmatpush1.msra.mxu0 0.0
    %7346 = vmatprep.subr.mxu0 0.0
    %7347 = vmatpush1.msra.mxu0 0.0
    %7348 = vmatprep.subr.mxu0 0.0
    %7349 = vmatpush1.msra.mxu0 0.0
    %7350 = vmatprep.subr.mxu0 0.0
    %7351 = vmatpush1.msra.mxu0 0.0
    %7352 = vmatprep.subr.mxu0 0.0
    %7353 = vmatpush1.msra.mxu0 0.0
    %7354 = vmatprep.subr.mxu0 0.0
    %7355 = vmatpush1.msra.mxu0 0.0
    %7356 = vmatprep.subr.mxu0 0.0
    %7357 = vmatpush1.msra.mxu0 0.0
    %7358 = vmatprep.subr.mxu0 0.0
    %7359 = vmatpush1.msra.mxu0 0.0
    %7360 = vmatprep.subr.mxu0 0.0
    %7361 = vmatpush1.msra.mxu0 0.0
    %7362 = vmatprep.subr.mxu0 0.0
    %7363 = vmatpush1.msra.mxu0 0.0
    %7364 = vmatprep.subr.mxu0 0.0
    %7365 = vmatpush1.msra.mxu0 0.0
    %7366 = vmatprep.subr.mxu0 0.0
    %7367 = vmatpush1.msra.mxu0 0.0
    %7368 = vmatprep.subr.mxu0 0.0
    %7369 = vmatpush1.msra.mxu0 0.0
    %7370 = vmatprep.subr.mxu0 0.0
    %7371 = vmatpush1.msra.mxu0 0.0
    %7372 = vmatprep.subr.mxu0 0.0
    %7373 = vmatpush1.msra.mxu0 0.0
    %7374 = vmatprep.subr.mxu0 0.0
    %7375 = vmatpush1.msra.mxu0 0.0
    %7376 = vmatprep.subr.mxu0 0.0
    %7377 = vmatpush1.msra.mxu0 0.0
    %7378 = vmatprep.subr.mxu0 0.0
    %7379 = vmatpush1.msra.mxu0 0.0
    %7380 = vmatprep.mubr.f32.mxu0 0.0
    %v7381 = vand.u32 %v7038, 4294901760
    %v7382 = vsub.f32 %v7038, %v7381
    %7383 = vmatmul.mubr.f32.gmra.mrb[0].mxu0 %v7382
    %v7384 = vpop.f32.mrb[0].mxu0
    %v7385 = vadd.f32 %v7280, %v7384
    %v7386 = vpop.f32.mrb[0].mxu0
    %v7387 = vadd.f32 %v7282, %v7386
    %7388 = vdwg.mxu0
    %v7389 = vand.u32 %v7010, 4294901760
    %7390 = vmatprep.subr.mxu0 %v7389
    %v7391 = vand.u32 %v7009, 4294901760
    %7392 = vmatpush1.msra.mxu0 %v7391
    %v7393 = vand.u32 %v7012, 4294901760
    %7394 = vmatprep.subr.mxu0 %v7393
    %v7395 = vand.u32 %v7011, 4294901760
    %7396 = vmatpush1.msra.mxu0 %v7395
    %v7397 = vand.u32 %v7014, 4294901760
    %7398 = vmatprep.subr.mxu0 %v7397
    %v7399 = vand.u32 %v7013, 4294901760
    %7400 = vmatpush1.msra.mxu0 %v7399
    %v7401 = vand.u32 %v7016, 4294901760
    %7402 = vmatprep.subr.mxu0 %v7401
    %v7403 = vand.u32 %v7015, 4294901760
    %7404 = vmatpush1.msra.mxu0 %v7403
    %v7405 = vand.u32 %v7018, 4294901760
    %7406 = vmatprep.subr.mxu0 %v7405
    %v7407 = vand.u32 %v7017, 4294901760
    %7408 = vmatpush1.msra.mxu0 %v7407
    %v7409 = vand.u32 %v7020, 4294901760
    %7410 = vmatprep.subr.mxu0 %v7409
    %v7411 = vand.u32 %v7019, 4294901760
    %7412 = vmatpush1.msra.mxu0 %v7411
    %v7413 = vand.u32 %v7022, 4294901760
    %7414 = vmatprep.subr.mxu0 %v7413
    %v7415 = vand.u32 %v7021, 4294901760
    %7416 = vmatpush1.msra.mxu0 %v7415
    %v7417 = vand.u32 %v7024, 4294901760
    %7418 = vmatprep.subr.mxu0 %v7417
    %v7419 = vand.u32 %v7023, 4294901760
    %7420 = vmatpush1.msra.mxu0 %v7419
    %7421 = vmatprep.subr.mxu0 0.0
    %7422 = vmatpush1.msra.mxu0 0.0
    %7423 = vmatprep.subr.mxu0 0.0
    %7424 = vmatpush1.msra.mxu0 0.0
    %7425 = vmatprep.subr.mxu0 0.0
    %7426 = vmatpush1.msra.mxu0 0.0
    %7427 = vmatprep.subr.mxu0 0.0
    %7428 = vmatpush1.msra.mxu0 0.0
    %7429 = vmatprep.subr.mxu0 0.0
    %7430 = vmatpush1.msra.mxu0 0.0
    %7431 = vmatprep.subr.mxu0 0.0
    %7432 = vmatpush1.msra.mxu0 0.0
    %7433 = vmatprep.subr.mxu0 0.0
    %7434 = vmatpush1.msra.mxu0 0.0
    %7435 = vmatprep.subr.mxu0 0.0
    %7436 = vmatpush1.msra.mxu0 0.0
    %7437 = vmatprep.subr.mxu0 0.0
    %7438 = vmatpush1.msra.mxu0 0.0
    %7439 = vmatprep.subr.mxu0 0.0
    %7440 = vmatpush1.msra.mxu0 0.0
    %7441 = vmatprep.subr.mxu0 0.0
    %7442 = vmatpush1.msra.mxu0 0.0
    %7443 = vmatprep.subr.mxu0 0.0
    %7444 = vmatpush1.msra.mxu0 0.0
    %7445 = vmatprep.subr.mxu0 0.0
    %7446 = vmatpush1.msra.mxu0 0.0
    %7447 = vmatprep.subr.mxu0 0.0
    %7448 = vmatpush1.msra.mxu0 0.0
    %7449 = vmatprep.subr.mxu0 0.0
    %7450 = vmatpush1.msra.mxu0 0.0
    %7451 = vmatprep.subr.mxu0 0.0
    %7452 = vmatpush1.msra.mxu0 0.0
    %7453 = vmatprep.subr.mxu0 0.0
    %7454 = vmatpush1.msra.mxu0 0.0
    %7455 = vmatprep.subr.mxu0 0.0
    %7456 = vmatpush1.msra.mxu0 0.0
    %7457 = vmatprep.subr.mxu0 0.0
    %7458 = vmatpush1.msra.mxu0 0.0
    %7459 = vmatprep.subr.mxu0 0.0
    %7460 = vmatpush1.msra.mxu0 0.0
    %7461 = vmatprep.subr.mxu0 0.0
    %7462 = vmatpush1.msra.mxu0 0.0
    %7463 = vmatprep.subr.mxu0 0.0
    %7464 = vmatpush1.msra.mxu0 0.0
    %7465 = vmatprep.subr.mxu0 0.0
    %7466 = vmatpush1.msra.mxu0 0.0
    %7467 = vmatprep.subr.mxu0 0.0
    %7468 = vmatpush1.msra.mxu0 0.0
    %7469 = vmatprep.mubr.f32.mxu0 0.0
    %v7470 = vand.u32 %v7038, 4294901760
    %v7471 = vsub.f32 %v7038, %v7470
    %v7472 = vand.u32 %v7471, 4294901760
    %7473 = vmatmul.mubr.f32.gmra.mrb[0].mxu0 %v7472
    %v7474 = vpop.f32.mrb[0].mxu0
    %v7475 = vadd.f32 %v7385, %v7474
    %v7476 = vpop.f32.mrb[0].mxu0
    %v7477 = vadd.f32 %v7387, %v7476
    %7478 = vdwg.mxu0
    %v7479 = vand.u32 %v7010, 4294901760
    %v7480 = vsub.f32 %v7010, %v7479
    %v7481 = vand.u32 %v7480, 4294901760
    %7482 = vmatprep.subr.mxu0 %v7481
    %v7483 = vand.u32 %v7009, 4294901760
    %v7484 = vsub.f32 %v7009, %v7483
    %v7485 = vand.u32 %v7484, 4294901760
    %7486 = vmatpush1.msra.mxu0 %v7485
    %v7487 = vand.u32 %v7012, 4294901760
    %v7488 = vsub.f32 %v7012, %v7487
    %v7489 = vand.u32 %v7488, 4294901760
    %7490 = vmatprep.subr.mxu0 %v7489
    %v7491 = vand.u32 %v7011, 4294901760
    %v7492 = vsub.f32 %v7011, %v7491
    %v7493 = vand.u32 %v7492, 4294901760
    %7494 = vmatpush1.msra.mxu0 %v7493
    %v7495 = vand.u32 %v7014, 4294901760
    %v7496 = vsub.f32 %v7014, %v7495
    %v7497 = vand.u32 %v7496, 4294901760
    %7498 = vmatprep.subr.mxu0 %v7497
    %v7499 = vand.u32 %v7013, 4294901760
    %v7500 = vsub.f32 %v7013, %v7499
    %v7501 = vand.u32 %v7500, 4294901760
    %7502 = vmatpush1.msra.mxu0 %v7501
    %v7503 = vand.u32 %v7016, 4294901760
    %v7504 = vsub.f32 %v7016, %v7503
    %v7505 = vand.u32 %v7504, 4294901760
    %7506 = vmatprep.subr.mxu0 %v7505
    %v7507 = vand.u32 %v7015, 4294901760
    %v7508 = vsub.f32 %v7015, %v7507
    %v7509 = vand.u32 %v7508, 4294901760
    %7510 = vmatpush1.msra.mxu0 %v7509
    %v7511 = vand.u32 %v7018, 4294901760
    %v7512 = vsub.f32 %v7018, %v7511
    %v7513 = vand.u32 %v7512, 4294901760
    %7514 = vmatprep.subr.mxu0 %v7513
    %v7515 = vand.u32 %v7017, 4294901760
    %v7516 = vsub.f32 %v7017, %v7515
    %v7517 = vand.u32 %v7516, 4294901760
    %7518 = vmatpush1.msra.mxu0 %v7517
    %v7519 = vand.u32 %v7020, 4294901760
    %v7520 = vsub.f32 %v7020, %v7519
    %v7521 = vand.u32 %v7520, 4294901760
    %7522 = vmatprep.subr.mxu0 %v7521
    %v7523 = vand.u32 %v7019, 4294901760
    %v7524 = vsub.f32 %v7019, %v7523
    %v7525 = vand.u32 %v7524, 4294901760
    %7526 = vmatpush1.msra.mxu0 %v7525
    %v7527 = vand.u32 %v7022, 4294901760
    %v7528 = vsub.f32 %v7022, %v7527
    %v7529 = vand.u32 %v7528, 4294901760
    %7530 = vmatprep.subr.mxu0 %v7529
    %v7531 = vand.u32 %v7021, 4294901760
    %v7532 = vsub.f32 %v7021, %v7531
    %v7533 = vand.u32 %v7532, 4294901760
    %7534 = vmatpush1.msra.mxu0 %v7533
    %v7535 = vand.u32 %v7024, 4294901760
    %v7536 = vsub.f32 %v7024, %v7535
    %v7537 = vand.u32 %v7536, 4294901760
    %7538 = vmatprep.subr.mxu0 %v7537
    %v7539 = vand.u32 %v7023, 4294901760
    %v7540 = vsub.f32 %v7023, %v7539
    %v7541 = vand.u32 %v7540, 4294901760
    %7542 = vmatpush1.msra.mxu0 %v7541
    %7543 = vmatprep.subr.mxu0 0.0
    %7544 = vmatpush1.msra.mxu0 0.0
    %7545 = vmatprep.subr.mxu0 0.0
    %7546 = vmatpush1.msra.mxu0 0.0
    %7547 = vmatprep.subr.mxu0 0.0
    %7548 = vmatpush1.msra.mxu0 0.0
    %7549 = vmatprep.subr.mxu0 0.0
    %7550 = vmatpush1.msra.mxu0 0.0
    %7551 = vmatprep.subr.mxu0 0.0
    %7552 = vmatpush1.msra.mxu0 0.0
    %7553 = vmatprep.subr.mxu0 0.0
    %7554 = vmatpush1.msra.mxu0 0.0
    %7555 = vmatprep.subr.mxu0 0.0
    %7556 = vmatpush1.msra.mxu0 0.0
    %7557 = vmatprep.subr.mxu0 0.0
    %7558 = vmatpush1.msra.mxu0 0.0
    %7559 = vmatprep.subr.mxu0 0.0
    %7560 = vmatpush1.msra.mxu0 0.0
    %7561 = vmatprep.subr.mxu0 0.0
    %7562 = vmatpush1.msra.mxu0 0.0
    %7563 = vmatprep.subr.mxu0 0.0
    %7564 = vmatpush1.msra.mxu0 0.0
    %7565 = vmatprep.subr.mxu0 0.0
    %7566 = vmatpush1.msra.mxu0 0.0
    %7567 = vmatprep.subr.mxu0 0.0
    %7568 = vmatpush1.msra.mxu0 0.0
    %7569 = vmatprep.subr.mxu0 0.0
    %7570 = vmatpush1.msra.mxu0 0.0
    %7571 = vmatprep.subr.mxu0 0.0
    %7572 = vmatpush1.msra.mxu0 0.0
    %7573 = vmatprep.subr.mxu0 0.0
    %7574 = vmatpush1.msra.mxu0 0.0
    %7575 = vmatprep.subr.mxu0 0.0
    %7576 = vmatpush1.msra.mxu0 0.0
    %7577 = vmatprep.subr.mxu0 0.0
    %7578 = vmatpush1.msra.mxu0 0.0
    %7579 = vmatprep.subr.mxu0 0.0
    %7580 = vmatpush1.msra.mxu0 0.0
    %7581 = vmatprep.subr.mxu0 0.0
    %7582 = vmatpush1.msra.mxu0 0.0
    %7583 = vmatprep.subr.mxu0 0.0
    %7584 = vmatpush1.msra.mxu0 0.0
    %7585 = vmatprep.subr.mxu0 0.0
    %7586 = vmatpush1.msra.mxu0 0.0
    %7587 = vmatprep.subr.mxu0 0.0
    %7588 = vmatpush1.msra.mxu0 0.0
    %7589 = vmatprep.subr.mxu0 0.0
    %7590 = vmatpush1.msra.mxu0 0.0
    %7591 = vmatprep.mubr.f32.mxu0 0.0
    %v7592 = vand.u32 %v7038, 4294901760
    %7593 = vmatmul.mubr.f32.gmra.mrb[0].mxu0 %v7592
    %v7594 = vpop.f32.mrb[0].mxu0
    %v7595 = vadd.f32 %v7475, %v7594
    %v7596 = vpop.f32.mrb[0].mxu0
    %v7597 = vadd.f32 %v7477, %v7596
    %7598 = vdwg.mxu0
    %v7599 = vand.u32 %v7010, 4294901760
    %7600 = vmatprep.subr.mxu0 %v7599
    %v7601 = vand.u32 %v7009, 4294901760
    %7602 = vmatpush1.msra.mxu0 %v7601
    %v7603 = vand.u32 %v7012, 4294901760
    %7604 = vmatprep.subr.mxu0 %v7603
    %v7605 = vand.u32 %v7011, 4294901760
    %7606 = vmatpush1.msra.mxu0 %v7605
    %v7607 = vand.u32 %v7014, 4294901760
    %7608 = vmatprep.subr.mxu0 %v7607
    %v7609 = vand.u32 %v7013, 4294901760
    %7610 = vmatpush1.msra.mxu0 %v7609
    %v7611 = vand.u32 %v7016, 4294901760
    %7612 = vmatprep.subr.mxu0 %v7611
    %v7613 = vand.u32 %v7015, 4294901760
    %7614 = vmatpush1.msra.mxu0 %v7613
    %v7615 = vand.u32 %v7018, 4294901760
    %7616 = vmatprep.subr.mxu0 %v7615
    %v7617 = vand.u32 %v7017, 4294901760
    %7618 = vmatpush1.msra.mxu0 %v7617
    %v7619 = vand.u32 %v7020, 4294901760
    %7620 = vmatprep.subr.mxu0 %v7619
    %v7621 = vand.u32 %v7019, 4294901760
    %7622 = vmatpush1.msra.mxu0 %v7621
    %v7623 = vand.u32 %v7022, 4294901760
    %7624 = vmatprep.subr.mxu0 %v7623
    %v7625 = vand.u32 %v7021, 4294901760
    %7626 = vmatpush1.msra.mxu0 %v7625
    %v7627 = vand.u32 %v7024, 4294901760
    %7628 = vmatprep.subr.mxu0 %v7627
    %v7629 = vand.u32 %v7023, 4294901760
    %7630 = vmatpush1.msra.mxu0 %v7629
    %7631 = vmatprep.subr.mxu0 0.0
    %7632 = vmatpush1.msra.mxu0 0.0
    %7633 = vmatprep.subr.mxu0 0.0
    %7634 = vmatpush1.msra.mxu0 0.0
    %7635 = vmatprep.subr.mxu0 0.0
    %7636 = vmatpush1.msra.mxu0 0.0
    %7637 = vmatprep.subr.mxu0 0.0
    %7638 = vmatpush1.msra.mxu0 0.0
    %7639 = vmatprep.subr.mxu0 0.0
    %7640 = vmatpush1.msra.mxu0 0.0
    %7641 = vmatprep.subr.mxu0 0.0
    %7642 = vmatpush1.msra.mxu0 0.0
    %7643 = vmatprep.subr.mxu0 0.0
    %7644 = vmatpush1.msra.mxu0 0.0
    %7645 = vmatprep.subr.mxu0 0.0
    %7646 = vmatpush1.msra.mxu0 0.0
    %7647 = vmatprep.subr.mxu0 0.0
    %7648 = vmatpush1.msra.mxu0 0.0
    %7649 = vmatprep.subr.mxu0 0.0
    %7650 = vmatpush1.msra.mxu0 0.0
    %7651 = vmatprep.subr.mxu0 0.0
    %7652 = vmatpush1.msra.mxu0 0.0
    %7653 = vmatprep.subr.mxu0 0.0
    %7654 = vmatpush1.msra.mxu0 0.0
    %7655 = vmatprep.subr.mxu0 0.0
    %7656 = vmatpush1.msra.mxu0 0.0
    %7657 = vmatprep.subr.mxu0 0.0
    %7658 = vmatpush1.msra.mxu0 0.0
    %7659 = vmatprep.subr.mxu0 0.0
    %7660 = vmatpush1.msra.mxu0 0.0
    %7661 = vmatprep.subr.mxu0 0.0
    %7662 = vmatpush1.msra.mxu0 0.0
    %7663 = vmatprep.subr.mxu0 0.0
    %7664 = vmatpush1.msra.mxu0 0.0
    %7665 = vmatprep.subr.mxu0 0.0
    %7666 = vmatpush1.msra.mxu0 0.0
    %7667 = vmatprep.subr.mxu0 0.0
    %7668 = vmatpush1.msra.mxu0 0.0
    %7669 = vmatprep.subr.mxu0 0.0
    %7670 = vmatpush1.msra.mxu0 0.0
    %7671 = vmatprep.subr.mxu0 0.0
    %7672 = vmatpush1.msra.mxu0 0.0
    %7673 = vmatprep.subr.mxu0 0.0
    %7674 = vmatpush1.msra.mxu0 0.0
    %7675 = vmatprep.subr.mxu0 0.0
    %7676 = vmatpush1.msra.mxu0 0.0
    %7677 = vmatprep.subr.mxu0 0.0
    %7678 = vmatpush1.msra.mxu0 0.0
    %7679 = vmatprep.mubr.f32.mxu0 0.0
    %v7680 = vand.u32 %v7038, 4294901760
    %7681 = vmatmul.mubr.f32.gmra.mrb[0].mxu0 %v7680
    %v7682 = vpop.f32.mrb[0].mxu0
    %v7683 = vadd.f32 %v7595, %v7682
    %v7684 = vpop.f32.mrb[0].mxu0
    %v7685 = vadd.f32 %v7597, %v7684
    %7686 = vdwg.mxu0
    %v7687 = vld [vmem:[%s17] sm:$0x3]
    %v7688 = vld [vmem:[%s19] sm:$0x3]
    %7690 = vrot.lane.b32.xlu0 %v7688, 32
    %v7691 = vpop.permute.xlu0 %7690
    %v7693 = vsel %vm138, %v7687, %v7691
    %v7694 = vld [vmem:[%s45] sm:$0xff]
    %v7695 = vld [vmem:[%s45 + $0x8] sm:$0xff]
    %v7696 = vld [vmem:[%s45 + $0x10] sm:$0xff]
    %v7697 = vld [vmem:[%s45 + $0x18] sm:$0xff]
    %v7698 = vld [vmem:[%s45 + $0x20] sm:$0xff]
    %v7699 = vld [vmem:[%s45 + $0x28] sm:$0xff]
    %v7700 = vld [vmem:[%s45 + $0x30] sm:$0xff]
    %v7701 = vld [vmem:[%s45 + $0x38] sm:$0xff]
    %v7702 = vld [vmem:[%s45 + $0x40] sm:$0xff]
    %v7703 = vld [vmem:[%s45 + $0x48] sm:$0xff]
    %v7704 = vld [vmem:[%s45 + $0x50] sm:$0xff]
    %v7705 = vld [vmem:[%s45 + $0x58] sm:$0xff]
    %v7706 = vld [vmem:[%s45 + $0x60] sm:$0xff]
    %v7707 = vld [vmem:[%s45 + $0x68] sm:$0xff]
    %v7708 = vld [vmem:[%s45 + $0x70] sm:$0xff]
    %v7709 = vld [vmem:[%s45 + $0x78] sm:$0xff]
    %v7710 = vld [vmem:[%s47] sm:$0x3]
    %v7712 = vlaneseq
    %v7713 = vshrl.u32 %v7712, 7
    %v7714 = vsub.s32 0, %v7713
    %v7715 = vrot.slane %v7710, %v7714
    %v7716 = vlaneseq
    %v7717 = vshrl.u32 %v7716, 7
    %v7718 = vsub.s32 1, %v7717
    %v7719 = vrot.slane %v7710, %v7718
    %v7723 = vsel %vm155, %v7693, 0
    %v7725 = vand.u32 %v7695, 4294901760
    %7726 = vmatprep.subr.mxu0 %v7725
    %v7727 = vand.u32 %v7694, 4294901760
    %7728 = vmatpush1.msra.mxu0 %v7727
    %v7729 = vand.u32 %v7697, 4294901760
    %7730 = vmatprep.subr.mxu0 %v7729
    %v7731 = vand.u32 %v7696, 4294901760
    %7732 = vmatpush1.msra.mxu0 %v7731
    %v7733 = vand.u32 %v7699, 4294901760
    %7734 = vmatprep.subr.mxu0 %v7733
    %v7735 = vand.u32 %v7698, 4294901760
    %7736 = vmatpush1.msra.mxu0 %v7735
    %v7737 = vand.u32 %v7701, 4294901760
    %7738 = vmatprep.subr.mxu0 %v7737
    %v7739 = vand.u32 %v7700, 4294901760
    %7740 = vmatpush1.msra.mxu0 %v7739
    %v7741 = vand.u32 %v7703, 4294901760
    %7742 = vmatprep.subr.mxu0 %v7741
    %v7743 = vand.u32 %v7702, 4294901760
    %7744 = vmatpush1.msra.mxu0 %v7743
    %v7745 = vand.u32 %v7705, 4294901760
    %7746 = vmatprep.subr.mxu0 %v7745
    %v7747 = vand.u32 %v7704, 4294901760
    %7748 = vmatpush1.msra.mxu0 %v7747
    %v7749 = vand.u32 %v7707, 4294901760
    %7750 = vmatprep.subr.mxu0 %v7749
    %v7751 = vand.u32 %v7706, 4294901760
    %7752 = vmatpush1.msra.mxu0 %v7751
    %v7753 = vand.u32 %v7709, 4294901760
    %7754 = vmatprep.subr.mxu0 %v7753
    %v7755 = vand.u32 %v7708, 4294901760
    %7756 = vmatpush1.msra.mxu0 %v7755
    %7757 = vmatprep.subr.mxu0 0.0
    %7758 = vmatpush1.msra.mxu0 0.0
    %7759 = vmatprep.subr.mxu0 0.0
    %7760 = vmatpush1.msra.mxu0 0.0
    %7761 = vmatprep.subr.mxu0 0.0
    %7762 = vmatpush1.msra.mxu0 0.0
    %7763 = vmatprep.subr.mxu0 0.0
    %7764 = vmatpush1.msra.mxu0 0.0
    %7765 = vmatprep.subr.mxu0 0.0
    %7766 = vmatpush1.msra.mxu0 0.0
    %7767 = vmatprep.subr.mxu0 0.0
    %7768 = vmatpush1.msra.mxu0 0.0
    %7769 = vmatprep.subr.mxu0 0.0
    %7770 = vmatpush1.msra.mxu0 0.0
    %7771 = vmatprep.subr.mxu0 0.0
    %7772 = vmatpush1.msra.mxu0 0.0
    %7773 = vmatprep.subr.mxu0 0.0
    %7774 = vmatpush1.msra.mxu0 0.0
    %7775 = vmatprep.subr.mxu0 0.0
    %7776 = vmatpush1.msra.mxu0 0.0
    %7777 = vmatprep.subr.mxu0 0.0
    %7778 = vmatpush1.msra.mxu0 0.0
    %7779 = vmatprep.subr.mxu0 0.0
    %7780 = vmatpush1.msra.mxu0 0.0
    %7781 = vmatprep.subr.mxu0 0.0
    %7782 = vmatpush1.msra.mxu0 0.0
    %7783 = vmatprep.subr.mxu0 0.0
    %7784 = vmatpush1.msra.mxu0 0.0
    %7785 = vmatprep.subr.mxu0 0.0
    %7786 = vmatpush1.msra.mxu0 0.0
    %7787 = vmatprep.subr.mxu0 0.0
    %7788 = vmatpush1.msra.mxu0 0.0
    %7789 = vmatprep.subr.mxu0 0.0
    %7790 = vmatpush1.msra.mxu0 0.0
    %7791 = vmatprep.subr.mxu0 0.0
    %7792 = vmatpush1.msra.mxu0 0.0
    %7793 = vmatprep.subr.mxu0 0.0
    %7794 = vmatpush1.msra.mxu0 0.0
    %7795 = vmatprep.subr.mxu0 0.0
    %7796 = vmatpush1.msra.mxu0 0.0
    %7797 = vmatprep.subr.mxu0 0.0
    %7798 = vmatpush1.msra.mxu0 0.0
    %7799 = vmatprep.subr.mxu0 0.0
    %7800 = vmatpush1.msra.mxu0 0.0
    %7801 = vmatprep.subr.mxu0 0.0
    %7802 = vmatpush1.msra.mxu0 0.0
    %7803 = vmatprep.subr.mxu0 0.0
    %7804 = vmatpush1.msra.mxu0 0.0
    %7805 = vmatprep.mubr.f32.mxu0 0.0
    %v7806 = vand.u32 %v7723, 4294901760
    %v7807 = vsub.f32 %v7723, %v7806
    %v7808 = vand.u32 %v7807, 4294901760
    %v7809 = vsub.f32 %v7807, %v7808
    %v7810 = vand.u32 %v7809, 4294901760
    %7811 = vmatmul.mubr.f32.gmra.mrb[0].mxu0 %v7810
    %v7812 = vpop.f32.mrb[0].mxu0
    %v7813 = vadd.f32 %v7715, %v7812
    %v7814 = vpop.f32.mrb[0].mxu0
    %v7815 = vadd.f32 %v7719, %v7814
    %7816 = vdwg.mxu0
    %v7817 = vand.u32 %v7695, 4294901760
    %v7818 = vsub.f32 %v7695, %v7817
    %v7819 = vand.u32 %v7818, 4294901760
    %v7820 = vsub.f32 %v7818, %v7819
    %v7821 = vand.u32 %v7820, 4294901760
    %7822 = vmatprep.subr.mxu0 %v7821
    %v7823 = vand.u32 %v7694, 4294901760
    %v7824 = vsub.f32 %v7694, %v7823
    %v7825 = vand.u32 %v7824, 4294901760
    %v7826 = vsub.f32 %v7824, %v7825
    %v7827 = vand.u32 %v7826, 4294901760
    %7828 = vmatpush1.msra.mxu0 %v7827
    %v7829 = vand.u32 %v7697, 4294901760
    %v7830 = vsub.f32 %v7697, %v7829
    %v7831 = vand.u32 %v7830, 4294901760
    %v7832 = vsub.f32 %v7830, %v7831
    %v7833 = vand.u32 %v7832, 4294901760
    %7834 = vmatprep.subr.mxu0 %v7833
    %v7835 = vand.u32 %v7696, 4294901760
    %v7836 = vsub.f32 %v7696, %v7835
    %v7837 = vand.u32 %v7836, 4294901760
    %v7838 = vsub.f32 %v7836, %v7837
    %v7839 = vand.u32 %v7838, 4294901760
    %7840 = vmatpush1.msra.mxu0 %v7839
    %v7841 = vand.u32 %v7699, 4294901760
    %v7842 = vsub.f32 %v7699, %v7841
    %v7843 = vand.u32 %v7842, 4294901760
    %v7844 = vsub.f32 %v7842, %v7843
    %v7845 = vand.u32 %v7844, 4294901760
    %7846 = vmatprep.subr.mxu0 %v7845
    %v7847 = vand.u32 %v7698, 4294901760
    %v7848 = vsub.f32 %v7698, %v7847
    %v7849 = vand.u32 %v7848, 4294901760
    %v7850 = vsub.f32 %v7848, %v7849
    %v7851 = vand.u32 %v7850, 4294901760
    %7852 = vmatpush1.msra.mxu0 %v7851
    %v7853 = vand.u32 %v7701, 4294901760
    %v7854 = vsub.f32 %v7701, %v7853
    %v7855 = vand.u32 %v7854, 4294901760
    %v7856 = vsub.f32 %v7854, %v7855
    %v7857 = vand.u32 %v7856, 4294901760
    %7858 = vmatprep.subr.mxu0 %v7857
    %v7859 = vand.u32 %v7700, 4294901760
    %v7860 = vsub.f32 %v7700, %v7859
    %v7861 = vand.u32 %v7860, 4294901760
    %v7862 = vsub.f32 %v7860, %v7861
    %v7863 = vand.u32 %v7862, 4294901760
    %7864 = vmatpush1.msra.mxu0 %v7863
    %v7865 = vand.u32 %v7703, 4294901760
    %v7866 = vsub.f32 %v7703, %v7865
    %v7867 = vand.u32 %v7866, 4294901760
    %v7868 = vsub.f32 %v7866, %v7867
    %v7869 = vand.u32 %v7868, 4294901760
    %7870 = vmatprep.subr.mxu0 %v7869
    %v7871 = vand.u32 %v7702, 4294901760
    %v7872 = vsub.f32 %v7702, %v7871
    %v7873 = vand.u32 %v7872, 4294901760
    %v7874 = vsub.f32 %v7872, %v7873
    %v7875 = vand.u32 %v7874, 4294901760
    %7876 = vmatpush1.msra.mxu0 %v7875
    %v7877 = vand.u32 %v7705, 4294901760
    %v7878 = vsub.f32 %v7705, %v7877
    %v7879 = vand.u32 %v7878, 4294901760
    %v7880 = vsub.f32 %v7878, %v7879
    %v7881 = vand.u32 %v7880, 4294901760
    %7882 = vmatprep.subr.mxu0 %v7881
    %v7883 = vand.u32 %v7704, 4294901760
    %v7884 = vsub.f32 %v7704, %v7883
    %v7885 = vand.u32 %v7884, 4294901760
    %v7886 = vsub.f32 %v7884, %v7885
    %v7887 = vand.u32 %v7886, 4294901760
    %7888 = vmatpush1.msra.mxu0 %v7887
    %v7889 = vand.u32 %v7707, 4294901760
    %v7890 = vsub.f32 %v7707, %v7889
    %v7891 = vand.u32 %v7890, 4294901760
    %v7892 = vsub.f32 %v7890, %v7891
    %v7893 = vand.u32 %v7892, 4294901760
    %7894 = vmatprep.subr.mxu0 %v7893
    %v7895 = vand.u32 %v7706, 4294901760
    %v7896 = vsub.f32 %v7706, %v7895
    %v7897 = vand.u32 %v7896, 4294901760
    %v7898 = vsub.f32 %v7896, %v7897
    %v7899 = vand.u32 %v7898, 4294901760
    %7900 = vmatpush1.msra.mxu0 %v7899
    %v7901 = vand.u32 %v7709, 4294901760
    %v7902 = vsub.f32 %v7709, %v7901
    %v7903 = vand.u32 %v7902, 4294901760
    %v7904 = vsub.f32 %v7902, %v7903
    %v7905 = vand.u32 %v7904, 4294901760
    %7906 = vmatprep.subr.mxu0 %v7905
    %v7907 = vand.u32 %v7708, 4294901760
    %v7908 = vsub.f32 %v7708, %v7907
    %v7909 = vand.u32 %v7908, 4294901760
    %v7910 = vsub.f32 %v7908, %v7909
    %v7911 = vand.u32 %v7910, 4294901760
    %7912 = vmatpush1.msra.mxu0 %v7911
    %7913 = vmatprep.subr.mxu0 0.0
    %7914 = vmatpush1.msra.mxu0 0.0
    %7915 = vmatprep.subr.mxu0 0.0
    %7916 = vmatpush1.msra.mxu0 0.0
    %7917 = vmatprep.subr.mxu0 0.0
    %7918 = vmatpush1.msra.mxu0 0.0
    %7919 = vmatprep.subr.mxu0 0.0
    %7920 = vmatpush1.msra.mxu0 0.0
    %7921 = vmatprep.subr.mxu0 0.0
    %7922 = vmatpush1.msra.mxu0 0.0
    %7923 = vmatprep.subr.mxu0 0.0
    %7924 = vmatpush1.msra.mxu0 0.0
    %7925 = vmatprep.subr.mxu0 0.0
    %7926 = vmatpush1.msra.mxu0 0.0
    %7927 = vmatprep.subr.mxu0 0.0
    %7928 = vmatpush1.msra.mxu0 0.0
    %7929 = vmatprep.subr.mxu0 0.0
    %7930 = vmatpush1.msra.mxu0 0.0
    %7931 = vmatprep.subr.mxu0 0.0
    %7932 = vmatpush1.msra.mxu0 0.0
    %7933 = vmatprep.subr.mxu0 0.0
    %7934 = vmatpush1.msra.mxu0 0.0
    %7935 = vmatprep.subr.mxu0 0.0
    %7936 = vmatpush1.msra.mxu0 0.0
    %7937 = vmatprep.subr.mxu0 0.0
    %7938 = vmatpush1.msra.mxu0 0.0
    %7939 = vmatprep.subr.mxu0 0.0
    %7940 = vmatpush1.msra.mxu0 0.0
    %7941 = vmatprep.subr.mxu0 0.0
    %7942 = vmatpush1.msra.mxu0 0.0
    %7943 = vmatprep.subr.mxu0 0.0
    %7944 = vmatpush1.msra.mxu0 0.0
    %7945 = vmatprep.subr.mxu0 0.0
    %7946 = vmatpush1.msra.mxu0 0.0
    %7947 = vmatprep.subr.mxu0 0.0
    %7948 = vmatpush1.msra.mxu0 0.0
    %7949 = vmatprep.subr.mxu0 0.0
    %7950 = vmatpush1.msra.mxu0 0.0
    %7951 = vmatprep.subr.mxu0 0.0
    %7952 = vmatpush1.msra.mxu0 0.0
    %7953 = vmatprep.subr.mxu0 0.0
    %7954 = vmatpush1.msra.mxu0 0.0
    %7955 = vmatprep.subr.mxu0 0.0
    %7956 = vmatpush1.msra.mxu0 0.0
    %7957 = vmatprep.subr.mxu0 0.0
    %7958 = vmatpush1.msra.mxu0 0.0
    %7959 = vmatprep.subr.mxu0 0.0
    %7960 = vmatpush1.msra.mxu0 0.0
    %7961 = vmatprep.mubr.f32.mxu0 0.0
    %v7962 = vand.u32 %v7723, 4294901760
    %7963 = vmatmul.mubr.f32.gmra.mrb[0].mxu0 %v7962
    %v7964 = vpop.f32.mrb[0].mxu0
    %v7965 = vadd.f32 %v7813, %v7964
    %v7966 = vpop.f32.mrb[0].mxu0
    %v7967 = vadd.f32 %v7815, %v7966
    %7968 = vdwg.mxu0
    %v7969 = vand.u32 %v7695, 4294901760
    %v7970 = vsub.f32 %v7695, %v7969
    %7971 = vmatprep.subr.mxu0 %v7970
    %v7972 = vand.u32 %v7694, 4294901760
    %v7973 = vsub.f32 %v7694, %v7972
    %7974 = vmatpush1.msra.mxu0 %v7973
    %v7975 = vand.u32 %v7697, 4294901760
    %v7976 = vsub.f32 %v7697, %v7975
    %7977 = vmatprep.subr.mxu0 %v7976
    %v7978 = vand.u32 %v7696, 4294901760
    %v7979 = vsub.f32 %v7696, %v7978
    %7980 = vmatpush1.msra.mxu0 %v7979
    %v7981 = vand.u32 %v7699, 4294901760
    %v7982 = vsub.f32 %v7699, %v7981
    %7983 = vmatprep.subr.mxu0 %v7982
    %v7984 = vand.u32 %v7698, 4294901760
    %v7985 = vsub.f32 %v7698, %v7984
    %7986 = vmatpush1.msra.mxu0 %v7985
    %v7987 = vand.u32 %v7701, 4294901760
    %v7988 = vsub.f32 %v7701, %v7987
    %7989 = vmatprep.subr.mxu0 %v7988
    %v7990 = vand.u32 %v7700, 4294901760
    %v7991 = vsub.f32 %v7700, %v7990
    %7992 = vmatpush1.msra.mxu0 %v7991
    %v7993 = vand.u32 %v7703, 4294901760
    %v7994 = vsub.f32 %v7703, %v7993
    %7995 = vmatprep.subr.mxu0 %v7994
    %v7996 = vand.u32 %v7702, 4294901760
    %v7997 = vsub.f32 %v7702, %v7996
    %7998 = vmatpush1.msra.mxu0 %v7997
    %v7999 = vand.u32 %v7705, 4294901760
    %v8000 = vsub.f32 %v7705, %v7999
    %8001 = vmatprep.subr.mxu0 %v8000
    %v8002 = vand.u32 %v7704, 4294901760
    %v8003 = vsub.f32 %v7704, %v8002
    %8004 = vmatpush1.msra.mxu0 %v8003
    %v8005 = vand.u32 %v7707, 4294901760
    %v8006 = vsub.f32 %v7707, %v8005
    %8007 = vmatprep.subr.mxu0 %v8006
    %v8008 = vand.u32 %v7706, 4294901760
    %v8009 = vsub.f32 %v7706, %v8008
    %8010 = vmatpush1.msra.mxu0 %v8009
    %v8011 = vand.u32 %v7709, 4294901760
    %v8012 = vsub.f32 %v7709, %v8011
    %8013 = vmatprep.subr.mxu0 %v8012
    %v8014 = vand.u32 %v7708, 4294901760
    %v8015 = vsub.f32 %v7708, %v8014
    %8016 = vmatpush1.msra.mxu0 %v8015
    %8017 = vmatprep.subr.mxu0 0.0
    %8018 = vmatpush1.msra.mxu0 0.0
    %8019 = vmatprep.subr.mxu0 0.0
    %8020 = vmatpush1.msra.mxu0 0.0
    %8021 = vmatprep.subr.mxu0 0.0
    %8022 = vmatpush1.msra.mxu0 0.0
    %8023 = vmatprep.subr.mxu0 0.0
    %8024 = vmatpush1.msra.mxu0 0.0
    %8025 = vmatprep.subr.mxu0 0.0
    %8026 = vmatpush1.msra.mxu0 0.0
    %8027 = vmatprep.subr.mxu0 0.0
    %8028 = vmatpush1.msra.mxu0 0.0
    %8029 = vmatprep.subr.mxu0 0.0
    %8030 = vmatpush1.msra.mxu0 0.0
    %8031 = vmatprep.subr.mxu0 0.0
    %8032 = vmatpush1.msra.mxu0 0.0
    %8033 = vmatprep.subr.mxu0 0.0
    %8034 = vmatpush1.msra.mxu0 0.0
    %8035 = vmatprep.subr.mxu0 0.0
    %8036 = vmatpush1.msra.mxu0 0.0
    %8037 = vmatprep.subr.mxu0 0.0
    %8038 = vmatpush1.msra.mxu0 0.0
    %8039 = vmatprep.subr.mxu0 0.0
    %8040 = vmatpush1.msra.mxu0 0.0
    %8041 = vmatprep.subr.mxu0 0.0
    %8042 = vmatpush1.msra.mxu0 0.0
    %8043 = vmatprep.subr.mxu0 0.0
    %8044 = vmatpush1.msra.mxu0 0.0
    %8045 = vmatprep.subr.mxu0 0.0
    %8046 = vmatpush1.msra.mxu0 0.0
    %8047 = vmatprep.subr.mxu0 0.0
    %8048 = vmatpush1.msra.mxu0 0.0
    %8049 = vmatprep.subr.mxu0 0.0
    %8050 = vmatpush1.msra.mxu0 0.0
    %8051 = vmatprep.subr.mxu0 0.0
    %8052 = vmatpush1.msra.mxu0 0.0
    %8053 = vmatprep.subr.mxu0 0.0
    %8054 = vmatpush1.msra.mxu0 0.0
    %8055 = vmatprep.subr.mxu0 0.0
    %8056 = vmatpush1.msra.mxu0 0.0
    %8057 = vmatprep.subr.mxu0 0.0
    %8058 = vmatpush1.msra.mxu0 0.0
    %8059 = vmatprep.subr.mxu0 0.0
    %8060 = vmatpush1.msra.mxu0 0.0
    %8061 = vmatprep.subr.mxu0 0.0
    %8062 = vmatpush1.msra.mxu0 0.0
    %8063 = vmatprep.subr.mxu0 0.0
    %8064 = vmatpush1.msra.mxu0 0.0
    %8065 = vmatprep.mubr.f32.mxu0 0.0
    %v8066 = vand.u32 %v7723, 4294901760
    %v8067 = vsub.f32 %v7723, %v8066
    %8068 = vmatmul.mubr.f32.gmra.mrb[0].mxu0 %v8067
    %v8069 = vpop.f32.mrb[0].mxu0
    %v8070 = vadd.f32 %v7965, %v8069
    %v8071 = vpop.f32.mrb[0].mxu0
    %v8072 = vadd.f32 %v7967, %v8071
    %8073 = vdwg.mxu0
    %v8074 = vand.u32 %v7695, 4294901760
    %8075 = vmatprep.subr.mxu0 %v8074
    %v8076 = vand.u32 %v7694, 4294901760
    %8077 = vmatpush1.msra.mxu0 %v8076
    %v8078 = vand.u32 %v7697, 4294901760
    %8079 = vmatprep.subr.mxu0 %v8078
    %v8080 = vand.u32 %v7696, 4294901760
    %8081 = vmatpush1.msra.mxu0 %v8080
    %v8082 = vand.u32 %v7699, 4294901760
    %8083 = vmatprep.subr.mxu0 %v8082
    %v8084 = vand.u32 %v7698, 4294901760
    %8085 = vmatpush1.msra.mxu0 %v8084
    %v8086 = vand.u32 %v7701, 4294901760
    %8087 = vmatprep.subr.mxu0 %v8086
    %v8088 = vand.u32 %v7700, 4294901760
    %8089 = vmatpush1.msra.mxu0 %v8088
    %v8090 = vand.u32 %v7703, 4294901760
    %8091 = vmatprep.subr.mxu0 %v8090
    %v8092 = vand.u32 %v7702, 4294901760
    %8093 = vmatpush1.msra.mxu0 %v8092
    %v8094 = vand.u32 %v7705, 4294901760
    %8095 = vmatprep.subr.mxu0 %v8094
    %v8096 = vand.u32 %v7704, 4294901760
    %8097 = vmatpush1.msra.mxu0 %v8096
    %v8098 = vand.u32 %v7707, 4294901760
    %8099 = vmatprep.subr.mxu0 %v8098
    %v8100 = vand.u32 %v7706, 4294901760
    %8101 = vmatpush1.msra.mxu0 %v8100
    %v8102 = vand.u32 %v7709, 4294901760
    %8103 = vmatprep.subr.mxu0 %v8102
    %v8104 = vand.u32 %v7708, 4294901760
    %8105 = vmatpush1.msra.mxu0 %v8104
    %8106 = vmatprep.subr.mxu0 0.0
    %8107 = vmatpush1.msra.mxu0 0.0
    %8108 = vmatprep.subr.mxu0 0.0
    %8109 = vmatpush1.msra.mxu0 0.0
    %8110 = vmatprep.subr.mxu0 0.0
    %8111 = vmatpush1.msra.mxu0 0.0
    %8112 = vmatprep.subr.mxu0 0.0
    %8113 = vmatpush1.msra.mxu0 0.0
    %8114 = vmatprep.subr.mxu0 0.0
    %8115 = vmatpush1.msra.mxu0 0.0
    %8116 = vmatprep.subr.mxu0 0.0
    %8117 = vmatpush1.msra.mxu0 0.0
    %8118 = vmatprep.subr.mxu0 0.0
    %8119 = vmatpush1.msra.mxu0 0.0
    %8120 = vmatprep.subr.mxu0 0.0
    %8121 = vmatpush1.msra.mxu0 0.0
    %8122 = vmatprep.subr.mxu0 0.0
    %8123 = vmatpush1.msra.mxu0 0.0
    %8124 = vmatprep.subr.mxu0 0.0
    %8125 = vmatpush1.msra.mxu0 0.0
    %8126 = vmatprep.subr.mxu0 0.0
    %8127 = vmatpush1.msra.mxu0 0.0
    %8128 = vmatprep.subr.mxu0 0.0
    %8129 = vmatpush1.msra.mxu0 0.0
    %8130 = vmatprep.subr.mxu0 0.0
    %8131 = vmatpush1.msra.mxu0 0.0
    %8132 = vmatprep.subr.mxu0 0.0
    %8133 = vmatpush1.msra.mxu0 0.0
    %8134 = vmatprep.subr.mxu0 0.0
    %8135 = vmatpush1.msra.mxu0 0.0
    %8136 = vmatprep.subr.mxu0 0.0
    %8137 = vmatpush1.msra.mxu0 0.0
    %8138 = vmatprep.subr.mxu0 0.0
    %8139 = vmatpush1.msra.mxu0 0.0
    %8140 = vmatprep.subr.mxu0 0.0
    %8141 = vmatpush1.msra.mxu0 0.0
    %8142 = vmatprep.subr.mxu0 0.0
    %8143 = vmatpush1.msra.mxu0 0.0
    %8144 = vmatprep.subr.mxu0 0.0
    %8145 = vmatpush1.msra.mxu0 0.0
    %8146 = vmatprep.subr.mxu0 0.0
    %8147 = vmatpush1.msra.mxu0 0.0
    %8148 = vmatprep.subr.mxu0 0.0
    %8149 = vmatpush1.msra.mxu0 0.0
    %8150 = vmatprep.subr.mxu0 0.0
    %8151 = vmatpush1.msra.mxu0 0.0
    %8152 = vmatprep.subr.mxu0 0.0
    %8153 = vmatpush1.msra.mxu0 0.0
    %8154 = vmatprep.mubr.f32.mxu0 0.0
    %v8155 = vand.u32 %v7723, 4294901760
    %v8156 = vsub.f32 %v7723, %v8155
    %v8157 = vand.u32 %v8156, 4294901760
    %8158 = vmatmul.mubr.f32.gmra.mrb[0].mxu0 %v8157
    %v8159 = vpop.f32.mrb[0].mxu0
    %v8160 = vadd.f32 %v8070, %v8159
    %v8161 = vpop.f32.mrb[0].mxu0
    %v8162 = vadd.f32 %v8072, %v8161
    %8163 = vdwg.mxu0
    %v8164 = vand.u32 %v7695, 4294901760
    %v8165 = vsub.f32 %v7695, %v8164
    %v8166 = vand.u32 %v8165, 4294901760
    %8167 = vmatprep.subr.mxu0 %v8166
    %v8168 = vand.u32 %v7694, 4294901760
    %v8169 = vsub.f32 %v7694, %v8168
    %v8170 = vand.u32 %v8169, 4294901760
    %8171 = vmatpush1.msra.mxu0 %v8170
    %v8172 = vand.u32 %v7697, 4294901760
    %v8173 = vsub.f32 %v7697, %v8172
    %v8174 = vand.u32 %v8173, 4294901760
    %8175 = vmatprep.subr.mxu0 %v8174
    %v8176 = vand.u32 %v7696, 4294901760
    %v8177 = vsub.f32 %v7696, %v8176
    %v8178 = vand.u32 %v8177, 4294901760
    %8179 = vmatpush1.msra.mxu0 %v8178
    %v8180 = vand.u32 %v7699, 4294901760
    %v8181 = vsub.f32 %v7699, %v8180
    %v8182 = vand.u32 %v8181, 4294901760
    %8183 = vmatprep.subr.mxu0 %v8182
    %v8184 = vand.u32 %v7698, 4294901760
    %v8185 = vsub.f32 %v7698, %v8184
    %v8186 = vand.u32 %v8185, 4294901760
    %8187 = vmatpush1.msra.mxu0 %v8186
    %v8188 = vand.u32 %v7701, 4294901760
    %v8189 = vsub.f32 %v7701, %v8188
    %v8190 = vand.u32 %v8189, 4294901760
    %8191 = vmatprep.subr.mxu0 %v8190
    %v8192 = vand.u32 %v7700, 4294901760
    %v8193 = vsub.f32 %v7700, %v8192
    %v8194 = vand.u32 %v8193, 4294901760
    %8195 = vmatpush1.msra.mxu0 %v8194
    %v8196 = vand.u32 %v7703, 4294901760
    %v8197 = vsub.f32 %v7703, %v8196
    %v8198 = vand.u32 %v8197, 4294901760
    %8199 = vmatprep.subr.mxu0 %v8198
    %v8200 = vand.u32 %v7702, 4294901760
    %v8201 = vsub.f32 %v7702, %v8200
    %v8202 = vand.u32 %v8201, 4294901760
    %8203 = vmatpush1.msra.mxu0 %v8202
    %v8204 = vand.u32 %v7705, 4294901760
    %v8205 = vsub.f32 %v7705, %v8204
    %v8206 = vand.u32 %v8205, 4294901760
    %8207 = vmatprep.subr.mxu0 %v8206
    %v8208 = vand.u32 %v7704, 4294901760
    %v8209 = vsub.f32 %v7704, %v8208
    %v8210 = vand.u32 %v8209, 4294901760
    %8211 = vmatpush1.msra.mxu0 %v8210
    %v8212 = vand.u32 %v7707, 4294901760
    %v8213 = vsub.f32 %v7707, %v8212
    %v8214 = vand.u32 %v8213, 4294901760
    %8215 = vmatprep.subr.mxu0 %v8214
    %v8216 = vand.u32 %v7706, 4294901760
    %v8217 = vsub.f32 %v7706, %v8216
    %v8218 = vand.u32 %v8217, 4294901760
    %8219 = vmatpush1.msra.mxu0 %v8218
    %v8220 = vand.u32 %v7709, 4294901760
    %v8221 = vsub.f32 %v7709, %v8220
    %v8222 = vand.u32 %v8221, 4294901760
    %8223 = vmatprep.subr.mxu0 %v8222
    %v8224 = vand.u32 %v7708, 4294901760
    %v8225 = vsub.f32 %v7708, %v8224
    %v8226 = vand.u32 %v8225, 4294901760
    %8227 = vmatpush1.msra.mxu0 %v8226
    %8228 = vmatprep.subr.mxu0 0.0
    %8229 = vmatpush1.msra.mxu0 0.0
    %8230 = vmatprep.subr.mxu0 0.0
    %8231 = vmatpush1.msra.mxu0 0.0
    %8232 = vmatprep.subr.mxu0 0.0
    %8233 = vmatpush1.msra.mxu0 0.0
    %8234 = vmatprep.subr.mxu0 0.0
    %8235 = vmatpush1.msra.mxu0 0.0
    %8236 = vmatprep.subr.mxu0 0.0
    %8237 = vmatpush1.msra.mxu0 0.0
    %8238 = vmatprep.subr.mxu0 0.0
    %8239 = vmatpush1.msra.mxu0 0.0
    %8240 = vmatprep.subr.mxu0 0.0
    %8241 = vmatpush1.msra.mxu0 0.0
    %8242 = vmatprep.subr.mxu0 0.0
    %8243 = vmatpush1.msra.mxu0 0.0
    %8244 = vmatprep.subr.mxu0 0.0
    %8245 = vmatpush1.msra.mxu0 0.0
    %8246 = vmatprep.subr.mxu0 0.0
    %8247 = vmatpush1.msra.mxu0 0.0
    %8248 = vmatprep.subr.mxu0 0.0
    %8249 = vmatpush1.msra.mxu0 0.0
    %8250 = vmatprep.subr.mxu0 0.0
    %8251 = vmatpush1.msra.mxu0 0.0
    %8252 = vmatprep.subr.mxu0 0.0
    %8253 = vmatpush1.msra.mxu0 0.0
    %8254 = vmatprep.subr.mxu0 0.0
    %8255 = vmatpush1.msra.mxu0 0.0
    %8256 = vmatprep.subr.mxu0 0.0
    %8257 = vmatpush1.msra.mxu0 0.0
    %8258 = vmatprep.subr.mxu0 0.0
    %8259 = vmatpush1.msra.mxu0 0.0
    %8260 = vmatprep.subr.mxu0 0.0
    %8261 = vmatpush1.msra.mxu0 0.0
    %8262 = vmatprep.subr.mxu0 0.0
    %8263 = vmatpush1.msra.mxu0 0.0
    %8264 = vmatprep.subr.mxu0 0.0
    %8265 = vmatpush1.msra.mxu0 0.0
    %8266 = vmatprep.subr.mxu0 0.0
    %8267 = vmatpush1.msra.mxu0 0.0
    %8268 = vmatprep.subr.mxu0 0.0
    %8269 = vmatpush1.msra.mxu0 0.0
    %8270 = vmatprep.subr.mxu0 0.0
    %8271 = vmatpush1.msra.mxu0 0.0
    %8272 = vmatprep.subr.mxu0 0.0
    %8273 = vmatpush1.msra.mxu0 0.0
    %8274 = vmatprep.subr.mxu0 0.0
    %8275 = vmatpush1.msra.mxu0 0.0
    %8276 = vmatprep.mubr.f32.mxu0 0.0
    %v8277 = vand.u32 %v7723, 4294901760
    %8278 = vmatmul.mubr.f32.gmra.mrb[0].mxu0 %v8277
    %v8279 = vpop.f32.mrb[0].mxu0
    %v8280 = vadd.f32 %v8160, %v8279
    %v8281 = vpop.f32.mrb[0].mxu0
    %v8282 = vadd.f32 %v8162, %v8281
    %8283 = vdwg.mxu0
    %v8284 = vand.u32 %v7695, 4294901760
    %8285 = vmatprep.subr.mxu0 %v8284
    %v8286 = vand.u32 %v7694, 4294901760
    %8287 = vmatpush1.msra.mxu0 %v8286
    %v8288 = vand.u32 %v7697, 4294901760
    %8289 = vmatprep.subr.mxu0 %v8288
    %v8290 = vand.u32 %v7696, 4294901760
    %8291 = vmatpush1.msra.mxu0 %v8290
    %v8292 = vand.u32 %v7699, 4294901760
    %8293 = vmatprep.subr.mxu0 %v8292
    %v8294 = vand.u32 %v7698, 4294901760
    %8295 = vmatpush1.msra.mxu0 %v8294
    %v8296 = vand.u32 %v7701, 4294901760
    %8297 = vmatprep.subr.mxu0 %v8296
    %v8298 = vand.u32 %v7700, 4294901760
    %8299 = vmatpush1.msra.mxu0 %v8298
    %v8300 = vand.u32 %v7703, 4294901760
    %8301 = vmatprep.subr.mxu0 %v8300
    %v8302 = vand.u32 %v7702, 4294901760
    %8303 = vmatpush1.msra.mxu0 %v8302
    %v8304 = vand.u32 %v7705, 4294901760
    %8305 = vmatprep.subr.mxu0 %v8304
    %v8306 = vand.u32 %v7704, 4294901760
    %8307 = vmatpush1.msra.mxu0 %v8306
    %v8308 = vand.u32 %v7707, 4294901760
    %8309 = vmatprep.subr.mxu0 %v8308
    %v8310 = vand.u32 %v7706, 4294901760
    %8311 = vmatpush1.msra.mxu0 %v8310
    %v8312 = vand.u32 %v7709, 4294901760
    %8313 = vmatprep.subr.mxu0 %v8312
    %v8314 = vand.u32 %v7708, 4294901760
    %8315 = vmatpush1.msra.mxu0 %v8314
    %8316 = vmatprep.subr.mxu0 0.0
    %8317 = vmatpush1.msra.mxu0 0.0
    %8318 = vmatprep.subr.mxu0 0.0
    %8319 = vmatpush1.msra.mxu0 0.0
    %8320 = vmatprep.subr.mxu0 0.0
    %8321 = vmatpush1.msra.mxu0 0.0
    %8322 = vmatprep.subr.mxu0 0.0
    %8323 = vmatpush1.msra.mxu0 0.0
    %8324 = vmatprep.subr.mxu0 0.0
    %8325 = vmatpush1.msra.mxu0 0.0
    %8326 = vmatprep.subr.mxu0 0.0
    %8327 = vmatpush1.msra.mxu0 0.0
    %8328 = vmatprep.subr.mxu0 0.0
    %8329 = vmatpush1.msra.mxu0 0.0
    %8330 = vmatprep.subr.mxu0 0.0
    %8331 = vmatpush1.msra.mxu0 0.0
    %8332 = vmatprep.subr.mxu0 0.0
    %8333 = vmatpush1.msra.mxu0 0.0
    %8334 = vmatprep.subr.mxu0 0.0
    %8335 = vmatpush1.msra.mxu0 0.0
    %8336 = vmatprep.subr.mxu0 0.0
    %8337 = vmatpush1.msra.mxu0 0.0
    %8338 = vmatprep.subr.mxu0 0.0
    %8339 = vmatpush1.msra.mxu0 0.0
    %8340 = vmatprep.subr.mxu0 0.0
    %8341 = vmatpush1.msra.mxu0 0.0
    %8342 = vmatprep.subr.mxu0 0.0
    %8343 = vmatpush1.msra.mxu0 0.0
    %8344 = vmatprep.subr.mxu0 0.0
    %8345 = vmatpush1.msra.mxu0 0.0
    %8346 = vmatprep.subr.mxu0 0.0
    %8347 = vmatpush1.msra.mxu0 0.0
    %8348 = vmatprep.subr.mxu0 0.0
    %8349 = vmatpush1.msra.mxu0 0.0
    %8350 = vmatprep.subr.mxu0 0.0
    %8351 = vmatpush1.msra.mxu0 0.0
    %8352 = vmatprep.subr.mxu0 0.0
    %8353 = vmatpush1.msra.mxu0 0.0
    %8354 = vmatprep.subr.mxu0 0.0
    %8355 = vmatpush1.msra.mxu0 0.0
    %8356 = vmatprep.subr.mxu0 0.0
    %8357 = vmatpush1.msra.mxu0 0.0
    %8358 = vmatprep.subr.mxu0 0.0
    %8359 = vmatpush1.msra.mxu0 0.0
    %8360 = vmatprep.subr.mxu0 0.0
    %8361 = vmatpush1.msra.mxu0 0.0
    %8362 = vmatprep.subr.mxu0 0.0
    %8363 = vmatpush1.msra.mxu0 0.0
    %8364 = vmatprep.mubr.f32.mxu0 0.0
    %v8365 = vand.u32 %v7723, 4294901760
    %8366 = vmatmul.mubr.f32.gmra.mrb[0].mxu0 %v8365
    %v8367 = vpop.f32.mrb[0].mxu0
    %v8368 = vadd.f32 %v8280, %v8367
    %v8369 = vpop.f32.mrb[0].mxu0
    %v8370 = vadd.f32 %v8282, %v8369
    %8371 = vdwg.mxu0
    %v8372 = vadd.f32 %v7683, %v8368
    %v8373 = vxor.u32 %v8372, 2147483648
    %v8374 = vmul.f32 %v8373, 1.442695
    %v8375 = vpow.pop %v8374
    %v8376 = vadd.f32 %v8375, 1.0
    %v8377 = vrcp.pop %v8376
    %v8378 = vmul.f32 1.0, %v8377
    %v8379 = vmul.f32 %v8378, %v8370
    %v8380 = vadd.f32 %v7685, %v8379
    %v8381 = vtanh.pop %v8380
    %v8382 = vsub.f32 1.0, %v8378
    %8384 = vrot.lane.b32.xlu0 %v8381, 64
    %v8385 = vpop.permute.xlu0 %8384
    %v8387 = vmul.f32 %v8382, %v8385
    %8388 = vrot.lane.b32.xlu0 %v7693, 64
    %v8389 = vpop.permute.xlu0 %8388
    %v8391 = vmul.f32 %v8378, %v8389
    %v8392 = vadd.f32 %v8387, %v8391
    %8394 = vrot.lane.b32.xlu0 %v2478, 64
    %v8395 = vpop.permute.xlu0 %8394
    %vm8397 = vcmask 517120
    %8398 = vst.msk [vmem:[#allocation2] sm:$0x3] %vm8397, %v8395
    %8400 = vrot.lane.b32.xlu0 %v8392, 64
    %v8401 = vpop.permute.xlu0 %8400
    %8403 = vst.msk [vmem:[#allocation6] sm:$0x3] %vm8397, %v8401
    // Predicated region
    $region118: #{tpu_custom_call.1} parent=1 // pred_check
      _
    $region119: #{tpu_custom_call.1} parent=1 // pred_check_branch
      %8405 = sbr.rel (0) target = $region121
    $region120: #{tpu_custom_call.1} parent=1 // pred_region
      %s8407 = ssub.s32 32, 32
      %8408 = vsyncadd [#allocation3], %s8407
      %s8410 = sshll.u32 [#allocation2], 4
      %s8411 = int_to_ptr.vmem [resolvable:$true] %s8410
      %8413 = dma.vmem_to_hbm [thread:$0]  %s8411, 32, %s59, [#allocation3]
    $region121: #{tpu_custom_call.1} parent=1 // pred_fallthru
      _
    // Predicated region
    $region122: #{tpu_custom_call.1} parent=1 // pred_check
      _
    $region123: #{tpu_custom_call.1} parent=1 // pred_check_branch
      %8415 = sbr.rel (0) target = $region125
    $region124: #{tpu_custom_call.1} parent=1 // pred_region
      %s8417 = ssub.s32 32, 32
      %8418 = vsyncadd [#allocation5], %s8417
      %s8420 = sshll.u32 [#allocation4], 4
      %s8421 = int_to_ptr.vmem [resolvable:$true] %s8420
      %8423 = dma.vmem_to_hbm [thread:$0]  %s8421, 32, %s61, [#allocation5]
    $region125: #{tpu_custom_call.1} parent=1 // pred_fallthru
      _
    // Predicated region
    $region126: #{tpu_custom_call.1} parent=1 // pred_check
      _
    $region127: #{tpu_custom_call.1} parent=1 // pred_check_branch
      %8425 = sbr.rel (0) target = $region129
    $region128: #{tpu_custom_call.1} parent=1 // pred_region
      %s8427 = ssub.s32 32, 32
      %8428 = vsyncadd [#allocation5], %s8427
      %s8430 = sshll.u32 [#allocation6], 4
      %s8431 = int_to_ptr.vmem [resolvable:$true] %s8430
      %8433 = dma.vmem_to_hbm [thread:$0]  %s8431, 32, %s63, [#allocation5]
    $region129: #{tpu_custom_call.1} parent=1 // pred_fallthru
      _
    // Predicated region
    $region130: #{tpu_custom_call.1} parent=1 // pred_check
      _
    $region131: #{tpu_custom_call.1} parent=1 // pred_check_branch
      %8435 = sbr.rel (0) target = $region133
    $region132: #{tpu_custom_call.1} parent=1 // pred_region
      _
    $region133: #{tpu_custom_call.1} parent=1 // pred_fallthru
      _
    // Predicated region
    $region134: #{tpu_custom_call.1} parent=1 // pred_check
      _
    $region135: #{tpu_custom_call.1} parent=1 // pred_check_branch
      %8437 = sbr.rel (0) target = $region137
    $region136: #{tpu_custom_call.1} parent=1 // pred_region
      %8438 = dma.done [#allocation3], 32
    $region137: #{tpu_custom_call.1} parent=1 // pred_fallthru
      _
    // Predicated region
    $region138: #{tpu_custom_call.1} parent=1 // pred_check
      _
    $region139: #{tpu_custom_call.1} parent=1 // pred_check_branch
      %8440 = sbr.rel (0) target = $region141
    $region140: #{tpu_custom_call.1} parent=1 // pred_region
      %8441 = dma.done [#allocation5], 32
    $region141: #{tpu_custom_call.1} parent=1 // pred_fallthru
      _
    // Predicated region
    $region142: #{tpu_custom_call.1} parent=1 // pred_check
      _
    $region143: #{tpu_custom_call.1} parent=1 // pred_check_branch
      %8443 = sbr.rel (0) target = $region145
    $region144: #{tpu_custom_call.1} parent=1 // pred_region
      %8444 = dma.done [#allocation5], 32
    $region145: #{tpu_custom_call.1} parent=1 // pred_fallthru
      _
    // Predicated region
    $region146: #{tpu_custom_call.1} parent=1 // pred_check
      _
    $region147: #{tpu_custom_call.1} parent=1 // pred_check_branch
      %8446 = sbr.rel (0) target = $region149
    $region148: #{tpu_custom_call.1} parent=1 // pred_region
      _
    $region149: #{tpu_custom_call.1} parent=1 // pred_fallthru
      _
    %8447 = vsyncpa [#allocation3], 1
    %8448 = vsyncpa [#allocation5], 1

</llo_original>
